<compile_context>
chip_gen: v5e
topology: v5e:2x2
jax: 0.10.0
libtpu: 0.0.40
codegen_flags: <defaults>
</compile_context>

<pallas_src>
import jax
import jax.numpy as jnp
import numpy as np
from jax.experimental import pallas as pl
from jax.experimental.pallas import tpu as pltpu

EPS = 1e-5
COMPUTE_DTYPE = jnp.bfloat16          # MXU input dtype (accumulation stays f32)
ACT_DTYPE = jnp.bfloat16              # inter-pass activation dtype in HBM
ROW_TILE_ROWS = 1024                  # target rows per tile (shrinks via the byte budget below)
TILE_VMEM_BUDGET = 20 * 1024 * 1024   # per-pass working set: dbl-buffered tiles + in-kernel temps
VMEM_LIMIT_BYTES = 48 * 1024 * 1024   # scoped VMEM limit; < v7x's 64 MiB physical VMEM

# TODO(synk): use_transpose=False branch (nn.Upsample bilinear, align_corners=True) not
#             implemented; only the default use_transpose=True path is covered.
# TODO(synk): kernels are tuned for lane-dense channel counts (C, F >= 128); tiny C/F (as in
#             the demo) runs correctly but every store is lane-sparse (masked vst).


def _cparams(*dimension_semantics):
    return pltpu.CompilerParams(
        dimension_semantics=dimension_semantics,
        vmem_limit_bytes=VMEM_LIMIT_BYTES,
    )


def _pick_row_tile(m, bytes_per_row, target=ROW_TILE_ROWS):
    """Largest sublane-aligned divisor of m whose working set fits the VMEM byte budget."""
    cap = min(target, max(8, TILE_VMEM_BUDGET // max(bytes_per_row, 1)))
    cap = max(8, (cap // 8) * 8)
    if m <= cap:
        return m
    for t in range(cap, 7, -1):
        if m % t == 0 and t % 8 == 0:
            return t
    # TODO(synk): awkward M (no sublane-aligned divisor <= cap) falls back to a single full-M
    #             tile; pad/mask the row dim if such shapes must stay under the VMEM budget.
    return m


def _pick_h_tile(h, w, bytes_per_hrow, target_rows=ROW_TILE_ROWS):
    """Rows-of-H tile for the tconv pass: tile_h*W ~= target rows and under the byte budget."""
    th_cap = min(h,
                 max(1, target_rows // max(w, 1)),
                 max(1, TILE_VMEM_BUDGET // max(bytes_per_hrow, 1)))
    for th in range(th_cap, 0, -1):
        if h % th == 0 and (th * w) % 8 == 0:
            return th
    # TODO(synk): no aligned divisor of H -> whole image per tile (may exceed the byte budget).
    return h


def _pick_partitions(n_tiles):
    """Leading 'parallel' grid-axis size for per-partition BN stats partials (megacore)."""
    for p in (8, 4, 2):
        if n_tiles % p == 0:
            return p
    return 1


# ---------------------------------------------------------------------------
# Kernels
# ---------------------------------------------------------------------------
def _matmul_stats_kernel(x_ref, w_ref, y_ref, stats_ref):
    """1x1 conv (pre-BN): y = x @ w ; accumulate per-channel [sum; sum_sq] partials."""
    y = jnp.dot(x_ref[...].astype(COMPUTE_DTYPE), w_ref[...],
                preferred_element_type=jnp.float32)
    y_ref[...] = y.astype(y_ref.dtype)

    @pl.when(pl.program_id(1) == 0)
    def _init():
        stats_ref[...] = jnp.zeros_like(stats_ref)

    stats_ref[0, 0:1, :] += jnp.sum(y, axis=0, keepdims=True)
    stats_ref[0, 1:2, :] += jnp.sum(y * y, axis=0, keepdims=True)


def _affine_relu_matmul_stats_kernel(y_ref, scale_ref, shift_ref, w_ref, o_ref, stats_ref):
    """Fused: previous-stage BN apply + ReLU, 1x1-conv matmul, next-stage BN stats partials."""
    h = jnp.maximum(y_ref[...].astype(jnp.float32) * scale_ref[...] + shift_ref[...], 0.0)
    o = jnp.dot(h.astype(COMPUTE_DTYPE), w_ref[...], preferred_element_type=jnp.float32)
    o_ref[...] = o.astype(o_ref.dtype)

    @pl.when(pl.program_id(1) == 0)
    def _init():
        stats_ref[...] = jnp.zeros_like(stats_ref)

    stats_ref[0, 0:1, :] += jnp.sum(o, axis=0, keepdims=True)
    stats_ref[0, 1:2, :] += jnp.sum(o * o, axis=0, keepdims=True)


def _affine_relu_kernel(y_ref, scale_ref, shift_ref, o_ref):
    """BN apply + ReLU: o = relu(y * scale + shift) (scale/shift precomputed)."""
    o_ref[...] = jnp.maximum(
        y_ref[...].astype(jnp.float32) * scale_ref[...] + shift_ref[...], 0.0
    ).astype(o_ref.dtype)


def _tconv_fused_kernel(xm_ref, xn_ref, sc_ref, sh_ref, w_ref, y_ref, stats_ref):
    """Stage-1 BN apply + ReLU fused with ConvTranspose2d(3, s=2, p=1, op=1) + stage-2 BN stats.

    xm_ref : (1, TH, W+1, C) bf16  rows [i*TH, (i+1)*TH) of the zero-padded conv1 output y1
    xn_ref : (1, 1,  W+1, C) bf16  row (i+1)*TH (bottom halo; the zero-pad row for the last tile)
    sc_ref, sh_ref : (1, C) f32    stage-1 BN scale / shift
    w_ref  : (4C, 4*Cout) bf16     packed taps (rows shift-major [x00|x01|x10|x11], cols parity-major)
    y_ref  : (TH*W, 4*Cout) bf16   parity-packed pre-BN tconv output rows for this tile
    stats_ref : (1, 2, 4*Cout) f32 per-image [sum; sum_sq] partials
    """
    _, th, wp1, c = xm_ref.shape
    wd = wp1 - 1

    sc = sc_ref[...]                                       # (1, C) broadcasts over (.., W+1, C)
    sh = sh_ref[...]

    # Stage-1 BN apply + ReLU in VMEM; the pad column (col == W) and the pad row (last tile's
    # halo row) must be forced back to zero since relu(0*scale + shift) can be nonzero.
    col = jax.lax.broadcasted_iota(jnp.int32, (wp1, c), 0)
    valid_col = col < wd                                   # (W+1, C)

    hm = jnp.maximum(xm_ref[0].astype(jnp.float32) * sc + sh, 0.0)
    hm = jnp.where(valid_col, hm, 0.0)                     # (TH, W+1, C)

    hn = jnp.maximum(xn_ref[0].astype(jnp.float32) * sc + sh, 0.0)
    hn = jnp.where(valid_col, hn, 0.0)                     # (1, W+1, C)
    is_pad_row = pl.program_id(1) == pl.num_programs(1) - 1
    hn = jnp.where(is_pad_row, jnp.zeros_like(hn), hn)

    h_dn = jnp.concatenate([hm[1:], hn], axis=0) if th > 1 else hn   # rows shifted down by one

    # 2x2 im2col as four K-split dots accumulated in f32 (no (TH*W, 4C) concat temporary).
    # TODO(synk): per-parity dots could additionally skip the 7 all-zero (shift, parity) blocks.
    def tap_dot(v, s):
        return jnp.dot(v.reshape(th * wd, c).astype(COMPUTE_DTYPE),
                       w_ref[s * c:(s + 1) * c, :],
                       preferred_element_type=jnp.float32)

    y = (tap_dot(hm[:, :wd, :], 0) + tap_dot(hm[:, 1:, :], 1)
         + tap_dot(h_dn[:, :wd, :], 2) + tap_dot(h_dn[:, 1:, :], 3))  # (TH*W, 4*Cout) f32
    y_ref[...] = y.astype(y_ref.dtype)

    @pl.when(pl.program_id(1) == 0)
    def _init():
        stats_ref[...] = jnp.zeros_like(stats_ref)

    stats_ref[0, 0:1, :] += jnp.sum(y, axis=0, keepdims=True)
    stats_ref[0, 1:2, :] += jnp.sum(y * y, axis=0, keepdims=True)


# ---------------------------------------------------------------------------
# pallas_call wrappers
# ---------------------------------------------------------------------------
def _matmul_stats(x2d, w):
    m, c_in = x2d.shape
    c_out = w.shape[1]
    bytes_per_row = (2 * (c_in * x2d.dtype.itemsize)   # x DMA tile (double-buffered)
                     + 2 * (c_out * 2)                 # y DMA tile (bf16, double-buffered)
                     + c_out * 4)                      # f32 matmul result
    tile_m = _pick_row_tile(m, bytes_per_row)
    n_tiles = m // tile_m
    n_par = _pick_partitions(n_tiles)
    steps = n_tiles // n_par
    return pl.pallas_call(
        _matmul_stats_kernel,
        grid=(n_par, steps),
        in_specs=[pl.BlockSpec((tile_m, c_in), lambda p, j: (p * steps + j, 0)),
                  pl.BlockSpec((c_in, c_out), lambda p, j: (0, 0))],
        out_specs=(pl.BlockSpec((tile_m, c_out), lambda p, j: (p * steps + j, 0)),
                   pl.BlockSpec((1, 2, c_out), lambda p, j: (p, 0, 0))),
        out_shape=(jax.ShapeDtypeStruct((m, c_out), ACT_DTYPE),
                   jax.ShapeDtypeStruct((n_par, 2, c_out), jnp.float32)),
        compiler_params=_cparams("parallel", "arbitrary"),
    )(x2d, w)


def _affine_relu_matmul_stats(y2d, scale, shift, w):
    m, c_in = y2d.shape
    f = w.shape[1]
    bytes_per_row = (2 * (c_in * y2d.dtype.itemsize)   # y DMA tile (double-buffered)
                     + 2 * (f * 2)                     # o DMA tile (bf16, double-buffered)
                     + c_in * 4 + f * 4)               # f32 affine temp + f32 matmul result
    tile_m = _pick_row_tile(m, bytes_per_row)
    n_tiles = m // tile_m
    n_par = _pick_partitions(n_tiles)
    steps = n_tiles // n_par
    return pl.pallas_call(
        _affine_relu_matmul_stats_kernel,
        grid=(n_par, steps),
        in_specs=[pl.BlockSpec((tile_m, c_in), lambda p, j: (p * steps + j, 0)),
                  pl.BlockSpec((1, c_in), lambda p, j: (0, 0)),
                  pl.BlockSpec((1, c_in), lambda p, j: (0, 0)),
                  pl.BlockSpec((c_in, f), lambda p, j: (0, 0))],
        out_specs=(pl.BlockSpec((tile_m, f), lambda p, j: (p * steps + j, 0)),
                   pl.BlockSpec((1, 2, f), lambda p, j: (p, 0, 0))),
        out_shape=(jax.ShapeDtypeStruct((m, f), ACT_DTYPE),
                   jax.ShapeDtypeStruct((n_par, 2, f), jnp.float32)),
        compiler_params=_cparams("parallel", "arbitrary"),
    )(y2d, scale, shift, w)


def _affine_relu(y2d, scale, shift, out_dtype=jnp.float32):
    m, k = y2d.shape
    out_bytes = np.dtype(out_dtype).itemsize
    bytes_per_row = 2 * (k * y2d.dtype.itemsize + k * out_bytes) + k * 4
    tile_m = _pick_row_tile(m, bytes_per_row)
    return pl.pallas_call(
        _affine_relu_kernel,
        grid=(m // tile_m,),
        in_specs=[pl.BlockSpec((tile_m, k), lambda i: (i, 0)),
                  pl.BlockSpec((1, k), lambda i: (0, 0)),
                  pl.BlockSpec((1, k), lambda i: (0, 0))],
        out_specs=pl.BlockSpec((tile_m, k), lambda i: (i, 0)),
        out_shape=jax.ShapeDtypeStruct((m, k), out_dtype),
        compiler_params=_cparams("parallel"),
    )(y2d, scale, shift)


def _tconv_fused(xpad, sc1, sh1, w_packed):
    n, hp1, wp1, c = xpad.shape
    h, w = hp1 - 1, wp1 - 1
    k = w_packed.shape[1]                               # 4 * Cout
    bytes_per_hrow = (2 * (wp1 * c * 2)                 # xm DMA (bf16, double-buffered)
                      + 2 * (w * k * 2)                 # y  DMA (bf16, double-buffered)
                      + 2 * (wp1 * c * 4)               # hm + h_dn (f32)
                      + 4 * (w * c * 2)                 # bf16 tap operands
                      + w * k * 4)                      # f32 accumulator
    tile_h = _pick_h_tile(h, w, bytes_per_hrow)
    n_h = h // tile_h
    rows = tile_h * w
    m = n * h * w
    return pl.pallas_call(
        _tconv_fused_kernel,
        grid=(n, n_h),
        in_specs=[
            # main TH-row slab of the padded pre-BN conv1 output
            pl.BlockSpec((1, tile_h, wp1, c), lambda b, i: (b, i, 0, 0)),
            # the single "next" row (row (i+1)*tile_h; row H is the zero-pad row)
            pl.BlockSpec((1, 1, wp1, c), lambda b, i: (b, (i + 1) * tile_h, 0, 0)),
            pl.BlockSpec((1, c), lambda b, i: (0, 0)),
            pl.BlockSpec((1, c), lambda b, i: (0, 0)),
            pl.BlockSpec((4 * c, k), lambda b, i: (0, 0)),
        ],
        out_specs=(pl.BlockSpec((rows, k), lambda b, i: (b * n_h + i, 0)),
                   pl.BlockSpec((1, 2, k), lambda b, i: (b, 0, 0))),
        out_shape=(jax.ShapeDtypeStruct((m, k), ACT_DTYPE),
                   jax.ShapeDtypeStruct((n, 2, k), jnp.float32)),
        compiler_params=_cparams("parallel", "arbitrary"),
    )(xpad, xpad, sc1, sh1, w_packed)


# ---------------------------------------------------------------------------
# Weight packing / BN finalization (tiny wrapper-side helpers)
# ---------------------------------------------------------------------------
def _pack_tconv_weight(w_pt):
    """Pack a PyTorch ConvTranspose2d weight (Cin, Cout, 3, 3) into (4*Cin, 4*Cout).

    Rows are the 2x2 im2col shifts s in [x00, x01, x10, x11]; columns are output
    parities p in [ee, eo, oe, oo] (p = ph*2 + pw).  Zero blocks for unused taps.
    """
    c_in, c_out = w_pt.shape[0], w_pt.shape[1]
    taps = {  # (shift s, parity p) -> (kh, kw)
        (0, 0): (1, 1),
        (0, 1): (1, 2), (1, 1): (1, 0),
        (0, 2): (2, 1), (2, 2): (0, 1),
        (0, 3): (2, 2), (1, 3): (2, 0), (2, 3): (0, 2), (3, 3): (0, 0),
    }
    wp = jnp.zeros((4, c_in, 4, c_out), w_pt.dtype)
    for (s, p), (kh, kw) in taps.items():
        wp = wp.at[s, :, p, :].set(w_pt[:, :, kh, kw])
    return wp.reshape(4 * c_in, 4 * c_out)


def _bn_scale_shift(stats, count, gamma, beta, parity_groups=1):
    """Finalize train-mode BN from per-partition [sum; sum_sq] partials of shape (P, 2, K).

    For parity-packed stats (lane = p*C + c) the parity lane-groups of the same channel are
    combined first.  Returns f32 (1, C) scale/shift.
    """
    s = stats.astype(jnp.float32).sum(axis=0)             # (2, K): fold per-core/per-image partials
    if parity_groups > 1:
        s = s.reshape(2, parity_groups, -1).sum(axis=1)    # (2, C)
    mean = s[0] / count
    var = jnp.maximum(s[1] / count - mean * mean, 0.0)     # biased var, clamped (cancellation guard)
    scale = gamma * jax.lax.rsqrt(var + EPS)
    shift = beta - mean * scale
    return (scale.reshape(1, -1).astype(jnp.float32),
            shift.reshape(1, -1).astype(jnp.float32))


# ---------------------------------------------------------------------------
# Module wrapper
# ---------------------------------------------------------------------------
def init_params(key, in_channels, n_filters):
    ks = jax.random.split(key, 6)
    c, f = in_channels, n_filters
    return {
        # conv1: nn.Conv2d(C, C, 1); weight stored as (Cin, Cout)
        "w1": jnp.transpose(jax.random.normal(ks[0], (c, c), jnp.float32) * 0.2),
        "b1": jax.random.normal(ks[1], (c,), jnp.float32) * 0.05,   # unused: cancelled by train-mode BN
        "g1": jnp.ones((c,), jnp.float32), "beta1": jnp.zeros((c,), jnp.float32),
        # up: nn.ConvTranspose2d(C, C, 3, stride=2, padding=1, output_padding=1); (Cin, Cout, 3, 3)
        "wt": jax.random.normal(ks[2], (c, c, 3, 3), jnp.float32) * 0.2,
        "bt": jax.random.normal(ks[3], (c,), jnp.float32) * 0.05,   # unused: cancelled by train-mode BN
        "gt": jnp.ones((c,), jnp.float32), "betat": jnp.zeros((c,), jnp.float32),
        # conv3: nn.Conv2d(C, F, 1); weight stored as (Cin, Cout)
        "w3": jnp.transpose(jax.random.normal(ks[4], (f, c), jnp.float32) * 0.2),
        "b3": jax.random.normal(ks[5], (f,), jnp.float32) * 0.05,   # unused: cancelled by train-mode BN
        "g3": jnp.ones((f,), jnp.float32), "beta3": jnp.zeros((f,), jnp.float32),
    }


def decoder_bottleneck_forward(x_nchw, p):
    n, c_in, h, w = x_nchw.shape
    m = n * h * w

    # NCHW -> channels-last rows (M, C): every hot op is a (rows, channels) matmul.
    x2d = jnp.transpose(x_nchw, (0, 2, 3, 1)).reshape(m, c_in)

    # ---- stage 1: conv1 (1x1) matmul + BN batch stats ---------------------------------
    y1, st1 = _matmul_stats(x2d, p["w1"].astype(COMPUTE_DTYPE))          # (M, C) bf16
    sc1, sh1 = _bn_scale_shift(st1, m, p["g1"], p["beta1"])

    # ---- stage 2: [BN1 apply + ReLU] fused with ConvTranspose2d(3, s=2, p=1, op=1) ----
    c_mid = y1.shape[1]
    y1p = jnp.pad(y1.reshape(n, h, w, c_mid), ((0, 0), (0, 1), (0, 1), (0, 0)))
    wt_packed = _pack_tconv_weight(p["wt"]).astype(COMPUTE_DTYPE)        # (4C, 4C)
    y2, st2 = _tconv_fused(y1p, sc1, sh1, wt_packed)                     # (M, 4C) bf16, parity-packed
    sc2, sh2 = _bn_scale_shift(st2, 4 * m, p["gt"], p["betat"], parity_groups=4)   # (1, C)

    # ---- stage 3: [BN2 apply + ReLU] fused with conv3 (1x1) + BN3 stats ----------------
    # The parity-packed (M, 4C) buffer is consumed as (4M, C) rows (same bytes), so conv3 runs
    # with its plain (C, F) weight instead of a 75%-zero block-diagonal one.
    n_f = p["w3"].shape[1]
    y2_rows = y2.reshape(4 * m, c_mid)
    y3, st3 = _affine_relu_matmul_stats(y2_rows, sc2, sh2,
                                        p["w3"].astype(COMPUTE_DTYPE))   # (4M, F) bf16
    sc3, sh3 = _bn_scale_shift(st3, 4 * m, p["g3"], p["beta3"])
    out_p = _affine_relu(y3, sc3, sh3, out_dtype=jnp.float32)            # (4M, F) f32

    # parity-unpack + NHWC->NCHW collapsed into one final transpose.
    out = out_p.reshape(n, h, w, 2, 2, n_f)
    out = jnp.transpose(out, (0, 5, 1, 3, 2, 4)).reshape(n, n_f, 2 * h, 2 * w)
    return out


if __name__ == "__main__":
    in_channels, n_filters = 4, 8
    N, H, W = 2, 32, 32      # M = 2048 -> every pass runs a multi-step / multi-partition grid

    key = jax.random.PRNGKey(0)
    kx, kp = jax.random.split(key)
    x = jax.random.normal(kx, (N, in_channels, H, W), jnp.float32)
    params = init_params(kp, in_channels, n_filters)

    fwd = jax.jit(decoder_bottleneck_forward)
    y = fwd(x, params)
    jax.block_until_ready(y)

    assert y.shape == (N, n_filters, 2 * H, 2 * W), y.shape
    assert bool(jnp.all(y >= 0.0))          # ReLU output
    assert bool(jnp.all(jnp.isfinite(y)))
    print("KERNEL_OK")
</pallas_src>

<mosaic_0001>
module attributes {stable_mosaic.version = 11 : i64} {
  func.func @_matmul_stats_kernel(%arg0: i32, %arg1: i32, %arg2: memref<1024x4xf32, #tpu.memory_space<vmem>>, %arg3: memref<4x4xbf16, #tpu.memory_space<vmem>>, %arg4: memref<1024x4xbf16, #tpu.memory_space<vmem>>, %arg5: memref<1x2x4xf32, #tpu.memory_space<vmem>>) attributes {dimension_semantics = [#tpu.dimension_semantics<parallel>, #tpu.dimension_semantics<arbitrary>], iteration_bounds = array<i64: 2, 1>, scalar_prefetch = 0 : i64, scratch_operands = 0 : i64, tpu.core_type = #tpu.core_type<tc>, window_params = [{transform_indices = @transform_0, window_bounds = array<i64: 1024, 4>}, {pipeline_mode = #tpu.pipeline_mode<synchronous>, transform_indices = @transform_1, window_bounds = array<i64: 4, 4>}, {transform_indices = @transform_2, window_bounds = array<i64: 1024, 4>}, {transform_indices = @transform_3, window_bounds = array<i64: 1, 2, 4>}]} {
    %c0 = arith.constant 0 : index
    %c0_0 = arith.constant 0 : index
    %0 = vector.load %arg2[%c0, %c0_0] : memref<1024x4xf32, #tpu.memory_space<vmem>>, vector<1024x4xf32>
    %1 = arith.truncf %0 : vector<1024x4xf32> to vector<1024x4xbf16>
    %c0_1 = arith.constant 0 : index
    %c0_2 = arith.constant 0 : index
    %2 = vector.load %arg3[%c0_1, %c0_2] : memref<4x4xbf16, #tpu.memory_space<vmem>>, vector<4x4xbf16>
    %cst = arith.constant dense<0.000000e+00> : vector<1024x4xf32>
    %3 = tpu.matmul %1, %2, %cst {dimension_numbers = #tpu.dot_dimension_numbers<[1], [0], [0], [1], [0, 0, 1, 1], [], []>} : vector<1024x4xbf16>, vector<4x4xbf16>, vector<1024x4xf32> -> vector<1024x4xf32>
    %4 = arith.truncf %3 : vector<1024x4xf32> to vector<1024x4xbf16>
    %c0_3 = arith.constant 0 : index
    %c0_4 = arith.constant 0 : index
    %5 = vector.load %arg4[%c0_3, %c0_4] : memref<1024x4xbf16, #tpu.memory_space<vmem>>, vector<1024x4xbf16>
    tpu.vector_store %arg4[%c0_3, %c0_4], %4 {strides = array<i32>} : memref<1024x4xbf16, #tpu.memory_space<vmem>>, vector<1024x4xbf16>,
    %c0_i32 = arith.constant 0 : i32
    %6 = arith.cmpi eq, %arg1, %c0_i32 : i32
    %7 = arith.extui %6 : i1 to i32
    %c0_i32_5 = arith.constant 0 : i32
    %8 = arith.cmpi ne, %7, %c0_i32_5 : i32
    scf.if %8 {
      %cst_19 = arith.constant 0.000000e+00 : f32
      %26 = vector.broadcast %cst_19 : f32 to vector<1x2x4xf32>
      %c0_20 = arith.constant 0 : index
      %c0_21 = arith.constant 0 : index
      %c0_22 = arith.constant 0 : index
      %27 = vector.load %arg5[%c0_20, %c0_21, %c0_22] : memref<1x2x4xf32, #tpu.memory_space<vmem>>, vector<1x2x4xf32>
      tpu.vector_store %arg5[%c0_20, %c0_21, %c0_22], %26 {strides = array<i32>} : memref<1x2x4xf32, #tpu.memory_space<vmem>>, vector<1x2x4xf32>,
    } else {
    }
    %c0_6 = arith.constant 0 : index
    %c0_7 = arith.constant 0 : index
    %c0_8 = arith.constant 0 : index
    %9 = vector.load %arg5[%c0_6, %c0_7, %c0_8] : memref<1x2x4xf32, #tpu.memory_space<vmem>>, vector<1x1x4xf32>
    %10 = vector.shape_cast %9 : vector<1x1x4xf32> to vector<1x4xf32>
    %cst_9 = arith.constant dense<0.000000e+00> : vector<4xf32>
    %11 = vector.multi_reduction <add>, %3, %cst_9 [0] : vector<1024x4xf32> to vector<4xf32>
    %12 = vector.shape_cast %11 : vector<4xf32> to vector<1x4xf32>
    %13 = arith.addf %10, %12 : vector<1x4xf32>
    %c0_10 = arith.constant 0 : index
    %c0_11 = arith.constant 0 : index
    %c0_12 = arith.constant 0 : index
    %14 = vector.load %arg5[%c0_10, %c0_11, %c0_12] : memref<1x2x4xf32, #tpu.memory_space<vmem>>, vector<1x1x4xf32>
    %15 = vector.shape_cast %14 : vector<1x1x4xf32> to vector<1x4xf32>
    %16 = vector.shape_cast %13 : vector<1x4xf32> to vector<1x1x4xf32>
    tpu.vector_store %arg5[%c0_10, %c0_11, %c0_12], %16 {strides = array<i32>} : memref<1x2x4xf32, #tpu.memory_space<vmem>>, vector<1x1x4xf32>,
    %c0_13 = arith.constant 0 : index
    %c1 = arith.constant 1 : index
    %c0_14 = arith.constant 0 : index
    %17 = vector.load %arg5[%c0_13, %c1, %c0_14] : memref<1x2x4xf32, #tpu.memory_space<vmem>>, vector<1x1x4xf32>
    %18 = vector.shape_cast %17 : vector<1x1x4xf32> to vector<1x4xf32>
    %19 = arith.mulf %3, %3 : vector<1024x4xf32>
    %cst_15 = arith.constant dense<0.000000e+00> : vector<4xf32>
    %20 = vector.multi_reduction <add>, %19, %cst_15 [0] : vector<1024x4xf32> to vector<4xf32>
    %21 = vector.shape_cast %20 : vector<4xf32> to vector<1x4xf32>
    %22 = arith.addf %18, %21 : vector<1x4xf32>
    %c0_16 = arith.constant 0 : index
    %c1_17 = arith.constant 1 : index
    %c0_18 = arith.constant 0 : index
    %23 = vector.load %arg5[%c0_16, %c1_17, %c0_18] : memref<1x2x4xf32, #tpu.memory_space<vmem>>, vector<1x1x4xf32>
    %24 = vector.shape_cast %23 : vector<1x1x4xf32> to vector<1x4xf32>
    %25 = vector.shape_cast %22 : vector<1x4xf32> to vector<1x1x4xf32>
    tpu.vector_store %arg5[%c0_16, %c1_17, %c0_18], %25 {strides = array<i32>} : memref<1x2x4xf32, #tpu.memory_space<vmem>>, vector<1x1x4xf32>,
    return
  }
  func.func @transform_0(%arg0: i32, %arg1: i32) -> (i32, i32) {
    %c1_i32 = arith.constant 1 : i32
    %0 = arith.muli %arg0, %c1_i32 : i32
    %1 = arith.addi %0, %arg1 : i32
    %c0_i32 = arith.constant 0 : i32
    %c0_i32_0 = arith.constant 0 : i32
    return %1, %c0_i32 : i32, i32
  }
  func.func @transform_1(%arg0: i32, %arg1: i32) -> (i32, i32) {
    %c0_i32 = arith.constant 0 : i32
    %c0_i32_0 = arith.constant 0 : i32
    %c0_i32_1 = arith.constant 0 : i32
    return %c0_i32, %c0_i32_0 : i32, i32
  }
  func.func @transform_2(%arg0: i32, %arg1: i32) -> (i32, i32) {
    %c1_i32 = arith.constant 1 : i32
    %0 = arith.muli %arg0, %c1_i32 : i32
    %1 = arith.addi %0, %arg1 : i32
    %c0_i32 = arith.constant 0 : i32
    %c0_i32_0 = arith.constant 0 : i32
    return %1, %c0_i32 : i32, i32
  }
  func.func @transform_3(%arg0: i32, %arg1: i32) -> (i32, i32, i32) {
    %c0_i32 = arith.constant 0 : i32
    %c0_i32_0 = arith.constant 0 : i32
    %c0_i32_1 = arith.constant 0 : i32
    return %arg0, %c0_i32, %c0_i32_0 : i32, i32, i32
  }
}

module attributes {stable_mosaic.version = 11 : i64} {
  func.func @_tconv_fused_kernel(%arg0: i32, %arg1: i32, %arg2: memref<1x32x33x4xbf16, #tpu.memory_space<vmem>>, %arg3: memref<1x1x33x4xbf16, #tpu.memory_space<vmem>>, %arg4: memref<1x4xf32, #tpu.memory_space<vmem>>, %arg5: memref<1x4xf32, #tpu.memory_space<vmem>>, %arg6: memref<16x16xbf16, #tpu.memory_space<vmem>>, %arg7: memref<1024x16xbf16, #tpu.memory_space<vmem>>, %arg8: memref<1x2x16xf32, #tpu.memory_space<vmem>>) attributes {dimension_semantics = [#tpu.dimension_semantics<parallel>, #tpu.dimension_semantics<arbitrary>], iteration_bounds = array<i64: 2, 1>, scalar_prefetch = 0 : i64, scratch_operands = 0 : i64, tpu.core_type = #tpu.core_type<tc>, window_params = [{transform_indices = @transform_0, window_bounds = array<i64: 1, 32, 33, 4>}, {transform_indices = @transform_1, window_bounds = array<i64: 1, 1, 33, 4>}, {pipeline_mode = #tpu.pipeline_mode<synchronous>, transform_indices = @transform_2, window_bounds = array<i64: 1, 4>}, {pipeline_mode = #tpu.pipeline_mode<synchronous>, transform_indices = @transform_3, window_bounds = array<i64: 1, 4>}, {pipeline_mode = #tpu.pipeline_mode<synchronous>, transform_indices = @transform_4, window_bounds = array<i64: 16, 16>}, {transform_indices = @transform_5, window_bounds = array<i64: 1024, 16>}, {transform_indices = @transform_6, window_bounds = array<i64: 1, 2, 16>}]} {
    %c0 = arith.constant 0 : index
    %c0_0 = arith.constant 0 : index
    %0 = vector.load %arg4[%c0, %c0_0] : memref<1x4xf32, #tpu.memory_space<vmem>>, vector<1x4xf32>
    %c0_1 = arith.constant 0 : index
    %c0_2 = arith.constant 0 : index
    %1 = vector.load %arg5[%c0_1, %c0_2] : memref<1x4xf32, #tpu.memory_space<vmem>>, vector<1x4xf32>
    %2 = tpu.iota {dimensions = array<i32: 0>} : vector<33x4xi32>
    %c32_i32 = arith.constant 32 : i32
    %3 = vector.broadcast %c32_i32 : i32 to vector<33x4xi32>
    %4 = arith.cmpi slt, %2, %3 : vector<33x4xi32>
    %c0_3 = arith.constant 0 : index
    %c0_4 = arith.constant 0 : index
    %c0_5 = arith.constant 0 : index
    %c0_6 = arith.constant 0 : index
    %5 = vector.load %arg2[%c0_3, %c0_4, %c0_5, %c0_6] : memref<1x32x33x4xbf16, #tpu.memory_space<vmem>>, vector<1x32x33x4xbf16>
    %6 = vector.shape_cast %5 : vector<1x32x33x4xbf16> to vector<32x33x4xbf16>
    %7 = arith.extf %6 : vector<32x33x4xbf16> to vector<32x33x4xf32>
    %8 = vector.shape_cast %0 : vector<1x4xf32> to vector<1x1x4xf32>
    %9 = vector.broadcast %8 : vector<1x1x4xf32> to vector<32x33x4xf32>
    %10 = arith.mulf %7, %9 : vector<32x33x4xf32>
    %11 = vector.shape_cast %1 : vector<1x4xf32> to vector<1x1x4xf32>
    %12 = vector.broadcast %11 : vector<1x1x4xf32> to vector<32x33x4xf32>
    %13 = arith.addf %10, %12 : vector<32x33x4xf32>
    %cst = arith.constant 0.000000e+00 : f32
    %14 = vector.broadcast %cst : f32 to vector<32x33x4xf32>
    %15 = arith.maximumf %13, %14 : vector<32x33x4xf32>
    %cst_7 = arith.constant 0.000000e+00 : f32
    %16 = vector.shape_cast %4 : vector<33x4xi1> to vector<1x33x4xi1>
    %17 = vector.broadcast %16 : vector<1x33x4xi1> to vector<32x33x4xi1>
    %18 = vector.broadcast %cst_7 : f32 to vector<32x33x4xf32>
    %19 = arith.select %17, %15, %18 : vector<32x33x4xi1>, vector<32x33x4xf32>
    %c0_8 = arith.constant 0 : index
    %c0_9 = arith.constant 0 : index
    %c0_10 = arith.constant 0 : index
    %c0_11 = arith.constant 0 : index
    %20 = vector.load %arg3[%c0_8, %c0_9, %c0_10, %c0_11] : memref<1x1x33x4xbf16, #tpu.memory_space<vmem>>, vector<1x1x33x4xbf16>
    %21 = vector.shape_cast %20 : vector<1x1x33x4xbf16> to vector<1x33x4xbf16>
    %22 = arith.extf %21 : vector<1x33x4xbf16> to vector<1x33x4xf32>
    %23 = vector.shape_cast %0 : vector<1x4xf32> to vector<1x1x4xf32>
    %24 = vector.broadcast %23 : vector<1x1x4xf32> to vector<1x33x4xf32>
    %25 = arith.mulf %22, %24 : vector<1x33x4xf32>
    %26 = vector.shape_cast %1 : vector<1x4xf32> to vector<1x1x4xf32>
    %27 = vector.broadcast %26 : vector<1x1x4xf32> to vector<1x33x4xf32>
    %28 = arith.addf %25, %27 : vector<1x33x4xf32>
    %cst_12 = arith.constant 0.000000e+00 : f32
    %29 = vector.broadcast %cst_12 : f32 to vector<1x33x4xf32>
    %30 = arith.maximumf %28, %29 : vector<1x33x4xf32>
    %cst_13 = arith.constant 0.000000e+00 : f32
    %31 = vector.shape_cast %4 : vector<33x4xi1> to vector<1x33x4xi1>
    %32 = vector.broadcast %cst_13 : f32 to vector<1x33x4xf32>
    %33 = arith.select %31, %30, %32 : vector<1x33x4xi1>, vector<1x33x4xf32>
    %c0_i32 = arith.constant 0 : i32
    %34 = arith.cmpi eq, %arg1, %c0_i32 : i32
    %cst_14 = arith.constant 0.000000e+00 : f32
    %35 = vector.broadcast %cst_14 : f32 to vector<1x33x4xf32>
    %36 = arith.select %34, %35, %33 : vector<1x33x4xf32>
    %37 = vector.extract_strided_slice %19 {offsets = [1, 0, 0], sizes = [31, 33, 4], strides = [1, 1, 1]} : vector<32x33x4xf32> to vector<31x33x4xf32>
    %38 = tpu.concatenate %37, %36 in 0 : vector<31x33x4xf32>, vector<1x33x4xf32> -> vector<32x33x4xf32>
    %39 = vector.extract_strided_slice %19 {offsets = [0, 0, 0], sizes = [32, 32, 4], strides = [1, 1, 1]} : vector<32x33x4xf32> to vector<32x32x4xf32>
    %40 = vector.shape_cast %39 : vector<32x32x4xf32> to vector<1024x4xf32>
    %41 = arith.truncf %40 : vector<1024x4xf32> to vector<1024x4xbf16>
    %c0_15 = arith.constant 0 : index
    %c0_16 = arith.constant 0 : index
    %42 = vector.load %arg6[%c0_15, %c0_16] : memref<16x16xbf16, #tpu.memory_space<vmem>>, vector<4x16xbf16>
    %cst_17 = arith.constant dense<0.000000e+00> : vector<1024x16xf32>
    %43 = tpu.matmul %41, %42, %cst_17 {dimension_numbers = #tpu.dot_dimension_numbers<[1], [0], [0], [1], [0, 0, 1, 1], [], []>} : vector<1024x4xbf16>, vector<4x16xbf16>, vector<1024x16xf32> -> vector<1024x16xf32>
    %44 = vector.extract_strided_slice %19 {offsets = [0, 1, 0], sizes = [32, 32, 4], strides = [1, 1, 1]} : vector<32x33x4xf32> to vector<32x32x4xf32>
    %45 = vector.shape_cast %44 : vector<32x32x4xf32> to vector<1024x4xf32>
    %46 = arith.truncf %45 : vector<1024x4xf32> to vector<1024x4xbf16>
    %c4 = arith.constant 4 : index
    %c0_18 = arith.constant 0 : index
    %47 = vector.load %arg6[%c4, %c0_18] : memref<16x16xbf16, #tpu.memory_space<vmem>>, vector<4x16xbf16>
    %cst_19 = arith.constant dense<0.000000e+00> : vector<1024x16xf32>
    %48 = tpu.matmul %46, %47, %cst_19 {dimension_numbers = #tpu.dot_dimension_numbers<[1], [0], [0], [1], [0, 0, 1, 1], [], []>} : vector<1024x4xbf16>, vector<4x16xbf16>, vector<1024x16xf32> -> vector<1024x16xf32>
    %49 = arith.addf %43, %48 : vector<1024x16xf32>
    %50 = vector.extract_strided_slice %38 {offsets = [0, 0, 0], sizes = [32, 32, 4], strides = [1, 1, 1]} : vector<32x33x4xf32> to vector<32x32x4xf32>
    %51 = vector.shape_cast %50 : vector<32x32x4xf32> to vector<1024x4xf32>
    %52 = arith.truncf %51 : vector<1024x4xf32> to vector<1024x4xbf16>
    %c8 = arith.constant 8 : index
    %c0_20 = arith.constant 0 : index
    %53 = vector.load %arg6[%c8, %c0_20] : memref<16x16xbf16, #tpu.memory_space<vmem>>, vector<4x16xbf16>
    %cst_21 = arith.constant dense<0.000000e+00> : vector<1024x16xf32>
    %54 = tpu.matmul %52, %53, %cst_21 {dimension_numbers = #tpu.dot_dimension_numbers<[1], [0], [0], [1], [0, 0, 1, 1], [], []>} : vector<1024x4xbf16>, vector<4x16xbf16>, vector<1024x16xf32> -> vector<1024x16xf32>
    %55 = arith.addf %49, %54 : vector<1024x16xf32>
    %56 = vector.extract_strided_slice %38 {offsets = [0, 1, 0], sizes = [32, 32, 4], strides = [1, 1, 1]} : vector<32x33x4xf32> to vector<32x32x4xf32>
    %57 = vector.shape_cast %56 : vector<32x32x4xf32> to vector<1024x4xf32>
    %58 = arith.truncf %57 : vector<1024x4xf32> to vector<1024x4xbf16>
    %c12 = arith.constant 12 : index
    %c0_22 = arith.constant 0 : index
    %59 = vector.load %arg6[%c12, %c0_22] : memref<16x16xbf16, #tpu.memory_space<vmem>>, vector<4x16xbf16>
    %cst_23 = arith.constant dense<0.000000e+00> : vector<1024x16xf32>
    %60 = tpu.matmul %58, %59, %cst_23 {dimension_numbers = #tpu.dot_dimension_numbers<[1], [0], [0], [1], [0, 0, 1, 1], [], []>} : vector<1024x4xbf16>, vector<4x16xbf16>, vector<1024x16xf32> -> vector<1024x16xf32>
    %61 = arith.addf %55, %60 : vector<1024x16xf32>
    %62 = arith.truncf %61 : vector<1024x16xf32> to vector<1024x16xbf16>
    %c0_24 = arith.constant 0 : index
    %c0_25 = arith.constant 0 : index
    %63 = vector.load %arg7[%c0_24, %c0_25] : memref<1024x16xbf16, #tpu.memory_space<vmem>>, vector<1024x16xbf16>
    tpu.vector_store %arg7[%c0_24, %c0_25], %62 {strides = array<i32>} : memref<1024x16xbf16, #tpu.memory_space<vmem>>, vector<1024x16xbf16>,
    %c0_i32_26 = arith.constant 0 : i32
    %64 = arith.cmpi eq, %arg1, %c0_i32_26 : i32
    %65 = arith.extui %64 : i1 to i32
    %c0_i32_27 = arith.constant 0 : i32
    %66 = arith.cmpi ne, %65, %c0_i32_27 : i32
    scf.if %66 {
      %cst_41 = arith.constant 0.000000e+00 : f32
      %84 = vector.broadcast %cst_41 : f32 to vector<1x2x16xf32>
      %c0_42 = arith.constant 0 : index
      %c0_43 = arith.constant 0 : index
      %c0_44 = arith.constant 0 : index
      %85 = vector.load %arg8[%c0_42, %c0_43, %c0_44] : memref<1x2x16xf32, #tpu.memory_space<vmem>>, vector<1x2x16xf32>
      tpu.vector_store %arg8[%c0_42, %c0_43, %c0_44], %84 {strides = array<i32>} : memref<1x2x16xf32, #tpu.memory_space<vmem>>, vector<1x2x16xf32>,
    } else {
    }
    %c0_28 = arith.constant 0 : index
    %c0_29 = arith.constant 0 : index
    %c0_30 = arith.constant 0 : index
    %67 = vector.load %arg8[%c0_28, %c0_29, %c0_30] : memref<1x2x16xf32, #tpu.memory_space<vmem>>, vector<1x1x16xf32>
    %68 = vector.shape_cast %67 : vector<1x1x16xf32> to vector<1x16xf32>
    %cst_31 = arith.constant dense<0.000000e+00> : vector<16xf32>
    %69 = vector.multi_reduction <add>, %61, %cst_31 [0] : vector<1024x16xf32> to vector<16xf32>
    %70 = vector.shape_cast %69 : vector<16xf32> to vector<1x16xf32>
    %71 = arith.addf %68, %70 : vector<1x16xf32>
    %c0_32 = arith.constant 0 : index
    %c0_33 = arith.constant 0 : index
    %c0_34 = arith.constant 0 : index
    %72 = vector.load %arg8[%c0_32, %c0_33, %c0_34] : memref<1x2x16xf32, #tpu.memory_space<vmem>>, vector<1x1x16xf32>
    %73 = vector.shape_cast %72 : vector<1x1x16xf32> to vector<1x16xf32>
    %74 = vector.shape_cast %71 : vector<1x16xf32> to vector<1x1x16xf32>
    tpu.vector_store %arg8[%c0_32, %c0_33, %c0_34], %74 {strides = array<i32>} : memref<1x2x16xf32, #tpu.memory_space<vmem>>, vector<1x1x16xf32>,
    %c0_35 = arith.constant 0 : index
    %c1 = arith.constant 1 : index
    %c0_36 = arith.constant 0 : index
    %75 = vector.load %arg8[%c0_35, %c1, %c0_36] : memref<1x2x16xf32, #tpu.memory_space<vmem>>, vector<1x1x16xf32>
    %76 = vector.shape_cast %75 : vector<1x1x16xf32> to vector<1x16xf32>
    %77 = arith.mulf %61, %61 : vector<1024x16xf32>
    %cst_37 = arith.constant dense<0.000000e+00> : vector<16xf32>
    %78 = vector.multi_reduction <add>, %77, %cst_37 [0] : vector<1024x16xf32> to vector<16xf32>
    %79 = vector.shape_cast %78 : vector<16xf32> to vector<1x16xf32>
    %80 = arith.addf %76, %79 : vector<1x16xf32>
    %c0_38 = arith.constant 0 : index
    %c1_39 = arith.constant 1 : index
    %c0_40 = arith.constant 0 : index
    %81 = vector.load %arg8[%c0_38, %c1_39, %c0_40] : memref<1x2x16xf32, #tpu.memory_space<vmem>>, vector<1x1x16xf32>
    %82 = vector.shape_cast %81 : vector<1x1x16xf32> to vector<1x16xf32>
    %83 = vector.shape_cast %80 : vector<1x16xf32> to vector<1x1x16xf32>
    tpu.vector_store %arg8[%c0_38, %c1_39, %c0_40], %83 {strides = array<i32>} : memref<1x2x16xf32, #tpu.memory_space<vmem>>, vector<1x1x16xf32>,
    return
  }
  func.func @transform_0(%arg0: i32, %arg1: i32) -> (i32, i32, i32, i32) {
    %c0_i32 = arith.constant 0 : i32
    %c0_i32_0 = arith.constant 0 : i32
    %c0_i32_1 = arith.constant 0 : i32
    return %arg0, %arg1, %c0_i32, %c0_i32_0 : i32, i32, i32, i32
  }
  func.func @transform_1(%arg0: i32, %arg1: i32) -> (i32, i32, i32, i32) {
    %c1_i32 = arith.constant 1 : i32
    %0 = arith.addi %arg1, %c1_i32 : i32
    %c32_i32 = arith.constant 32 : i32
    %1 = arith.muli %0, %c32_i32 : i32
    %c0_i32 = arith.constant 0 : i32
    %c0_i32_0 = arith.constant 0 : i32
    %c0_i32_1 = arith.constant 0 : i32
    return %arg0, %1, %c0_i32, %c0_i32_0 : i32, i32, i32, i32
  }
  func.func @transform_2(%arg0: i32, %arg1: i32) -> (i32, i32) {
    %c0_i32 = arith.constant 0 : i32
    %c0_i32_0 = arith.constant 0 : i32
    %c0_i32_1 = arith.constant 0 : i32
    return %c0_i32, %c0_i32_0 : i32, i32
  }
  func.func @transform_3(%arg0: i32, %arg1: i32) -> (i32, i32) {
    %c0_i32 = arith.constant 0 : i32
    %c0_i32_0 = arith.constant 0 : i32
    %c0_i32_1 = arith.constant 0 : i32
    return %c0_i32, %c0_i32_0 : i32, i32
  }
  func.func @transform_4(%arg0: i32, %arg1: i32) -> (i32, i32) {
    %c0_i32 = arith.constant 0 : i32
    %c0_i32_0 = arith.constant 0 : i32
    %c0_i32_1 = arith.constant 0 : i32
    return %c0_i32, %c0_i32_0 : i32, i32
  }
  func.func @transform_5(%arg0: i32, %arg1: i32) -> (i32, i32) {
    %c1_i32 = arith.constant 1 : i32
    %0 = arith.muli %arg0, %c1_i32 : i32
    %1 = arith.addi %0, %arg1 : i32
    %c0_i32 = arith.constant 0 : i32
    %c0_i32_0 = arith.constant 0 : i32
    return %1, %c0_i32 : i32, i32
  }
  func.func @transform_6(%arg0: i32, %arg1: i32) -> (i32, i32, i32) {
    %c0_i32 = arith.constant 0 : i32
    %c0_i32_0 = arith.constant 0 : i32
    %c0_i32_1 = arith.constant 0 : i32
    return %arg0, %c0_i32, %c0_i32_0 : i32, i32, i32
  }
}

module attributes {stable_mosaic.version = 11 : i64} {
  func.func @_affine_relu_matmul_stats_kernel(%arg0: i32, %arg1: i32, %arg2: memref<1024x4xbf16, #tpu.memory_space<vmem>>, %arg3: memref<1x4xf32, #tpu.memory_space<vmem>>, %arg4: memref<1x4xf32, #tpu.memory_space<vmem>>, %arg5: memref<4x8xbf16, #tpu.memory_space<vmem>>, %arg6: memref<1024x8xbf16, #tpu.memory_space<vmem>>, %arg7: memref<1x2x8xf32, #tpu.memory_space<vmem>>) attributes {dimension_semantics = [#tpu.dimension_semantics<parallel>, #tpu.dimension_semantics<arbitrary>], iteration_bounds = array<i64: 8, 1>, scalar_prefetch = 0 : i64, scratch_operands = 0 : i64, tpu.core_type = #tpu.core_type<tc>, window_params = [{transform_indices = @transform_0, window_bounds = array<i64: 1024, 4>}, {pipeline_mode = #tpu.pipeline_mode<synchronous>, transform_indices = @transform_1, window_bounds = array<i64: 1, 4>}, {pipeline_mode = #tpu.pipeline_mode<synchronous>, transform_indices = @transform_2, window_bounds = array<i64: 1, 4>}, {pipeline_mode = #tpu.pipeline_mode<synchronous>, transform_indices = @transform_3, window_bounds = array<i64: 4, 8>}, {transform_indices = @transform_4, window_bounds = array<i64: 1024, 8>}, {transform_indices = @transform_5, window_bounds = array<i64: 1, 2, 8>}]} {
    %c0 = arith.constant 0 : index
    %c0_0 = arith.constant 0 : index
    %0 = vector.load %arg2[%c0, %c0_0] : memref<1024x4xbf16, #tpu.memory_space<vmem>>, vector<1024x4xbf16>
    %1 = arith.extf %0 : vector<1024x4xbf16> to vector<1024x4xf32>
    %c0_1 = arith.constant 0 : index
    %c0_2 = arith.constant 0 : index
    %2 = vector.load %arg3[%c0_1, %c0_2] : memref<1x4xf32, #tpu.memory_space<vmem>>, vector<1x4xf32>
    %3 = vector.broadcast %2 : vector<1x4xf32> to vector<1024x4xf32>
    %4 = arith.mulf %1, %3 : vector<1024x4xf32>
    %c0_3 = arith.constant 0 : index
    %c0_4 = arith.constant 0 : index
    %5 = vector.load %arg4[%c0_3, %c0_4] : memref<1x4xf32, #tpu.memory_space<vmem>>, vector<1x4xf32>
    %6 = vector.broadcast %5 : vector<1x4xf32> to vector<1024x4xf32>
    %7 = arith.addf %4, %6 : vector<1024x4xf32>
    %cst = arith.constant 0.000000e+00 : f32
    %8 = vector.broadcast %cst : f32 to vector<1024x4xf32>
    %9 = arith.maximumf %7, %8 : vector<1024x4xf32>
    %10 = arith.truncf %9 : vector<1024x4xf32> to vector<1024x4xbf16>
    %c0_5 = arith.constant 0 : index
    %c0_6 = arith.constant 0 : index
    %11 = vector.load %arg5[%c0_5, %c0_6] : memref<4x8xbf16, #tpu.memory_space<vmem>>, vector<4x8xbf16>
    %cst_7 = arith.constant dense<0.000000e+00> : vector<1024x8xf32>
    %12 = tpu.matmul %10, %11, %cst_7 {dimension_numbers = #tpu.dot_dimension_numbers<[1], [0], [0], [1], [0, 0, 1, 1], [], []>} : vector<1024x4xbf16>, vector<4x8xbf16>, vector<1024x8xf32> -> vector<1024x8xf32>
    %13 = arith.truncf %12 : vector<1024x8xf32> to vector<1024x8xbf16>
    %c0_8 = arith.constant 0 : index
    %c0_9 = arith.constant 0 : index
    %14 = vector.load %arg6[%c0_8, %c0_9] : memref<1024x8xbf16, #tpu.memory_space<vmem>>, vector<1024x8xbf16>
    tpu.vector_store %arg6[%c0_8, %c0_9], %13 {strides = array<i32>} : memref<1024x8xbf16, #tpu.memory_space<vmem>>, vector<1024x8xbf16>,
    %c0_i32 = arith.constant 0 : i32
    %15 = arith.cmpi eq, %arg1, %c0_i32 : i32
    %16 = arith.extui %15 : i1 to i32
    %c0_i32_10 = arith.constant 0 : i32
    %17 = arith.cmpi ne, %16, %c0_i32_10 : i32
    scf.if %17 {
      %cst_24 = arith.constant 0.000000e+00 : f32
      %35 = vector.broadcast %cst_24 : f32 to vector<1x2x8xf32>
      %c0_25 = arith.constant 0 : index
      %c0_26 = arith.constant 0 : index
      %c0_27 = arith.constant 0 : index
      %36 = vector.load %arg7[%c0_25, %c0_26, %c0_27] : memref<1x2x8xf32, #tpu.memory_space<vmem>>, vector<1x2x8xf32>
      tpu.vector_store %arg7[%c0_25, %c0_26, %c0_27], %35 {strides = array<i32>} : memref<1x2x8xf32, #tpu.memory_space<vmem>>, vector<1x2x8xf32>,
    } else {
    }
    %c0_11 = arith.constant 0 : index
    %c0_12 = arith.constant 0 : index
    %c0_13 = arith.constant 0 : index
    %18 = vector.load %arg7[%c0_11, %c0_12, %c0_13] : memref<1x2x8xf32, #tpu.memory_space<vmem>>, vector<1x1x8xf32>
    %19 = vector.shape_cast %18 : vector<1x1x8xf32> to vector<1x8xf32>
    %cst_14 = arith.constant dense<0.000000e+00> : vector<8xf32>
    %20 = vector.multi_reduction <add>, %12, %cst_14 [0] : vector<1024x8xf32> to vector<8xf32>
    %21 = vector.shape_cast %20 : vector<8xf32> to vector<1x8xf32>
    %22 = arith.addf %19, %21 : vector<1x8xf32>
    %c0_15 = arith.constant 0 : index
    %c0_16 = arith.constant 0 : index
    %c0_17 = arith.constant 0 : index
    %23 = vector.load %arg7[%c0_15, %c0_16, %c0_17] : memref<1x2x8xf32, #tpu.memory_space<vmem>>, vector<1x1x8xf32>
    %24 = vector.shape_cast %23 : vector<1x1x8xf32> to vector<1x8xf32>
    %25 = vector.shape_cast %22 : vector<1x8xf32> to vector<1x1x8xf32>
    tpu.vector_store %arg7[%c0_15, %c0_16, %c0_17], %25 {strides = array<i32>} : memref<1x2x8xf32, #tpu.memory_space<vmem>>, vector<1x1x8xf32>,
    %c0_18 = arith.constant 0 : index
    %c1 = arith.constant 1 : index
    %c0_19 = arith.constant 0 : index
    %26 = vector.load %arg7[%c0_18, %c1, %c0_19] : memref<1x2x8xf32, #tpu.memory_space<vmem>>, vector<1x1x8xf32>
    %27 = vector.shape_cast %26 : vector<1x1x8xf32> to vector<1x8xf32>
    %28 = arith.mulf %12, %12 : vector<1024x8xf32>
    %cst_20 = arith.constant dense<0.000000e+00> : vector<8xf32>
    %29 = vector.multi_reduction <add>, %28, %cst_20 [0] : vector<1024x8xf32> to vector<8xf32>
    %30 = vector.shape_cast %29 : vector<8xf32> to vector<1x8xf32>
    %31 = arith.addf %27, %30 : vector<1x8xf32>
    %c0_21 = arith.constant 0 : index
    %c1_22 = arith.constant 1 : index
    %c0_23 = arith.constant 0 : index
    %32 = vector.load %arg7[%c0_21, %c1_22, %c0_23] : memref<1x2x8xf32, #tpu.memory_space<vmem>>, vector<1x1x8xf32>
    %33 = vector.shape_cast %32 : vector<1x1x8xf32> to vector<1x8xf32>
    %34 = vector.shape_cast %31 : vector<1x8xf32> to vector<1x1x8xf32>
    tpu.vector_store %arg7[%c0_21, %c1_22, %c0_23], %34 {strides = array<i32>} : memref<1x2x8xf32, #tpu.memory_space<vmem>>, vector<1x1x8xf32>,
    return
  }
  func.func @transform_0(%arg0: i32, %arg1: i32) -> (i32, i32) {
    %c1_i32 = arith.constant 1 : i32
    %0 = arith.muli %arg0, %c1_i32 : i32
    %1 = arith.addi %0, %arg1 : i32
    %c0_i32 = arith.constant 0 : i32
    %c0_i32_0 = arith.constant 0 : i32
    return %1, %c0_i32 : i32, i32
  }
  func.func @transform_1(%arg0: i32, %arg1: i32) -> (i32, i32) {
    %c0_i32 = arith.constant 0 : i32
    %c0_i32_0 = arith.constant 0 : i32
    %c0_i32_1 = arith.constant 0 : i32
    return %c0_i32, %c0_i32_0 : i32, i32
  }
  func.func @transform_2(%arg0: i32, %arg1: i32) -> (i32, i32) {
    %c0_i32 = arith.constant 0 : i32
    %c0_i32_0 = arith.constant 0 : i32
    %c0_i32_1 = arith.constant 0 : i32
    return %c0_i32, %c0_i32_0 : i32, i32
  }
  func.func @transform_3(%arg0: i32, %arg1: i32) -> (i32, i32) {
    %c0_i32 = arith.constant 0 : i32
    %c0_i32_0 = arith.constant 0 : i32
    %c0_i32_1 = arith.constant 0 : i32
    return %c0_i32, %c0_i32_0 : i32, i32
  }
  func.func @transform_4(%arg0: i32, %arg1: i32) -> (i32, i32) {
    %c1_i32 = arith.constant 1 : i32
    %0 = arith.muli %arg0, %c1_i32 : i32
    %1 = arith.addi %0, %arg1 : i32
    %c0_i32 = arith.constant 0 : i32
    %c0_i32_0 = arith.constant 0 : i32
    return %1, %c0_i32 : i32, i32
  }
  func.func @transform_5(%arg0: i32, %arg1: i32) -> (i32, i32, i32) {
    %c0_i32 = arith.constant 0 : i32
    %c0_i32_0 = arith.constant 0 : i32
    %c0_i32_1 = arith.constant 0 : i32
    return %arg0, %c0_i32, %c0_i32_0 : i32, i32, i32
  }
}

module attributes {stable_mosaic.version = 11 : i64} {
  func.func @_affine_relu_kernel(%arg0: i32, %arg1: memref<1024x8xbf16, #tpu.memory_space<vmem>>, %arg2: memref<1x8xf32, #tpu.memory_space<vmem>>, %arg3: memref<1x8xf32, #tpu.memory_space<vmem>>, %arg4: memref<1024x8xf32, #tpu.memory_space<vmem>>) attributes {dimension_semantics = [#tpu.dimension_semantics<parallel>], iteration_bounds = array<i64: 8>, scalar_prefetch = 0 : i64, scratch_operands = 0 : i64, tpu.core_type = #tpu.core_type<tc>, window_params = [{transform_indices = @transform_0, window_bounds = array<i64: 1024, 8>}, {pipeline_mode = #tpu.pipeline_mode<synchronous>, transform_indices = @transform_1, window_bounds = array<i64: 1, 8>}, {pipeline_mode = #tpu.pipeline_mode<synchronous>, transform_indices = @transform_2, window_bounds = array<i64: 1, 8>}, {transform_indices = @transform_3, window_bounds = array<i64: 1024, 8>}]} {
    %c0 = arith.constant 0 : index
    %c0_0 = arith.constant 0 : index
    %0 = vector.load %arg1[%c0, %c0_0] : memref<1024x8xbf16, #tpu.memory_space<vmem>>, vector<1024x8xbf16>
    %1 = arith.extf %0 : vector<1024x8xbf16> to vector<1024x8xf32>
    %c0_1 = arith.constant 0 : index
    %c0_2 = arith.constant 0 : index
    %2 = vector.load %arg2[%c0_1, %c0_2] : memref<1x8xf32, #tpu.memory_space<vmem>>, vector<1x8xf32>
    %3 = vector.broadcast %2 : vector<1x8xf32> to vector<1024x8xf32>
    %4 = arith.mulf %1, %3 : vector<1024x8xf32>
    %c0_3 = arith.constant 0 : index
    %c0_4 = arith.constant 0 : index
    %5 = vector.load %arg3[%c0_3, %c0_4] : memref<1x8xf32, #tpu.memory_space<vmem>>, vector<1x8xf32>
    %6 = vector.broadcast %5 : vector<1x8xf32> to vector<1024x8xf32>
    %7 = arith.addf %4, %6 : vector<1024x8xf32>
    %cst = arith.constant 0.000000e+00 : f32
    %8 = vector.broadcast %cst : f32 to vector<1024x8xf32>
    %9 = arith.maximumf %7, %8 : vector<1024x8xf32>
    %c0_5 = arith.constant 0 : index
    %c0_6 = arith.constant 0 : index
    %10 = vector.load %arg4[%c0_5, %c0_6] : memref<1024x8xf32, #tpu.memory_space<vmem>>, vector<1024x8xf32>
    tpu.vector_store %arg4[%c0_5, %c0_6], %9 {strides = array<i32>} : memref<1024x8xf32, #tpu.memory_space<vmem>>, vector<1024x8xf32>,
    return
  }
  func.func @transform_0(%arg0: i32) -> (i32, i32) {
    %c0_i32 = arith.constant 0 : i32
    %c0_i32_0 = arith.constant 0 : i32
    return %arg0, %c0_i32 : i32, i32
  }
  func.func @transform_1(%arg0: i32) -> (i32, i32) {
    %c0_i32 = arith.constant 0 : i32
    %c0_i32_0 = arith.constant 0 : i32
    %c0_i32_1 = arith.constant 0 : i32
    return %c0_i32, %c0_i32_0 : i32, i32
  }
  func.func @transform_2(%arg0: i32) -> (i32, i32) {
    %c0_i32 = arith.constant 0 : i32
    %c0_i32_0 = arith.constant 0 : i32
    %c0_i32_1 = arith.constant 0 : i32
    return %c0_i32, %c0_i32_0 : i32, i32
  }
  func.func @transform_3(%arg0: i32) -> (i32, i32) {
    %c0_i32 = arith.constant 0 : i32
    %c0_i32_0 = arith.constant 0 : i32
    return %arg0, %c0_i32 : i32, i32
  }
}

</mosaic_0001>

<llo_original>
// kernel: decoder_bottleneck_forward.4
$region0: #{decoder_bottleneck_forward.4}
  #allocation0 [shape = 'u32[]', space=smem, size = 0x4, offset = 0x4, fixed_abs, tag = 'smem constant byte address 0x4 - core index']
  #allocation1 [shape = 'u32[72,128]{1,0:T(1,128)}', space=vmem, size = 0x9000, scoped, tag = 'internal scratch']
  %s0 = inlined_call_operand.vmem [shape: f32[2048,4], index: 0, kind: input, shape index: {}]
  %s1 = inlined_call_operand.vmem [shape: bf16[4,4], index: 1, kind: input, shape index: {}]
  %s2 = inlined_call_operand.vmem [shape: bf16[2048,4], index: 2, kind: output, shape index: {0}]
  %s3 = inlined_call_operand.vmem [shape: f32[2,2,4], index: 3, kind: output, shape index: {1}]
  %4 = xla_tuple %s2, %s3
  %s5 = sld [smem:[#allocation0]]
  $region53: #{decoder_bottleneck_forward.4} parent=0
    _
  %s7 = ssub.s32 1, %s5
  %s8 = scalar_select 0, %s7, %s5
  loop: start=0, step=1, limit=4
  $region2: #{decoder_bottleneck_forward.4} parent=0 // loop_pre_header
    _
  $region3: #{decoder_bottleneck_forward.4} parent=0 // loop_header
    %s10 = sphi 0, %s14
    %p11 = scmp.ge.s32.totalorder %s10, 4
    %s17 = sphi 0, %s29
    %s18 = sphi 0, %s25
    %s19 = sphi 0, %s17
    %s20 = sphi 0, %s18
    %s21 = sphi 0, %s19
    %s22 = sphi 0, %s20
    %s34 = sphi 0, %s36
    %s37 = sphi 0, %s34
    %s38 = sphi 0, %s37
    %s54 = sphi 0, %s38
    %s58 = sphi 0, %s58
    %s60 = sphi 0, %s58
    %s61 = sphi 0, %s60
    %s75 = sphi 0, %s61
    %s83 = sphi 0, %s85
    %s86 = sphi 0, %s83
    %s87 = sphi 0, %s86
    %s103 = sphi 0, %s87
    %s109 = sphi 0, %s111
    %s112 = sphi 0, %s109
    %s113 = sphi 0, %s112
    %s129 = sphi 0, %s113
  $region4: #{decoder_bottleneck_forward.4} parent=0 // loop_header_branch
    %13 = sbr.rel (%p11) target = $region8
  $region5: #{decoder_bottleneck_forward.4} parent=0 // loop_body
    %s15 = ssub.s32 %s10, 1
    %s16 = ssub.s32 %s10, 2
    %s23 = sadd.s32 1, %s18
    %p24 = scmp.ge.s32.totalorder %s23, 1
    %s25 = scalar_select %p24, 0, %s23
    %s26 = sadd.s32 1, %s17
    %s27 = scalar_select %p24, %s26, %s17
    %p28 = scmp.ge.s32.totalorder %s27, 2
    %s29 = scalar_select %p28, 0, %s27
    %s30 = sadd.s32 %s17, %s18
    %s31 = sadd.s32 %s29, %s25
    %s32 = ssub.s32 %s30, %s31
    %p33 = scmp.eq.s32.totalorder %s32, 0
    %s35 = sadd.s32 %s34, 1
    %s36 = scalar_select %p33, %s34, %s35
    %p39 = pneg %p33
    %p40 = scmp.eq.s32.totalorder %s10, 1
    %p41 = por %p39, %p40
    %p42 = scmp.ne.s32.totalorder %s34, %s37
    %p43 = scmp.eq.s32.totalorder %s10, 0
    %p44 = por %p42, %p43
    %p45 = scmp.ne.s32.totalorder %s34, %s37
    %p46 = scmp.eq.s32.totalorder %s15, 1
    %p47 = por %p45, %p46
    %p48 = scmp.ne.s32.totalorder %s37, %s38
    %p49 = scmp.eq.s32.totalorder %s15, 0
    %p50 = por %p48, %p49
    %p51 = scmp.ne.s32.totalorder %s37, %s38
    %p52 = scmp.eq.s32.totalorder %s16, 1
    %p53 = por %p51, %p52
    %p55 = scmp.ne.s32.totalorder %s38, %s54
    %p56 = scmp.eq.s32.totalorder %s16, 0
    %p57 = por %p55, %p56
    %s59 = sadd.s32 %s58, 1
    %p62 = scmp.eq.s32.totalorder %s10, 1
    %p63 = scmp.ne.s32.totalorder %s58, %s60
    %p64 = scmp.eq.s32.totalorder %s10, 0
    %p65 = por %p63, %p64
    %p66 = scmp.ne.s32.totalorder %s58, %s60
    %p67 = scmp.eq.s32.totalorder %s15, 1
    %p68 = por %p66, %p67
    %p69 = scmp.ne.s32.totalorder %s60, %s61
    %p70 = scmp.eq.s32.totalorder %s15, 0
    %p71 = por %p69, %p70
    %p72 = scmp.ne.s32.totalorder %s60, %s61
    %p73 = scmp.eq.s32.totalorder %s16, 1
    %p74 = por %p72, %p73
    %p76 = scmp.ne.s32.totalorder %s61, %s75
    %p77 = scmp.eq.s32.totalorder %s16, 0
    %p78 = por %p76, %p77
    %s79 = sadd.s32 %s17, %s18
    %s80 = sadd.s32 %s29, %s25
    %s81 = ssub.s32 %s79, %s80
    %p82 = scmp.eq.s32.totalorder %s81, 0
    %s84 = sadd.s32 %s83, 1
    %s85 = scalar_select %p82, %s83, %s84
    %p88 = pneg %p82
    %p89 = scmp.eq.s32.totalorder %s10, 1
    %p90 = por %p88, %p89
    %p91 = scmp.ne.s32.totalorder %s83, %s86
    %p92 = scmp.eq.s32.totalorder %s10, 0
    %p93 = por %p91, %p92
    %p94 = scmp.ne.s32.totalorder %s83, %s86
    %p95 = scmp.eq.s32.totalorder %s15, 1
    %p96 = por %p94, %p95
    %p97 = scmp.ne.s32.totalorder %s86, %s87
    %p98 = scmp.eq.s32.totalorder %s15, 0
    %p99 = por %p97, %p98
    %p100 = scmp.ne.s32.totalorder %s86, %s87
    %p101 = scmp.eq.s32.totalorder %s16, 1
    %p102 = por %p100, %p101
    %p104 = scmp.ne.s32.totalorder %s87, %s103
    %p105 = scmp.eq.s32.totalorder %s16, 0
    %p106 = por %p104, %p105
    %s107 = ssub.s32 %s17, %s29
    %p108 = scmp.eq.s32.totalorder %s107, 0
    %s110 = sadd.s32 %s109, 1
    %s111 = scalar_select %p108, %s109, %s110
    %p114 = pneg %p108
    %p115 = scmp.eq.s32.totalorder %s10, 1
    %p116 = por %p114, %p115
    %p117 = scmp.ne.s32.totalorder %s109, %s112
    %p118 = scmp.eq.s32.totalorder %s10, 0
    %p119 = por %p117, %p118
    %p120 = scmp.ne.s32.totalorder %s109, %s112
    %p121 = scmp.eq.s32.totalorder %s15, 1
    %p122 = por %p120, %p121
    %p123 = scmp.ne.s32.totalorder %s112, %s113
    %p124 = scmp.eq.s32.totalorder %s15, 0
    %p125 = por %p123, %p124
    %p126 = scmp.ne.s32.totalorder %s112, %s113
    %p127 = scmp.eq.s32.totalorder %s16, 1
    %p128 = por %p126, %p127
    %p130 = scmp.ne.s32.totalorder %s113, %s129
    %p131 = scmp.eq.s32.totalorder %s16, 0
    %p132 = por %p130, %p131
    %p133 = scmp.le.s32.totalorder 1, %s10
    %p134 = scmp.lt.s32.totalorder %s10, 3
    %p135 = pnand %p133, %p134
    %p136 = pneg %p135
    // Predicated region
    $region9: #{decoder_bottleneck_forward.4} parent=5 // pred_check
      _
    $region10: #{decoder_bottleneck_forward.4} parent=5 // pred_check_branch
      %138 = sbr.rel (%p135) target = $region12
    $region11: #{decoder_bottleneck_forward.4} parent=5 // pred_region
      %s139 = ssub.s32 %s10, 1
      // Predicated region
      $region13: #{decoder_bottleneck_forward.4} parent=11 // pred_check
        %p140 = pneg %p71
      $region14: #{decoder_bottleneck_forward.4} parent=11 // pred_check_branch
        %142 = sbr.rel (%p140) target = $region16
      $region15: #{decoder_bottleneck_forward.4} parent=11 // pred_region
        _
      $region16: #{decoder_bottleneck_forward.4} parent=11 // pred_fallthru
        _
    $region12: #{decoder_bottleneck_forward.4} parent=5 // pred_fallthru
      _
    %p143 = scmp.lt.s32.totalorder %s10, 2
    // Predicated region
    $region17: #{decoder_bottleneck_forward.4} parent=5 // pred_check
      %p144 = pneg %p143
    $region18: #{decoder_bottleneck_forward.4} parent=5 // pred_check_branch
      %146 = sbr.rel (%p144) target = $region20
    $region19: #{decoder_bottleneck_forward.4} parent=5 // pred_region
      // Predicated region
      $region21: #{decoder_bottleneck_forward.4} parent=19 // pred_check
        %p147 = pneg %p44
      $region22: #{decoder_bottleneck_forward.4} parent=19 // pred_check_branch
        %149 = sbr.rel (%p147) target = $region24
      $region23: #{decoder_bottleneck_forward.4} parent=19 // pred_region
        %s150 = sadd.s32 %s17, %s18
        %s151 = smul.u32 128, %s150
        %p152 = scmp.lt.s32.totalorder %s151, 255
        %s153 = scalar_select %p152, %s151, 255
        %s154 = smul.addr %s153, 8
        %s155 = scalar_lea.vmem %s0, %s154
        %s156 = sadd.s32 %s17, %s18
        %s157 = smul.u32 128, %s156
      $region24: #{decoder_bottleneck_forward.4} parent=19 // pred_fallthru
        _
    $region20: #{decoder_bottleneck_forward.4} parent=5 // pred_fallthru
      _
    %p158 = scmp.le.s32.totalorder 1, %s10
    %p159 = scmp.lt.s32.totalorder %s10, 3
    %p160 = pnand %p158, %p159
    %p161 = pneg %p160
    // Predicated region
    $region25: #{decoder_bottleneck_forward.4} parent=5 // pred_check
      _
    $region26: #{decoder_bottleneck_forward.4} parent=5 // pred_check_branch
      %163 = sbr.rel (%p160) target = $region28
    $region27: #{decoder_bottleneck_forward.4} parent=5 // pred_region
      %s164 = ssub.s32 %s10, 1
      %s165 = sadd.s32 %s19, %s20
      %s166 = smul.u32 128, %s165
      %p167 = scmp.lt.s32.totalorder %s166, 255
      %s168 = scalar_select %p167, %s166, 255
      %s169 = smul.addr %s168, 8
      %s170 = scalar_lea.vmem %s0, %s169
      %p171 = pneg %p50
      %p172 = pneg %p47
      %p173 = pneg %p71
      %p174 = pneg %p68
      %p175 = pneg %p99
      %p176 = pneg %p96
      %s177 = sadd.s32 %s19, %s20
      %s178 = smul.u32 128, %s177
      %p179 = scmp.lt.s32.totalorder %s178, 255
      %s180 = scalar_select %p179, %s178, 255
      %s181 = smul.addr %s180, 4
      %s182 = scalar_lea.vmem %s2, %s181
      %p183 = pneg %p125
      %p184 = pneg %p122
      %p185 = scmp.lt.s32.totalorder %s19, 1
      %s186 = scalar_select %p185, %s19, 1
      %s187 = smul.addr %s186, 2
      %s188 = scalar_lea.vmem %s3, %s187
      %s189 = sadd.s32 %s19, %s20
      %s190 = smul.u32 128, %s189
      %p191 = scmp.lt.s32.totalorder %s190, 255
      %s192 = scalar_select %p191, %s190, 255
      %s193 = smul.addr %s192, 8
      %s194 = scalar_lea.vmem %s0, %s193
      %s195 = sadd.s32 %s19, %s20
      %s196 = smul.u32 128, %s195
      %s197 = sadd.s32 %s19, %s20
      %s198 = smul.u32 128, %s197
      %p199 = scmp.lt.s32.totalorder %s198, 255
      %s200 = scalar_select %p199, %s198, 255
      %s201 = smul.addr %s200, 4
      %s202 = scalar_lea.vmem %s2, %s201
      %s203 = sadd.s32 %s19, %s20
      %s204 = smul.u32 128, %s203
      %p205 = scmp.lt.s32.totalorder %s19, 1
      %s206 = scalar_select %p205, %s19, 1
      %s207 = smul.addr %s206, 2
      %s208 = scalar_lea.vmem %s3, %s207
      %v210 = vld [vmem:[%s194] sm:$0xff]
      %v211 = vld [vmem:[%s194 + $0x8] sm:$0xff]
      %v212 = vld [vmem:[%s194 + $0x10] sm:$0xff]
      %v213 = vld [vmem:[%s194 + $0x18] sm:$0xff]
      %v214 = vld [vmem:[%s194 + $0x20] sm:$0xff]
      %v215 = vld [vmem:[%s194 + $0x28] sm:$0xff]
      %v216 = vld [vmem:[%s194 + $0x30] sm:$0xff]
      %v217 = vld [vmem:[%s194 + $0x38] sm:$0xff]
      %v218 = vld [vmem:[%s194 + $0x40] sm:$0xff]
      %v219 = vld [vmem:[%s194 + $0x48] sm:$0xff]
      %v220 = vld [vmem:[%s194 + $0x50] sm:$0xff]
      %v221 = vld [vmem:[%s194 + $0x58] sm:$0xff]
      %v222 = vld [vmem:[%s194 + $0x60] sm:$0xff]
      %v223 = vld [vmem:[%s194 + $0x68] sm:$0xff]
      %v224 = vld [vmem:[%s194 + $0x70] sm:$0xff]
      %v225 = vld [vmem:[%s194 + $0x78] sm:$0xff]
      %v226 = vld [vmem:[%s194 + $0x80] sm:$0xff]
      %v227 = vld [vmem:[%s194 + $0x88] sm:$0xff]
      %v228 = vld [vmem:[%s194 + $0x90] sm:$0xff]
      %v229 = vld [vmem:[%s194 + $0x98] sm:$0xff]
      %v230 = vld [vmem:[%s194 + $0xa0] sm:$0xff]
      %v231 = vld [vmem:[%s194 + $0xa8] sm:$0xff]
      %v232 = vld [vmem:[%s194 + $0xb0] sm:$0xff]
      %v233 = vld [vmem:[%s194 + $0xb8] sm:$0xff]
      %v234 = vld [vmem:[%s194 + $0xc0] sm:$0xff]
      %v235 = vld [vmem:[%s194 + $0xc8] sm:$0xff]
      %v236 = vld [vmem:[%s194 + $0xd0] sm:$0xff]
      %v237 = vld [vmem:[%s194 + $0xd8] sm:$0xff]
      %v238 = vld [vmem:[%s194 + $0xe0] sm:$0xff]
      %v239 = vld [vmem:[%s194 + $0xe8] sm:$0xff]
      %v240 = vld [vmem:[%s194 + $0xf0] sm:$0xff]
      %v241 = vld [vmem:[%s194 + $0xf8] sm:$0xff]
      %v242 = vld [vmem:[%s194 + $0x100] sm:$0xff]
      %v243 = vld [vmem:[%s194 + $0x108] sm:$0xff]
      %v244 = vld [vmem:[%s194 + $0x110] sm:$0xff]
      %v245 = vld [vmem:[%s194 + $0x118] sm:$0xff]
      %v246 = vld [vmem:[%s194 + $0x120] sm:$0xff]
      %v247 = vld [vmem:[%s194 + $0x128] sm:$0xff]
      %v248 = vld [vmem:[%s194 + $0x130] sm:$0xff]
      %v249 = vld [vmem:[%s194 + $0x138] sm:$0xff]
      %v250 = vld [vmem:[%s194 + $0x140] sm:$0xff]
      %v251 = vld [vmem:[%s194 + $0x148] sm:$0xff]
      %v252 = vld [vmem:[%s194 + $0x150] sm:$0xff]
      %v253 = vld [vmem:[%s194 + $0x158] sm:$0xff]
      %v254 = vld [vmem:[%s194 + $0x160] sm:$0xff]
      %v255 = vld [vmem:[%s194 + $0x168] sm:$0xff]
      %v256 = vld [vmem:[%s194 + $0x170] sm:$0xff]
      %v257 = vld [vmem:[%s194 + $0x178] sm:$0xff]
      %v258 = vld [vmem:[%s194 + $0x180] sm:$0xff]
      %v259 = vld [vmem:[%s194 + $0x188] sm:$0xff]
      %v260 = vld [vmem:[%s194 + $0x190] sm:$0xff]
      %v261 = vld [vmem:[%s194 + $0x198] sm:$0xff]
      %v262 = vld [vmem:[%s194 + $0x1a0] sm:$0xff]
      %v263 = vld [vmem:[%s194 + $0x1a8] sm:$0xff]
      %v264 = vld [vmem:[%s194 + $0x1b0] sm:$0xff]
      %v265 = vld [vmem:[%s194 + $0x1b8] sm:$0xff]
      %v266 = vld [vmem:[%s194 + $0x1c0] sm:$0xff]
      %v267 = vld [vmem:[%s194 + $0x1c8] sm:$0xff]
      %v268 = vld [vmem:[%s194 + $0x1d0] sm:$0xff]
      %v269 = vld [vmem:[%s194 + $0x1d8] sm:$0xff]
      %v270 = vld [vmem:[%s194 + $0x1e0] sm:$0xff]
      %v271 = vld [vmem:[%s194 + $0x1e8] sm:$0xff]
      %v272 = vld [vmem:[%s194 + $0x1f0] sm:$0xff]
      %v273 = vld [vmem:[%s194 + $0x1f8] sm:$0xff]
      %v274 = vld [vmem:[%s194 + $0x200] sm:$0xff]
      %v275 = vld [vmem:[%s194 + $0x208] sm:$0xff]
      %v276 = vld [vmem:[%s194 + $0x210] sm:$0xff]
      %v277 = vld [vmem:[%s194 + $0x218] sm:$0xff]
      %v278 = vld [vmem:[%s194 + $0x220] sm:$0xff]
      %v279 = vld [vmem:[%s194 + $0x228] sm:$0xff]
      %v280 = vld [vmem:[%s194 + $0x230] sm:$0xff]
      %v281 = vld [vmem:[%s194 + $0x238] sm:$0xff]
      %v282 = vld [vmem:[%s194 + $0x240] sm:$0xff]
      %v283 = vld [vmem:[%s194 + $0x248] sm:$0xff]
      %v284 = vld [vmem:[%s194 + $0x250] sm:$0xff]
      %v285 = vld [vmem:[%s194 + $0x258] sm:$0xff]
      %v286 = vld [vmem:[%s194 + $0x260] sm:$0xff]
      %v287 = vld [vmem:[%s194 + $0x268] sm:$0xff]
      %v288 = vld [vmem:[%s194 + $0x270] sm:$0xff]
      %v289 = vld [vmem:[%s194 + $0x278] sm:$0xff]
      %v290 = vld [vmem:[%s194 + $0x280] sm:$0xff]
      %v291 = vld [vmem:[%s194 + $0x288] sm:$0xff]
      %v292 = vld [vmem:[%s194 + $0x290] sm:$0xff]
      %v293 = vld [vmem:[%s194 + $0x298] sm:$0xff]
      %v294 = vld [vmem:[%s194 + $0x2a0] sm:$0xff]
      %v295 = vld [vmem:[%s194 + $0x2a8] sm:$0xff]
      %v296 = vld [vmem:[%s194 + $0x2b0] sm:$0xff]
      %v297 = vld [vmem:[%s194 + $0x2b8] sm:$0xff]
      %v298 = vld [vmem:[%s194 + $0x2c0] sm:$0xff]
      %v299 = vld [vmem:[%s194 + $0x2c8] sm:$0xff]
      %v300 = vld [vmem:[%s194 + $0x2d0] sm:$0xff]
      %v301 = vld [vmem:[%s194 + $0x2d8] sm:$0xff]
      %v302 = vld [vmem:[%s194 + $0x2e0] sm:$0xff]
      %v303 = vld [vmem:[%s194 + $0x2e8] sm:$0xff]
      %v304 = vld [vmem:[%s194 + $0x2f0] sm:$0xff]
      %v305 = vld [vmem:[%s194 + $0x2f8] sm:$0xff]
      %v306 = vld [vmem:[%s194 + $0x300] sm:$0xff]
      %v307 = vld [vmem:[%s194 + $0x308] sm:$0xff]
      %v308 = vld [vmem:[%s194 + $0x310] sm:$0xff]
      %v309 = vld [vmem:[%s194 + $0x318] sm:$0xff]
      %v310 = vld [vmem:[%s194 + $0x320] sm:$0xff]
      %v311 = vld [vmem:[%s194 + $0x328] sm:$0xff]
      %v312 = vld [vmem:[%s194 + $0x330] sm:$0xff]
      %v313 = vld [vmem:[%s194 + $0x338] sm:$0xff]
      %v314 = vld [vmem:[%s194 + $0x340] sm:$0xff]
      %v315 = vld [vmem:[%s194 + $0x348] sm:$0xff]
      %v316 = vld [vmem:[%s194 + $0x350] sm:$0xff]
      %v317 = vld [vmem:[%s194 + $0x358] sm:$0xff]
      %v318 = vld [vmem:[%s194 + $0x360] sm:$0xff]
      %v319 = vld [vmem:[%s194 + $0x368] sm:$0xff]
      %v320 = vld [vmem:[%s194 + $0x370] sm:$0xff]
      %v321 = vld [vmem:[%s194 + $0x378] sm:$0xff]
      %v322 = vld [vmem:[%s194 + $0x380] sm:$0xff]
      %v323 = vld [vmem:[%s194 + $0x388] sm:$0xff]
      %v324 = vld [vmem:[%s194 + $0x390] sm:$0xff]
      %v325 = vld [vmem:[%s194 + $0x398] sm:$0xff]
      %v326 = vld [vmem:[%s194 + $0x3a0] sm:$0xff]
      %v327 = vld [vmem:[%s194 + $0x3a8] sm:$0xff]
      %v328 = vld [vmem:[%s194 + $0x3b0] sm:$0xff]
      %v329 = vld [vmem:[%s194 + $0x3b8] sm:$0xff]
      %v330 = vld [vmem:[%s194 + $0x3c0] sm:$0xff]
      %v331 = vld [vmem:[%s194 + $0x3c8] sm:$0xff]
      %v332 = vld [vmem:[%s194 + $0x3d0] sm:$0xff]
      %v333 = vld [vmem:[%s194 + $0x3d8] sm:$0xff]
      %v334 = vld [vmem:[%s194 + $0x3e0] sm:$0xff]
      %v335 = vld [vmem:[%s194 + $0x3e8] sm:$0xff]
      %v336 = vld [vmem:[%s194 + $0x3f0] sm:$0xff]
      %v337 = vld [vmem:[%s194 + $0x3f8] sm:$0xff]
      %v338 = vpack.c.bf16 %v211, %v210
      %v339 = vpack.c.bf16 %v213, %v212
      %v340 = vpack.c.bf16 %v215, %v214
      %v341 = vpack.c.bf16 %v217, %v216
      %v342 = vpack.c.bf16 %v219, %v218
      %v343 = vpack.c.bf16 %v221, %v220
      %v344 = vpack.c.bf16 %v223, %v222
      %v345 = vpack.c.bf16 %v225, %v224
      %v346 = vpack.c.bf16 %v227, %v226
      %v347 = vpack.c.bf16 %v229, %v228
      %v348 = vpack.c.bf16 %v231, %v230
      %v349 = vpack.c.bf16 %v233, %v232
      %v350 = vpack.c.bf16 %v235, %v234
      %v351 = vpack.c.bf16 %v237, %v236
      %v352 = vpack.c.bf16 %v239, %v238
      %v353 = vpack.c.bf16 %v241, %v240
      %v354 = vpack.c.bf16 %v243, %v242
      %v355 = vpack.c.bf16 %v245, %v244
      %v356 = vpack.c.bf16 %v247, %v246
      %v357 = vpack.c.bf16 %v249, %v248
      %v358 = vpack.c.bf16 %v251, %v250
      %v359 = vpack.c.bf16 %v253, %v252
      %v360 = vpack.c.bf16 %v255, %v254
      %v361 = vpack.c.bf16 %v257, %v256
      %v362 = vpack.c.bf16 %v259, %v258
      %v363 = vpack.c.bf16 %v261, %v260
      %v364 = vpack.c.bf16 %v263, %v262
      %v365 = vpack.c.bf16 %v265, %v264
      %v366 = vpack.c.bf16 %v267, %v266
      %v367 = vpack.c.bf16 %v269, %v268
      %v368 = vpack.c.bf16 %v271, %v270
      %v369 = vpack.c.bf16 %v273, %v272
      %v370 = vpack.c.bf16 %v275, %v274
      %v371 = vpack.c.bf16 %v277, %v276
      %v372 = vpack.c.bf16 %v279, %v278
      %v373 = vpack.c.bf16 %v281, %v280
      %v374 = vpack.c.bf16 %v283, %v282
      %v375 = vpack.c.bf16 %v285, %v284
      %v376 = vpack.c.bf16 %v287, %v286
      %v377 = vpack.c.bf16 %v289, %v288
      %v378 = vpack.c.bf16 %v291, %v290
      %v379 = vpack.c.bf16 %v293, %v292
      %v380 = vpack.c.bf16 %v295, %v294
      %v381 = vpack.c.bf16 %v297, %v296
      %v382 = vpack.c.bf16 %v299, %v298
      %v383 = vpack.c.bf16 %v301, %v300
      %v384 = vpack.c.bf16 %v303, %v302
      %v385 = vpack.c.bf16 %v305, %v304
      %v386 = vpack.c.bf16 %v307, %v306
      %v387 = vpack.c.bf16 %v309, %v308
      %v388 = vpack.c.bf16 %v311, %v310
      %v389 = vpack.c.bf16 %v313, %v312
      %v390 = vpack.c.bf16 %v315, %v314
      %v391 = vpack.c.bf16 %v317, %v316
      %v392 = vpack.c.bf16 %v319, %v318
      %v393 = vpack.c.bf16 %v321, %v320
      %v394 = vpack.c.bf16 %v323, %v322
      %v395 = vpack.c.bf16 %v325, %v324
      %v396 = vpack.c.bf16 %v327, %v326
      %v397 = vpack.c.bf16 %v329, %v328
      %v398 = vpack.c.bf16 %v331, %v330
      %v399 = vpack.c.bf16 %v333, %v332
      %v400 = vpack.c.bf16 %v335, %v334
      %v401 = vpack.c.bf16 %v337, %v336
      %v402 = vld [vmem:[%s1] sm:$0x3]
      %vm403 = vcmask 31744
      %v405 = vsel %vm403, %v338, 0
      %v408 = vsel %vm403, %v339, 0
      %v411 = vsel %vm403, %v340, 0
      %v414 = vsel %vm403, %v341, 0
      %v417 = vsel %vm403, %v342, 0
      %v420 = vsel %vm403, %v343, 0
      %v423 = vsel %vm403, %v344, 0
      %v426 = vsel %vm403, %v345, 0
      %v429 = vsel %vm403, %v346, 0
      %v432 = vsel %vm403, %v347, 0
      %v435 = vsel %vm403, %v348, 0
      %v438 = vsel %vm403, %v349, 0
      %v441 = vsel %vm403, %v350, 0
      %v444 = vsel %vm403, %v351, 0
      %v447 = vsel %vm403, %v352, 0
      %v450 = vsel %vm403, %v353, 0
      %v453 = vsel %vm403, %v354, 0
      %v456 = vsel %vm403, %v355, 0
      %v459 = vsel %vm403, %v356, 0
      %v462 = vsel %vm403, %v357, 0
      %v465 = vsel %vm403, %v358, 0
      %v468 = vsel %vm403, %v359, 0
      %v471 = vsel %vm403, %v360, 0
      %v474 = vsel %vm403, %v361, 0
      %v477 = vsel %vm403, %v362, 0
      %v480 = vsel %vm403, %v363, 0
      %v483 = vsel %vm403, %v364, 0
      %v486 = vsel %vm403, %v365, 0
      %v489 = vsel %vm403, %v366, 0
      %v492 = vsel %vm403, %v367, 0
      %v495 = vsel %vm403, %v368, 0
      %v498 = vsel %vm403, %v369, 0
      %v501 = vsel %vm403, %v370, 0
      %v504 = vsel %vm403, %v371, 0
      %v507 = vsel %vm403, %v372, 0
      %v510 = vsel %vm403, %v373, 0
      %v513 = vsel %vm403, %v374, 0
      %v516 = vsel %vm403, %v375, 0
      %v519 = vsel %vm403, %v376, 0
      %v522 = vsel %vm403, %v377, 0
      %v525 = vsel %vm403, %v378, 0
      %v528 = vsel %vm403, %v379, 0
      %v531 = vsel %vm403, %v380, 0
      %v534 = vsel %vm403, %v381, 0
      %v537 = vsel %vm403, %v382, 0
      %v540 = vsel %vm403, %v383, 0
      %v543 = vsel %vm403, %v384, 0
      %v546 = vsel %vm403, %v385, 0
      %v549 = vsel %vm403, %v386, 0
      %v552 = vsel %vm403, %v387, 0
      %v555 = vsel %vm403, %v388, 0
      %v558 = vsel %vm403, %v389, 0
      %v561 = vsel %vm403, %v390, 0
      %v564 = vsel %vm403, %v391, 0
      %v567 = vsel %vm403, %v392, 0
      %v570 = vsel %vm403, %v393, 0
      %v573 = vsel %vm403, %v394, 0
      %v576 = vsel %vm403, %v395, 0
      %v579 = vsel %vm403, %v396, 0
      %v582 = vsel %vm403, %v397, 0
      %v585 = vsel %vm403, %v398, 0
      %v588 = vsel %vm403, %v399, 0
      %v591 = vsel %vm403, %v400, 0
      %v594 = vsel %vm403, %v401, 0
      %vm596 = vcmask 1041408
      %v598 = vsel %vm596, %v402, 0
      %600 = vmatpush.bf16.msra.mxu0 0
      %601 = vmatpush.bf16.msra.mxu0 0
      %602 = vmatpush.bf16.msra.mxu0 0
      %603 = vmatpush.bf16.msra.mxu0 0
      %604 = vmatpush.bf16.msra.mxu0 0
      %605 = vmatpush.bf16.msra.mxu0 0
      %606 = vmatpush.bf16.msra.mxu0 0
      %607 = vmatpush.bf16.msra.mxu0 %v598
      %608 = vmatmul.bf16.gmra.mxu0 %v405
      %v609 = vpop.f32.mrf.mxu0
      %v610 = vadd.f32 0.0, %v609
      %v611 = vpop.f32.mrf.mxu0
      %v612 = vadd.f32 0.0, %v611
      %613 = vmatmul.bf16.gmra.mxu0 %v408
      %v614 = vpop.f32.mrf.mxu0
      %v615 = vadd.f32 0.0, %v614
      %v616 = vpop.f32.mrf.mxu0
      %v617 = vadd.f32 0.0, %v616
      %618 = vmatmul.bf16.gmra.mxu0 %v411
      %v619 = vpop.f32.mrf.mxu0
      %v620 = vadd.f32 0.0, %v619
      %v621 = vpop.f32.mrf.mxu0
      %v622 = vadd.f32 0.0, %v621
      %623 = vmatmul.bf16.gmra.mxu0 %v414
      %v624 = vpop.f32.mrf.mxu0
      %v625 = vadd.f32 0.0, %v624
      %v626 = vpop.f32.mrf.mxu0
      %v627 = vadd.f32 0.0, %v626
      %628 = vmatmul.bf16.gmra.mxu0 %v417
      %v629 = vpop.f32.mrf.mxu0
      %v630 = vadd.f32 0.0, %v629
      %v631 = vpop.f32.mrf.mxu0
      %v632 = vadd.f32 0.0, %v631
      %633 = vmatmul.bf16.gmra.mxu0 %v420
      %v634 = vpop.f32.mrf.mxu0
      %v635 = vadd.f32 0.0, %v634
      %v636 = vpop.f32.mrf.mxu0
      %v637 = vadd.f32 0.0, %v636
      %638 = vmatmul.bf16.gmra.mxu0 %v423
      %v639 = vpop.f32.mrf.mxu0
      %v640 = vadd.f32 0.0, %v639
      %v641 = vpop.f32.mrf.mxu0
      %v642 = vadd.f32 0.0, %v641
      %643 = vmatmul.bf16.gmra.mxu0 %v426
      %v644 = vpop.f32.mrf.mxu0
      %v645 = vadd.f32 0.0, %v644
      %v646 = vpop.f32.mrf.mxu0
      %v647 = vadd.f32 0.0, %v646
      %648 = vmatmul.bf16.gmra.mxu0 %v429
      %v649 = vpop.f32.mrf.mxu0
      %v650 = vadd.f32 0.0, %v649
      %v651 = vpop.f32.mrf.mxu0
      %v652 = vadd.f32 0.0, %v651
      %653 = vmatmul.bf16.gmra.mxu0 %v432
      %v654 = vpop.f32.mrf.mxu0
      %v655 = vadd.f32 0.0, %v654
      %v656 = vpop.f32.mrf.mxu0
      %v657 = vadd.f32 0.0, %v656
      %658 = vmatmul.bf16.gmra.mxu0 %v435
      %v659 = vpop.f32.mrf.mxu0
      %v660 = vadd.f32 0.0, %v659
      %v661 = vpop.f32.mrf.mxu0
      %v662 = vadd.f32 0.0, %v661
      %663 = vmatmul.bf16.gmra.mxu0 %v438
      %v664 = vpop.f32.mrf.mxu0
      %v665 = vadd.f32 0.0, %v664
      %v666 = vpop.f32.mrf.mxu0
      %v667 = vadd.f32 0.0, %v666
      %668 = vmatmul.bf16.gmra.mxu0 %v441
      %v669 = vpop.f32.mrf.mxu0
      %v670 = vadd.f32 0.0, %v669
      %v671 = vpop.f32.mrf.mxu0
      %v672 = vadd.f32 0.0, %v671
      %673 = vmatmul.bf16.gmra.mxu0 %v444
      %v674 = vpop.f32.mrf.mxu0
      %v675 = vadd.f32 0.0, %v674
      %v676 = vpop.f32.mrf.mxu0
      %v677 = vadd.f32 0.0, %v676
      %678 = vmatmul.bf16.gmra.mxu0 %v447
      %v679 = vpop.f32.mrf.mxu0
      %v680 = vadd.f32 0.0, %v679
      %v681 = vpop.f32.mrf.mxu0
      %v682 = vadd.f32 0.0, %v681
      %683 = vmatmul.bf16.gmra.mxu0 %v450
      %v684 = vpop.f32.mrf.mxu0
      %v685 = vadd.f32 0.0, %v684
      %v686 = vpop.f32.mrf.mxu0
      %v687 = vadd.f32 0.0, %v686
      %688 = vmatmul.bf16.gmra.mxu0 %v453
      %v689 = vpop.f32.mrf.mxu0
      %v690 = vadd.f32 0.0, %v689
      %v691 = vpop.f32.mrf.mxu0
      %v692 = vadd.f32 0.0, %v691
      %693 = vmatmul.bf16.gmra.mxu0 %v456
      %v694 = vpop.f32.mrf.mxu0
      %v695 = vadd.f32 0.0, %v694
      %v696 = vpop.f32.mrf.mxu0
      %v697 = vadd.f32 0.0, %v696
      %698 = vmatmul.bf16.gmra.mxu0 %v459
      %v699 = vpop.f32.mrf.mxu0
      %v700 = vadd.f32 0.0, %v699
      %v701 = vpop.f32.mrf.mxu0
      %v702 = vadd.f32 0.0, %v701
      %703 = vmatmul.bf16.gmra.mxu0 %v462
      %v704 = vpop.f32.mrf.mxu0
      %v705 = vadd.f32 0.0, %v704
      %v706 = vpop.f32.mrf.mxu0
      %v707 = vadd.f32 0.0, %v706
      %708 = vmatmul.bf16.gmra.mxu0 %v465
      %v709 = vpop.f32.mrf.mxu0
      %v710 = vadd.f32 0.0, %v709
      %v711 = vpop.f32.mrf.mxu0
      %v712 = vadd.f32 0.0, %v711
      %713 = vmatmul.bf16.gmra.mxu0 %v468
      %v714 = vpop.f32.mrf.mxu0
      %v715 = vadd.f32 0.0, %v714
      %v716 = vpop.f32.mrf.mxu0
      %v717 = vadd.f32 0.0, %v716
      %718 = vmatmul.bf16.gmra.mxu0 %v471
      %v719 = vpop.f32.mrf.mxu0
      %v720 = vadd.f32 0.0, %v719
      %v721 = vpop.f32.mrf.mxu0
      %v722 = vadd.f32 0.0, %v721
      %723 = vmatmul.bf16.gmra.mxu0 %v474
      %v724 = vpop.f32.mrf.mxu0
      %v725 = vadd.f32 0.0, %v724
      %v726 = vpop.f32.mrf.mxu0
      %v727 = vadd.f32 0.0, %v726
      %728 = vmatmul.bf16.gmra.mxu0 %v477
      %v729 = vpop.f32.mrf.mxu0
      %v730 = vadd.f32 0.0, %v729
      %v731 = vpop.f32.mrf.mxu0
      %v732 = vadd.f32 0.0, %v731
      %733 = vmatmul.bf16.gmra.mxu0 %v480
      %v734 = vpop.f32.mrf.mxu0
      %v735 = vadd.f32 0.0, %v734
      %v736 = vpop.f32.mrf.mxu0
      %v737 = vadd.f32 0.0, %v736
      %738 = vmatmul.bf16.gmra.mxu0 %v483
      %v739 = vpop.f32.mrf.mxu0
      %v740 = vadd.f32 0.0, %v739
      %v741 = vpop.f32.mrf.mxu0
      %v742 = vadd.f32 0.0, %v741
      %743 = vmatmul.bf16.gmra.mxu0 %v486
      %v744 = vpop.f32.mrf.mxu0
      %v745 = vadd.f32 0.0, %v744
      %v746 = vpop.f32.mrf.mxu0
      %v747 = vadd.f32 0.0, %v746
      %748 = vmatmul.bf16.gmra.mxu0 %v489
      %v749 = vpop.f32.mrf.mxu0
      %v750 = vadd.f32 0.0, %v749
      %v751 = vpop.f32.mrf.mxu0
      %v752 = vadd.f32 0.0, %v751
      %753 = vmatmul.bf16.gmra.mxu0 %v492
      %v754 = vpop.f32.mrf.mxu0
      %v755 = vadd.f32 0.0, %v754
      %v756 = vpop.f32.mrf.mxu0
      %v757 = vadd.f32 0.0, %v756
      %758 = vmatmul.bf16.gmra.mxu0 %v495
      %v759 = vpop.f32.mrf.mxu0
      %v760 = vadd.f32 0.0, %v759
      %v761 = vpop.f32.mrf.mxu0
      %v762 = vadd.f32 0.0, %v761
      %763 = vmatmul.bf16.gmra.mxu0 %v498
      %v764 = vpop.f32.mrf.mxu0
      %v765 = vadd.f32 0.0, %v764
      %v766 = vpop.f32.mrf.mxu0
      %v767 = vadd.f32 0.0, %v766
      %768 = vmatmul.bf16.gmra.mxu0 %v501
      %v769 = vpop.f32.mrf.mxu0
      %v770 = vadd.f32 0.0, %v769
      %v771 = vpop.f32.mrf.mxu0
      %v772 = vadd.f32 0.0, %v771
      %773 = vmatmul.bf16.gmra.mxu0 %v504
      %v774 = vpop.f32.mrf.mxu0
      %v775 = vadd.f32 0.0, %v774
      %v776 = vpop.f32.mrf.mxu0
      %v777 = vadd.f32 0.0, %v776
      %778 = vmatmul.bf16.gmra.mxu0 %v507
      %v779 = vpop.f32.mrf.mxu0
      %v780 = vadd.f32 0.0, %v779
      %v781 = vpop.f32.mrf.mxu0
      %v782 = vadd.f32 0.0, %v781
      %783 = vmatmul.bf16.gmra.mxu0 %v510
      %v784 = vpop.f32.mrf.mxu0
      %v785 = vadd.f32 0.0, %v784
      %v786 = vpop.f32.mrf.mxu0
      %v787 = vadd.f32 0.0, %v786
      %788 = vmatmul.bf16.gmra.mxu0 %v513
      %v789 = vpop.f32.mrf.mxu0
      %v790 = vadd.f32 0.0, %v789
      %v791 = vpop.f32.mrf.mxu0
      %v792 = vadd.f32 0.0, %v791
      %793 = vmatmul.bf16.gmra.mxu0 %v516
      %v794 = vpop.f32.mrf.mxu0
      %v795 = vadd.f32 0.0, %v794
      %v796 = vpop.f32.mrf.mxu0
      %v797 = vadd.f32 0.0, %v796
      %798 = vmatmul.bf16.gmra.mxu0 %v519
      %v799 = vpop.f32.mrf.mxu0
      %v800 = vadd.f32 0.0, %v799
      %v801 = vpop.f32.mrf.mxu0
      %v802 = vadd.f32 0.0, %v801
      %803 = vmatmul.bf16.gmra.mxu0 %v522
      %v804 = vpop.f32.mrf.mxu0
      %v805 = vadd.f32 0.0, %v804
      %v806 = vpop.f32.mrf.mxu0
      %v807 = vadd.f32 0.0, %v806
      %808 = vmatmul.bf16.gmra.mxu0 %v525
      %v809 = vpop.f32.mrf.mxu0
      %v810 = vadd.f32 0.0, %v809
      %v811 = vpop.f32.mrf.mxu0
      %v812 = vadd.f32 0.0, %v811
      %813 = vmatmul.bf16.gmra.mxu0 %v528
      %v814 = vpop.f32.mrf.mxu0
      %v815 = vadd.f32 0.0, %v814
      %v816 = vpop.f32.mrf.mxu0
      %v817 = vadd.f32 0.0, %v816
      %818 = vmatmul.bf16.gmra.mxu0 %v531
      %v819 = vpop.f32.mrf.mxu0
      %v820 = vadd.f32 0.0, %v819
      %v821 = vpop.f32.mrf.mxu0
      %v822 = vadd.f32 0.0, %v821
      %823 = vmatmul.bf16.gmra.mxu0 %v534
      %v824 = vpop.f32.mrf.mxu0
      %v825 = vadd.f32 0.0, %v824
      %v826 = vpop.f32.mrf.mxu0
      %v827 = vadd.f32 0.0, %v826
      %828 = vmatmul.bf16.gmra.mxu0 %v537
      %v829 = vpop.f32.mrf.mxu0
      %v830 = vadd.f32 0.0, %v829
      %v831 = vpop.f32.mrf.mxu0
      %v832 = vadd.f32 0.0, %v831
      %833 = vmatmul.bf16.gmra.mxu0 %v540
      %v834 = vpop.f32.mrf.mxu0
      %v835 = vadd.f32 0.0, %v834
      %v836 = vpop.f32.mrf.mxu0
      %v837 = vadd.f32 0.0, %v836
      %838 = vmatmul.bf16.gmra.mxu0 %v543
      %v839 = vpop.f32.mrf.mxu0
      %v840 = vadd.f32 0.0, %v839
      %v841 = vpop.f32.mrf.mxu0
      %v842 = vadd.f32 0.0, %v841
      %843 = vmatmul.bf16.gmra.mxu0 %v546
      %v844 = vpop.f32.mrf.mxu0
      %v845 = vadd.f32 0.0, %v844
      %v846 = vpop.f32.mrf.mxu0
      %v847 = vadd.f32 0.0, %v846
      %848 = vmatmul.bf16.gmra.mxu0 %v549
      %v849 = vpop.f32.mrf.mxu0
      %v850 = vadd.f32 0.0, %v849
      %v851 = vpop.f32.mrf.mxu0
      %v852 = vadd.f32 0.0, %v851
      %853 = vmatmul.bf16.gmra.mxu0 %v552
      %v854 = vpop.f32.mrf.mxu0
      %v855 = vadd.f32 0.0, %v854
      %v856 = vpop.f32.mrf.mxu0
      %v857 = vadd.f32 0.0, %v856
      %858 = vmatmul.bf16.gmra.mxu0 %v555
      %v859 = vpop.f32.mrf.mxu0
      %v860 = vadd.f32 0.0, %v859
      %v861 = vpop.f32.mrf.mxu0
      %v862 = vadd.f32 0.0, %v861
      %863 = vmatmul.bf16.gmra.mxu0 %v558
      %v864 = vpop.f32.mrf.mxu0
      %v865 = vadd.f32 0.0, %v864
      %v866 = vpop.f32.mrf.mxu0
      %v867 = vadd.f32 0.0, %v866
      %868 = vmatmul.bf16.gmra.mxu0 %v561
      %v869 = vpop.f32.mrf.mxu0
      %v870 = vadd.f32 0.0, %v869
      %v871 = vpop.f32.mrf.mxu0
      %v872 = vadd.f32 0.0, %v871
      %873 = vmatmul.bf16.gmra.mxu0 %v564
      %v874 = vpop.f32.mrf.mxu0
      %v875 = vadd.f32 0.0, %v874
      %v876 = vpop.f32.mrf.mxu0
      %v877 = vadd.f32 0.0, %v876
      %878 = vmatmul.bf16.gmra.mxu0 %v567
      %v879 = vpop.f32.mrf.mxu0
      %v880 = vadd.f32 0.0, %v879
      %v881 = vpop.f32.mrf.mxu0
      %v882 = vadd.f32 0.0, %v881
      %883 = vmatmul.bf16.gmra.mxu0 %v570
      %v884 = vpop.f32.mrf.mxu0
      %v885 = vadd.f32 0.0, %v884
      %v886 = vpop.f32.mrf.mxu0
      %v887 = vadd.f32 0.0, %v886
      %888 = vmatmul.bf16.gmra.mxu0 %v573
      %v889 = vpop.f32.mrf.mxu0
      %v890 = vadd.f32 0.0, %v889
      %v891 = vpop.f32.mrf.mxu0
      %v892 = vadd.f32 0.0, %v891
      %893 = vmatmul.bf16.gmra.mxu0 %v576
      %v894 = vpop.f32.mrf.mxu0
      %v895 = vadd.f32 0.0, %v894
      %v896 = vpop.f32.mrf.mxu0
      %v897 = vadd.f32 0.0, %v896
      %898 = vmatmul.bf16.gmra.mxu0 %v579
      %v899 = vpop.f32.mrf.mxu0
      %v900 = vadd.f32 0.0, %v899
      %v901 = vpop.f32.mrf.mxu0
      %v902 = vadd.f32 0.0, %v901
      %903 = vmatmul.bf16.gmra.mxu0 %v582
      %v904 = vpop.f32.mrf.mxu0
      %v905 = vadd.f32 0.0, %v904
      %v906 = vpop.f32.mrf.mxu0
      %v907 = vadd.f32 0.0, %v906
      %908 = vmatmul.bf16.gmra.mxu0 %v585
      %v909 = vpop.f32.mrf.mxu0
      %v910 = vadd.f32 0.0, %v909
      %v911 = vpop.f32.mrf.mxu0
      %v912 = vadd.f32 0.0, %v911
      %913 = vmatmul.bf16.gmra.mxu0 %v588
      %v914 = vpop.f32.mrf.mxu0
      %v915 = vadd.f32 0.0, %v914
      %v916 = vpop.f32.mrf.mxu0
      %v917 = vadd.f32 0.0, %v916
      %918 = vmatmul.bf16.gmra.mxu0 %v591
      %v919 = vpop.f32.mrf.mxu0
      %v920 = vadd.f32 0.0, %v919
      %v921 = vpop.f32.mrf.mxu0
      %v922 = vadd.f32 0.0, %v921
      %923 = vmatmul.bf16.gmra.mxu0 %v594
      %v924 = vpop.f32.mrf.mxu0
      %v925 = vadd.f32 0.0, %v924
      %v926 = vpop.f32.mrf.mxu0
      %v927 = vadd.f32 0.0, %v926
      %928 = vdwg.mxu0
      %v929 = vpack.c.bf16 %v610, %v610
      %v930 = vpack.c.bf16 %v612, %v612
      %v931 = vpack.c.bf16 %v615, %v615
      %v932 = vpack.c.bf16 %v617, %v617
      %v933 = vpack.c.bf16 %v620, %v620
      %v934 = vpack.c.bf16 %v622, %v622
      %v935 = vpack.c.bf16 %v625, %v625
      %v936 = vpack.c.bf16 %v627, %v627
      %v937 = vpack.c.bf16 %v630, %v630
      %v938 = vpack.c.bf16 %v632, %v632
      %v939 = vpack.c.bf16 %v635, %v635
      %v940 = vpack.c.bf16 %v637, %v637
      %v941 = vpack.c.bf16 %v640, %v640
      %v942 = vpack.c.bf16 %v642, %v642
      %v943 = vpack.c.bf16 %v645, %v645
      %v944 = vpack.c.bf16 %v647, %v647
      %v945 = vpack.c.bf16 %v650, %v650
      %v946 = vpack.c.bf16 %v652, %v652
      %v947 = vpack.c.bf16 %v655, %v655
      %v948 = vpack.c.bf16 %v657, %v657
      %v949 = vpack.c.bf16 %v660, %v660
      %v950 = vpack.c.bf16 %v662, %v662
      %v951 = vpack.c.bf16 %v665, %v665
      %v952 = vpack.c.bf16 %v667, %v667
      %v953 = vpack.c.bf16 %v670, %v670
      %v954 = vpack.c.bf16 %v672, %v672
      %v955 = vpack.c.bf16 %v675, %v675
      %v956 = vpack.c.bf16 %v677, %v677
      %v957 = vpack.c.bf16 %v680, %v680
      %v958 = vpack.c.bf16 %v682, %v682
      %v959 = vpack.c.bf16 %v685, %v685
      %v960 = vpack.c.bf16 %v687, %v687
      %v961 = vpack.c.bf16 %v690, %v690
      %v962 = vpack.c.bf16 %v692, %v692
      %v963 = vpack.c.bf16 %v695, %v695
      %v964 = vpack.c.bf16 %v697, %v697
      %v965 = vpack.c.bf16 %v700, %v700
      %v966 = vpack.c.bf16 %v702, %v702
      %v967 = vpack.c.bf16 %v705, %v705
      %v968 = vpack.c.bf16 %v707, %v707
      %v969 = vpack.c.bf16 %v710, %v710
      %v970 = vpack.c.bf16 %v712, %v712
      %v971 = vpack.c.bf16 %v715, %v715
      %v972 = vpack.c.bf16 %v717, %v717
      %v973 = vpack.c.bf16 %v720, %v720
      %v974 = vpack.c.bf16 %v722, %v722
      %v975 = vpack.c.bf16 %v725, %v725
      %v976 = vpack.c.bf16 %v727, %v727
      %v977 = vpack.c.bf16 %v730, %v730
      %v978 = vpack.c.bf16 %v732, %v732
      %v979 = vpack.c.bf16 %v735, %v735
      %v980 = vpack.c.bf16 %v737, %v737
      %v981 = vpack.c.bf16 %v740, %v740
      %v982 = vpack.c.bf16 %v742, %v742
      %v983 = vpack.c.bf16 %v745, %v745
      %v984 = vpack.c.bf16 %v747, %v747
      %v985 = vpack.c.bf16 %v750, %v750
      %v986 = vpack.c.bf16 %v752, %v752
      %v987 = vpack.c.bf16 %v755, %v755
      %v988 = vpack.c.bf16 %v757, %v757
      %v989 = vpack.c.bf16 %v760, %v760
      %v990 = vpack.c.bf16 %v762, %v762
      %v991 = vpack.c.bf16 %v765, %v765
      %v992 = vpack.c.bf16 %v767, %v767
      %v993 = vpack.c.bf16 %v770, %v770
      %v994 = vpack.c.bf16 %v772, %v772
      %v995 = vpack.c.bf16 %v775, %v775
      %v996 = vpack.c.bf16 %v777, %v777
      %v997 = vpack.c.bf16 %v780, %v780
      %v998 = vpack.c.bf16 %v782, %v782
      %v999 = vpack.c.bf16 %v785, %v785
      %v1000 = vpack.c.bf16 %v787, %v787
      %v1001 = vpack.c.bf16 %v790, %v790
      %v1002 = vpack.c.bf16 %v792, %v792
      %v1003 = vpack.c.bf16 %v795, %v795
      %v1004 = vpack.c.bf16 %v797, %v797
      %v1005 = vpack.c.bf16 %v800, %v800
      %v1006 = vpack.c.bf16 %v802, %v802
      %v1007 = vpack.c.bf16 %v805, %v805
      %v1008 = vpack.c.bf16 %v807, %v807
      %v1009 = vpack.c.bf16 %v810, %v810
      %v1010 = vpack.c.bf16 %v812, %v812
      %v1011 = vpack.c.bf16 %v815, %v815
      %v1012 = vpack.c.bf16 %v817, %v817
      %v1013 = vpack.c.bf16 %v820, %v820
      %v1014 = vpack.c.bf16 %v822, %v822
      %v1015 = vpack.c.bf16 %v825, %v825
      %v1016 = vpack.c.bf16 %v827, %v827
      %v1017 = vpack.c.bf16 %v830, %v830
      %v1018 = vpack.c.bf16 %v832, %v832
      %v1019 = vpack.c.bf16 %v835, %v835
      %v1020 = vpack.c.bf16 %v837, %v837
      %v1021 = vpack.c.bf16 %v840, %v840
      %v1022 = vpack.c.bf16 %v842, %v842
      %v1023 = vpack.c.bf16 %v845, %v845
      %v1024 = vpack.c.bf16 %v847, %v847
      %v1025 = vpack.c.bf16 %v850, %v850
      %v1026 = vpack.c.bf16 %v852, %v852
      %v1027 = vpack.c.bf16 %v855, %v855
      %v1028 = vpack.c.bf16 %v857, %v857
      %v1029 = vpack.c.bf16 %v860, %v860
      %v1030 = vpack.c.bf16 %v862, %v862
      %v1031 = vpack.c.bf16 %v865, %v865
      %v1032 = vpack.c.bf16 %v867, %v867
      %v1033 = vpack.c.bf16 %v870, %v870
      %v1034 = vpack.c.bf16 %v872, %v872
      %v1035 = vpack.c.bf16 %v875, %v875
      %v1036 = vpack.c.bf16 %v877, %v877
      %v1037 = vpack.c.bf16 %v880, %v880
      %v1038 = vpack.c.bf16 %v882, %v882
      %v1039 = vpack.c.bf16 %v885, %v885
      %v1040 = vpack.c.bf16 %v887, %v887
      %v1041 = vpack.c.bf16 %v890, %v890
      %v1042 = vpack.c.bf16 %v892, %v892
      %v1043 = vpack.c.bf16 %v895, %v895
      %v1044 = vpack.c.bf16 %v897, %v897
      %v1045 = vpack.c.bf16 %v900, %v900
      %v1046 = vpack.c.bf16 %v902, %v902
      %v1047 = vpack.c.bf16 %v905, %v905
      %v1048 = vpack.c.bf16 %v907, %v907
      %v1049 = vpack.c.bf16 %v910, %v910
      %v1050 = vpack.c.bf16 %v912, %v912
      %v1051 = vpack.c.bf16 %v915, %v915
      %v1052 = vpack.c.bf16 %v917, %v917
      %v1053 = vpack.c.bf16 %v920, %v920
      %v1054 = vpack.c.bf16 %v922, %v922
      %v1055 = vpack.c.bf16 %v925, %v925
      %v1056 = vpack.c.bf16 %v927, %v927
      %vm1057 = vcmask 27648
      %1058 = vst.msk [vmem:[%s202] sm:$0xf] %vm1057, %v929
      %1059 = vst.msk [vmem:[%s202 + $0x4] sm:$0xf] %vm1057, %v930
      %1060 = vst.msk [vmem:[%s202 + $0x8] sm:$0xf] %vm1057, %v931
      %1061 = vst.msk [vmem:[%s202 + $0xc] sm:$0xf] %vm1057, %v932
      %1062 = vst.msk [vmem:[%s202 + $0x10] sm:$0xf] %vm1057, %v933
      %1063 = vst.msk [vmem:[%s202 + $0x14] sm:$0xf] %vm1057, %v934
      %1064 = vst.msk [vmem:[%s202 + $0x18] sm:$0xf] %vm1057, %v935
      %1065 = vst.msk [vmem:[%s202 + $0x1c] sm:$0xf] %vm1057, %v936
      %1066 = vst.msk [vmem:[%s202 + $0x20] sm:$0xf] %vm1057, %v937
      %1067 = vst.msk [vmem:[%s202 + $0x24] sm:$0xf] %vm1057, %v938
      %1068 = vst.msk [vmem:[%s202 + $0x28] sm:$0xf] %vm1057, %v939
      %1069 = vst.msk [vmem:[%s202 + $0x2c] sm:$0xf] %vm1057, %v940
      %1070 = vst.msk [vmem:[%s202 + $0x30] sm:$0xf] %vm1057, %v941
      %1071 = vst.msk [vmem:[%s202 + $0x34] sm:$0xf] %vm1057, %v942
      %1072 = vst.msk [vmem:[%s202 + $0x38] sm:$0xf] %vm1057, %v943
      %1073 = vst.msk [vmem:[%s202 + $0x3c] sm:$0xf] %vm1057, %v944
      %1074 = vst.msk [vmem:[%s202 + $0x40] sm:$0xf] %vm1057, %v945
      %1075 = vst.msk [vmem:[%s202 + $0x44] sm:$0xf] %vm1057, %v946
      %1076 = vst.msk [vmem:[%s202 + $0x48] sm:$0xf] %vm1057, %v947
      %1077 = vst.msk [vmem:[%s202 + $0x4c] sm:$0xf] %vm1057, %v948
      %1078 = vst.msk [vmem:[%s202 + $0x50] sm:$0xf] %vm1057, %v949
      %1079 = vst.msk [vmem:[%s202 + $0x54] sm:$0xf] %vm1057, %v950
      %1080 = vst.msk [vmem:[%s202 + $0x58] sm:$0xf] %vm1057, %v951
      %1081 = vst.msk [vmem:[%s202 + $0x5c] sm:$0xf] %vm1057, %v952
      %1082 = vst.msk [vmem:[%s202 + $0x60] sm:$0xf] %vm1057, %v953
      %1083 = vst.msk [vmem:[%s202 + $0x64] sm:$0xf] %vm1057, %v954
      %1084 = vst.msk [vmem:[%s202 + $0x68] sm:$0xf] %vm1057, %v955
      %1085 = vst.msk [vmem:[%s202 + $0x6c] sm:$0xf] %vm1057, %v956
      %1086 = vst.msk [vmem:[%s202 + $0x70] sm:$0xf] %vm1057, %v957
      %1087 = vst.msk [vmem:[%s202 + $0x74] sm:$0xf] %vm1057, %v958
      %1088 = vst.msk [vmem:[%s202 + $0x78] sm:$0xf] %vm1057, %v959
      %1089 = vst.msk [vmem:[%s202 + $0x7c] sm:$0xf] %vm1057, %v960
      %1090 = vst.msk [vmem:[%s202 + $0x80] sm:$0xf] %vm1057, %v961
      %1091 = vst.msk [vmem:[%s202 + $0x84] sm:$0xf] %vm1057, %v962
      %1092 = vst.msk [vmem:[%s202 + $0x88] sm:$0xf] %vm1057, %v963
      %1093 = vst.msk [vmem:[%s202 + $0x8c] sm:$0xf] %vm1057, %v964
      %1094 = vst.msk [vmem:[%s202 + $0x90] sm:$0xf] %vm1057, %v965
      %1095 = vst.msk [vmem:[%s202 + $0x94] sm:$0xf] %vm1057, %v966
      %1096 = vst.msk [vmem:[%s202 + $0x98] sm:$0xf] %vm1057, %v967
      %1097 = vst.msk [vmem:[%s202 + $0x9c] sm:$0xf] %vm1057, %v968
      %1098 = vst.msk [vmem:[%s202 + $0xa0] sm:$0xf] %vm1057, %v969
      %1099 = vst.msk [vmem:[%s202 + $0xa4] sm:$0xf] %vm1057, %v970
      %1100 = vst.msk [vmem:[%s202 + $0xa8] sm:$0xf] %vm1057, %v971
      %1101 = vst.msk [vmem:[%s202 + $0xac] sm:$0xf] %vm1057, %v972
      %1102 = vst.msk [vmem:[%s202 + $0xb0] sm:$0xf] %vm1057, %v973
      %1103 = vst.msk [vmem:[%s202 + $0xb4] sm:$0xf] %vm1057, %v974
      %1104 = vst.msk [vmem:[%s202 + $0xb8] sm:$0xf] %vm1057, %v975
      %1105 = vst.msk [vmem:[%s202 + $0xbc] sm:$0xf] %vm1057, %v976
      %1106 = vst.msk [vmem:[%s202 + $0xc0] sm:$0xf] %vm1057, %v977
      %1107 = vst.msk [vmem:[%s202 + $0xc4] sm:$0xf] %vm1057, %v978
      %1108 = vst.msk [vmem:[%s202 + $0xc8] sm:$0xf] %vm1057, %v979
      %1109 = vst.msk [vmem:[%s202 + $0xcc] sm:$0xf] %vm1057, %v980
      %1110 = vst.msk [vmem:[%s202 + $0xd0] sm:$0xf] %vm1057, %v981
      %1111 = vst.msk [vmem:[%s202 + $0xd4] sm:$0xf] %vm1057, %v982
      %1112 = vst.msk [vmem:[%s202 + $0xd8] sm:$0xf] %vm1057, %v983
      %1113 = vst.msk [vmem:[%s202 + $0xdc] sm:$0xf] %vm1057, %v984
      %1114 = vst.msk [vmem:[%s202 + $0xe0] sm:$0xf] %vm1057, %v985
      %1115 = vst.msk [vmem:[%s202 + $0xe4] sm:$0xf] %vm1057, %v986
      %1116 = vst.msk [vmem:[%s202 + $0xe8] sm:$0xf] %vm1057, %v987
      %1117 = vst.msk [vmem:[%s202 + $0xec] sm:$0xf] %vm1057, %v988
      %1118 = vst.msk [vmem:[%s202 + $0xf0] sm:$0xf] %vm1057, %v989
      %1119 = vst.msk [vmem:[%s202 + $0xf4] sm:$0xf] %vm1057, %v990
      %1120 = vst.msk [vmem:[%s202 + $0xf8] sm:$0xf] %vm1057, %v991
      %1121 = vst.msk [vmem:[%s202 + $0xfc] sm:$0xf] %vm1057, %v992
      %1122 = vst.msk [vmem:[%s202 + $0x100] sm:$0xf] %vm1057, %v993
      %1123 = vst.msk [vmem:[%s202 + $0x104] sm:$0xf] %vm1057, %v994
      %1124 = vst.msk [vmem:[%s202 + $0x108] sm:$0xf] %vm1057, %v995
      %1125 = vst.msk [vmem:[%s202 + $0x10c] sm:$0xf] %vm1057, %v996
      %1126 = vst.msk [vmem:[%s202 + $0x110] sm:$0xf] %vm1057, %v997
      %1127 = vst.msk [vmem:[%s202 + $0x114] sm:$0xf] %vm1057, %v998
      %1128 = vst.msk [vmem:[%s202 + $0x118] sm:$0xf] %vm1057, %v999
      %1129 = vst.msk [vmem:[%s202 + $0x11c] sm:$0xf] %vm1057, %v1000
      %1130 = vst.msk [vmem:[%s202 + $0x120] sm:$0xf] %vm1057, %v1001
      %1131 = vst.msk [vmem:[%s202 + $0x124] sm:$0xf] %vm1057, %v1002
      %1132 = vst.msk [vmem:[%s202 + $0x128] sm:$0xf] %vm1057, %v1003
      %1133 = vst.msk [vmem:[%s202 + $0x12c] sm:$0xf] %vm1057, %v1004
      %1134 = vst.msk [vmem:[%s202 + $0x130] sm:$0xf] %vm1057, %v1005
      %1135 = vst.msk [vmem:[%s202 + $0x134] sm:$0xf] %vm1057, %v1006
      %1136 = vst.msk [vmem:[%s202 + $0x138] sm:$0xf] %vm1057, %v1007
      %1137 = vst.msk [vmem:[%s202 + $0x13c] sm:$0xf] %vm1057, %v1008
      %1138 = vst.msk [vmem:[%s202 + $0x140] sm:$0xf] %vm1057, %v1009
      %1139 = vst.msk [vmem:[%s202 + $0x144] sm:$0xf] %vm1057, %v1010
      %1140 = vst.msk [vmem:[%s202 + $0x148] sm:$0xf] %vm1057, %v1011
      %1141 = vst.msk [vmem:[%s202 + $0x14c] sm:$0xf] %vm1057, %v1012
      %1142 = vst.msk [vmem:[%s202 + $0x150] sm:$0xf] %vm1057, %v1013
      %1143 = vst.msk [vmem:[%s202 + $0x154] sm:$0xf] %vm1057, %v1014
      %1144 = vst.msk [vmem:[%s202 + $0x158] sm:$0xf] %vm1057, %v1015
      %1145 = vst.msk [vmem:[%s202 + $0x15c] sm:$0xf] %vm1057, %v1016
      %1146 = vst.msk [vmem:[%s202 + $0x160] sm:$0xf] %vm1057, %v1017
      %1147 = vst.msk [vmem:[%s202 + $0x164] sm:$0xf] %vm1057, %v1018
      %1148 = vst.msk [vmem:[%s202 + $0x168] sm:$0xf] %vm1057, %v1019
      %1149 = vst.msk [vmem:[%s202 + $0x16c] sm:$0xf] %vm1057, %v1020
      %1150 = vst.msk [vmem:[%s202 + $0x170] sm:$0xf] %vm1057, %v1021
      %1151 = vst.msk [vmem:[%s202 + $0x174] sm:$0xf] %vm1057, %v1022
      %1152 = vst.msk [vmem:[%s202 + $0x178] sm:$0xf] %vm1057, %v1023
      %1153 = vst.msk [vmem:[%s202 + $0x17c] sm:$0xf] %vm1057, %v1024
      %1154 = vst.msk [vmem:[%s202 + $0x180] sm:$0xf] %vm1057, %v1025
      %1155 = vst.msk [vmem:[%s202 + $0x184] sm:$0xf] %vm1057, %v1026
      %1156 = vst.msk [vmem:[%s202 + $0x188] sm:$0xf] %vm1057, %v1027
      %1157 = vst.msk [vmem:[%s202 + $0x18c] sm:$0xf] %vm1057, %v1028
      %1158 = vst.msk [vmem:[%s202 + $0x190] sm:$0xf] %vm1057, %v1029
      %1159 = vst.msk [vmem:[%s202 + $0x194] sm:$0xf] %vm1057, %v1030
      %1160 = vst.msk [vmem:[%s202 + $0x198] sm:$0xf] %vm1057, %v1031
      %1161 = vst.msk [vmem:[%s202 + $0x19c] sm:$0xf] %vm1057, %v1032
      %1162 = vst.msk [vmem:[%s202 + $0x1a0] sm:$0xf] %vm1057, %v1033
      %1163 = vst.msk [vmem:[%s202 + $0x1a4] sm:$0xf] %vm1057, %v1034
      %1164 = vst.msk [vmem:[%s202 + $0x1a8] sm:$0xf] %vm1057, %v1035
      %1165 = vst.msk [vmem:[%s202 + $0x1ac] sm:$0xf] %vm1057, %v1036
      %1166 = vst.msk [vmem:[%s202 + $0x1b0] sm:$0xf] %vm1057, %v1037
      %1167 = vst.msk [vmem:[%s202 + $0x1b4] sm:$0xf] %vm1057, %v1038
      %1168 = vst.msk [vmem:[%s202 + $0x1b8] sm:$0xf] %vm1057, %v1039
      %1169 = vst.msk [vmem:[%s202 + $0x1bc] sm:$0xf] %vm1057, %v1040
      %1170 = vst.msk [vmem:[%s202 + $0x1c0] sm:$0xf] %vm1057, %v1041
      %1171 = vst.msk [vmem:[%s202 + $0x1c4] sm:$0xf] %vm1057, %v1042
      %1172 = vst.msk [vmem:[%s202 + $0x1c8] sm:$0xf] %vm1057, %v1043
      %1173 = vst.msk [vmem:[%s202 + $0x1cc] sm:$0xf] %vm1057, %v1044
      %1174 = vst.msk [vmem:[%s202 + $0x1d0] sm:$0xf] %vm1057, %v1045
      %1175 = vst.msk [vmem:[%s202 + $0x1d4] sm:$0xf] %vm1057, %v1046
      %1176 = vst.msk [vmem:[%s202 + $0x1d8] sm:$0xf] %vm1057, %v1047
      %1177 = vst.msk [vmem:[%s202 + $0x1dc] sm:$0xf] %vm1057, %v1048
      %1178 = vst.msk [vmem:[%s202 + $0x1e0] sm:$0xf] %vm1057, %v1049
      %1179 = vst.msk [vmem:[%s202 + $0x1e4] sm:$0xf] %vm1057, %v1050
      %1180 = vst.msk [vmem:[%s202 + $0x1e8] sm:$0xf] %vm1057, %v1051
      %1181 = vst.msk [vmem:[%s202 + $0x1ec] sm:$0xf] %vm1057, %v1052
      %1182 = vst.msk [vmem:[%s202 + $0x1f0] sm:$0xf] %vm1057, %v1053
      %1183 = vst.msk [vmem:[%s202 + $0x1f4] sm:$0xf] %vm1057, %v1054
      %1184 = vst.msk [vmem:[%s202 + $0x1f8] sm:$0xf] %vm1057, %v1055
      %1185 = vst.msk [vmem:[%s202 + $0x1fc] sm:$0xf] %vm1057, %v1056
      %p1186 = scmp.eq.s32.totalorder %s20, 0
      // Predicated region
      $region29: #{decoder_bottleneck_forward.4} parent=27 // pred_check
        %p1187 = pneg %p1186
      $region30: #{decoder_bottleneck_forward.4} parent=27 // pred_check_branch
        %1189 = sbr.rel (%p1187) target = $region32
      $region31: #{decoder_bottleneck_forward.4} parent=27 // pred_region
        %vm1190 = vcmask 25600
        %1191 = vst.msk [vmem:[%s208] sm:$0x3] %vm1190, 0.0
      $region32: #{decoder_bottleneck_forward.4} parent=27 // pred_fallthru
        _
      %v1192 = vld [vmem:[%s208] sm:$0x1]
      %v1193 = vsel %vm403, %v610, 0.0
      %v1194 = vsel %vm403, %v612, 0.0
      %v1195 = vadd.f32 %v1193, %v1194
      %v1196 = vsel %vm403, %v615, 0.0
      %v1197 = vadd.f32 %v1195, %v1196
      %v1198 = vsel %vm403, %v617, 0.0
      %v1199 = vadd.f32 %v1197, %v1198
      %v1200 = vsel %vm403, %v620, 0.0
      %v1201 = vadd.f32 %v1199, %v1200
      %v1202 = vsel %vm403, %v622, 0.0
      %v1203 = vadd.f32 %v1201, %v1202
      %v1204 = vsel %vm403, %v625, 0.0
      %v1205 = vadd.f32 %v1203, %v1204
      %v1206 = vsel %vm403, %v627, 0.0
      %v1207 = vadd.f32 %v1205, %v1206
      %v1208 = vsel %vm403, %v630, 0.0
      %v1209 = vadd.f32 %v1207, %v1208
      %v1210 = vsel %vm403, %v632, 0.0
      %v1211 = vadd.f32 %v1209, %v1210
      %v1212 = vsel %vm403, %v635, 0.0
      %v1213 = vadd.f32 %v1211, %v1212
      %v1214 = vsel %vm403, %v637, 0.0
      %v1215 = vadd.f32 %v1213, %v1214
      %v1216 = vsel %vm403, %v640, 0.0
      %v1217 = vadd.f32 %v1215, %v1216
      %v1218 = vsel %vm403, %v642, 0.0
      %v1219 = vadd.f32 %v1217, %v1218
      %v1220 = vsel %vm403, %v645, 0.0
      %v1221 = vadd.f32 %v1219, %v1220
      %v1222 = vsel %vm403, %v647, 0.0
      %v1223 = vadd.f32 %v1221, %v1222
      %v1224 = vsel %vm403, %v650, 0.0
      %v1225 = vadd.f32 %v1223, %v1224
      %v1226 = vsel %vm403, %v652, 0.0
      %v1227 = vadd.f32 %v1225, %v1226
      %v1228 = vsel %vm403, %v655, 0.0
      %v1229 = vadd.f32 %v1227, %v1228
      %v1230 = vsel %vm403, %v657, 0.0
      %v1231 = vadd.f32 %v1229, %v1230
      %v1232 = vsel %vm403, %v660, 0.0
      %v1233 = vadd.f32 %v1231, %v1232
      %v1234 = vsel %vm403, %v662, 0.0
      %v1235 = vadd.f32 %v1233, %v1234
      %v1236 = vsel %vm403, %v665, 0.0
      %v1237 = vadd.f32 %v1235, %v1236
      %v1238 = vsel %vm403, %v667, 0.0
      %v1239 = vadd.f32 %v1237, %v1238
      %v1240 = vsel %vm403, %v670, 0.0
      %v1241 = vadd.f32 %v1239, %v1240
      %v1242 = vsel %vm403, %v672, 0.0
      %v1243 = vadd.f32 %v1241, %v1242
      %v1244 = vsel %vm403, %v675, 0.0
      %v1245 = vadd.f32 %v1243, %v1244
      %v1246 = vsel %vm403, %v677, 0.0
      %v1247 = vadd.f32 %v1245, %v1246
      %v1248 = vsel %vm403, %v680, 0.0
      %v1249 = vadd.f32 %v1247, %v1248
      %v1250 = vsel %vm403, %v682, 0.0
      %v1251 = vadd.f32 %v1249, %v1250
      %v1252 = vsel %vm403, %v685, 0.0
      %v1253 = vadd.f32 %v1251, %v1252
      %v1254 = vsel %vm403, %v687, 0.0
      %v1255 = vadd.f32 %v1253, %v1254
      %v1256 = vsel %vm403, %v690, 0.0
      %v1257 = vadd.f32 %v1255, %v1256
      %v1258 = vsel %vm403, %v692, 0.0
      %v1259 = vadd.f32 %v1257, %v1258
      %v1260 = vsel %vm403, %v695, 0.0
      %v1261 = vadd.f32 %v1259, %v1260
      %v1262 = vsel %vm403, %v697, 0.0
      %v1263 = vadd.f32 %v1261, %v1262
      %v1264 = vsel %vm403, %v700, 0.0
      %v1265 = vadd.f32 %v1263, %v1264
      %v1266 = vsel %vm403, %v702, 0.0
      %v1267 = vadd.f32 %v1265, %v1266
      %v1268 = vsel %vm403, %v705, 0.0
      %v1269 = vadd.f32 %v1267, %v1268
      %v1270 = vsel %vm403, %v707, 0.0
      %v1271 = vadd.f32 %v1269, %v1270
      %v1272 = vsel %vm403, %v710, 0.0
      %v1273 = vadd.f32 %v1271, %v1272
      %v1274 = vsel %vm403, %v712, 0.0
      %v1275 = vadd.f32 %v1273, %v1274
      %v1276 = vsel %vm403, %v715, 0.0
      %v1277 = vadd.f32 %v1275, %v1276
      %v1278 = vsel %vm403, %v717, 0.0
      %v1279 = vadd.f32 %v1277, %v1278
      %v1280 = vsel %vm403, %v720, 0.0
      %v1281 = vadd.f32 %v1279, %v1280
      %v1282 = vsel %vm403, %v722, 0.0
      %v1283 = vadd.f32 %v1281, %v1282
      %v1284 = vsel %vm403, %v725, 0.0
      %v1285 = vadd.f32 %v1283, %v1284
      %v1286 = vsel %vm403, %v727, 0.0
      %v1287 = vadd.f32 %v1285, %v1286
      %v1288 = vsel %vm403, %v730, 0.0
      %v1289 = vadd.f32 %v1287, %v1288
      %v1290 = vsel %vm403, %v732, 0.0
      %v1291 = vadd.f32 %v1289, %v1290
      %v1292 = vsel %vm403, %v735, 0.0
      %v1293 = vadd.f32 %v1291, %v1292
      %v1294 = vsel %vm403, %v737, 0.0
      %v1295 = vadd.f32 %v1293, %v1294
      %v1296 = vsel %vm403, %v740, 0.0
      %v1297 = vadd.f32 %v1295, %v1296
      %v1298 = vsel %vm403, %v742, 0.0
      %v1299 = vadd.f32 %v1297, %v1298
      %v1300 = vsel %vm403, %v745, 0.0
      %v1301 = vadd.f32 %v1299, %v1300
      %v1302 = vsel %vm403, %v747, 0.0
      %v1303 = vadd.f32 %v1301, %v1302
      %v1304 = vsel %vm403, %v750, 0.0
      %v1305 = vadd.f32 %v1303, %v1304
      %v1306 = vsel %vm403, %v752, 0.0
      %v1307 = vadd.f32 %v1305, %v1306
      %v1308 = vsel %vm403, %v755, 0.0
      %v1309 = vadd.f32 %v1307, %v1308
      %v1310 = vsel %vm403, %v757, 0.0
      %v1311 = vadd.f32 %v1309, %v1310
      %v1312 = vsel %vm403, %v760, 0.0
      %v1313 = vadd.f32 %v1311, %v1312
      %v1314 = vsel %vm403, %v762, 0.0
      %v1315 = vadd.f32 %v1313, %v1314
      %v1316 = vsel %vm403, %v765, 0.0
      %v1317 = vadd.f32 %v1315, %v1316
      %v1318 = vsel %vm403, %v767, 0.0
      %v1319 = vadd.f32 %v1317, %v1318
      %v1320 = vsel %vm403, %v770, 0.0
      %v1321 = vadd.f32 %v1319, %v1320
      %v1322 = vsel %vm403, %v772, 0.0
      %v1323 = vadd.f32 %v1321, %v1322
      %v1324 = vsel %vm403, %v775, 0.0
      %v1325 = vadd.f32 %v1323, %v1324
      %v1326 = vsel %vm403, %v777, 0.0
      %v1327 = vadd.f32 %v1325, %v1326
      %v1328 = vsel %vm403, %v780, 0.0
      %v1329 = vadd.f32 %v1327, %v1328
      %v1330 = vsel %vm403, %v782, 0.0
      %v1331 = vadd.f32 %v1329, %v1330
      %v1332 = vsel %vm403, %v785, 0.0
      %v1333 = vadd.f32 %v1331, %v1332
      %v1334 = vsel %vm403, %v787, 0.0
      %v1335 = vadd.f32 %v1333, %v1334
      %v1336 = vsel %vm403, %v790, 0.0
      %v1337 = vadd.f32 %v1335, %v1336
      %v1338 = vsel %vm403, %v792, 0.0
      %v1339 = vadd.f32 %v1337, %v1338
      %v1340 = vsel %vm403, %v795, 0.0
      %v1341 = vadd.f32 %v1339, %v1340
      %v1342 = vsel %vm403, %v797, 0.0
      %v1343 = vadd.f32 %v1341, %v1342
      %v1344 = vsel %vm403, %v800, 0.0
      %v1345 = vadd.f32 %v1343, %v1344
      %v1346 = vsel %vm403, %v802, 0.0
      %v1347 = vadd.f32 %v1345, %v1346
      %v1348 = vsel %vm403, %v805, 0.0
      %v1349 = vadd.f32 %v1347, %v1348
      %v1350 = vsel %vm403, %v807, 0.0
      %v1351 = vadd.f32 %v1349, %v1350
      %v1352 = vsel %vm403, %v810, 0.0
      %v1353 = vadd.f32 %v1351, %v1352
      %v1354 = vsel %vm403, %v812, 0.0
      %v1355 = vadd.f32 %v1353, %v1354
      %v1356 = vsel %vm403, %v815, 0.0
      %v1357 = vadd.f32 %v1355, %v1356
      %v1358 = vsel %vm403, %v817, 0.0
      %v1359 = vadd.f32 %v1357, %v1358
      %v1360 = vsel %vm403, %v820, 0.0
      %v1361 = vadd.f32 %v1359, %v1360
      %v1362 = vsel %vm403, %v822, 0.0
      %v1363 = vadd.f32 %v1361, %v1362
      %v1364 = vsel %vm403, %v825, 0.0
      %v1365 = vadd.f32 %v1363, %v1364
      %v1366 = vsel %vm403, %v827, 0.0
      %v1367 = vadd.f32 %v1365, %v1366
      %v1368 = vsel %vm403, %v830, 0.0
      %v1369 = vadd.f32 %v1367, %v1368
      %v1370 = vsel %vm403, %v832, 0.0
      %v1371 = vadd.f32 %v1369, %v1370
      %v1372 = vsel %vm403, %v835, 0.0
      %v1373 = vadd.f32 %v1371, %v1372
      %v1374 = vsel %vm403, %v837, 0.0
      %v1375 = vadd.f32 %v1373, %v1374
      %v1376 = vsel %vm403, %v840, 0.0
      %v1377 = vadd.f32 %v1375, %v1376
      %v1378 = vsel %vm403, %v842, 0.0
      %v1379 = vadd.f32 %v1377, %v1378
      %v1380 = vsel %vm403, %v845, 0.0
      %v1381 = vadd.f32 %v1379, %v1380
      %v1382 = vsel %vm403, %v847, 0.0
      %v1383 = vadd.f32 %v1381, %v1382
      %v1384 = vsel %vm403, %v850, 0.0
      %v1385 = vadd.f32 %v1383, %v1384
      %v1386 = vsel %vm403, %v852, 0.0
      %v1387 = vadd.f32 %v1385, %v1386
      %v1388 = vsel %vm403, %v855, 0.0
      %v1389 = vadd.f32 %v1387, %v1388
      %v1390 = vsel %vm403, %v857, 0.0
      %v1391 = vadd.f32 %v1389, %v1390
      %v1392 = vsel %vm403, %v860, 0.0
      %v1393 = vadd.f32 %v1391, %v1392
      %v1394 = vsel %vm403, %v862, 0.0
      %v1395 = vadd.f32 %v1393, %v1394
      %v1396 = vsel %vm403, %v865, 0.0
      %v1397 = vadd.f32 %v1395, %v1396
      %v1398 = vsel %vm403, %v867, 0.0
      %v1399 = vadd.f32 %v1397, %v1398
      %v1400 = vsel %vm403, %v870, 0.0
      %v1401 = vadd.f32 %v1399, %v1400
      %v1402 = vsel %vm403, %v872, 0.0
      %v1403 = vadd.f32 %v1401, %v1402
      %v1404 = vsel %vm403, %v875, 0.0
      %v1405 = vadd.f32 %v1403, %v1404
      %v1406 = vsel %vm403, %v877, 0.0
      %v1407 = vadd.f32 %v1405, %v1406
      %v1408 = vsel %vm403, %v880, 0.0
      %v1409 = vadd.f32 %v1407, %v1408
      %v1410 = vsel %vm403, %v882, 0.0
      %v1411 = vadd.f32 %v1409, %v1410
      %v1412 = vsel %vm403, %v885, 0.0
      %v1413 = vadd.f32 %v1411, %v1412
      %v1414 = vsel %vm403, %v887, 0.0
      %v1415 = vadd.f32 %v1413, %v1414
      %v1416 = vsel %vm403, %v890, 0.0
      %v1417 = vadd.f32 %v1415, %v1416
      %v1418 = vsel %vm403, %v892, 0.0
      %v1419 = vadd.f32 %v1417, %v1418
      %v1420 = vsel %vm403, %v895, 0.0
      %v1421 = vadd.f32 %v1419, %v1420
      %v1422 = vsel %vm403, %v897, 0.0
      %v1423 = vadd.f32 %v1421, %v1422
      %v1424 = vsel %vm403, %v900, 0.0
      %v1425 = vadd.f32 %v1423, %v1424
      %v1426 = vsel %vm403, %v902, 0.0
      %v1427 = vadd.f32 %v1425, %v1426
      %v1428 = vsel %vm403, %v905, 0.0
      %v1429 = vadd.f32 %v1427, %v1428
      %v1430 = vsel %vm403, %v907, 0.0
      %v1431 = vadd.f32 %v1429, %v1430
      %v1432 = vsel %vm403, %v910, 0.0
      %v1433 = vadd.f32 %v1431, %v1432
      %v1434 = vsel %vm403, %v912, 0.0
      %v1435 = vadd.f32 %v1433, %v1434
      %v1436 = vsel %vm403, %v915, 0.0
      %v1437 = vadd.f32 %v1435, %v1436
      %v1438 = vsel %vm403, %v917, 0.0
      %v1439 = vadd.f32 %v1437, %v1438
      %v1440 = vsel %vm403, %v920, 0.0
      %v1441 = vadd.f32 %v1439, %v1440
      %v1442 = vsel %vm403, %v922, 0.0
      %v1443 = vadd.f32 %v1441, %v1442
      %v1444 = vsel %vm403, %v925, 0.0
      %v1445 = vadd.f32 %v1443, %v1444
      %v1446 = vsel %vm403, %v927, 0.0
      %v1447 = vadd.f32 %v1445, %v1446
      %v1448 = vrot.slane %v1447, 4
      %v1449 = vadd.f32 %v1447, %v1448
      %v1450 = vrot.slane %v1449, 2
      %v1451 = vadd.f32 %v1449, %v1450
      %v1452 = vrot.slane %v1451, 1
      %v1453 = vadd.f32 %v1451, %v1452
      %v1454 = vadd.f32 %v1192, %v1453
      %vm1455 = vcmask 24576
      %1456 = vst.msk [vmem:[%s208] sm:$0x1] %vm1455, %v1454
      %v1457 = vld [vmem:[%s208 + $0x1] sm:$0x1]
      %v1458 = vmul.f32 %v610, %v610
      %v1459 = vmul.f32 %v612, %v612
      %v1460 = vmul.f32 %v615, %v615
      %v1461 = vmul.f32 %v617, %v617
      %v1462 = vmul.f32 %v620, %v620
      %v1463 = vmul.f32 %v622, %v622
      %v1464 = vmul.f32 %v625, %v625
      %v1465 = vmul.f32 %v627, %v627
      %v1466 = vmul.f32 %v630, %v630
      %v1467 = vmul.f32 %v632, %v632
      %v1468 = vmul.f32 %v635, %v635
      %v1469 = vmul.f32 %v637, %v637
      %v1470 = vmul.f32 %v640, %v640
      %v1471 = vmul.f32 %v642, %v642
      %v1472 = vmul.f32 %v645, %v645
      %v1473 = vmul.f32 %v647, %v647
      %v1474 = vmul.f32 %v650, %v650
      %v1475 = vmul.f32 %v652, %v652
      %v1476 = vmul.f32 %v655, %v655
      %v1477 = vmul.f32 %v657, %v657
      %v1478 = vmul.f32 %v660, %v660
      %v1479 = vmul.f32 %v662, %v662
      %v1480 = vmul.f32 %v665, %v665
      %v1481 = vmul.f32 %v667, %v667
      %v1482 = vmul.f32 %v670, %v670
      %v1483 = vmul.f32 %v672, %v672
      %v1484 = vmul.f32 %v675, %v675
      %v1485 = vmul.f32 %v677, %v677
      %v1486 = vmul.f32 %v680, %v680
      %v1487 = vmul.f32 %v682, %v682
      %v1488 = vmul.f32 %v685, %v685
      %v1489 = vmul.f32 %v687, %v687
      %v1490 = vmul.f32 %v690, %v690
      %v1491 = vmul.f32 %v692, %v692
      %v1492 = vmul.f32 %v695, %v695
      %v1493 = vmul.f32 %v697, %v697
      %v1494 = vmul.f32 %v700, %v700
      %v1495 = vmul.f32 %v702, %v702
      %v1496 = vmul.f32 %v705, %v705
      %v1497 = vmul.f32 %v707, %v707
      %v1498 = vmul.f32 %v710, %v710
      %v1499 = vmul.f32 %v712, %v712
      %v1500 = vmul.f32 %v715, %v715
      %v1501 = vmul.f32 %v717, %v717
      %v1502 = vmul.f32 %v720, %v720
      %v1503 = vmul.f32 %v722, %v722
      %v1504 = vmul.f32 %v725, %v725
      %v1505 = vmul.f32 %v727, %v727
      %v1506 = vmul.f32 %v730, %v730
      %v1507 = vmul.f32 %v732, %v732
      %v1508 = vmul.f32 %v735, %v735
      %v1509 = vmul.f32 %v737, %v737
      %v1510 = vmul.f32 %v740, %v740
      %v1511 = vmul.f32 %v742, %v742
      %v1512 = vmul.f32 %v745, %v745
      %v1513 = vmul.f32 %v747, %v747
      %v1514 = vmul.f32 %v750, %v750
      %v1515 = vmul.f32 %v752, %v752
      %v1516 = vmul.f32 %v755, %v755
      %v1517 = vmul.f32 %v757, %v757
      %v1518 = vmul.f32 %v760, %v760
      %v1519 = vmul.f32 %v762, %v762
      %v1520 = vmul.f32 %v765, %v765
      %v1521 = vmul.f32 %v767, %v767
      %v1522 = vmul.f32 %v770, %v770
      %v1523 = vmul.f32 %v772, %v772
      %v1524 = vmul.f32 %v775, %v775
      %v1525 = vmul.f32 %v777, %v777
      %v1526 = vmul.f32 %v780, %v780
      %v1527 = vmul.f32 %v782, %v782
      %v1528 = vmul.f32 %v785, %v785
      %v1529 = vmul.f32 %v787, %v787
      %v1530 = vmul.f32 %v790, %v790
      %v1531 = vmul.f32 %v792, %v792
      %v1532 = vmul.f32 %v795, %v795
      %v1533 = vmul.f32 %v797, %v797
      %v1534 = vmul.f32 %v800, %v800
      %v1535 = vmul.f32 %v802, %v802
      %v1536 = vmul.f32 %v805, %v805
      %v1537 = vmul.f32 %v807, %v807
      %v1538 = vmul.f32 %v810, %v810
      %v1539 = vmul.f32 %v812, %v812
      %v1540 = vmul.f32 %v815, %v815
      %v1541 = vmul.f32 %v817, %v817
      %v1542 = vmul.f32 %v820, %v820
      %v1543 = vmul.f32 %v822, %v822
      %v1544 = vmul.f32 %v825, %v825
      %v1545 = vmul.f32 %v827, %v827
      %v1546 = vmul.f32 %v830, %v830
      %v1547 = vmul.f32 %v832, %v832
      %v1548 = vmul.f32 %v835, %v835
      %v1549 = vmul.f32 %v837, %v837
      %v1550 = vmul.f32 %v840, %v840
      %v1551 = vmul.f32 %v842, %v842
      %v1552 = vmul.f32 %v845, %v845
      %v1553 = vmul.f32 %v847, %v847
      %v1554 = vmul.f32 %v850, %v850
      %v1555 = vmul.f32 %v852, %v852
      %v1556 = vmul.f32 %v855, %v855
      %v1557 = vmul.f32 %v857, %v857
      %v1558 = vmul.f32 %v860, %v860
      %v1559 = vmul.f32 %v862, %v862
      %v1560 = vmul.f32 %v865, %v865
      %v1561 = vmul.f32 %v867, %v867
      %v1562 = vmul.f32 %v870, %v870
      %v1563 = vmul.f32 %v872, %v872
      %v1564 = vmul.f32 %v875, %v875
      %v1565 = vmul.f32 %v877, %v877
      %v1566 = vmul.f32 %v880, %v880
      %v1567 = vmul.f32 %v882, %v882
      %v1568 = vmul.f32 %v885, %v885
      %v1569 = vmul.f32 %v887, %v887
      %v1570 = vmul.f32 %v890, %v890
      %v1571 = vmul.f32 %v892, %v892
      %v1572 = vmul.f32 %v895, %v895
      %v1573 = vmul.f32 %v897, %v897
      %v1574 = vmul.f32 %v900, %v900
      %v1575 = vmul.f32 %v902, %v902
      %v1576 = vmul.f32 %v905, %v905
      %v1577 = vmul.f32 %v907, %v907
      %v1578 = vmul.f32 %v910, %v910
      %v1579 = vmul.f32 %v912, %v912
      %v1580 = vmul.f32 %v915, %v915
      %v1581 = vmul.f32 %v917, %v917
      %v1582 = vmul.f32 %v920, %v920
      %v1583 = vmul.f32 %v922, %v922
      %v1584 = vmul.f32 %v925, %v925
      %v1585 = vmul.f32 %v927, %v927
      %v1586 = vsel %vm403, %v1458, 0.0
      %v1587 = vsel %vm403, %v1459, 0.0
      %v1588 = vadd.f32 %v1586, %v1587
      %v1589 = vsel %vm403, %v1460, 0.0
      %v1590 = vadd.f32 %v1588, %v1589
      %v1591 = vsel %vm403, %v1461, 0.0
      %v1592 = vadd.f32 %v1590, %v1591
      %v1593 = vsel %vm403, %v1462, 0.0
      %v1594 = vadd.f32 %v1592, %v1593
      %v1595 = vsel %vm403, %v1463, 0.0
      %v1596 = vadd.f32 %v1594, %v1595
      %v1597 = vsel %vm403, %v1464, 0.0
      %v1598 = vadd.f32 %v1596, %v1597
      %v1599 = vsel %vm403, %v1465, 0.0
      %v1600 = vadd.f32 %v1598, %v1599
      %v1601 = vsel %vm403, %v1466, 0.0
      %v1602 = vadd.f32 %v1600, %v1601
      %v1603 = vsel %vm403, %v1467, 0.0
      %v1604 = vadd.f32 %v1602, %v1603
      %v1605 = vsel %vm403, %v1468, 0.0
      %v1606 = vadd.f32 %v1604, %v1605
      %v1607 = vsel %vm403, %v1469, 0.0
      %v1608 = vadd.f32 %v1606, %v1607
      %v1609 = vsel %vm403, %v1470, 0.0
      %v1610 = vadd.f32 %v1608, %v1609
      %v1611 = vsel %vm403, %v1471, 0.0
      %v1612 = vadd.f32 %v1610, %v1611
      %v1613 = vsel %vm403, %v1472, 0.0
      %v1614 = vadd.f32 %v1612, %v1613
      %v1615 = vsel %vm403, %v1473, 0.0
      %v1616 = vadd.f32 %v1614, %v1615
      %v1617 = vsel %vm403, %v1474, 0.0
      %v1618 = vadd.f32 %v1616, %v1617
      %v1619 = vsel %vm403, %v1475, 0.0
      %v1620 = vadd.f32 %v1618, %v1619
      %v1621 = vsel %vm403, %v1476, 0.0
      %v1622 = vadd.f32 %v1620, %v1621
      %v1623 = vsel %vm403, %v1477, 0.0
      %v1624 = vadd.f32 %v1622, %v1623
      %v1625 = vsel %vm403, %v1478, 0.0
      %v1626 = vadd.f32 %v1624, %v1625
      %v1627 = vsel %vm403, %v1479, 0.0
      %v1628 = vadd.f32 %v1626, %v1627
      %v1629 = vsel %vm403, %v1480, 0.0
      %v1630 = vadd.f32 %v1628, %v1629
      %v1631 = vsel %vm403, %v1481, 0.0
      %v1632 = vadd.f32 %v1630, %v1631
      %v1633 = vsel %vm403, %v1482, 0.0
      %v1634 = vadd.f32 %v1632, %v1633
      %v1635 = vsel %vm403, %v1483, 0.0
      %v1636 = vadd.f32 %v1634, %v1635
      %v1637 = vsel %vm403, %v1484, 0.0
      %v1638 = vadd.f32 %v1636, %v1637
      %v1639 = vsel %vm403, %v1485, 0.0
      %v1640 = vadd.f32 %v1638, %v1639
      %v1641 = vsel %vm403, %v1486, 0.0
      %v1642 = vadd.f32 %v1640, %v1641
      %v1643 = vsel %vm403, %v1487, 0.0
      %v1644 = vadd.f32 %v1642, %v1643
      %v1645 = vsel %vm403, %v1488, 0.0
      %v1646 = vadd.f32 %v1644, %v1645
      %v1647 = vsel %vm403, %v1489, 0.0
      %v1648 = vadd.f32 %v1646, %v1647
      %v1649 = vsel %vm403, %v1490, 0.0
      %v1650 = vadd.f32 %v1648, %v1649
      %v1651 = vsel %vm403, %v1491, 0.0
      %v1652 = vadd.f32 %v1650, %v1651
      %v1653 = vsel %vm403, %v1492, 0.0
      %v1654 = vadd.f32 %v1652, %v1653
      %v1655 = vsel %vm403, %v1493, 0.0
      %v1656 = vadd.f32 %v1654, %v1655
      %v1657 = vsel %vm403, %v1494, 0.0
      %v1658 = vadd.f32 %v1656, %v1657
      %v1659 = vsel %vm403, %v1495, 0.0
      %v1660 = vadd.f32 %v1658, %v1659
      %v1661 = vsel %vm403, %v1496, 0.0
      %v1662 = vadd.f32 %v1660, %v1661
      %v1663 = vsel %vm403, %v1497, 0.0
      %v1664 = vadd.f32 %v1662, %v1663
      %v1665 = vsel %vm403, %v1498, 0.0
      %v1666 = vadd.f32 %v1664, %v1665
      %v1667 = vsel %vm403, %v1499, 0.0
      %v1668 = vadd.f32 %v1666, %v1667
      %v1669 = vsel %vm403, %v1500, 0.0
      %v1670 = vadd.f32 %v1668, %v1669
      %v1671 = vsel %vm403, %v1501, 0.0
      %v1672 = vadd.f32 %v1670, %v1671
      %v1673 = vsel %vm403, %v1502, 0.0
      %v1674 = vadd.f32 %v1672, %v1673
      %v1675 = vsel %vm403, %v1503, 0.0
      %v1676 = vadd.f32 %v1674, %v1675
      %v1677 = vsel %vm403, %v1504, 0.0
      %v1678 = vadd.f32 %v1676, %v1677
      %v1679 = vsel %vm403, %v1505, 0.0
      %v1680 = vadd.f32 %v1678, %v1679
      %v1681 = vsel %vm403, %v1506, 0.0
      %v1682 = vadd.f32 %v1680, %v1681
      %v1683 = vsel %vm403, %v1507, 0.0
      %v1684 = vadd.f32 %v1682, %v1683
      %v1685 = vsel %vm403, %v1508, 0.0
      %v1686 = vadd.f32 %v1684, %v1685
      %v1687 = vsel %vm403, %v1509, 0.0
      %v1688 = vadd.f32 %v1686, %v1687
      %v1689 = vsel %vm403, %v1510, 0.0
      %v1690 = vadd.f32 %v1688, %v1689
      %v1691 = vsel %vm403, %v1511, 0.0
      %v1692 = vadd.f32 %v1690, %v1691
      %v1693 = vsel %vm403, %v1512, 0.0
      %v1694 = vadd.f32 %v1692, %v1693
      %v1695 = vsel %vm403, %v1513, 0.0
      %v1696 = vadd.f32 %v1694, %v1695
      %v1697 = vsel %vm403, %v1514, 0.0
      %v1698 = vadd.f32 %v1696, %v1697
      %v1699 = vsel %vm403, %v1515, 0.0
      %v1700 = vadd.f32 %v1698, %v1699
      %v1701 = vsel %vm403, %v1516, 0.0
      %v1702 = vadd.f32 %v1700, %v1701
      %v1703 = vsel %vm403, %v1517, 0.0
      %v1704 = vadd.f32 %v1702, %v1703
      %v1705 = vsel %vm403, %v1518, 0.0
      %v1706 = vadd.f32 %v1704, %v1705
      %v1707 = vsel %vm403, %v1519, 0.0
      %v1708 = vadd.f32 %v1706, %v1707
      %v1709 = vsel %vm403, %v1520, 0.0
      %v1710 = vadd.f32 %v1708, %v1709
      %v1711 = vsel %vm403, %v1521, 0.0
      %v1712 = vadd.f32 %v1710, %v1711
      %v1713 = vsel %vm403, %v1522, 0.0
      %v1714 = vadd.f32 %v1712, %v1713
      %v1715 = vsel %vm403, %v1523, 0.0
      %v1716 = vadd.f32 %v1714, %v1715
      %v1717 = vsel %vm403, %v1524, 0.0
      %v1718 = vadd.f32 %v1716, %v1717
      %v1719 = vsel %vm403, %v1525, 0.0
      %v1720 = vadd.f32 %v1718, %v1719
      %v1721 = vsel %vm403, %v1526, 0.0
      %v1722 = vadd.f32 %v1720, %v1721
      %v1723 = vsel %vm403, %v1527, 0.0
      %v1724 = vadd.f32 %v1722, %v1723
      %v1725 = vsel %vm403, %v1528, 0.0
      %v1726 = vadd.f32 %v1724, %v1725
      %v1727 = vsel %vm403, %v1529, 0.0
      %v1728 = vadd.f32 %v1726, %v1727
      %v1729 = vsel %vm403, %v1530, 0.0
      %v1730 = vadd.f32 %v1728, %v1729
      %v1731 = vsel %vm403, %v1531, 0.0
      %v1732 = vadd.f32 %v1730, %v1731
      %v1733 = vsel %vm403, %v1532, 0.0
      %v1734 = vadd.f32 %v1732, %v1733
      %v1735 = vsel %vm403, %v1533, 0.0
      %v1736 = vadd.f32 %v1734, %v1735
      %v1737 = vsel %vm403, %v1534, 0.0
      %v1738 = vadd.f32 %v1736, %v1737
      %v1739 = vsel %vm403, %v1535, 0.0
      %v1740 = vadd.f32 %v1738, %v1739
      %v1741 = vsel %vm403, %v1536, 0.0
      %v1742 = vadd.f32 %v1740, %v1741
      %v1743 = vsel %vm403, %v1537, 0.0
      %v1744 = vadd.f32 %v1742, %v1743
      %v1745 = vsel %vm403, %v1538, 0.0
      %v1746 = vadd.f32 %v1744, %v1745
      %v1747 = vsel %vm403, %v1539, 0.0
      %v1748 = vadd.f32 %v1746, %v1747
      %v1749 = vsel %vm403, %v1540, 0.0
      %v1750 = vadd.f32 %v1748, %v1749
      %v1751 = vsel %vm403, %v1541, 0.0
      %v1752 = vadd.f32 %v1750, %v1751
      %v1753 = vsel %vm403, %v1542, 0.0
      %v1754 = vadd.f32 %v1752, %v1753
      %v1755 = vsel %vm403, %v1543, 0.0
      %v1756 = vadd.f32 %v1754, %v1755
      %v1757 = vsel %vm403, %v1544, 0.0
      %v1758 = vadd.f32 %v1756, %v1757
      %v1759 = vsel %vm403, %v1545, 0.0
      %v1760 = vadd.f32 %v1758, %v1759
      %v1761 = vsel %vm403, %v1546, 0.0
      %v1762 = vadd.f32 %v1760, %v1761
      %v1763 = vsel %vm403, %v1547, 0.0
      %v1764 = vadd.f32 %v1762, %v1763
      %v1765 = vsel %vm403, %v1548, 0.0
      %v1766 = vadd.f32 %v1764, %v1765
      %v1767 = vsel %vm403, %v1549, 0.0
      %v1768 = vadd.f32 %v1766, %v1767
      %v1769 = vsel %vm403, %v1550, 0.0
      %v1770 = vadd.f32 %v1768, %v1769
      %v1771 = vsel %vm403, %v1551, 0.0
      %v1772 = vadd.f32 %v1770, %v1771
      %v1773 = vsel %vm403, %v1552, 0.0
      %v1774 = vadd.f32 %v1772, %v1773
      %v1775 = vsel %vm403, %v1553, 0.0
      %v1776 = vadd.f32 %v1774, %v1775
      %v1777 = vsel %vm403, %v1554, 0.0
      %v1778 = vadd.f32 %v1776, %v1777
      %v1779 = vsel %vm403, %v1555, 0.0
      %v1780 = vadd.f32 %v1778, %v1779
      %v1781 = vsel %vm403, %v1556, 0.0
      %v1782 = vadd.f32 %v1780, %v1781
      %v1783 = vsel %vm403, %v1557, 0.0
      %v1784 = vadd.f32 %v1782, %v1783
      %v1785 = vsel %vm403, %v1558, 0.0
      %v1786 = vadd.f32 %v1784, %v1785
      %v1787 = vsel %vm403, %v1559, 0.0
      %v1788 = vadd.f32 %v1786, %v1787
      %v1789 = vsel %vm403, %v1560, 0.0
      %v1790 = vadd.f32 %v1788, %v1789
      %v1791 = vsel %vm403, %v1561, 0.0
      %v1792 = vadd.f32 %v1790, %v1791
      %v1793 = vsel %vm403, %v1562, 0.0
      %v1794 = vadd.f32 %v1792, %v1793
      %v1795 = vsel %vm403, %v1563, 0.0
      %v1796 = vadd.f32 %v1794, %v1795
      %v1797 = vsel %vm403, %v1564, 0.0
      %v1798 = vadd.f32 %v1796, %v1797
      %v1799 = vsel %vm403, %v1565, 0.0
      %v1800 = vadd.f32 %v1798, %v1799
      %v1801 = vsel %vm403, %v1566, 0.0
      %v1802 = vadd.f32 %v1800, %v1801
      %v1803 = vsel %vm403, %v1567, 0.0
      %v1804 = vadd.f32 %v1802, %v1803
      %v1805 = vsel %vm403, %v1568, 0.0
      %v1806 = vadd.f32 %v1804, %v1805
      %v1807 = vsel %vm403, %v1569, 0.0
      %v1808 = vadd.f32 %v1806, %v1807
      %v1809 = vsel %vm403, %v1570, 0.0
      %v1810 = vadd.f32 %v1808, %v1809
      %v1811 = vsel %vm403, %v1571, 0.0
      %v1812 = vadd.f32 %v1810, %v1811
      %v1813 = vsel %vm403, %v1572, 0.0
      %v1814 = vadd.f32 %v1812, %v1813
      %v1815 = vsel %vm403, %v1573, 0.0
      %v1816 = vadd.f32 %v1814, %v1815
      %v1817 = vsel %vm403, %v1574, 0.0
      %v1818 = vadd.f32 %v1816, %v1817
      %v1819 = vsel %vm403, %v1575, 0.0
      %v1820 = vadd.f32 %v1818, %v1819
      %v1821 = vsel %vm403, %v1576, 0.0
      %v1822 = vadd.f32 %v1820, %v1821
      %v1823 = vsel %vm403, %v1577, 0.0
      %v1824 = vadd.f32 %v1822, %v1823
      %v1825 = vsel %vm403, %v1578, 0.0
      %v1826 = vadd.f32 %v1824, %v1825
      %v1827 = vsel %vm403, %v1579, 0.0
      %v1828 = vadd.f32 %v1826, %v1827
      %v1829 = vsel %vm403, %v1580, 0.0
      %v1830 = vadd.f32 %v1828, %v1829
      %v1831 = vsel %vm403, %v1581, 0.0
      %v1832 = vadd.f32 %v1830, %v1831
      %v1833 = vsel %vm403, %v1582, 0.0
      %v1834 = vadd.f32 %v1832, %v1833
      %v1835 = vsel %vm403, %v1583, 0.0
      %v1836 = vadd.f32 %v1834, %v1835
      %v1837 = vsel %vm403, %v1584, 0.0
      %v1838 = vadd.f32 %v1836, %v1837
      %v1839 = vsel %vm403, %v1585, 0.0
      %v1840 = vadd.f32 %v1838, %v1839
      %v1841 = vrot.slane %v1840, 4
      %v1842 = vadd.f32 %v1840, %v1841
      %v1843 = vrot.slane %v1842, 2
      %v1844 = vadd.f32 %v1842, %v1843
      %v1845 = vrot.slane %v1844, 1
      %v1846 = vadd.f32 %v1844, %v1845
      %v1847 = vadd.f32 %v1457, %v1846
      %1848 = vst.msk [vmem:[%s208 + $0x1] sm:$0x1] %vm1455, %v1847
      %s1849 = sadd.s32 %s19, %s20
      %s1850 = smul.u32 128, %s1849
      %p1851 = scmp.lt.s32.totalorder %s1850, 255
      %s1852 = scalar_select %p1851, %s1850, 255
      %s1853 = smul.addr %s1852, 4
      %s1854 = scalar_lea.vmem %s2, %s1853
      %p1855 = scmp.lt.s32.totalorder %s19, 1
      %s1856 = scalar_select %p1855, %s19, 1
      %s1857 = smul.addr %s1856, 2
      %s1858 = scalar_lea.vmem %s3, %s1857
      // Predicated region
      $region33: #{decoder_bottleneck_forward.4} parent=27 // pred_check
        %p1859 = pneg %p96
      $region34: #{decoder_bottleneck_forward.4} parent=27 // pred_check_branch
        %1861 = sbr.rel (%p1859) target = $region36
      $region35: #{decoder_bottleneck_forward.4} parent=27 // pred_region
        %s1862 = sadd.s32 %s19, %s20
        %s1863 = smul.u32 128, %s1862
      $region36: #{decoder_bottleneck_forward.4} parent=27 // pred_fallthru
        _
      // Predicated region
      $region37: #{decoder_bottleneck_forward.4} parent=27 // pred_check
        %p1864 = pneg %p122
      $region38: #{decoder_bottleneck_forward.4} parent=27 // pred_check_branch
        %1866 = sbr.rel (%p1864) target = $region40
      $region39: #{decoder_bottleneck_forward.4} parent=27 // pred_region
        _
      $region40: #{decoder_bottleneck_forward.4} parent=27 // pred_fallthru
        _
    $region28: #{decoder_bottleneck_forward.4} parent=5 // pred_fallthru
      _
    %p1867 = scmp.le.s32.totalorder 2, %s10
    // Predicated region
    $region41: #{decoder_bottleneck_forward.4} parent=5 // pred_check
      %p1868 = pneg %p1867
    $region42: #{decoder_bottleneck_forward.4} parent=5 // pred_check_branch
      %1870 = sbr.rel (%p1868) target = $region44
    $region43: #{decoder_bottleneck_forward.4} parent=5 // pred_region
      %s1871 = ssub.s32 %s10, 2
      // Predicated region
      $region45: #{decoder_bottleneck_forward.4} parent=43 // pred_check
        %p1872 = pneg %p102
      $region46: #{decoder_bottleneck_forward.4} parent=43 // pred_check_branch
        %1874 = sbr.rel (%p1872) target = $region48
      $region47: #{decoder_bottleneck_forward.4} parent=43 // pred_region
        %s1875 = sadd.s32 %s21, %s22
        %s1876 = smul.u32 128, %s1875
        %p1877 = scmp.lt.s32.totalorder %s1876, 255
        %s1878 = scalar_select %p1877, %s1876, 255
        %s1879 = smul.addr %s1878, 4
        %s1880 = scalar_lea.vmem %s2, %s1879
      $region48: #{decoder_bottleneck_forward.4} parent=43 // pred_fallthru
        _
      // Predicated region
      $region49: #{decoder_bottleneck_forward.4} parent=43 // pred_check
        %p1881 = pneg %p128
      $region50: #{decoder_bottleneck_forward.4} parent=43 // pred_check_branch
        %1883 = sbr.rel (%p1881) target = $region52
      $region51: #{decoder_bottleneck_forward.4} parent=43 // pred_region
        %p1884 = scmp.lt.s32.totalorder %s21, 1
        %s1885 = scalar_select %p1884, %s21, 1
        %s1886 = smul.addr %s1885, 2
        %s1887 = scalar_lea.vmem %s3, %s1886
      $region52: #{decoder_bottleneck_forward.4} parent=43 // pred_fallthru
        _
    $region44: #{decoder_bottleneck_forward.4} parent=5 // pred_fallthru
      _
  $region6: #{decoder_bottleneck_forward.4} parent=0 // loop_footer
    %s14 = sadd.s32 1, %s10
  $region7: #{decoder_bottleneck_forward.4} parent=0 // loop_footer_branch
    %9 = sbr.rel target = $region3
  $region8: #{decoder_bottleneck_forward.4} parent=0 // loop_exit
    _

// kernel: decoder_bottleneck_forward.6
$region0: #{decoder_bottleneck_forward.6}
  #allocation0 [shape = 'u32[]', space=smem, size = 0x4, offset = 0x4, fixed_abs, tag = 'smem constant byte address 0x4 - core index']
  #allocation1 [shape = 'u32[72,128]{1,0:T(1,128)}', space=vmem, size = 0x9000, scoped, tag = 'internal scratch']
  %s0 = inlined_call_operand.vmem [shape: bf16[8192,4], index: 0, kind: input, shape index: {}]
  %s1 = inlined_call_operand.vmem [shape: f32[1,4], index: 1, kind: input, shape index: {}]
  %s2 = inlined_call_operand.vmem [shape: f32[1,4], index: 2, kind: input, shape index: {}]
  %s3 = inlined_call_operand.vmem [shape: bf16[4,8], index: 3, kind: input, shape index: {}]
  %s4 = inlined_call_operand.vmem [shape: bf16[8192,8], index: 4, kind: output, shape index: {0}]
  %s5 = inlined_call_operand.vmem [shape: f32[8,2,8], index: 5, kind: output, shape index: {1}]
  %6 = xla_tuple %s4, %s5
  %s7 = sld [smem:[#allocation0]]
  $region61: #{decoder_bottleneck_forward.6} parent=0
    _
  %s9 = ssub.s32 1, %s7
  %s10 = scalar_select 0, %s9, %s7
  loop: start=0, step=1, limit=10
  $region2: #{decoder_bottleneck_forward.6} parent=0 // loop_pre_header
    _
  $region3: #{decoder_bottleneck_forward.6} parent=0 // loop_header
    %s12 = sphi 0, %s16
    %p13 = scmp.ge.s32.totalorder %s12, 10
    %s19 = sphi 0, %s31
    %s20 = sphi 0, %s27
    %s21 = sphi 0, %s19
    %s22 = sphi 0, %s20
    %s23 = sphi 0, %s21
    %s24 = sphi 0, %s22
    %s36 = sphi 0, %s38
    %s39 = sphi 0, %s36
    %s40 = sphi 0, %s39
    %s56 = sphi 0, %s40
    %s60 = sphi 0, %s60
    %s62 = sphi 0, %s60
    %s63 = sphi 0, %s62
    %s77 = sphi 0, %s63
    %s81 = sphi 0, %s81
    %s83 = sphi 0, %s81
    %s84 = sphi 0, %s83
    %s98 = sphi 0, %s84
    %s102 = sphi 0, %s102
    %s104 = sphi 0, %s102
    %s105 = sphi 0, %s104
    %s119 = sphi 0, %s105
    %s127 = sphi 0, %s129
    %s130 = sphi 0, %s127
    %s131 = sphi 0, %s130
    %s147 = sphi 0, %s131
    %s153 = sphi 0, %s155
    %s156 = sphi 0, %s153
    %s157 = sphi 0, %s156
    %s173 = sphi 0, %s157
  $region4: #{decoder_bottleneck_forward.6} parent=0 // loop_header_branch
    %15 = sbr.rel (%p13) target = $region8
  $region5: #{decoder_bottleneck_forward.6} parent=0 // loop_body
    %s17 = ssub.s32 %s12, 1
    %s18 = ssub.s32 %s12, 2
    %s25 = sadd.s32 1, %s20
    %p26 = scmp.ge.s32.totalorder %s25, 1
    %s27 = scalar_select %p26, 0, %s25
    %s28 = sadd.s32 1, %s19
    %s29 = scalar_select %p26, %s28, %s19
    %p30 = scmp.ge.s32.totalorder %s29, 8
    %s31 = scalar_select %p30, 0, %s29
    %s32 = sadd.s32 %s19, %s20
    %s33 = sadd.s32 %s31, %s27
    %s34 = ssub.s32 %s32, %s33
    %p35 = scmp.eq.s32.totalorder %s34, 0
    %s37 = sadd.s32 %s36, 1
    %s38 = scalar_select %p35, %s36, %s37
    %p41 = pneg %p35
    %p42 = scmp.eq.s32.totalorder %s12, 7
    %p43 = por %p41, %p42
    %p44 = scmp.ne.s32.totalorder %s36, %s39
    %p45 = scmp.eq.s32.totalorder %s12, 0
    %p46 = por %p44, %p45
    %p47 = scmp.ne.s32.totalorder %s36, %s39
    %p48 = scmp.eq.s32.totalorder %s17, 7
    %p49 = por %p47, %p48
    %p50 = scmp.ne.s32.totalorder %s39, %s40
    %p51 = scmp.eq.s32.totalorder %s17, 0
    %p52 = por %p50, %p51
    %p53 = scmp.ne.s32.totalorder %s39, %s40
    %p54 = scmp.eq.s32.totalorder %s18, 7
    %p55 = por %p53, %p54
    %p57 = scmp.ne.s32.totalorder %s40, %s56
    %p58 = scmp.eq.s32.totalorder %s18, 0
    %p59 = por %p57, %p58
    %s61 = sadd.s32 %s60, 1
    %p64 = scmp.eq.s32.totalorder %s12, 7
    %p65 = scmp.ne.s32.totalorder %s60, %s62
    %p66 = scmp.eq.s32.totalorder %s12, 0
    %p67 = por %p65, %p66
    %p68 = scmp.ne.s32.totalorder %s60, %s62
    %p69 = scmp.eq.s32.totalorder %s17, 7
    %p70 = por %p68, %p69
    %p71 = scmp.ne.s32.totalorder %s62, %s63
    %p72 = scmp.eq.s32.totalorder %s17, 0
    %p73 = por %p71, %p72
    %p74 = scmp.ne.s32.totalorder %s62, %s63
    %p75 = scmp.eq.s32.totalorder %s18, 7
    %p76 = por %p74, %p75
    %p78 = scmp.ne.s32.totalorder %s63, %s77
    %p79 = scmp.eq.s32.totalorder %s18, 0
    %p80 = por %p78, %p79
    %s82 = sadd.s32 %s81, 1
    %p85 = scmp.eq.s32.totalorder %s12, 7
    %p86 = scmp.ne.s32.totalorder %s81, %s83
    %p87 = scmp.eq.s32.totalorder %s12, 0
    %p88 = por %p86, %p87
    %p89 = scmp.ne.s32.totalorder %s81, %s83
    %p90 = scmp.eq.s32.totalorder %s17, 7
    %p91 = por %p89, %p90
    %p92 = scmp.ne.s32.totalorder %s83, %s84
    %p93 = scmp.eq.s32.totalorder %s17, 0
    %p94 = por %p92, %p93
    %p95 = scmp.ne.s32.totalorder %s83, %s84
    %p96 = scmp.eq.s32.totalorder %s18, 7
    %p97 = por %p95, %p96
    %p99 = scmp.ne.s32.totalorder %s84, %s98
    %p100 = scmp.eq.s32.totalorder %s18, 0
    %p101 = por %p99, %p100
    %s103 = sadd.s32 %s102, 1
    %p106 = scmp.eq.s32.totalorder %s12, 7
    %p107 = scmp.ne.s32.totalorder %s102, %s104
    %p108 = scmp.eq.s32.totalorder %s12, 0
    %p109 = por %p107, %p108
    %p110 = scmp.ne.s32.totalorder %s102, %s104
    %p111 = scmp.eq.s32.totalorder %s17, 7
    %p112 = por %p110, %p111
    %p113 = scmp.ne.s32.totalorder %s104, %s105
    %p114 = scmp.eq.s32.totalorder %s17, 0
    %p115 = por %p113, %p114
    %p116 = scmp.ne.s32.totalorder %s104, %s105
    %p117 = scmp.eq.s32.totalorder %s18, 7
    %p118 = por %p116, %p117
    %p120 = scmp.ne.s32.totalorder %s105, %s119
    %p121 = scmp.eq.s32.totalorder %s18, 0
    %p122 = por %p120, %p121
    %s123 = sadd.s32 %s19, %s20
    %s124 = sadd.s32 %s31, %s27
    %s125 = ssub.s32 %s123, %s124
    %p126 = scmp.eq.s32.totalorder %s125, 0
    %s128 = sadd.s32 %s127, 1
    %s129 = scalar_select %p126, %s127, %s128
    %p132 = pneg %p126
    %p133 = scmp.eq.s32.totalorder %s12, 7
    %p134 = por %p132, %p133
    %p135 = scmp.ne.s32.totalorder %s127, %s130
    %p136 = scmp.eq.s32.totalorder %s12, 0
    %p137 = por %p135, %p136
    %p138 = scmp.ne.s32.totalorder %s127, %s130
    %p139 = scmp.eq.s32.totalorder %s17, 7
    %p140 = por %p138, %p139
    %p141 = scmp.ne.s32.totalorder %s130, %s131
    %p142 = scmp.eq.s32.totalorder %s17, 0
    %p143 = por %p141, %p142
    %p144 = scmp.ne.s32.totalorder %s130, %s131
    %p145 = scmp.eq.s32.totalorder %s18, 7
    %p146 = por %p144, %p145
    %p148 = scmp.ne.s32.totalorder %s131, %s147
    %p149 = scmp.eq.s32.totalorder %s18, 0
    %p150 = por %p148, %p149
    %s151 = ssub.s32 %s19, %s31
    %p152 = scmp.eq.s32.totalorder %s151, 0
    %s154 = sadd.s32 %s153, 1
    %s155 = scalar_select %p152, %s153, %s154
    %p158 = pneg %p152
    %p159 = scmp.eq.s32.totalorder %s12, 7
    %p160 = por %p158, %p159
    %p161 = scmp.ne.s32.totalorder %s153, %s156
    %p162 = scmp.eq.s32.totalorder %s12, 0
    %p163 = por %p161, %p162
    %p164 = scmp.ne.s32.totalorder %s153, %s156
    %p165 = scmp.eq.s32.totalorder %s17, 7
    %p166 = por %p164, %p165
    %p167 = scmp.ne.s32.totalorder %s156, %s157
    %p168 = scmp.eq.s32.totalorder %s17, 0
    %p169 = por %p167, %p168
    %p170 = scmp.ne.s32.totalorder %s156, %s157
    %p171 = scmp.eq.s32.totalorder %s18, 7
    %p172 = por %p170, %p171
    %p174 = scmp.ne.s32.totalorder %s157, %s173
    %p175 = scmp.eq.s32.totalorder %s18, 0
    %p176 = por %p174, %p175
    %p177 = scmp.le.s32.totalorder 1, %s12
    %p178 = scmp.lt.s32.totalorder %s12, 9
    %p179 = pnand %p177, %p178
    %p180 = pneg %p179
    // Predicated region
    $region9: #{decoder_bottleneck_forward.6} parent=5 // pred_check
      _
    $region10: #{decoder_bottleneck_forward.6} parent=5 // pred_check_branch
      %182 = sbr.rel (%p179) target = $region12
    $region11: #{decoder_bottleneck_forward.6} parent=5 // pred_region
      %s183 = ssub.s32 %s12, 1
      // Predicated region
      $region13: #{decoder_bottleneck_forward.6} parent=11 // pred_check
        %p184 = pneg %p73
      $region14: #{decoder_bottleneck_forward.6} parent=11 // pred_check_branch
        %186 = sbr.rel (%p184) target = $region16
      $region15: #{decoder_bottleneck_forward.6} parent=11 // pred_region
        _
      $region16: #{decoder_bottleneck_forward.6} parent=11 // pred_fallthru
        _
      // Predicated region
      $region17: #{decoder_bottleneck_forward.6} parent=11 // pred_check
        %p187 = pneg %p94
      $region18: #{decoder_bottleneck_forward.6} parent=11 // pred_check_branch
        %189 = sbr.rel (%p187) target = $region20
      $region19: #{decoder_bottleneck_forward.6} parent=11 // pred_region
        _
      $region20: #{decoder_bottleneck_forward.6} parent=11 // pred_fallthru
        _
      // Predicated region
      $region21: #{decoder_bottleneck_forward.6} parent=11 // pred_check
        %p190 = pneg %p115
      $region22: #{decoder_bottleneck_forward.6} parent=11 // pred_check_branch
        %192 = sbr.rel (%p190) target = $region24
      $region23: #{decoder_bottleneck_forward.6} parent=11 // pred_region
        _
      $region24: #{decoder_bottleneck_forward.6} parent=11 // pred_fallthru
        _
    $region12: #{decoder_bottleneck_forward.6} parent=5 // pred_fallthru
      _
    %p193 = scmp.lt.s32.totalorder %s12, 8
    // Predicated region
    $region25: #{decoder_bottleneck_forward.6} parent=5 // pred_check
      %p194 = pneg %p193
    $region26: #{decoder_bottleneck_forward.6} parent=5 // pred_check_branch
      %196 = sbr.rel (%p194) target = $region28
    $region27: #{decoder_bottleneck_forward.6} parent=5 // pred_region
      // Predicated region
      $region29: #{decoder_bottleneck_forward.6} parent=27 // pred_check
        %p197 = pneg %p46
      $region30: #{decoder_bottleneck_forward.6} parent=27 // pred_check_branch
        %199 = sbr.rel (%p197) target = $region32
      $region31: #{decoder_bottleneck_forward.6} parent=27 // pred_region
        %s200 = sadd.s32 %s19, %s20
        %s201 = smul.u32 128, %s200
        %p202 = scmp.lt.s32.totalorder %s201, 1023
        %s203 = scalar_select %p202, %s201, 1023
        %s204 = smul.addr %s203, 4
        %s205 = scalar_lea.vmem %s0, %s204
        %s206 = sadd.s32 %s19, %s20
        %s207 = smul.u32 128, %s206
      $region32: #{decoder_bottleneck_forward.6} parent=27 // pred_fallthru
        _
    $region28: #{decoder_bottleneck_forward.6} parent=5 // pred_fallthru
      _
    %p208 = scmp.le.s32.totalorder 1, %s12
    %p209 = scmp.lt.s32.totalorder %s12, 9
    %p210 = pnand %p208, %p209
    %p211 = pneg %p210
    // Predicated region
    $region33: #{decoder_bottleneck_forward.6} parent=5 // pred_check
      _
    $region34: #{decoder_bottleneck_forward.6} parent=5 // pred_check_branch
      %213 = sbr.rel (%p210) target = $region36
    $region35: #{decoder_bottleneck_forward.6} parent=5 // pred_region
      %s214 = ssub.s32 %s12, 1
      %s215 = sadd.s32 %s21, %s22
      %s216 = smul.u32 128, %s215
      %p217 = scmp.lt.s32.totalorder %s216, 1023
      %s218 = scalar_select %p217, %s216, 1023
      %s219 = smul.addr %s218, 4
      %s220 = scalar_lea.vmem %s0, %s219
      %p221 = pneg %p52
      %p222 = pneg %p49
      %p223 = pneg %p73
      %p224 = pneg %p70
      %p225 = pneg %p94
      %p226 = pneg %p91
      %p227 = pneg %p115
      %p228 = pneg %p112
      %p229 = pneg %p143
      %p230 = pneg %p140
      %s231 = sadd.s32 %s21, %s22
      %s232 = smul.u32 128, %s231
      %p233 = scmp.lt.s32.totalorder %s232, 1023
      %s234 = scalar_select %p233, %s232, 1023
      %s235 = smul.addr %s234, 4
      %s236 = scalar_lea.vmem %s4, %s235
      %p237 = pneg %p169
      %p238 = pneg %p166
      %p239 = scmp.lt.s32.totalorder %s21, 7
      %s240 = scalar_select %p239, %s21, 7
      %s241 = smul.addr %s240, 2
      %s242 = scalar_lea.vmem %s5, %s241
      %s243 = sadd.s32 %s21, %s22
      %s244 = smul.u32 128, %s243
      %p245 = scmp.lt.s32.totalorder %s244, 1023
      %s246 = scalar_select %p245, %s244, 1023
      %s247 = smul.addr %s246, 4
      %s248 = scalar_lea.vmem %s0, %s247
      %s249 = sadd.s32 %s21, %s22
      %s250 = smul.u32 128, %s249
      %s251 = sadd.s32 %s21, %s22
      %s252 = smul.u32 128, %s251
      %p253 = scmp.lt.s32.totalorder %s252, 1023
      %s254 = scalar_select %p253, %s252, 1023
      %s255 = smul.addr %s254, 4
      %s256 = scalar_lea.vmem %s4, %s255
      %s257 = sadd.s32 %s21, %s22
      %s258 = smul.u32 128, %s257
      %p259 = scmp.lt.s32.totalorder %s21, 7
      %s260 = scalar_select %p259, %s21, 7
      %s261 = smul.addr %s260, 2
      %s262 = scalar_lea.vmem %s5, %s261
      %v264 = vld [vmem:[%s248] sm:$0xf]
      %v265 = vld [vmem:[%s248 + $0x4] sm:$0xf]
      %v266 = vld [vmem:[%s248 + $0x8] sm:$0xf]
      %v267 = vld [vmem:[%s248 + $0xc] sm:$0xf]
      %v268 = vld [vmem:[%s248 + $0x10] sm:$0xf]
      %v269 = vld [vmem:[%s248 + $0x14] sm:$0xf]
      %v270 = vld [vmem:[%s248 + $0x18] sm:$0xf]
      %v271 = vld [vmem:[%s248 + $0x1c] sm:$0xf]
      %v272 = vld [vmem:[%s248 + $0x20] sm:$0xf]
      %v273 = vld [vmem:[%s248 + $0x24] sm:$0xf]
      %v274 = vld [vmem:[%s248 + $0x28] sm:$0xf]
      %v275 = vld [vmem:[%s248 + $0x2c] sm:$0xf]
      %v276 = vld [vmem:[%s248 + $0x30] sm:$0xf]
      %v277 = vld [vmem:[%s248 + $0x34] sm:$0xf]
      %v278 = vld [vmem:[%s248 + $0x38] sm:$0xf]
      %v279 = vld [vmem:[%s248 + $0x3c] sm:$0xf]
      %v280 = vld [vmem:[%s248 + $0x40] sm:$0xf]
      %v281 = vld [vmem:[%s248 + $0x44] sm:$0xf]
      %v282 = vld [vmem:[%s248 + $0x48] sm:$0xf]
      %v283 = vld [vmem:[%s248 + $0x4c] sm:$0xf]
      %v284 = vld [vmem:[%s248 + $0x50] sm:$0xf]
      %v285 = vld [vmem:[%s248 + $0x54] sm:$0xf]
      %v286 = vld [vmem:[%s248 + $0x58] sm:$0xf]
      %v287 = vld [vmem:[%s248 + $0x5c] sm:$0xf]
      %v288 = vld [vmem:[%s248 + $0x60] sm:$0xf]
      %v289 = vld [vmem:[%s248 + $0x64] sm:$0xf]
      %v290 = vld [vmem:[%s248 + $0x68] sm:$0xf]
      %v291 = vld [vmem:[%s248 + $0x6c] sm:$0xf]
      %v292 = vld [vmem:[%s248 + $0x70] sm:$0xf]
      %v293 = vld [vmem:[%s248 + $0x74] sm:$0xf]
      %v294 = vld [vmem:[%s248 + $0x78] sm:$0xf]
      %v295 = vld [vmem:[%s248 + $0x7c] sm:$0xf]
      %v296 = vld [vmem:[%s248 + $0x80] sm:$0xf]
      %v297 = vld [vmem:[%s248 + $0x84] sm:$0xf]
      %v298 = vld [vmem:[%s248 + $0x88] sm:$0xf]
      %v299 = vld [vmem:[%s248 + $0x8c] sm:$0xf]
      %v300 = vld [vmem:[%s248 + $0x90] sm:$0xf]
      %v301 = vld [vmem:[%s248 + $0x94] sm:$0xf]
      %v302 = vld [vmem:[%s248 + $0x98] sm:$0xf]
      %v303 = vld [vmem:[%s248 + $0x9c] sm:$0xf]
      %v304 = vld [vmem:[%s248 + $0xa0] sm:$0xf]
      %v305 = vld [vmem:[%s248 + $0xa4] sm:$0xf]
      %v306 = vld [vmem:[%s248 + $0xa8] sm:$0xf]
      %v307 = vld [vmem:[%s248 + $0xac] sm:$0xf]
      %v308 = vld [vmem:[%s248 + $0xb0] sm:$0xf]
      %v309 = vld [vmem:[%s248 + $0xb4] sm:$0xf]
      %v310 = vld [vmem:[%s248 + $0xb8] sm:$0xf]
      %v311 = vld [vmem:[%s248 + $0xbc] sm:$0xf]
      %v312 = vld [vmem:[%s248 + $0xc0] sm:$0xf]
      %v313 = vld [vmem:[%s248 + $0xc4] sm:$0xf]
      %v314 = vld [vmem:[%s248 + $0xc8] sm:$0xf]
      %v315 = vld [vmem:[%s248 + $0xcc] sm:$0xf]
      %v316 = vld [vmem:[%s248 + $0xd0] sm:$0xf]
      %v317 = vld [vmem:[%s248 + $0xd4] sm:$0xf]
      %v318 = vld [vmem:[%s248 + $0xd8] sm:$0xf]
      %v319 = vld [vmem:[%s248 + $0xdc] sm:$0xf]
      %v320 = vld [vmem:[%s248 + $0xe0] sm:$0xf]
      %v321 = vld [vmem:[%s248 + $0xe4] sm:$0xf]
      %v322 = vld [vmem:[%s248 + $0xe8] sm:$0xf]
      %v323 = vld [vmem:[%s248 + $0xec] sm:$0xf]
      %v324 = vld [vmem:[%s248 + $0xf0] sm:$0xf]
      %v325 = vld [vmem:[%s248 + $0xf4] sm:$0xf]
      %v326 = vld [vmem:[%s248 + $0xf8] sm:$0xf]
      %v327 = vld [vmem:[%s248 + $0xfc] sm:$0xf]
      %v328 = vld [vmem:[%s248 + $0x100] sm:$0xf]
      %v329 = vld [vmem:[%s248 + $0x104] sm:$0xf]
      %v330 = vld [vmem:[%s248 + $0x108] sm:$0xf]
      %v331 = vld [vmem:[%s248 + $0x10c] sm:$0xf]
      %v332 = vld [vmem:[%s248 + $0x110] sm:$0xf]
      %v333 = vld [vmem:[%s248 + $0x114] sm:$0xf]
      %v334 = vld [vmem:[%s248 + $0x118] sm:$0xf]
      %v335 = vld [vmem:[%s248 + $0x11c] sm:$0xf]
      %v336 = vld [vmem:[%s248 + $0x120] sm:$0xf]
      %v337 = vld [vmem:[%s248 + $0x124] sm:$0xf]
      %v338 = vld [vmem:[%s248 + $0x128] sm:$0xf]
      %v339 = vld [vmem:[%s248 + $0x12c] sm:$0xf]
      %v340 = vld [vmem:[%s248 + $0x130] sm:$0xf]
      %v341 = vld [vmem:[%s248 + $0x134] sm:$0xf]
      %v342 = vld [vmem:[%s248 + $0x138] sm:$0xf]
      %v343 = vld [vmem:[%s248 + $0x13c] sm:$0xf]
      %v344 = vld [vmem:[%s248 + $0x140] sm:$0xf]
      %v345 = vld [vmem:[%s248 + $0x144] sm:$0xf]
      %v346 = vld [vmem:[%s248 + $0x148] sm:$0xf]
      %v347 = vld [vmem:[%s248 + $0x14c] sm:$0xf]
      %v348 = vld [vmem:[%s248 + $0x150] sm:$0xf]
      %v349 = vld [vmem:[%s248 + $0x154] sm:$0xf]
      %v350 = vld [vmem:[%s248 + $0x158] sm:$0xf]
      %v351 = vld [vmem:[%s248 + $0x15c] sm:$0xf]
      %v352 = vld [vmem:[%s248 + $0x160] sm:$0xf]
      %v353 = vld [vmem:[%s248 + $0x164] sm:$0xf]
      %v354 = vld [vmem:[%s248 + $0x168] sm:$0xf]
      %v355 = vld [vmem:[%s248 + $0x16c] sm:$0xf]
      %v356 = vld [vmem:[%s248 + $0x170] sm:$0xf]
      %v357 = vld [vmem:[%s248 + $0x174] sm:$0xf]
      %v358 = vld [vmem:[%s248 + $0x178] sm:$0xf]
      %v359 = vld [vmem:[%s248 + $0x17c] sm:$0xf]
      %v360 = vld [vmem:[%s248 + $0x180] sm:$0xf]
      %v361 = vld [vmem:[%s248 + $0x184] sm:$0xf]
      %v362 = vld [vmem:[%s248 + $0x188] sm:$0xf]
      %v363 = vld [vmem:[%s248 + $0x18c] sm:$0xf]
      %v364 = vld [vmem:[%s248 + $0x190] sm:$0xf]
      %v365 = vld [vmem:[%s248 + $0x194] sm:$0xf]
      %v366 = vld [vmem:[%s248 + $0x198] sm:$0xf]
      %v367 = vld [vmem:[%s248 + $0x19c] sm:$0xf]
      %v368 = vld [vmem:[%s248 + $0x1a0] sm:$0xf]
      %v369 = vld [vmem:[%s248 + $0x1a4] sm:$0xf]
      %v370 = vld [vmem:[%s248 + $0x1a8] sm:$0xf]
      %v371 = vld [vmem:[%s248 + $0x1ac] sm:$0xf]
      %v372 = vld [vmem:[%s248 + $0x1b0] sm:$0xf]
      %v373 = vld [vmem:[%s248 + $0x1b4] sm:$0xf]
      %v374 = vld [vmem:[%s248 + $0x1b8] sm:$0xf]
      %v375 = vld [vmem:[%s248 + $0x1bc] sm:$0xf]
      %v376 = vld [vmem:[%s248 + $0x1c0] sm:$0xf]
      %v377 = vld [vmem:[%s248 + $0x1c4] sm:$0xf]
      %v378 = vld [vmem:[%s248 + $0x1c8] sm:$0xf]
      %v379 = vld [vmem:[%s248 + $0x1cc] sm:$0xf]
      %v380 = vld [vmem:[%s248 + $0x1d0] sm:$0xf]
      %v381 = vld [vmem:[%s248 + $0x1d4] sm:$0xf]
      %v382 = vld [vmem:[%s248 + $0x1d8] sm:$0xf]
      %v383 = vld [vmem:[%s248 + $0x1dc] sm:$0xf]
      %v384 = vld [vmem:[%s248 + $0x1e0] sm:$0xf]
      %v385 = vld [vmem:[%s248 + $0x1e4] sm:$0xf]
      %v386 = vld [vmem:[%s248 + $0x1e8] sm:$0xf]
      %v387 = vld [vmem:[%s248 + $0x1ec] sm:$0xf]
      %v388 = vld [vmem:[%s248 + $0x1f0] sm:$0xf]
      %v389 = vld [vmem:[%s248 + $0x1f4] sm:$0xf]
      %v390 = vld [vmem:[%s248 + $0x1f8] sm:$0xf]
      %v391 = vld [vmem:[%s248 + $0x1fc] sm:$0xf]
      %v392 = vunpack.c.l.bf16 %v264
      %v393 = vunpack.c.l.bf16 %v265
      %v394 = vunpack.c.l.bf16 %v266
      %v395 = vunpack.c.l.bf16 %v267
      %v396 = vunpack.c.l.bf16 %v268
      %v397 = vunpack.c.l.bf16 %v269
      %v398 = vunpack.c.l.bf16 %v270
      %v399 = vunpack.c.l.bf16 %v271
      %v400 = vunpack.c.l.bf16 %v272
      %v401 = vunpack.c.l.bf16 %v273
      %v402 = vunpack.c.l.bf16 %v274
      %v403 = vunpack.c.l.bf16 %v275
      %v404 = vunpack.c.l.bf16 %v276
      %v405 = vunpack.c.l.bf16 %v277
      %v406 = vunpack.c.l.bf16 %v278
      %v407 = vunpack.c.l.bf16 %v279
      %v408 = vunpack.c.l.bf16 %v280
      %v409 = vunpack.c.l.bf16 %v281
      %v410 = vunpack.c.l.bf16 %v282
      %v411 = vunpack.c.l.bf16 %v283
      %v412 = vunpack.c.l.bf16 %v284
      %v413 = vunpack.c.l.bf16 %v285
      %v414 = vunpack.c.l.bf16 %v286
      %v415 = vunpack.c.l.bf16 %v287
      %v416 = vunpack.c.l.bf16 %v288
      %v417 = vunpack.c.l.bf16 %v289
      %v418 = vunpack.c.l.bf16 %v290
      %v419 = vunpack.c.l.bf16 %v291
      %v420 = vunpack.c.l.bf16 %v292
      %v421 = vunpack.c.l.bf16 %v293
      %v422 = vunpack.c.l.bf16 %v294
      %v423 = vunpack.c.l.bf16 %v295
      %v424 = vunpack.c.l.bf16 %v296
      %v425 = vunpack.c.l.bf16 %v297
      %v426 = vunpack.c.l.bf16 %v298
      %v427 = vunpack.c.l.bf16 %v299
      %v428 = vunpack.c.l.bf16 %v300
      %v429 = vunpack.c.l.bf16 %v301
      %v430 = vunpack.c.l.bf16 %v302
      %v431 = vunpack.c.l.bf16 %v303
      %v432 = vunpack.c.l.bf16 %v304
      %v433 = vunpack.c.l.bf16 %v305
      %v434 = vunpack.c.l.bf16 %v306
      %v435 = vunpack.c.l.bf16 %v307
      %v436 = vunpack.c.l.bf16 %v308
      %v437 = vunpack.c.l.bf16 %v309
      %v438 = vunpack.c.l.bf16 %v310
      %v439 = vunpack.c.l.bf16 %v311
      %v440 = vunpack.c.l.bf16 %v312
      %v441 = vunpack.c.l.bf16 %v313
      %v442 = vunpack.c.l.bf16 %v314
      %v443 = vunpack.c.l.bf16 %v315
      %v444 = vunpack.c.l.bf16 %v316
      %v445 = vunpack.c.l.bf16 %v317
      %v446 = vunpack.c.l.bf16 %v318
      %v447 = vunpack.c.l.bf16 %v319
      %v448 = vunpack.c.l.bf16 %v320
      %v449 = vunpack.c.l.bf16 %v321
      %v450 = vunpack.c.l.bf16 %v322
      %v451 = vunpack.c.l.bf16 %v323
      %v452 = vunpack.c.l.bf16 %v324
      %v453 = vunpack.c.l.bf16 %v325
      %v454 = vunpack.c.l.bf16 %v326
      %v455 = vunpack.c.l.bf16 %v327
      %v456 = vunpack.c.l.bf16 %v328
      %v457 = vunpack.c.l.bf16 %v329
      %v458 = vunpack.c.l.bf16 %v330
      %v459 = vunpack.c.l.bf16 %v331
      %v460 = vunpack.c.l.bf16 %v332
      %v461 = vunpack.c.l.bf16 %v333
      %v462 = vunpack.c.l.bf16 %v334
      %v463 = vunpack.c.l.bf16 %v335
      %v464 = vunpack.c.l.bf16 %v336
      %v465 = vunpack.c.l.bf16 %v337
      %v466 = vunpack.c.l.bf16 %v338
      %v467 = vunpack.c.l.bf16 %v339
      %v468 = vunpack.c.l.bf16 %v340
      %v469 = vunpack.c.l.bf16 %v341
      %v470 = vunpack.c.l.bf16 %v342
      %v471 = vunpack.c.l.bf16 %v343
      %v472 = vunpack.c.l.bf16 %v344
      %v473 = vunpack.c.l.bf16 %v345
      %v474 = vunpack.c.l.bf16 %v346
      %v475 = vunpack.c.l.bf16 %v347
      %v476 = vunpack.c.l.bf16 %v348
      %v477 = vunpack.c.l.bf16 %v349
      %v478 = vunpack.c.l.bf16 %v350
      %v479 = vunpack.c.l.bf16 %v351
      %v480 = vunpack.c.l.bf16 %v352
      %v481 = vunpack.c.l.bf16 %v353
      %v482 = vunpack.c.l.bf16 %v354
      %v483 = vunpack.c.l.bf16 %v355
      %v484 = vunpack.c.l.bf16 %v356
      %v485 = vunpack.c.l.bf16 %v357
      %v486 = vunpack.c.l.bf16 %v358
      %v487 = vunpack.c.l.bf16 %v359
      %v488 = vunpack.c.l.bf16 %v360
      %v489 = vunpack.c.l.bf16 %v361
      %v490 = vunpack.c.l.bf16 %v362
      %v491 = vunpack.c.l.bf16 %v363
      %v492 = vunpack.c.l.bf16 %v364
      %v493 = vunpack.c.l.bf16 %v365
      %v494 = vunpack.c.l.bf16 %v366
      %v495 = vunpack.c.l.bf16 %v367
      %v496 = vunpack.c.l.bf16 %v368
      %v497 = vunpack.c.l.bf16 %v369
      %v498 = vunpack.c.l.bf16 %v370
      %v499 = vunpack.c.l.bf16 %v371
      %v500 = vunpack.c.l.bf16 %v372
      %v501 = vunpack.c.l.bf16 %v373
      %v502 = vunpack.c.l.bf16 %v374
      %v503 = vunpack.c.l.bf16 %v375
      %v504 = vunpack.c.l.bf16 %v376
      %v505 = vunpack.c.l.bf16 %v377
      %v506 = vunpack.c.l.bf16 %v378
      %v507 = vunpack.c.l.bf16 %v379
      %v508 = vunpack.c.l.bf16 %v380
      %v509 = vunpack.c.l.bf16 %v381
      %v510 = vunpack.c.l.bf16 %v382
      %v511 = vunpack.c.l.bf16 %v383
      %v512 = vunpack.c.l.bf16 %v384
      %v513 = vunpack.c.l.bf16 %v385
      %v514 = vunpack.c.l.bf16 %v386
      %v515 = vunpack.c.l.bf16 %v387
      %v516 = vunpack.c.l.bf16 %v388
      %v517 = vunpack.c.l.bf16 %v389
      %v518 = vunpack.c.l.bf16 %v390
      %v519 = vunpack.c.l.bf16 %v391
      %v520 = vld [vmem:[%s1] sm:$0x1]
      %v522 = vperm.slane %v520, 0
      %v524 = vmul.f32 %v392, %v522
      %v525 = vmul.f32 %v393, %v522
      %v526 = vmul.f32 %v394, %v522
      %v527 = vmul.f32 %v395, %v522
      %v528 = vmul.f32 %v396, %v522
      %v529 = vmul.f32 %v397, %v522
      %v530 = vmul.f32 %v398, %v522
      %v531 = vmul.f32 %v399, %v522
      %v532 = vmul.f32 %v400, %v522
      %v533 = vmul.f32 %v401, %v522
      %v534 = vmul.f32 %v402, %v522
      %v535 = vmul.f32 %v403, %v522
      %v536 = vmul.f32 %v404, %v522
      %v537 = vmul.f32 %v405, %v522
      %v538 = vmul.f32 %v406, %v522
      %v539 = vmul.f32 %v407, %v522
      %v540 = vmul.f32 %v408, %v522
      %v541 = vmul.f32 %v409, %v522
      %v542 = vmul.f32 %v410, %v522
      %v543 = vmul.f32 %v411, %v522
      %v544 = vmul.f32 %v412, %v522
      %v545 = vmul.f32 %v413, %v522
      %v546 = vmul.f32 %v414, %v522
      %v547 = vmul.f32 %v415, %v522
      %v548 = vmul.f32 %v416, %v522
      %v549 = vmul.f32 %v417, %v522
      %v550 = vmul.f32 %v418, %v522
      %v551 = vmul.f32 %v419, %v522
      %v552 = vmul.f32 %v420, %v522
      %v553 = vmul.f32 %v421, %v522
      %v554 = vmul.f32 %v422, %v522
      %v555 = vmul.f32 %v423, %v522
      %v556 = vmul.f32 %v424, %v522
      %v557 = vmul.f32 %v425, %v522
      %v558 = vmul.f32 %v426, %v522
      %v559 = vmul.f32 %v427, %v522
      %v560 = vmul.f32 %v428, %v522
      %v561 = vmul.f32 %v429, %v522
      %v562 = vmul.f32 %v430, %v522
      %v563 = vmul.f32 %v431, %v522
      %v564 = vmul.f32 %v432, %v522
      %v565 = vmul.f32 %v433, %v522
      %v566 = vmul.f32 %v434, %v522
      %v567 = vmul.f32 %v435, %v522
      %v568 = vmul.f32 %v436, %v522
      %v569 = vmul.f32 %v437, %v522
      %v570 = vmul.f32 %v438, %v522
      %v571 = vmul.f32 %v439, %v522
      %v572 = vmul.f32 %v440, %v522
      %v573 = vmul.f32 %v441, %v522
      %v574 = vmul.f32 %v442, %v522
      %v575 = vmul.f32 %v443, %v522
      %v576 = vmul.f32 %v444, %v522
      %v577 = vmul.f32 %v445, %v522
      %v578 = vmul.f32 %v446, %v522
      %v579 = vmul.f32 %v447, %v522
      %v580 = vmul.f32 %v448, %v522
      %v581 = vmul.f32 %v449, %v522
      %v582 = vmul.f32 %v450, %v522
      %v583 = vmul.f32 %v451, %v522
      %v584 = vmul.f32 %v452, %v522
      %v585 = vmul.f32 %v453, %v522
      %v586 = vmul.f32 %v454, %v522
      %v587 = vmul.f32 %v455, %v522
      %v588 = vmul.f32 %v456, %v522
      %v589 = vmul.f32 %v457, %v522
      %v590 = vmul.f32 %v458, %v522
      %v591 = vmul.f32 %v459, %v522
      %v592 = vmul.f32 %v460, %v522
      %v593 = vmul.f32 %v461, %v522
      %v594 = vmul.f32 %v462, %v522
      %v595 = vmul.f32 %v463, %v522
      %v596 = vmul.f32 %v464, %v522
      %v597 = vmul.f32 %v465, %v522
      %v598 = vmul.f32 %v466, %v522
      %v599 = vmul.f32 %v467, %v522
      %v600 = vmul.f32 %v468, %v522
      %v601 = vmul.f32 %v469, %v522
      %v602 = vmul.f32 %v470, %v522
      %v603 = vmul.f32 %v471, %v522
      %v604 = vmul.f32 %v472, %v522
      %v605 = vmul.f32 %v473, %v522
      %v606 = vmul.f32 %v474, %v522
      %v607 = vmul.f32 %v475, %v522
      %v608 = vmul.f32 %v476, %v522
      %v609 = vmul.f32 %v477, %v522
      %v610 = vmul.f32 %v478, %v522
      %v611 = vmul.f32 %v479, %v522
      %v612 = vmul.f32 %v480, %v522
      %v613 = vmul.f32 %v481, %v522
      %v614 = vmul.f32 %v482, %v522
      %v615 = vmul.f32 %v483, %v522
      %v616 = vmul.f32 %v484, %v522
      %v617 = vmul.f32 %v485, %v522
      %v618 = vmul.f32 %v486, %v522
      %v619 = vmul.f32 %v487, %v522
      %v620 = vmul.f32 %v488, %v522
      %v621 = vmul.f32 %v489, %v522
      %v622 = vmul.f32 %v490, %v522
      %v623 = vmul.f32 %v491, %v522
      %v624 = vmul.f32 %v492, %v522
      %v625 = vmul.f32 %v493, %v522
      %v626 = vmul.f32 %v494, %v522
      %v627 = vmul.f32 %v495, %v522
      %v628 = vmul.f32 %v496, %v522
      %v629 = vmul.f32 %v497, %v522
      %v630 = vmul.f32 %v498, %v522
      %v631 = vmul.f32 %v499, %v522
      %v632 = vmul.f32 %v500, %v522
      %v633 = vmul.f32 %v501, %v522
      %v634 = vmul.f32 %v502, %v522
      %v635 = vmul.f32 %v503, %v522
      %v636 = vmul.f32 %v504, %v522
      %v637 = vmul.f32 %v505, %v522
      %v638 = vmul.f32 %v506, %v522
      %v639 = vmul.f32 %v507, %v522
      %v640 = vmul.f32 %v508, %v522
      %v641 = vmul.f32 %v509, %v522
      %v642 = vmul.f32 %v510, %v522
      %v643 = vmul.f32 %v511, %v522
      %v644 = vmul.f32 %v512, %v522
      %v645 = vmul.f32 %v513, %v522
      %v646 = vmul.f32 %v514, %v522
      %v647 = vmul.f32 %v515, %v522
      %v648 = vmul.f32 %v516, %v522
      %v649 = vmul.f32 %v517, %v522
      %v650 = vmul.f32 %v518, %v522
      %v651 = vmul.f32 %v519, %v522
      %v652 = vld [vmem:[%s2] sm:$0x1]
      %v654 = vperm.slane %v652, 0
      %v656 = vadd.f32 %v524, %v654
      %v657 = vadd.f32 %v525, %v654
      %v658 = vadd.f32 %v526, %v654
      %v659 = vadd.f32 %v527, %v654
      %v660 = vadd.f32 %v528, %v654
      %v661 = vadd.f32 %v529, %v654
      %v662 = vadd.f32 %v530, %v654
      %v663 = vadd.f32 %v531, %v654
      %v664 = vadd.f32 %v532, %v654
      %v665 = vadd.f32 %v533, %v654
      %v666 = vadd.f32 %v534, %v654
      %v667 = vadd.f32 %v535, %v654
      %v668 = vadd.f32 %v536, %v654
      %v669 = vadd.f32 %v537, %v654
      %v670 = vadd.f32 %v538, %v654
      %v671 = vadd.f32 %v539, %v654
      %v672 = vadd.f32 %v540, %v654
      %v673 = vadd.f32 %v541, %v654
      %v674 = vadd.f32 %v542, %v654
      %v675 = vadd.f32 %v543, %v654
      %v676 = vadd.f32 %v544, %v654
      %v677 = vadd.f32 %v545, %v654
      %v678 = vadd.f32 %v546, %v654
      %v679 = vadd.f32 %v547, %v654
      %v680 = vadd.f32 %v548, %v654
      %v681 = vadd.f32 %v549, %v654
      %v682 = vadd.f32 %v550, %v654
      %v683 = vadd.f32 %v551, %v654
      %v684 = vadd.f32 %v552, %v654
      %v685 = vadd.f32 %v553, %v654
      %v686 = vadd.f32 %v554, %v654
      %v687 = vadd.f32 %v555, %v654
      %v688 = vadd.f32 %v556, %v654
      %v689 = vadd.f32 %v557, %v654
      %v690 = vadd.f32 %v558, %v654
      %v691 = vadd.f32 %v559, %v654
      %v692 = vadd.f32 %v560, %v654
      %v693 = vadd.f32 %v561, %v654
      %v694 = vadd.f32 %v562, %v654
      %v695 = vadd.f32 %v563, %v654
      %v696 = vadd.f32 %v564, %v654
      %v697 = vadd.f32 %v565, %v654
      %v698 = vadd.f32 %v566, %v654
      %v699 = vadd.f32 %v567, %v654
      %v700 = vadd.f32 %v568, %v654
      %v701 = vadd.f32 %v569, %v654
      %v702 = vadd.f32 %v570, %v654
      %v703 = vadd.f32 %v571, %v654
      %v704 = vadd.f32 %v572, %v654
      %v705 = vadd.f32 %v573, %v654
      %v706 = vadd.f32 %v574, %v654
      %v707 = vadd.f32 %v575, %v654
      %v708 = vadd.f32 %v576, %v654
      %v709 = vadd.f32 %v577, %v654
      %v710 = vadd.f32 %v578, %v654
      %v711 = vadd.f32 %v579, %v654
      %v712 = vadd.f32 %v580, %v654
      %v713 = vadd.f32 %v581, %v654
      %v714 = vadd.f32 %v582, %v654
      %v715 = vadd.f32 %v583, %v654
      %v716 = vadd.f32 %v584, %v654
      %v717 = vadd.f32 %v585, %v654
      %v718 = vadd.f32 %v586, %v654
      %v719 = vadd.f32 %v587, %v654
      %v720 = vadd.f32 %v588, %v654
      %v721 = vadd.f32 %v589, %v654
      %v722 = vadd.f32 %v590, %v654
      %v723 = vadd.f32 %v591, %v654
      %v724 = vadd.f32 %v592, %v654
      %v725 = vadd.f32 %v593, %v654
      %v726 = vadd.f32 %v594, %v654
      %v727 = vadd.f32 %v595, %v654
      %v728 = vadd.f32 %v596, %v654
      %v729 = vadd.f32 %v597, %v654
      %v730 = vadd.f32 %v598, %v654
      %v731 = vadd.f32 %v599, %v654
      %v732 = vadd.f32 %v600, %v654
      %v733 = vadd.f32 %v601, %v654
      %v734 = vadd.f32 %v602, %v654
      %v735 = vadd.f32 %v603, %v654
      %v736 = vadd.f32 %v604, %v654
      %v737 = vadd.f32 %v605, %v654
      %v738 = vadd.f32 %v606, %v654
      %v739 = vadd.f32 %v607, %v654
      %v740 = vadd.f32 %v608, %v654
      %v741 = vadd.f32 %v609, %v654
      %v742 = vadd.f32 %v610, %v654
      %v743 = vadd.f32 %v611, %v654
      %v744 = vadd.f32 %v612, %v654
      %v745 = vadd.f32 %v613, %v654
      %v746 = vadd.f32 %v614, %v654
      %v747 = vadd.f32 %v615, %v654
      %v748 = vadd.f32 %v616, %v654
      %v749 = vadd.f32 %v617, %v654
      %v750 = vadd.f32 %v618, %v654
      %v751 = vadd.f32 %v619, %v654
      %v752 = vadd.f32 %v620, %v654
      %v753 = vadd.f32 %v621, %v654
      %v754 = vadd.f32 %v622, %v654
      %v755 = vadd.f32 %v623, %v654
      %v756 = vadd.f32 %v624, %v654
      %v757 = vadd.f32 %v625, %v654
      %v758 = vadd.f32 %v626, %v654
      %v759 = vadd.f32 %v627, %v654
      %v760 = vadd.f32 %v628, %v654
      %v761 = vadd.f32 %v629, %v654
      %v762 = vadd.f32 %v630, %v654
      %v763 = vadd.f32 %v631, %v654
      %v764 = vadd.f32 %v632, %v654
      %v765 = vadd.f32 %v633, %v654
      %v766 = vadd.f32 %v634, %v654
      %v767 = vadd.f32 %v635, %v654
      %v768 = vadd.f32 %v636, %v654
      %v769 = vadd.f32 %v637, %v654
      %v770 = vadd.f32 %v638, %v654
      %v771 = vadd.f32 %v639, %v654
      %v772 = vadd.f32 %v640, %v654
      %v773 = vadd.f32 %v641, %v654
      %v774 = vadd.f32 %v642, %v654
      %v775 = vadd.f32 %v643, %v654
      %v776 = vadd.f32 %v644, %v654
      %v777 = vadd.f32 %v645, %v654
      %v778 = vadd.f32 %v646, %v654
      %v779 = vadd.f32 %v647, %v654
      %v780 = vadd.f32 %v648, %v654
      %v781 = vadd.f32 %v649, %v654
      %v782 = vadd.f32 %v650, %v654
      %v783 = vadd.f32 %v651, %v654
      %v784 = vmax.f32 %v656, 0.0
      %v785 = vmax.f32 %v657, 0.0
      %v786 = vmax.f32 %v658, 0.0
      %v787 = vmax.f32 %v659, 0.0
      %v788 = vmax.f32 %v660, 0.0
      %v789 = vmax.f32 %v661, 0.0
      %v790 = vmax.f32 %v662, 0.0
      %v791 = vmax.f32 %v663, 0.0
      %v792 = vmax.f32 %v664, 0.0
      %v793 = vmax.f32 %v665, 0.0
      %v794 = vmax.f32 %v666, 0.0
      %v795 = vmax.f32 %v667, 0.0
      %v796 = vmax.f32 %v668, 0.0
      %v797 = vmax.f32 %v669, 0.0
      %v798 = vmax.f32 %v670, 0.0
      %v799 = vmax.f32 %v671, 0.0
      %v800 = vmax.f32 %v672, 0.0
      %v801 = vmax.f32 %v673, 0.0
      %v802 = vmax.f32 %v674, 0.0
      %v803 = vmax.f32 %v675, 0.0
      %v804 = vmax.f32 %v676, 0.0
      %v805 = vmax.f32 %v677, 0.0
      %v806 = vmax.f32 %v678, 0.0
      %v807 = vmax.f32 %v679, 0.0
      %v808 = vmax.f32 %v680, 0.0
      %v809 = vmax.f32 %v681, 0.0
      %v810 = vmax.f32 %v682, 0.0
      %v811 = vmax.f32 %v683, 0.0
      %v812 = vmax.f32 %v684, 0.0
      %v813 = vmax.f32 %v685, 0.0
      %v814 = vmax.f32 %v686, 0.0
      %v815 = vmax.f32 %v687, 0.0
      %v816 = vmax.f32 %v688, 0.0
      %v817 = vmax.f32 %v689, 0.0
      %v818 = vmax.f32 %v690, 0.0
      %v819 = vmax.f32 %v691, 0.0
      %v820 = vmax.f32 %v692, 0.0
      %v821 = vmax.f32 %v693, 0.0
      %v822 = vmax.f32 %v694, 0.0
      %v823 = vmax.f32 %v695, 0.0
      %v824 = vmax.f32 %v696, 0.0
      %v825 = vmax.f32 %v697, 0.0
      %v826 = vmax.f32 %v698, 0.0
      %v827 = vmax.f32 %v699, 0.0
      %v828 = vmax.f32 %v700, 0.0
      %v829 = vmax.f32 %v701, 0.0
      %v830 = vmax.f32 %v702, 0.0
      %v831 = vmax.f32 %v703, 0.0
      %v832 = vmax.f32 %v704, 0.0
      %v833 = vmax.f32 %v705, 0.0
      %v834 = vmax.f32 %v706, 0.0
      %v835 = vmax.f32 %v707, 0.0
      %v836 = vmax.f32 %v708, 0.0
      %v837 = vmax.f32 %v709, 0.0
      %v838 = vmax.f32 %v710, 0.0
      %v839 = vmax.f32 %v711, 0.0
      %v840 = vmax.f32 %v712, 0.0
      %v841 = vmax.f32 %v713, 0.0
      %v842 = vmax.f32 %v714, 0.0
      %v843 = vmax.f32 %v715, 0.0
      %v844 = vmax.f32 %v716, 0.0
      %v845 = vmax.f32 %v717, 0.0
      %v846 = vmax.f32 %v718, 0.0
      %v847 = vmax.f32 %v719, 0.0
      %v848 = vmax.f32 %v720, 0.0
      %v849 = vmax.f32 %v721, 0.0
      %v850 = vmax.f32 %v722, 0.0
      %v851 = vmax.f32 %v723, 0.0
      %v852 = vmax.f32 %v724, 0.0
      %v853 = vmax.f32 %v725, 0.0
      %v854 = vmax.f32 %v726, 0.0
      %v855 = vmax.f32 %v727, 0.0
      %v856 = vmax.f32 %v728, 0.0
      %v857 = vmax.f32 %v729, 0.0
      %v858 = vmax.f32 %v730, 0.0
      %v859 = vmax.f32 %v731, 0.0
      %v860 = vmax.f32 %v732, 0.0
      %v861 = vmax.f32 %v733, 0.0
      %v862 = vmax.f32 %v734, 0.0
      %v863 = vmax.f32 %v735, 0.0
      %v864 = vmax.f32 %v736, 0.0
      %v865 = vmax.f32 %v737, 0.0
      %v866 = vmax.f32 %v738, 0.0
      %v867 = vmax.f32 %v739, 0.0
      %v868 = vmax.f32 %v740, 0.0
      %v869 = vmax.f32 %v741, 0.0
      %v870 = vmax.f32 %v742, 0.0
      %v871 = vmax.f32 %v743, 0.0
      %v872 = vmax.f32 %v744, 0.0
      %v873 = vmax.f32 %v745, 0.0
      %v874 = vmax.f32 %v746, 0.0
      %v875 = vmax.f32 %v747, 0.0
      %v876 = vmax.f32 %v748, 0.0
      %v877 = vmax.f32 %v749, 0.0
      %v878 = vmax.f32 %v750, 0.0
      %v879 = vmax.f32 %v751, 0.0
      %v880 = vmax.f32 %v752, 0.0
      %v881 = vmax.f32 %v753, 0.0
      %v882 = vmax.f32 %v754, 0.0
      %v883 = vmax.f32 %v755, 0.0
      %v884 = vmax.f32 %v756, 0.0
      %v885 = vmax.f32 %v757, 0.0
      %v886 = vmax.f32 %v758, 0.0
      %v887 = vmax.f32 %v759, 0.0
      %v888 = vmax.f32 %v760, 0.0
      %v889 = vmax.f32 %v761, 0.0
      %v890 = vmax.f32 %v762, 0.0
      %v891 = vmax.f32 %v763, 0.0
      %v892 = vmax.f32 %v764, 0.0
      %v893 = vmax.f32 %v765, 0.0
      %v894 = vmax.f32 %v766, 0.0
      %v895 = vmax.f32 %v767, 0.0
      %v896 = vmax.f32 %v768, 0.0
      %v897 = vmax.f32 %v769, 0.0
      %v898 = vmax.f32 %v770, 0.0
      %v899 = vmax.f32 %v771, 0.0
      %v900 = vmax.f32 %v772, 0.0
      %v901 = vmax.f32 %v773, 0.0
      %v902 = vmax.f32 %v774, 0.0
      %v903 = vmax.f32 %v775, 0.0
      %v904 = vmax.f32 %v776, 0.0
      %v905 = vmax.f32 %v777, 0.0
      %v906 = vmax.f32 %v778, 0.0
      %v907 = vmax.f32 %v779, 0.0
      %v908 = vmax.f32 %v780, 0.0
      %v909 = vmax.f32 %v781, 0.0
      %v910 = vmax.f32 %v782, 0.0
      %v911 = vmax.f32 %v783, 0.0
      %v912 = vpack.c.bf16 %v785, %v784
      %v913 = vpack.c.bf16 %v787, %v786
      %v914 = vpack.c.bf16 %v789, %v788
      %v915 = vpack.c.bf16 %v791, %v790
      %v916 = vpack.c.bf16 %v793, %v792
      %v917 = vpack.c.bf16 %v795, %v794
      %v918 = vpack.c.bf16 %v797, %v796
      %v919 = vpack.c.bf16 %v799, %v798
      %v920 = vpack.c.bf16 %v801, %v800
      %v921 = vpack.c.bf16 %v803, %v802
      %v922 = vpack.c.bf16 %v805, %v804
      %v923 = vpack.c.bf16 %v807, %v806
      %v924 = vpack.c.bf16 %v809, %v808
      %v925 = vpack.c.bf16 %v811, %v810
      %v926 = vpack.c.bf16 %v813, %v812
      %v927 = vpack.c.bf16 %v815, %v814
      %v928 = vpack.c.bf16 %v817, %v816
      %v929 = vpack.c.bf16 %v819, %v818
      %v930 = vpack.c.bf16 %v821, %v820
      %v931 = vpack.c.bf16 %v823, %v822
      %v932 = vpack.c.bf16 %v825, %v824
      %v933 = vpack.c.bf16 %v827, %v826
      %v934 = vpack.c.bf16 %v829, %v828
      %v935 = vpack.c.bf16 %v831, %v830
      %v936 = vpack.c.bf16 %v833, %v832
      %v937 = vpack.c.bf16 %v835, %v834
      %v938 = vpack.c.bf16 %v837, %v836
      %v939 = vpack.c.bf16 %v839, %v838
      %v940 = vpack.c.bf16 %v841, %v840
      %v941 = vpack.c.bf16 %v843, %v842
      %v942 = vpack.c.bf16 %v845, %v844
      %v943 = vpack.c.bf16 %v847, %v846
      %v944 = vpack.c.bf16 %v849, %v848
      %v945 = vpack.c.bf16 %v851, %v850
      %v946 = vpack.c.bf16 %v853, %v852
      %v947 = vpack.c.bf16 %v855, %v854
      %v948 = vpack.c.bf16 %v857, %v856
      %v949 = vpack.c.bf16 %v859, %v858
      %v950 = vpack.c.bf16 %v861, %v860
      %v951 = vpack.c.bf16 %v863, %v862
      %v952 = vpack.c.bf16 %v865, %v864
      %v953 = vpack.c.bf16 %v867, %v866
      %v954 = vpack.c.bf16 %v869, %v868
      %v955 = vpack.c.bf16 %v871, %v870
      %v956 = vpack.c.bf16 %v873, %v872
      %v957 = vpack.c.bf16 %v875, %v874
      %v958 = vpack.c.bf16 %v877, %v876
      %v959 = vpack.c.bf16 %v879, %v878
      %v960 = vpack.c.bf16 %v881, %v880
      %v961 = vpack.c.bf16 %v883, %v882
      %v962 = vpack.c.bf16 %v885, %v884
      %v963 = vpack.c.bf16 %v887, %v886
      %v964 = vpack.c.bf16 %v889, %v888
      %v965 = vpack.c.bf16 %v891, %v890
      %v966 = vpack.c.bf16 %v893, %v892
      %v967 = vpack.c.bf16 %v895, %v894
      %v968 = vpack.c.bf16 %v897, %v896
      %v969 = vpack.c.bf16 %v899, %v898
      %v970 = vpack.c.bf16 %v901, %v900
      %v971 = vpack.c.bf16 %v903, %v902
      %v972 = vpack.c.bf16 %v905, %v904
      %v973 = vpack.c.bf16 %v907, %v906
      %v974 = vpack.c.bf16 %v909, %v908
      %v975 = vpack.c.bf16 %v911, %v910
      %v976 = vld [vmem:[%s3] sm:$0x3]
      %vm977 = vcmask 31744
      %v979 = vsel %vm977, %v912, 0
      %v982 = vsel %vm977, %v913, 0
      %v985 = vsel %vm977, %v914, 0
      %v988 = vsel %vm977, %v915, 0
      %v991 = vsel %vm977, %v916, 0
      %v994 = vsel %vm977, %v917, 0
      %v997 = vsel %vm977, %v918, 0
      %v1000 = vsel %vm977, %v919, 0
      %v1003 = vsel %vm977, %v920, 0
      %v1006 = vsel %vm977, %v921, 0
      %v1009 = vsel %vm977, %v922, 0
      %v1012 = vsel %vm977, %v923, 0
      %v1015 = vsel %vm977, %v924, 0
      %v1018 = vsel %vm977, %v925, 0
      %v1021 = vsel %vm977, %v926, 0
      %v1024 = vsel %vm977, %v927, 0
      %v1027 = vsel %vm977, %v928, 0
      %v1030 = vsel %vm977, %v929, 0
      %v1033 = vsel %vm977, %v930, 0
      %v1036 = vsel %vm977, %v931, 0
      %v1039 = vsel %vm977, %v932, 0
      %v1042 = vsel %vm977, %v933, 0
      %v1045 = vsel %vm977, %v934, 0
      %v1048 = vsel %vm977, %v935, 0
      %v1051 = vsel %vm977, %v936, 0
      %v1054 = vsel %vm977, %v937, 0
      %v1057 = vsel %vm977, %v938, 0
      %v1060 = vsel %vm977, %v939, 0
      %v1063 = vsel %vm977, %v940, 0
      %v1066 = vsel %vm977, %v941, 0
      %v1069 = vsel %vm977, %v942, 0
      %v1072 = vsel %vm977, %v943, 0
      %v1075 = vsel %vm977, %v944, 0
      %v1078 = vsel %vm977, %v945, 0
      %v1081 = vsel %vm977, %v946, 0
      %v1084 = vsel %vm977, %v947, 0
      %v1087 = vsel %vm977, %v948, 0
      %v1090 = vsel %vm977, %v949, 0
      %v1093 = vsel %vm977, %v950, 0
      %v1096 = vsel %vm977, %v951, 0
      %v1099 = vsel %vm977, %v952, 0
      %v1102 = vsel %vm977, %v953, 0
      %v1105 = vsel %vm977, %v954, 0
      %v1108 = vsel %vm977, %v955, 0
      %v1111 = vsel %vm977, %v956, 0
      %v1114 = vsel %vm977, %v957, 0
      %v1117 = vsel %vm977, %v958, 0
      %v1120 = vsel %vm977, %v959, 0
      %v1123 = vsel %vm977, %v960, 0
      %v1126 = vsel %vm977, %v961, 0
      %v1129 = vsel %vm977, %v962, 0
      %v1132 = vsel %vm977, %v963, 0
      %v1135 = vsel %vm977, %v964, 0
      %v1138 = vsel %vm977, %v965, 0
      %v1141 = vsel %vm977, %v966, 0
      %v1144 = vsel %vm977, %v967, 0
      %v1147 = vsel %vm977, %v968, 0
      %v1150 = vsel %vm977, %v969, 0
      %v1153 = vsel %vm977, %v970, 0
      %v1156 = vsel %vm977, %v971, 0
      %v1159 = vsel %vm977, %v972, 0
      %v1162 = vsel %vm977, %v973, 0
      %v1165 = vsel %vm977, %v974, 0
      %v1168 = vsel %vm977, %v975, 0
      %vm1170 = vcmask 1041408
      %v1172 = vsel %vm1170, %v976, 0
      %1174 = vmatpush.bf16.msra.mxu0 0
      %1175 = vmatpush.bf16.msra.mxu0 0
      %1176 = vmatpush.bf16.msra.mxu0 0
      %1177 = vmatpush.bf16.msra.mxu0 0
      %1178 = vmatpush.bf16.msra.mxu0 0
      %1179 = vmatpush.bf16.msra.mxu0 0
      %1180 = vmatpush.bf16.msra.mxu0 0
      %1181 = vmatpush.bf16.msra.mxu0 %v1172
      %1182 = vmatmul.bf16.gmra.mxu0 %v979
      %v1183 = vpop.f32.mrf.mxu0
      %v1184 = vadd.f32 0.0, %v1183
      %v1185 = vpop.f32.mrf.mxu0
      %v1186 = vadd.f32 0.0, %v1185
      %1187 = vmatmul.bf16.gmra.mxu0 %v982
      %v1188 = vpop.f32.mrf.mxu0
      %v1189 = vadd.f32 0.0, %v1188
      %v1190 = vpop.f32.mrf.mxu0
      %v1191 = vadd.f32 0.0, %v1190
      %1192 = vmatmul.bf16.gmra.mxu0 %v985
      %v1193 = vpop.f32.mrf.mxu0
      %v1194 = vadd.f32 0.0, %v1193
      %v1195 = vpop.f32.mrf.mxu0
      %v1196 = vadd.f32 0.0, %v1195
      %1197 = vmatmul.bf16.gmra.mxu0 %v988
      %v1198 = vpop.f32.mrf.mxu0
      %v1199 = vadd.f32 0.0, %v1198
      %v1200 = vpop.f32.mrf.mxu0
      %v1201 = vadd.f32 0.0, %v1200
      %1202 = vmatmul.bf16.gmra.mxu0 %v991
      %v1203 = vpop.f32.mrf.mxu0
      %v1204 = vadd.f32 0.0, %v1203
      %v1205 = vpop.f32.mrf.mxu0
      %v1206 = vadd.f32 0.0, %v1205
      %1207 = vmatmul.bf16.gmra.mxu0 %v994
      %v1208 = vpop.f32.mrf.mxu0
      %v1209 = vadd.f32 0.0, %v1208
      %v1210 = vpop.f32.mrf.mxu0
      %v1211 = vadd.f32 0.0, %v1210
      %1212 = vmatmul.bf16.gmra.mxu0 %v997
      %v1213 = vpop.f32.mrf.mxu0
      %v1214 = vadd.f32 0.0, %v1213
      %v1215 = vpop.f32.mrf.mxu0
      %v1216 = vadd.f32 0.0, %v1215
      %1217 = vmatmul.bf16.gmra.mxu0 %v1000
      %v1218 = vpop.f32.mrf.mxu0
      %v1219 = vadd.f32 0.0, %v1218
      %v1220 = vpop.f32.mrf.mxu0
      %v1221 = vadd.f32 0.0, %v1220
      %1222 = vmatmul.bf16.gmra.mxu0 %v1003
      %v1223 = vpop.f32.mrf.mxu0
      %v1224 = vadd.f32 0.0, %v1223
      %v1225 = vpop.f32.mrf.mxu0
      %v1226 = vadd.f32 0.0, %v1225
      %1227 = vmatmul.bf16.gmra.mxu0 %v1006
      %v1228 = vpop.f32.mrf.mxu0
      %v1229 = vadd.f32 0.0, %v1228
      %v1230 = vpop.f32.mrf.mxu0
      %v1231 = vadd.f32 0.0, %v1230
      %1232 = vmatmul.bf16.gmra.mxu0 %v1009
      %v1233 = vpop.f32.mrf.mxu0
      %v1234 = vadd.f32 0.0, %v1233
      %v1235 = vpop.f32.mrf.mxu0
      %v1236 = vadd.f32 0.0, %v1235
      %1237 = vmatmul.bf16.gmra.mxu0 %v1012
      %v1238 = vpop.f32.mrf.mxu0
      %v1239 = vadd.f32 0.0, %v1238
      %v1240 = vpop.f32.mrf.mxu0
      %v1241 = vadd.f32 0.0, %v1240
      %1242 = vmatmul.bf16.gmra.mxu0 %v1015
      %v1243 = vpop.f32.mrf.mxu0
      %v1244 = vadd.f32 0.0, %v1243
      %v1245 = vpop.f32.mrf.mxu0
      %v1246 = vadd.f32 0.0, %v1245
      %1247 = vmatmul.bf16.gmra.mxu0 %v1018
      %v1248 = vpop.f32.mrf.mxu0
      %v1249 = vadd.f32 0.0, %v1248
      %v1250 = vpop.f32.mrf.mxu0
      %v1251 = vadd.f32 0.0, %v1250
      %1252 = vmatmul.bf16.gmra.mxu0 %v1021
      %v1253 = vpop.f32.mrf.mxu0
      %v1254 = vadd.f32 0.0, %v1253
      %v1255 = vpop.f32.mrf.mxu0
      %v1256 = vadd.f32 0.0, %v1255
      %1257 = vmatmul.bf16.gmra.mxu0 %v1024
      %v1258 = vpop.f32.mrf.mxu0
      %v1259 = vadd.f32 0.0, %v1258
      %v1260 = vpop.f32.mrf.mxu0
      %v1261 = vadd.f32 0.0, %v1260
      %1262 = vmatmul.bf16.gmra.mxu0 %v1027
      %v1263 = vpop.f32.mrf.mxu0
      %v1264 = vadd.f32 0.0, %v1263
      %v1265 = vpop.f32.mrf.mxu0
      %v1266 = vadd.f32 0.0, %v1265
      %1267 = vmatmul.bf16.gmra.mxu0 %v1030
      %v1268 = vpop.f32.mrf.mxu0
      %v1269 = vadd.f32 0.0, %v1268
      %v1270 = vpop.f32.mrf.mxu0
      %v1271 = vadd.f32 0.0, %v1270
      %1272 = vmatmul.bf16.gmra.mxu0 %v1033
      %v1273 = vpop.f32.mrf.mxu0
      %v1274 = vadd.f32 0.0, %v1273
      %v1275 = vpop.f32.mrf.mxu0
      %v1276 = vadd.f32 0.0, %v1275
      %1277 = vmatmul.bf16.gmra.mxu0 %v1036
      %v1278 = vpop.f32.mrf.mxu0
      %v1279 = vadd.f32 0.0, %v1278
      %v1280 = vpop.f32.mrf.mxu0
      %v1281 = vadd.f32 0.0, %v1280
      %1282 = vmatmul.bf16.gmra.mxu0 %v1039
      %v1283 = vpop.f32.mrf.mxu0
      %v1284 = vadd.f32 0.0, %v1283
      %v1285 = vpop.f32.mrf.mxu0
      %v1286 = vadd.f32 0.0, %v1285
      %1287 = vmatmul.bf16.gmra.mxu0 %v1042
      %v1288 = vpop.f32.mrf.mxu0
      %v1289 = vadd.f32 0.0, %v1288
      %v1290 = vpop.f32.mrf.mxu0
      %v1291 = vadd.f32 0.0, %v1290
      %1292 = vmatmul.bf16.gmra.mxu0 %v1045
      %v1293 = vpop.f32.mrf.mxu0
      %v1294 = vadd.f32 0.0, %v1293
      %v1295 = vpop.f32.mrf.mxu0
      %v1296 = vadd.f32 0.0, %v1295
      %1297 = vmatmul.bf16.gmra.mxu0 %v1048
      %v1298 = vpop.f32.mrf.mxu0
      %v1299 = vadd.f32 0.0, %v1298
      %v1300 = vpop.f32.mrf.mxu0
      %v1301 = vadd.f32 0.0, %v1300
      %1302 = vmatmul.bf16.gmra.mxu0 %v1051
      %v1303 = vpop.f32.mrf.mxu0
      %v1304 = vadd.f32 0.0, %v1303
      %v1305 = vpop.f32.mrf.mxu0
      %v1306 = vadd.f32 0.0, %v1305
      %1307 = vmatmul.bf16.gmra.mxu0 %v1054
      %v1308 = vpop.f32.mrf.mxu0
      %v1309 = vadd.f32 0.0, %v1308
      %v1310 = vpop.f32.mrf.mxu0
      %v1311 = vadd.f32 0.0, %v1310
      %1312 = vmatmul.bf16.gmra.mxu0 %v1057
      %v1313 = vpop.f32.mrf.mxu0
      %v1314 = vadd.f32 0.0, %v1313
      %v1315 = vpop.f32.mrf.mxu0
      %v1316 = vadd.f32 0.0, %v1315
      %1317 = vmatmul.bf16.gmra.mxu0 %v1060
      %v1318 = vpop.f32.mrf.mxu0
      %v1319 = vadd.f32 0.0, %v1318
      %v1320 = vpop.f32.mrf.mxu0
      %v1321 = vadd.f32 0.0, %v1320
      %1322 = vmatmul.bf16.gmra.mxu0 %v1063
      %v1323 = vpop.f32.mrf.mxu0
      %v1324 = vadd.f32 0.0, %v1323
      %v1325 = vpop.f32.mrf.mxu0
      %v1326 = vadd.f32 0.0, %v1325
      %1327 = vmatmul.bf16.gmra.mxu0 %v1066
      %v1328 = vpop.f32.mrf.mxu0
      %v1329 = vadd.f32 0.0, %v1328
      %v1330 = vpop.f32.mrf.mxu0
      %v1331 = vadd.f32 0.0, %v1330
      %1332 = vmatmul.bf16.gmra.mxu0 %v1069
      %v1333 = vpop.f32.mrf.mxu0
      %v1334 = vadd.f32 0.0, %v1333
      %v1335 = vpop.f32.mrf.mxu0
      %v1336 = vadd.f32 0.0, %v1335
      %1337 = vmatmul.bf16.gmra.mxu0 %v1072
      %v1338 = vpop.f32.mrf.mxu0
      %v1339 = vadd.f32 0.0, %v1338
      %v1340 = vpop.f32.mrf.mxu0
      %v1341 = vadd.f32 0.0, %v1340
      %1342 = vmatmul.bf16.gmra.mxu0 %v1075
      %v1343 = vpop.f32.mrf.mxu0
      %v1344 = vadd.f32 0.0, %v1343
      %v1345 = vpop.f32.mrf.mxu0
      %v1346 = vadd.f32 0.0, %v1345
      %1347 = vmatmul.bf16.gmra.mxu0 %v1078
      %v1348 = vpop.f32.mrf.mxu0
      %v1349 = vadd.f32 0.0, %v1348
      %v1350 = vpop.f32.mrf.mxu0
      %v1351 = vadd.f32 0.0, %v1350
      %1352 = vmatmul.bf16.gmra.mxu0 %v1081
      %v1353 = vpop.f32.mrf.mxu0
      %v1354 = vadd.f32 0.0, %v1353
      %v1355 = vpop.f32.mrf.mxu0
      %v1356 = vadd.f32 0.0, %v1355
      %1357 = vmatmul.bf16.gmra.mxu0 %v1084
      %v1358 = vpop.f32.mrf.mxu0
      %v1359 = vadd.f32 0.0, %v1358
      %v1360 = vpop.f32.mrf.mxu0
      %v1361 = vadd.f32 0.0, %v1360
      %1362 = vmatmul.bf16.gmra.mxu0 %v1087
      %v1363 = vpop.f32.mrf.mxu0
      %v1364 = vadd.f32 0.0, %v1363
      %v1365 = vpop.f32.mrf.mxu0
      %v1366 = vadd.f32 0.0, %v1365
      %1367 = vmatmul.bf16.gmra.mxu0 %v1090
      %v1368 = vpop.f32.mrf.mxu0
      %v1369 = vadd.f32 0.0, %v1368
      %v1370 = vpop.f32.mrf.mxu0
      %v1371 = vadd.f32 0.0, %v1370
      %1372 = vmatmul.bf16.gmra.mxu0 %v1093
      %v1373 = vpop.f32.mrf.mxu0
      %v1374 = vadd.f32 0.0, %v1373
      %v1375 = vpop.f32.mrf.mxu0
      %v1376 = vadd.f32 0.0, %v1375
      %1377 = vmatmul.bf16.gmra.mxu0 %v1096
      %v1378 = vpop.f32.mrf.mxu0
      %v1379 = vadd.f32 0.0, %v1378
      %v1380 = vpop.f32.mrf.mxu0
      %v1381 = vadd.f32 0.0, %v1380
      %1382 = vmatmul.bf16.gmra.mxu0 %v1099
      %v1383 = vpop.f32.mrf.mxu0
      %v1384 = vadd.f32 0.0, %v1383
      %v1385 = vpop.f32.mrf.mxu0
      %v1386 = vadd.f32 0.0, %v1385
      %1387 = vmatmul.bf16.gmra.mxu0 %v1102
      %v1388 = vpop.f32.mrf.mxu0
      %v1389 = vadd.f32 0.0, %v1388
      %v1390 = vpop.f32.mrf.mxu0
      %v1391 = vadd.f32 0.0, %v1390
      %1392 = vmatmul.bf16.gmra.mxu0 %v1105
      %v1393 = vpop.f32.mrf.mxu0
      %v1394 = vadd.f32 0.0, %v1393
      %v1395 = vpop.f32.mrf.mxu0
      %v1396 = vadd.f32 0.0, %v1395
      %1397 = vmatmul.bf16.gmra.mxu0 %v1108
      %v1398 = vpop.f32.mrf.mxu0
      %v1399 = vadd.f32 0.0, %v1398
      %v1400 = vpop.f32.mrf.mxu0
      %v1401 = vadd.f32 0.0, %v1400
      %1402 = vmatmul.bf16.gmra.mxu0 %v1111
      %v1403 = vpop.f32.mrf.mxu0
      %v1404 = vadd.f32 0.0, %v1403
      %v1405 = vpop.f32.mrf.mxu0
      %v1406 = vadd.f32 0.0, %v1405
      %1407 = vmatmul.bf16.gmra.mxu0 %v1114
      %v1408 = vpop.f32.mrf.mxu0
      %v1409 = vadd.f32 0.0, %v1408
      %v1410 = vpop.f32.mrf.mxu0
      %v1411 = vadd.f32 0.0, %v1410
      %1412 = vmatmul.bf16.gmra.mxu0 %v1117
      %v1413 = vpop.f32.mrf.mxu0
      %v1414 = vadd.f32 0.0, %v1413
      %v1415 = vpop.f32.mrf.mxu0
      %v1416 = vadd.f32 0.0, %v1415
      %1417 = vmatmul.bf16.gmra.mxu0 %v1120
      %v1418 = vpop.f32.mrf.mxu0
      %v1419 = vadd.f32 0.0, %v1418
      %v1420 = vpop.f32.mrf.mxu0
      %v1421 = vadd.f32 0.0, %v1420
      %1422 = vmatmul.bf16.gmra.mxu0 %v1123
      %v1423 = vpop.f32.mrf.mxu0
      %v1424 = vadd.f32 0.0, %v1423
      %v1425 = vpop.f32.mrf.mxu0
      %v1426 = vadd.f32 0.0, %v1425
      %1427 = vmatmul.bf16.gmra.mxu0 %v1126
      %v1428 = vpop.f32.mrf.mxu0
      %v1429 = vadd.f32 0.0, %v1428
      %v1430 = vpop.f32.mrf.mxu0
      %v1431 = vadd.f32 0.0, %v1430
      %1432 = vmatmul.bf16.gmra.mxu0 %v1129
      %v1433 = vpop.f32.mrf.mxu0
      %v1434 = vadd.f32 0.0, %v1433
      %v1435 = vpop.f32.mrf.mxu0
      %v1436 = vadd.f32 0.0, %v1435
      %1437 = vmatmul.bf16.gmra.mxu0 %v1132
      %v1438 = vpop.f32.mrf.mxu0
      %v1439 = vadd.f32 0.0, %v1438
      %v1440 = vpop.f32.mrf.mxu0
      %v1441 = vadd.f32 0.0, %v1440
      %1442 = vmatmul.bf16.gmra.mxu0 %v1135
      %v1443 = vpop.f32.mrf.mxu0
      %v1444 = vadd.f32 0.0, %v1443
      %v1445 = vpop.f32.mrf.mxu0
      %v1446 = vadd.f32 0.0, %v1445
      %1447 = vmatmul.bf16.gmra.mxu0 %v1138
      %v1448 = vpop.f32.mrf.mxu0
      %v1449 = vadd.f32 0.0, %v1448
      %v1450 = vpop.f32.mrf.mxu0
      %v1451 = vadd.f32 0.0, %v1450
      %1452 = vmatmul.bf16.gmra.mxu0 %v1141
      %v1453 = vpop.f32.mrf.mxu0
      %v1454 = vadd.f32 0.0, %v1453
      %v1455 = vpop.f32.mrf.mxu0
      %v1456 = vadd.f32 0.0, %v1455
      %1457 = vmatmul.bf16.gmra.mxu0 %v1144
      %v1458 = vpop.f32.mrf.mxu0
      %v1459 = vadd.f32 0.0, %v1458
      %v1460 = vpop.f32.mrf.mxu0
      %v1461 = vadd.f32 0.0, %v1460
      %1462 = vmatmul.bf16.gmra.mxu0 %v1147
      %v1463 = vpop.f32.mrf.mxu0
      %v1464 = vadd.f32 0.0, %v1463
      %v1465 = vpop.f32.mrf.mxu0
      %v1466 = vadd.f32 0.0, %v1465
      %1467 = vmatmul.bf16.gmra.mxu0 %v1150
      %v1468 = vpop.f32.mrf.mxu0
      %v1469 = vadd.f32 0.0, %v1468
      %v1470 = vpop.f32.mrf.mxu0
      %v1471 = vadd.f32 0.0, %v1470
      %1472 = vmatmul.bf16.gmra.mxu0 %v1153
      %v1473 = vpop.f32.mrf.mxu0
      %v1474 = vadd.f32 0.0, %v1473
      %v1475 = vpop.f32.mrf.mxu0
      %v1476 = vadd.f32 0.0, %v1475
      %1477 = vmatmul.bf16.gmra.mxu0 %v1156
      %v1478 = vpop.f32.mrf.mxu0
      %v1479 = vadd.f32 0.0, %v1478
      %v1480 = vpop.f32.mrf.mxu0
      %v1481 = vadd.f32 0.0, %v1480
      %1482 = vmatmul.bf16.gmra.mxu0 %v1159
      %v1483 = vpop.f32.mrf.mxu0
      %v1484 = vadd.f32 0.0, %v1483
      %v1485 = vpop.f32.mrf.mxu0
      %v1486 = vadd.f32 0.0, %v1485
      %1487 = vmatmul.bf16.gmra.mxu0 %v1162
      %v1488 = vpop.f32.mrf.mxu0
      %v1489 = vadd.f32 0.0, %v1488
      %v1490 = vpop.f32.mrf.mxu0
      %v1491 = vadd.f32 0.0, %v1490
      %1492 = vmatmul.bf16.gmra.mxu0 %v1165
      %v1493 = vpop.f32.mrf.mxu0
      %v1494 = vadd.f32 0.0, %v1493
      %v1495 = vpop.f32.mrf.mxu0
      %v1496 = vadd.f32 0.0, %v1495
      %1497 = vmatmul.bf16.gmra.mxu0 %v1168
      %v1498 = vpop.f32.mrf.mxu0
      %v1499 = vadd.f32 0.0, %v1498
      %v1500 = vpop.f32.mrf.mxu0
      %v1501 = vadd.f32 0.0, %v1500
      %1502 = vdwg.mxu0
      %v1503 = vpack.c.bf16 %v1184, %v1184
      %v1504 = vpack.c.bf16 %v1186, %v1186
      %v1505 = vpack.c.bf16 %v1189, %v1189
      %v1506 = vpack.c.bf16 %v1191, %v1191
      %v1507 = vpack.c.bf16 %v1194, %v1194
      %v1508 = vpack.c.bf16 %v1196, %v1196
      %v1509 = vpack.c.bf16 %v1199, %v1199
      %v1510 = vpack.c.bf16 %v1201, %v1201
      %v1511 = vpack.c.bf16 %v1204, %v1204
      %v1512 = vpack.c.bf16 %v1206, %v1206
      %v1513 = vpack.c.bf16 %v1209, %v1209
      %v1514 = vpack.c.bf16 %v1211, %v1211
      %v1515 = vpack.c.bf16 %v1214, %v1214
      %v1516 = vpack.c.bf16 %v1216, %v1216
      %v1517 = vpack.c.bf16 %v1219, %v1219
      %v1518 = vpack.c.bf16 %v1221, %v1221
      %v1519 = vpack.c.bf16 %v1224, %v1224
      %v1520 = vpack.c.bf16 %v1226, %v1226
      %v1521 = vpack.c.bf16 %v1229, %v1229
      %v1522 = vpack.c.bf16 %v1231, %v1231
      %v1523 = vpack.c.bf16 %v1234, %v1234
      %v1524 = vpack.c.bf16 %v1236, %v1236
      %v1525 = vpack.c.bf16 %v1239, %v1239
      %v1526 = vpack.c.bf16 %v1241, %v1241
      %v1527 = vpack.c.bf16 %v1244, %v1244
      %v1528 = vpack.c.bf16 %v1246, %v1246
      %v1529 = vpack.c.bf16 %v1249, %v1249
      %v1530 = vpack.c.bf16 %v1251, %v1251
      %v1531 = vpack.c.bf16 %v1254, %v1254
      %v1532 = vpack.c.bf16 %v1256, %v1256
      %v1533 = vpack.c.bf16 %v1259, %v1259
      %v1534 = vpack.c.bf16 %v1261, %v1261
      %v1535 = vpack.c.bf16 %v1264, %v1264
      %v1536 = vpack.c.bf16 %v1266, %v1266
      %v1537 = vpack.c.bf16 %v1269, %v1269
      %v1538 = vpack.c.bf16 %v1271, %v1271
      %v1539 = vpack.c.bf16 %v1274, %v1274
      %v1540 = vpack.c.bf16 %v1276, %v1276
      %v1541 = vpack.c.bf16 %v1279, %v1279
      %v1542 = vpack.c.bf16 %v1281, %v1281
      %v1543 = vpack.c.bf16 %v1284, %v1284
      %v1544 = vpack.c.bf16 %v1286, %v1286
      %v1545 = vpack.c.bf16 %v1289, %v1289
      %v1546 = vpack.c.bf16 %v1291, %v1291
      %v1547 = vpack.c.bf16 %v1294, %v1294
      %v1548 = vpack.c.bf16 %v1296, %v1296
      %v1549 = vpack.c.bf16 %v1299, %v1299
      %v1550 = vpack.c.bf16 %v1301, %v1301
      %v1551 = vpack.c.bf16 %v1304, %v1304
      %v1552 = vpack.c.bf16 %v1306, %v1306
      %v1553 = vpack.c.bf16 %v1309, %v1309
      %v1554 = vpack.c.bf16 %v1311, %v1311
      %v1555 = vpack.c.bf16 %v1314, %v1314
      %v1556 = vpack.c.bf16 %v1316, %v1316
      %v1557 = vpack.c.bf16 %v1319, %v1319
      %v1558 = vpack.c.bf16 %v1321, %v1321
      %v1559 = vpack.c.bf16 %v1324, %v1324
      %v1560 = vpack.c.bf16 %v1326, %v1326
      %v1561 = vpack.c.bf16 %v1329, %v1329
      %v1562 = vpack.c.bf16 %v1331, %v1331
      %v1563 = vpack.c.bf16 %v1334, %v1334
      %v1564 = vpack.c.bf16 %v1336, %v1336
      %v1565 = vpack.c.bf16 %v1339, %v1339
      %v1566 = vpack.c.bf16 %v1341, %v1341
      %v1567 = vpack.c.bf16 %v1344, %v1344
      %v1568 = vpack.c.bf16 %v1346, %v1346
      %v1569 = vpack.c.bf16 %v1349, %v1349
      %v1570 = vpack.c.bf16 %v1351, %v1351
      %v1571 = vpack.c.bf16 %v1354, %v1354
      %v1572 = vpack.c.bf16 %v1356, %v1356
      %v1573 = vpack.c.bf16 %v1359, %v1359
      %v1574 = vpack.c.bf16 %v1361, %v1361
      %v1575 = vpack.c.bf16 %v1364, %v1364
      %v1576 = vpack.c.bf16 %v1366, %v1366
      %v1577 = vpack.c.bf16 %v1369, %v1369
      %v1578 = vpack.c.bf16 %v1371, %v1371
      %v1579 = vpack.c.bf16 %v1374, %v1374
      %v1580 = vpack.c.bf16 %v1376, %v1376
      %v1581 = vpack.c.bf16 %v1379, %v1379
      %v1582 = vpack.c.bf16 %v1381, %v1381
      %v1583 = vpack.c.bf16 %v1384, %v1384
      %v1584 = vpack.c.bf16 %v1386, %v1386
      %v1585 = vpack.c.bf16 %v1389, %v1389
      %v1586 = vpack.c.bf16 %v1391, %v1391
      %v1587 = vpack.c.bf16 %v1394, %v1394
      %v1588 = vpack.c.bf16 %v1396, %v1396
      %v1589 = vpack.c.bf16 %v1399, %v1399
      %v1590 = vpack.c.bf16 %v1401, %v1401
      %v1591 = vpack.c.bf16 %v1404, %v1404
      %v1592 = vpack.c.bf16 %v1406, %v1406
      %v1593 = vpack.c.bf16 %v1409, %v1409
      %v1594 = vpack.c.bf16 %v1411, %v1411
      %v1595 = vpack.c.bf16 %v1414, %v1414
      %v1596 = vpack.c.bf16 %v1416, %v1416
      %v1597 = vpack.c.bf16 %v1419, %v1419
      %v1598 = vpack.c.bf16 %v1421, %v1421
      %v1599 = vpack.c.bf16 %v1424, %v1424
      %v1600 = vpack.c.bf16 %v1426, %v1426
      %v1601 = vpack.c.bf16 %v1429, %v1429
      %v1602 = vpack.c.bf16 %v1431, %v1431
      %v1603 = vpack.c.bf16 %v1434, %v1434
      %v1604 = vpack.c.bf16 %v1436, %v1436
      %v1605 = vpack.c.bf16 %v1439, %v1439
      %v1606 = vpack.c.bf16 %v1441, %v1441
      %v1607 = vpack.c.bf16 %v1444, %v1444
      %v1608 = vpack.c.bf16 %v1446, %v1446
      %v1609 = vpack.c.bf16 %v1449, %v1449
      %v1610 = vpack.c.bf16 %v1451, %v1451
      %v1611 = vpack.c.bf16 %v1454, %v1454
      %v1612 = vpack.c.bf16 %v1456, %v1456
      %v1613 = vpack.c.bf16 %v1459, %v1459
      %v1614 = vpack.c.bf16 %v1461, %v1461
      %v1615 = vpack.c.bf16 %v1464, %v1464
      %v1616 = vpack.c.bf16 %v1466, %v1466
      %v1617 = vpack.c.bf16 %v1469, %v1469
      %v1618 = vpack.c.bf16 %v1471, %v1471
      %v1619 = vpack.c.bf16 %v1474, %v1474
      %v1620 = vpack.c.bf16 %v1476, %v1476
      %v1621 = vpack.c.bf16 %v1479, %v1479
      %v1622 = vpack.c.bf16 %v1481, %v1481
      %v1623 = vpack.c.bf16 %v1484, %v1484
      %v1624 = vpack.c.bf16 %v1486, %v1486
      %v1625 = vpack.c.bf16 %v1489, %v1489
      %v1626 = vpack.c.bf16 %v1491, %v1491
      %v1627 = vpack.c.bf16 %v1494, %v1494
      %v1628 = vpack.c.bf16 %v1496, %v1496
      %v1629 = vpack.c.bf16 %v1499, %v1499
      %v1630 = vpack.c.bf16 %v1501, %v1501
      %vm1631 = vcmask 60416
      %1632 = vst.msk [vmem:[%s256] sm:$0xf] %vm1631, %v1503
      %1633 = vst.msk [vmem:[%s256 + $0x4] sm:$0xf] %vm1631, %v1504
      %1634 = vst.msk [vmem:[%s256 + $0x8] sm:$0xf] %vm1631, %v1505
      %1635 = vst.msk [vmem:[%s256 + $0xc] sm:$0xf] %vm1631, %v1506
      %1636 = vst.msk [vmem:[%s256 + $0x10] sm:$0xf] %vm1631, %v1507
      %1637 = vst.msk [vmem:[%s256 + $0x14] sm:$0xf] %vm1631, %v1508
      %1638 = vst.msk [vmem:[%s256 + $0x18] sm:$0xf] %vm1631, %v1509
      %1639 = vst.msk [vmem:[%s256 + $0x1c] sm:$0xf] %vm1631, %v1510
      %1640 = vst.msk [vmem:[%s256 + $0x20] sm:$0xf] %vm1631, %v1511
      %1641 = vst.msk [vmem:[%s256 + $0x24] sm:$0xf] %vm1631, %v1512
      %1642 = vst.msk [vmem:[%s256 + $0x28] sm:$0xf] %vm1631, %v1513
      %1643 = vst.msk [vmem:[%s256 + $0x2c] sm:$0xf] %vm1631, %v1514
      %1644 = vst.msk [vmem:[%s256 + $0x30] sm:$0xf] %vm1631, %v1515
      %1645 = vst.msk [vmem:[%s256 + $0x34] sm:$0xf] %vm1631, %v1516
      %1646 = vst.msk [vmem:[%s256 + $0x38] sm:$0xf] %vm1631, %v1517
      %1647 = vst.msk [vmem:[%s256 + $0x3c] sm:$0xf] %vm1631, %v1518
      %1648 = vst.msk [vmem:[%s256 + $0x40] sm:$0xf] %vm1631, %v1519
      %1649 = vst.msk [vmem:[%s256 + $0x44] sm:$0xf] %vm1631, %v1520
      %1650 = vst.msk [vmem:[%s256 + $0x48] sm:$0xf] %vm1631, %v1521
      %1651 = vst.msk [vmem:[%s256 + $0x4c] sm:$0xf] %vm1631, %v1522
      %1652 = vst.msk [vmem:[%s256 + $0x50] sm:$0xf] %vm1631, %v1523
      %1653 = vst.msk [vmem:[%s256 + $0x54] sm:$0xf] %vm1631, %v1524
      %1654 = vst.msk [vmem:[%s256 + $0x58] sm:$0xf] %vm1631, %v1525
      %1655 = vst.msk [vmem:[%s256 + $0x5c] sm:$0xf] %vm1631, %v1526
      %1656 = vst.msk [vmem:[%s256 + $0x60] sm:$0xf] %vm1631, %v1527
      %1657 = vst.msk [vmem:[%s256 + $0x64] sm:$0xf] %vm1631, %v1528
      %1658 = vst.msk [vmem:[%s256 + $0x68] sm:$0xf] %vm1631, %v1529
      %1659 = vst.msk [vmem:[%s256 + $0x6c] sm:$0xf] %vm1631, %v1530
      %1660 = vst.msk [vmem:[%s256 + $0x70] sm:$0xf] %vm1631, %v1531
      %1661 = vst.msk [vmem:[%s256 + $0x74] sm:$0xf] %vm1631, %v1532
      %1662 = vst.msk [vmem:[%s256 + $0x78] sm:$0xf] %vm1631, %v1533
      %1663 = vst.msk [vmem:[%s256 + $0x7c] sm:$0xf] %vm1631, %v1534
      %1664 = vst.msk [vmem:[%s256 + $0x80] sm:$0xf] %vm1631, %v1535
      %1665 = vst.msk [vmem:[%s256 + $0x84] sm:$0xf] %vm1631, %v1536
      %1666 = vst.msk [vmem:[%s256 + $0x88] sm:$0xf] %vm1631, %v1537
      %1667 = vst.msk [vmem:[%s256 + $0x8c] sm:$0xf] %vm1631, %v1538
      %1668 = vst.msk [vmem:[%s256 + $0x90] sm:$0xf] %vm1631, %v1539
      %1669 = vst.msk [vmem:[%s256 + $0x94] sm:$0xf] %vm1631, %v1540
      %1670 = vst.msk [vmem:[%s256 + $0x98] sm:$0xf] %vm1631, %v1541
      %1671 = vst.msk [vmem:[%s256 + $0x9c] sm:$0xf] %vm1631, %v1542
      %1672 = vst.msk [vmem:[%s256 + $0xa0] sm:$0xf] %vm1631, %v1543
      %1673 = vst.msk [vmem:[%s256 + $0xa4] sm:$0xf] %vm1631, %v1544
      %1674 = vst.msk [vmem:[%s256 + $0xa8] sm:$0xf] %vm1631, %v1545
      %1675 = vst.msk [vmem:[%s256 + $0xac] sm:$0xf] %vm1631, %v1546
      %1676 = vst.msk [vmem:[%s256 + $0xb0] sm:$0xf] %vm1631, %v1547
      %1677 = vst.msk [vmem:[%s256 + $0xb4] sm:$0xf] %vm1631, %v1548
      %1678 = vst.msk [vmem:[%s256 + $0xb8] sm:$0xf] %vm1631, %v1549
      %1679 = vst.msk [vmem:[%s256 + $0xbc] sm:$0xf] %vm1631, %v1550
      %1680 = vst.msk [vmem:[%s256 + $0xc0] sm:$0xf] %vm1631, %v1551
      %1681 = vst.msk [vmem:[%s256 + $0xc4] sm:$0xf] %vm1631, %v1552
      %1682 = vst.msk [vmem:[%s256 + $0xc8] sm:$0xf] %vm1631, %v1553
      %1683 = vst.msk [vmem:[%s256 + $0xcc] sm:$0xf] %vm1631, %v1554
      %1684 = vst.msk [vmem:[%s256 + $0xd0] sm:$0xf] %vm1631, %v1555
      %1685 = vst.msk [vmem:[%s256 + $0xd4] sm:$0xf] %vm1631, %v1556
      %1686 = vst.msk [vmem:[%s256 + $0xd8] sm:$0xf] %vm1631, %v1557
      %1687 = vst.msk [vmem:[%s256 + $0xdc] sm:$0xf] %vm1631, %v1558
      %1688 = vst.msk [vmem:[%s256 + $0xe0] sm:$0xf] %vm1631, %v1559
      %1689 = vst.msk [vmem:[%s256 + $0xe4] sm:$0xf] %vm1631, %v1560
      %1690 = vst.msk [vmem:[%s256 + $0xe8] sm:$0xf] %vm1631, %v1561
      %1691 = vst.msk [vmem:[%s256 + $0xec] sm:$0xf] %vm1631, %v1562
      %1692 = vst.msk [vmem:[%s256 + $0xf0] sm:$0xf] %vm1631, %v1563
      %1693 = vst.msk [vmem:[%s256 + $0xf4] sm:$0xf] %vm1631, %v1564
      %1694 = vst.msk [vmem:[%s256 + $0xf8] sm:$0xf] %vm1631, %v1565
      %1695 = vst.msk [vmem:[%s256 + $0xfc] sm:$0xf] %vm1631, %v1566
      %1696 = vst.msk [vmem:[%s256 + $0x100] sm:$0xf] %vm1631, %v1567
      %1697 = vst.msk [vmem:[%s256 + $0x104] sm:$0xf] %vm1631, %v1568
      %1698 = vst.msk [vmem:[%s256 + $0x108] sm:$0xf] %vm1631, %v1569
      %1699 = vst.msk [vmem:[%s256 + $0x10c] sm:$0xf] %vm1631, %v1570
      %1700 = vst.msk [vmem:[%s256 + $0x110] sm:$0xf] %vm1631, %v1571
      %1701 = vst.msk [vmem:[%s256 + $0x114] sm:$0xf] %vm1631, %v1572
      %1702 = vst.msk [vmem:[%s256 + $0x118] sm:$0xf] %vm1631, %v1573
      %1703 = vst.msk [vmem:[%s256 + $0x11c] sm:$0xf] %vm1631, %v1574
      %1704 = vst.msk [vmem:[%s256 + $0x120] sm:$0xf] %vm1631, %v1575
      %1705 = vst.msk [vmem:[%s256 + $0x124] sm:$0xf] %vm1631, %v1576
      %1706 = vst.msk [vmem:[%s256 + $0x128] sm:$0xf] %vm1631, %v1577
      %1707 = vst.msk [vmem:[%s256 + $0x12c] sm:$0xf] %vm1631, %v1578
      %1708 = vst.msk [vmem:[%s256 + $0x130] sm:$0xf] %vm1631, %v1579
      %1709 = vst.msk [vmem:[%s256 + $0x134] sm:$0xf] %vm1631, %v1580
      %1710 = vst.msk [vmem:[%s256 + $0x138] sm:$0xf] %vm1631, %v1581
      %1711 = vst.msk [vmem:[%s256 + $0x13c] sm:$0xf] %vm1631, %v1582
      %1712 = vst.msk [vmem:[%s256 + $0x140] sm:$0xf] %vm1631, %v1583
      %1713 = vst.msk [vmem:[%s256 + $0x144] sm:$0xf] %vm1631, %v1584
      %1714 = vst.msk [vmem:[%s256 + $0x148] sm:$0xf] %vm1631, %v1585
      %1715 = vst.msk [vmem:[%s256 + $0x14c] sm:$0xf] %vm1631, %v1586
      %1716 = vst.msk [vmem:[%s256 + $0x150] sm:$0xf] %vm1631, %v1587
      %1717 = vst.msk [vmem:[%s256 + $0x154] sm:$0xf] %vm1631, %v1588
      %1718 = vst.msk [vmem:[%s256 + $0x158] sm:$0xf] %vm1631, %v1589
      %1719 = vst.msk [vmem:[%s256 + $0x15c] sm:$0xf] %vm1631, %v1590
      %1720 = vst.msk [vmem:[%s256 + $0x160] sm:$0xf] %vm1631, %v1591
      %1721 = vst.msk [vmem:[%s256 + $0x164] sm:$0xf] %vm1631, %v1592
      %1722 = vst.msk [vmem:[%s256 + $0x168] sm:$0xf] %vm1631, %v1593
      %1723 = vst.msk [vmem:[%s256 + $0x16c] sm:$0xf] %vm1631, %v1594
      %1724 = vst.msk [vmem:[%s256 + $0x170] sm:$0xf] %vm1631, %v1595
      %1725 = vst.msk [vmem:[%s256 + $0x174] sm:$0xf] %vm1631, %v1596
      %1726 = vst.msk [vmem:[%s256 + $0x178] sm:$0xf] %vm1631, %v1597
      %1727 = vst.msk [vmem:[%s256 + $0x17c] sm:$0xf] %vm1631, %v1598
      %1728 = vst.msk [vmem:[%s256 + $0x180] sm:$0xf] %vm1631, %v1599
      %1729 = vst.msk [vmem:[%s256 + $0x184] sm:$0xf] %vm1631, %v1600
      %1730 = vst.msk [vmem:[%s256 + $0x188] sm:$0xf] %vm1631, %v1601
      %1731 = vst.msk [vmem:[%s256 + $0x18c] sm:$0xf] %vm1631, %v1602
      %1732 = vst.msk [vmem:[%s256 + $0x190] sm:$0xf] %vm1631, %v1603
      %1733 = vst.msk [vmem:[%s256 + $0x194] sm:$0xf] %vm1631, %v1604
      %1734 = vst.msk [vmem:[%s256 + $0x198] sm:$0xf] %vm1631, %v1605
      %1735 = vst.msk [vmem:[%s256 + $0x19c] sm:$0xf] %vm1631, %v1606
      %1736 = vst.msk [vmem:[%s256 + $0x1a0] sm:$0xf] %vm1631, %v1607
      %1737 = vst.msk [vmem:[%s256 + $0x1a4] sm:$0xf] %vm1631, %v1608
      %1738 = vst.msk [vmem:[%s256 + $0x1a8] sm:$0xf] %vm1631, %v1609
      %1739 = vst.msk [vmem:[%s256 + $0x1ac] sm:$0xf] %vm1631, %v1610
      %1740 = vst.msk [vmem:[%s256 + $0x1b0] sm:$0xf] %vm1631, %v1611
      %1741 = vst.msk [vmem:[%s256 + $0x1b4] sm:$0xf] %vm1631, %v1612
      %1742 = vst.msk [vmem:[%s256 + $0x1b8] sm:$0xf] %vm1631, %v1613
      %1743 = vst.msk [vmem:[%s256 + $0x1bc] sm:$0xf] %vm1631, %v1614
      %1744 = vst.msk [vmem:[%s256 + $0x1c0] sm:$0xf] %vm1631, %v1615
      %1745 = vst.msk [vmem:[%s256 + $0x1c4] sm:$0xf] %vm1631, %v1616
      %1746 = vst.msk [vmem:[%s256 + $0x1c8] sm:$0xf] %vm1631, %v1617
      %1747 = vst.msk [vmem:[%s256 + $0x1cc] sm:$0xf] %vm1631, %v1618
      %1748 = vst.msk [vmem:[%s256 + $0x1d0] sm:$0xf] %vm1631, %v1619
      %1749 = vst.msk [vmem:[%s256 + $0x1d4] sm:$0xf] %vm1631, %v1620
      %1750 = vst.msk [vmem:[%s256 + $0x1d8] sm:$0xf] %vm1631, %v1621
      %1751 = vst.msk [vmem:[%s256 + $0x1dc] sm:$0xf] %vm1631, %v1622
      %1752 = vst.msk [vmem:[%s256 + $0x1e0] sm:$0xf] %vm1631, %v1623
      %1753 = vst.msk [vmem:[%s256 + $0x1e4] sm:$0xf] %vm1631, %v1624
      %1754 = vst.msk [vmem:[%s256 + $0x1e8] sm:$0xf] %vm1631, %v1625
      %1755 = vst.msk [vmem:[%s256 + $0x1ec] sm:$0xf] %vm1631, %v1626
      %1756 = vst.msk [vmem:[%s256 + $0x1f0] sm:$0xf] %vm1631, %v1627
      %1757 = vst.msk [vmem:[%s256 + $0x1f4] sm:$0xf] %vm1631, %v1628
      %1758 = vst.msk [vmem:[%s256 + $0x1f8] sm:$0xf] %vm1631, %v1629
      %1759 = vst.msk [vmem:[%s256 + $0x1fc] sm:$0xf] %vm1631, %v1630
      %p1760 = scmp.eq.s32.totalorder %s22, 0
      // Predicated region
      $region37: #{decoder_bottleneck_forward.6} parent=35 // pred_check
        %p1761 = pneg %p1760
      $region38: #{decoder_bottleneck_forward.6} parent=35 // pred_check_branch
        %1763 = sbr.rel (%p1761) target = $region40
      $region39: #{decoder_bottleneck_forward.6} parent=35 // pred_region
        %vm1764 = vcmask 58368
        %1765 = vst.msk [vmem:[%s262] sm:$0x3] %vm1764, 0.0
      $region40: #{decoder_bottleneck_forward.6} parent=35 // pred_fallthru
        _
      %v1766 = vld [vmem:[%s262] sm:$0x1]
      %vm1767 = vcmask 64512
      %v1768 = vsel %vm1767, %v1184, 0.0
      %v1769 = vsel %vm1767, %v1186, 0.0
      %v1770 = vadd.f32 %v1768, %v1769
      %v1771 = vsel %vm1767, %v1189, 0.0
      %v1772 = vadd.f32 %v1770, %v1771
      %v1773 = vsel %vm1767, %v1191, 0.0
      %v1774 = vadd.f32 %v1772, %v1773
      %v1775 = vsel %vm1767, %v1194, 0.0
      %v1776 = vadd.f32 %v1774, %v1775
      %v1777 = vsel %vm1767, %v1196, 0.0
      %v1778 = vadd.f32 %v1776, %v1777
      %v1779 = vsel %vm1767, %v1199, 0.0
      %v1780 = vadd.f32 %v1778, %v1779
      %v1781 = vsel %vm1767, %v1201, 0.0
      %v1782 = vadd.f32 %v1780, %v1781
      %v1783 = vsel %vm1767, %v1204, 0.0
      %v1784 = vadd.f32 %v1782, %v1783
      %v1785 = vsel %vm1767, %v1206, 0.0
      %v1786 = vadd.f32 %v1784, %v1785
      %v1787 = vsel %vm1767, %v1209, 0.0
      %v1788 = vadd.f32 %v1786, %v1787
      %v1789 = vsel %vm1767, %v1211, 0.0
      %v1790 = vadd.f32 %v1788, %v1789
      %v1791 = vsel %vm1767, %v1214, 0.0
      %v1792 = vadd.f32 %v1790, %v1791
      %v1793 = vsel %vm1767, %v1216, 0.0
      %v1794 = vadd.f32 %v1792, %v1793
      %v1795 = vsel %vm1767, %v1219, 0.0
      %v1796 = vadd.f32 %v1794, %v1795
      %v1797 = vsel %vm1767, %v1221, 0.0
      %v1798 = vadd.f32 %v1796, %v1797
      %v1799 = vsel %vm1767, %v1224, 0.0
      %v1800 = vadd.f32 %v1798, %v1799
      %v1801 = vsel %vm1767, %v1226, 0.0
      %v1802 = vadd.f32 %v1800, %v1801
      %v1803 = vsel %vm1767, %v1229, 0.0
      %v1804 = vadd.f32 %v1802, %v1803
      %v1805 = vsel %vm1767, %v1231, 0.0
      %v1806 = vadd.f32 %v1804, %v1805
      %v1807 = vsel %vm1767, %v1234, 0.0
      %v1808 = vadd.f32 %v1806, %v1807
      %v1809 = vsel %vm1767, %v1236, 0.0
      %v1810 = vadd.f32 %v1808, %v1809
      %v1811 = vsel %vm1767, %v1239, 0.0
      %v1812 = vadd.f32 %v1810, %v1811
      %v1813 = vsel %vm1767, %v1241, 0.0
      %v1814 = vadd.f32 %v1812, %v1813
      %v1815 = vsel %vm1767, %v1244, 0.0
      %v1816 = vadd.f32 %v1814, %v1815
      %v1817 = vsel %vm1767, %v1246, 0.0
      %v1818 = vadd.f32 %v1816, %v1817
      %v1819 = vsel %vm1767, %v1249, 0.0
      %v1820 = vadd.f32 %v1818, %v1819
      %v1821 = vsel %vm1767, %v1251, 0.0
      %v1822 = vadd.f32 %v1820, %v1821
      %v1823 = vsel %vm1767, %v1254, 0.0
      %v1824 = vadd.f32 %v1822, %v1823
      %v1825 = vsel %vm1767, %v1256, 0.0
      %v1826 = vadd.f32 %v1824, %v1825
      %v1827 = vsel %vm1767, %v1259, 0.0
      %v1828 = vadd.f32 %v1826, %v1827
      %v1829 = vsel %vm1767, %v1261, 0.0
      %v1830 = vadd.f32 %v1828, %v1829
      %v1831 = vsel %vm1767, %v1264, 0.0
      %v1832 = vadd.f32 %v1830, %v1831
      %v1833 = vsel %vm1767, %v1266, 0.0
      %v1834 = vadd.f32 %v1832, %v1833
      %v1835 = vsel %vm1767, %v1269, 0.0
      %v1836 = vadd.f32 %v1834, %v1835
      %v1837 = vsel %vm1767, %v1271, 0.0
      %v1838 = vadd.f32 %v1836, %v1837
      %v1839 = vsel %vm1767, %v1274, 0.0
      %v1840 = vadd.f32 %v1838, %v1839
      %v1841 = vsel %vm1767, %v1276, 0.0
      %v1842 = vadd.f32 %v1840, %v1841
      %v1843 = vsel %vm1767, %v1279, 0.0
      %v1844 = vadd.f32 %v1842, %v1843
      %v1845 = vsel %vm1767, %v1281, 0.0
      %v1846 = vadd.f32 %v1844, %v1845
      %v1847 = vsel %vm1767, %v1284, 0.0
      %v1848 = vadd.f32 %v1846, %v1847
      %v1849 = vsel %vm1767, %v1286, 0.0
      %v1850 = vadd.f32 %v1848, %v1849
      %v1851 = vsel %vm1767, %v1289, 0.0
      %v1852 = vadd.f32 %v1850, %v1851
      %v1853 = vsel %vm1767, %v1291, 0.0
      %v1854 = vadd.f32 %v1852, %v1853
      %v1855 = vsel %vm1767, %v1294, 0.0
      %v1856 = vadd.f32 %v1854, %v1855
      %v1857 = vsel %vm1767, %v1296, 0.0
      %v1858 = vadd.f32 %v1856, %v1857
      %v1859 = vsel %vm1767, %v1299, 0.0
      %v1860 = vadd.f32 %v1858, %v1859
      %v1861 = vsel %vm1767, %v1301, 0.0
      %v1862 = vadd.f32 %v1860, %v1861
      %v1863 = vsel %vm1767, %v1304, 0.0
      %v1864 = vadd.f32 %v1862, %v1863
      %v1865 = vsel %vm1767, %v1306, 0.0
      %v1866 = vadd.f32 %v1864, %v1865
      %v1867 = vsel %vm1767, %v1309, 0.0
      %v1868 = vadd.f32 %v1866, %v1867
      %v1869 = vsel %vm1767, %v1311, 0.0
      %v1870 = vadd.f32 %v1868, %v1869
      %v1871 = vsel %vm1767, %v1314, 0.0
      %v1872 = vadd.f32 %v1870, %v1871
      %v1873 = vsel %vm1767, %v1316, 0.0
      %v1874 = vadd.f32 %v1872, %v1873
      %v1875 = vsel %vm1767, %v1319, 0.0
      %v1876 = vadd.f32 %v1874, %v1875
      %v1877 = vsel %vm1767, %v1321, 0.0
      %v1878 = vadd.f32 %v1876, %v1877
      %v1879 = vsel %vm1767, %v1324, 0.0
      %v1880 = vadd.f32 %v1878, %v1879
      %v1881 = vsel %vm1767, %v1326, 0.0
      %v1882 = vadd.f32 %v1880, %v1881
      %v1883 = vsel %vm1767, %v1329, 0.0
      %v1884 = vadd.f32 %v1882, %v1883
      %v1885 = vsel %vm1767, %v1331, 0.0
      %v1886 = vadd.f32 %v1884, %v1885
      %v1887 = vsel %vm1767, %v1334, 0.0
      %v1888 = vadd.f32 %v1886, %v1887
      %v1889 = vsel %vm1767, %v1336, 0.0
      %v1890 = vadd.f32 %v1888, %v1889
      %v1891 = vsel %vm1767, %v1339, 0.0
      %v1892 = vadd.f32 %v1890, %v1891
      %v1893 = vsel %vm1767, %v1341, 0.0
      %v1894 = vadd.f32 %v1892, %v1893
      %v1895 = vsel %vm1767, %v1344, 0.0
      %v1896 = vadd.f32 %v1894, %v1895
      %v1897 = vsel %vm1767, %v1346, 0.0
      %v1898 = vadd.f32 %v1896, %v1897
      %v1899 = vsel %vm1767, %v1349, 0.0
      %v1900 = vadd.f32 %v1898, %v1899
      %v1901 = vsel %vm1767, %v1351, 0.0
      %v1902 = vadd.f32 %v1900, %v1901
      %v1903 = vsel %vm1767, %v1354, 0.0
      %v1904 = vadd.f32 %v1902, %v1903
      %v1905 = vsel %vm1767, %v1356, 0.0
      %v1906 = vadd.f32 %v1904, %v1905
      %v1907 = vsel %vm1767, %v1359, 0.0
      %v1908 = vadd.f32 %v1906, %v1907
      %v1909 = vsel %vm1767, %v1361, 0.0
      %v1910 = vadd.f32 %v1908, %v1909
      %v1911 = vsel %vm1767, %v1364, 0.0
      %v1912 = vadd.f32 %v1910, %v1911
      %v1913 = vsel %vm1767, %v1366, 0.0
      %v1914 = vadd.f32 %v1912, %v1913
      %v1915 = vsel %vm1767, %v1369, 0.0
      %v1916 = vadd.f32 %v1914, %v1915
      %v1917 = vsel %vm1767, %v1371, 0.0
      %v1918 = vadd.f32 %v1916, %v1917
      %v1919 = vsel %vm1767, %v1374, 0.0
      %v1920 = vadd.f32 %v1918, %v1919
      %v1921 = vsel %vm1767, %v1376, 0.0
      %v1922 = vadd.f32 %v1920, %v1921
      %v1923 = vsel %vm1767, %v1379, 0.0
      %v1924 = vadd.f32 %v1922, %v1923
      %v1925 = vsel %vm1767, %v1381, 0.0
      %v1926 = vadd.f32 %v1924, %v1925
      %v1927 = vsel %vm1767, %v1384, 0.0
      %v1928 = vadd.f32 %v1926, %v1927
      %v1929 = vsel %vm1767, %v1386, 0.0
      %v1930 = vadd.f32 %v1928, %v1929
      %v1931 = vsel %vm1767, %v1389, 0.0
      %v1932 = vadd.f32 %v1930, %v1931
      %v1933 = vsel %vm1767, %v1391, 0.0
      %v1934 = vadd.f32 %v1932, %v1933
      %v1935 = vsel %vm1767, %v1394, 0.0
      %v1936 = vadd.f32 %v1934, %v1935
      %v1937 = vsel %vm1767, %v1396, 0.0
      %v1938 = vadd.f32 %v1936, %v1937
      %v1939 = vsel %vm1767, %v1399, 0.0
      %v1940 = vadd.f32 %v1938, %v1939
      %v1941 = vsel %vm1767, %v1401, 0.0
      %v1942 = vadd.f32 %v1940, %v1941
      %v1943 = vsel %vm1767, %v1404, 0.0
      %v1944 = vadd.f32 %v1942, %v1943
      %v1945 = vsel %vm1767, %v1406, 0.0
      %v1946 = vadd.f32 %v1944, %v1945
      %v1947 = vsel %vm1767, %v1409, 0.0
      %v1948 = vadd.f32 %v1946, %v1947
      %v1949 = vsel %vm1767, %v1411, 0.0
      %v1950 = vadd.f32 %v1948, %v1949
      %v1951 = vsel %vm1767, %v1414, 0.0
      %v1952 = vadd.f32 %v1950, %v1951
      %v1953 = vsel %vm1767, %v1416, 0.0
      %v1954 = vadd.f32 %v1952, %v1953
      %v1955 = vsel %vm1767, %v1419, 0.0
      %v1956 = vadd.f32 %v1954, %v1955
      %v1957 = vsel %vm1767, %v1421, 0.0
      %v1958 = vadd.f32 %v1956, %v1957
      %v1959 = vsel %vm1767, %v1424, 0.0
      %v1960 = vadd.f32 %v1958, %v1959
      %v1961 = vsel %vm1767, %v1426, 0.0
      %v1962 = vadd.f32 %v1960, %v1961
      %v1963 = vsel %vm1767, %v1429, 0.0
      %v1964 = vadd.f32 %v1962, %v1963
      %v1965 = vsel %vm1767, %v1431, 0.0
      %v1966 = vadd.f32 %v1964, %v1965
      %v1967 = vsel %vm1767, %v1434, 0.0
      %v1968 = vadd.f32 %v1966, %v1967
      %v1969 = vsel %vm1767, %v1436, 0.0
      %v1970 = vadd.f32 %v1968, %v1969
      %v1971 = vsel %vm1767, %v1439, 0.0
      %v1972 = vadd.f32 %v1970, %v1971
      %v1973 = vsel %vm1767, %v1441, 0.0
      %v1974 = vadd.f32 %v1972, %v1973
      %v1975 = vsel %vm1767, %v1444, 0.0
      %v1976 = vadd.f32 %v1974, %v1975
      %v1977 = vsel %vm1767, %v1446, 0.0
      %v1978 = vadd.f32 %v1976, %v1977
      %v1979 = vsel %vm1767, %v1449, 0.0
      %v1980 = vadd.f32 %v1978, %v1979
      %v1981 = vsel %vm1767, %v1451, 0.0
      %v1982 = vadd.f32 %v1980, %v1981
      %v1983 = vsel %vm1767, %v1454, 0.0
      %v1984 = vadd.f32 %v1982, %v1983
      %v1985 = vsel %vm1767, %v1456, 0.0
      %v1986 = vadd.f32 %v1984, %v1985
      %v1987 = vsel %vm1767, %v1459, 0.0
      %v1988 = vadd.f32 %v1986, %v1987
      %v1989 = vsel %vm1767, %v1461, 0.0
      %v1990 = vadd.f32 %v1988, %v1989
      %v1991 = vsel %vm1767, %v1464, 0.0
      %v1992 = vadd.f32 %v1990, %v1991
      %v1993 = vsel %vm1767, %v1466, 0.0
      %v1994 = vadd.f32 %v1992, %v1993
      %v1995 = vsel %vm1767, %v1469, 0.0
      %v1996 = vadd.f32 %v1994, %v1995
      %v1997 = vsel %vm1767, %v1471, 0.0
      %v1998 = vadd.f32 %v1996, %v1997
      %v1999 = vsel %vm1767, %v1474, 0.0
      %v2000 = vadd.f32 %v1998, %v1999
      %v2001 = vsel %vm1767, %v1476, 0.0
      %v2002 = vadd.f32 %v2000, %v2001
      %v2003 = vsel %vm1767, %v1479, 0.0
      %v2004 = vadd.f32 %v2002, %v2003
      %v2005 = vsel %vm1767, %v1481, 0.0
      %v2006 = vadd.f32 %v2004, %v2005
      %v2007 = vsel %vm1767, %v1484, 0.0
      %v2008 = vadd.f32 %v2006, %v2007
      %v2009 = vsel %vm1767, %v1486, 0.0
      %v2010 = vadd.f32 %v2008, %v2009
      %v2011 = vsel %vm1767, %v1489, 0.0
      %v2012 = vadd.f32 %v2010, %v2011
      %v2013 = vsel %vm1767, %v1491, 0.0
      %v2014 = vadd.f32 %v2012, %v2013
      %v2015 = vsel %vm1767, %v1494, 0.0
      %v2016 = vadd.f32 %v2014, %v2015
      %v2017 = vsel %vm1767, %v1496, 0.0
      %v2018 = vadd.f32 %v2016, %v2017
      %v2019 = vsel %vm1767, %v1499, 0.0
      %v2020 = vadd.f32 %v2018, %v2019
      %v2021 = vsel %vm1767, %v1501, 0.0
      %v2022 = vadd.f32 %v2020, %v2021
      %v2023 = vrot.slane %v2022, 4
      %v2024 = vadd.f32 %v2022, %v2023
      %v2025 = vrot.slane %v2024, 2
      %v2026 = vadd.f32 %v2024, %v2025
      %v2027 = vrot.slane %v2026, 1
      %v2028 = vadd.f32 %v2026, %v2027
      %v2029 = vadd.f32 %v1766, %v2028
      %vm2030 = vcmask 57344
      %2031 = vst.msk [vmem:[%s262] sm:$0x1] %vm2030, %v2029
      %v2032 = vld [vmem:[%s262 + $0x1] sm:$0x1]
      %v2033 = vmul.f32 %v1184, %v1184
      %v2034 = vmul.f32 %v1186, %v1186
      %v2035 = vmul.f32 %v1189, %v1189
      %v2036 = vmul.f32 %v1191, %v1191
      %v2037 = vmul.f32 %v1194, %v1194
      %v2038 = vmul.f32 %v1196, %v1196
      %v2039 = vmul.f32 %v1199, %v1199
      %v2040 = vmul.f32 %v1201, %v1201
      %v2041 = vmul.f32 %v1204, %v1204
      %v2042 = vmul.f32 %v1206, %v1206
      %v2043 = vmul.f32 %v1209, %v1209
      %v2044 = vmul.f32 %v1211, %v1211
      %v2045 = vmul.f32 %v1214, %v1214
      %v2046 = vmul.f32 %v1216, %v1216
      %v2047 = vmul.f32 %v1219, %v1219
      %v2048 = vmul.f32 %v1221, %v1221
      %v2049 = vmul.f32 %v1224, %v1224
      %v2050 = vmul.f32 %v1226, %v1226
      %v2051 = vmul.f32 %v1229, %v1229
      %v2052 = vmul.f32 %v1231, %v1231
      %v2053 = vmul.f32 %v1234, %v1234
      %v2054 = vmul.f32 %v1236, %v1236
      %v2055 = vmul.f32 %v1239, %v1239
      %v2056 = vmul.f32 %v1241, %v1241
      %v2057 = vmul.f32 %v1244, %v1244
      %v2058 = vmul.f32 %v1246, %v1246
      %v2059 = vmul.f32 %v1249, %v1249
      %v2060 = vmul.f32 %v1251, %v1251
      %v2061 = vmul.f32 %v1254, %v1254
      %v2062 = vmul.f32 %v1256, %v1256
      %v2063 = vmul.f32 %v1259, %v1259
      %v2064 = vmul.f32 %v1261, %v1261
      %v2065 = vmul.f32 %v1264, %v1264
      %v2066 = vmul.f32 %v1266, %v1266
      %v2067 = vmul.f32 %v1269, %v1269
      %v2068 = vmul.f32 %v1271, %v1271
      %v2069 = vmul.f32 %v1274, %v1274
      %v2070 = vmul.f32 %v1276, %v1276
      %v2071 = vmul.f32 %v1279, %v1279
      %v2072 = vmul.f32 %v1281, %v1281
      %v2073 = vmul.f32 %v1284, %v1284
      %v2074 = vmul.f32 %v1286, %v1286
      %v2075 = vmul.f32 %v1289, %v1289
      %v2076 = vmul.f32 %v1291, %v1291
      %v2077 = vmul.f32 %v1294, %v1294
      %v2078 = vmul.f32 %v1296, %v1296
      %v2079 = vmul.f32 %v1299, %v1299
      %v2080 = vmul.f32 %v1301, %v1301
      %v2081 = vmul.f32 %v1304, %v1304
      %v2082 = vmul.f32 %v1306, %v1306
      %v2083 = vmul.f32 %v1309, %v1309
      %v2084 = vmul.f32 %v1311, %v1311
      %v2085 = vmul.f32 %v1314, %v1314
      %v2086 = vmul.f32 %v1316, %v1316
      %v2087 = vmul.f32 %v1319, %v1319
      %v2088 = vmul.f32 %v1321, %v1321
      %v2089 = vmul.f32 %v1324, %v1324
      %v2090 = vmul.f32 %v1326, %v1326
      %v2091 = vmul.f32 %v1329, %v1329
      %v2092 = vmul.f32 %v1331, %v1331
      %v2093 = vmul.f32 %v1334, %v1334
      %v2094 = vmul.f32 %v1336, %v1336
      %v2095 = vmul.f32 %v1339, %v1339
      %v2096 = vmul.f32 %v1341, %v1341
      %v2097 = vmul.f32 %v1344, %v1344
      %v2098 = vmul.f32 %v1346, %v1346
      %v2099 = vmul.f32 %v1349, %v1349
      %v2100 = vmul.f32 %v1351, %v1351
      %v2101 = vmul.f32 %v1354, %v1354
      %v2102 = vmul.f32 %v1356, %v1356
      %v2103 = vmul.f32 %v1359, %v1359
      %v2104 = vmul.f32 %v1361, %v1361
      %v2105 = vmul.f32 %v1364, %v1364
      %v2106 = vmul.f32 %v1366, %v1366
      %v2107 = vmul.f32 %v1369, %v1369
      %v2108 = vmul.f32 %v1371, %v1371
      %v2109 = vmul.f32 %v1374, %v1374
      %v2110 = vmul.f32 %v1376, %v1376
      %v2111 = vmul.f32 %v1379, %v1379
      %v2112 = vmul.f32 %v1381, %v1381
      %v2113 = vmul.f32 %v1384, %v1384
      %v2114 = vmul.f32 %v1386, %v1386
      %v2115 = vmul.f32 %v1389, %v1389
      %v2116 = vmul.f32 %v1391, %v1391
      %v2117 = vmul.f32 %v1394, %v1394
      %v2118 = vmul.f32 %v1396, %v1396
      %v2119 = vmul.f32 %v1399, %v1399
      %v2120 = vmul.f32 %v1401, %v1401
      %v2121 = vmul.f32 %v1404, %v1404
      %v2122 = vmul.f32 %v1406, %v1406
      %v2123 = vmul.f32 %v1409, %v1409
      %v2124 = vmul.f32 %v1411, %v1411
      %v2125 = vmul.f32 %v1414, %v1414
      %v2126 = vmul.f32 %v1416, %v1416
      %v2127 = vmul.f32 %v1419, %v1419
      %v2128 = vmul.f32 %v1421, %v1421
      %v2129 = vmul.f32 %v1424, %v1424
      %v2130 = vmul.f32 %v1426, %v1426
      %v2131 = vmul.f32 %v1429, %v1429
      %v2132 = vmul.f32 %v1431, %v1431
      %v2133 = vmul.f32 %v1434, %v1434
      %v2134 = vmul.f32 %v1436, %v1436
      %v2135 = vmul.f32 %v1439, %v1439
      %v2136 = vmul.f32 %v1441, %v1441
      %v2137 = vmul.f32 %v1444, %v1444
      %v2138 = vmul.f32 %v1446, %v1446
      %v2139 = vmul.f32 %v1449, %v1449
      %v2140 = vmul.f32 %v1451, %v1451
      %v2141 = vmul.f32 %v1454, %v1454
      %v2142 = vmul.f32 %v1456, %v1456
      %v2143 = vmul.f32 %v1459, %v1459
      %v2144 = vmul.f32 %v1461, %v1461
      %v2145 = vmul.f32 %v1464, %v1464
      %v2146 = vmul.f32 %v1466, %v1466
      %v2147 = vmul.f32 %v1469, %v1469
      %v2148 = vmul.f32 %v1471, %v1471
      %v2149 = vmul.f32 %v1474, %v1474
      %v2150 = vmul.f32 %v1476, %v1476
      %v2151 = vmul.f32 %v1479, %v1479
      %v2152 = vmul.f32 %v1481, %v1481
      %v2153 = vmul.f32 %v1484, %v1484
      %v2154 = vmul.f32 %v1486, %v1486
      %v2155 = vmul.f32 %v1489, %v1489
      %v2156 = vmul.f32 %v1491, %v1491
      %v2157 = vmul.f32 %v1494, %v1494
      %v2158 = vmul.f32 %v1496, %v1496
      %v2159 = vmul.f32 %v1499, %v1499
      %v2160 = vmul.f32 %v1501, %v1501
      %v2161 = vsel %vm1767, %v2033, 0.0
      %v2162 = vsel %vm1767, %v2034, 0.0
      %v2163 = vadd.f32 %v2161, %v2162
      %v2164 = vsel %vm1767, %v2035, 0.0
      %v2165 = vadd.f32 %v2163, %v2164
      %v2166 = vsel %vm1767, %v2036, 0.0
      %v2167 = vadd.f32 %v2165, %v2166
      %v2168 = vsel %vm1767, %v2037, 0.0
      %v2169 = vadd.f32 %v2167, %v2168
      %v2170 = vsel %vm1767, %v2038, 0.0
      %v2171 = vadd.f32 %v2169, %v2170
      %v2172 = vsel %vm1767, %v2039, 0.0
      %v2173 = vadd.f32 %v2171, %v2172
      %v2174 = vsel %vm1767, %v2040, 0.0
      %v2175 = vadd.f32 %v2173, %v2174
      %v2176 = vsel %vm1767, %v2041, 0.0
      %v2177 = vadd.f32 %v2175, %v2176
      %v2178 = vsel %vm1767, %v2042, 0.0
      %v2179 = vadd.f32 %v2177, %v2178
      %v2180 = vsel %vm1767, %v2043, 0.0
      %v2181 = vadd.f32 %v2179, %v2180
      %v2182 = vsel %vm1767, %v2044, 0.0
      %v2183 = vadd.f32 %v2181, %v2182
      %v2184 = vsel %vm1767, %v2045, 0.0
      %v2185 = vadd.f32 %v2183, %v2184
      %v2186 = vsel %vm1767, %v2046, 0.0
      %v2187 = vadd.f32 %v2185, %v2186
      %v2188 = vsel %vm1767, %v2047, 0.0
      %v2189 = vadd.f32 %v2187, %v2188
      %v2190 = vsel %vm1767, %v2048, 0.0
      %v2191 = vadd.f32 %v2189, %v2190
      %v2192 = vsel %vm1767, %v2049, 0.0
      %v2193 = vadd.f32 %v2191, %v2192
      %v2194 = vsel %vm1767, %v2050, 0.0
      %v2195 = vadd.f32 %v2193, %v2194
      %v2196 = vsel %vm1767, %v2051, 0.0
      %v2197 = vadd.f32 %v2195, %v2196
      %v2198 = vsel %vm1767, %v2052, 0.0
      %v2199 = vadd.f32 %v2197, %v2198
      %v2200 = vsel %vm1767, %v2053, 0.0
      %v2201 = vadd.f32 %v2199, %v2200
      %v2202 = vsel %vm1767, %v2054, 0.0
      %v2203 = vadd.f32 %v2201, %v2202
      %v2204 = vsel %vm1767, %v2055, 0.0
      %v2205 = vadd.f32 %v2203, %v2204
      %v2206 = vsel %vm1767, %v2056, 0.0
      %v2207 = vadd.f32 %v2205, %v2206
      %v2208 = vsel %vm1767, %v2057, 0.0
      %v2209 = vadd.f32 %v2207, %v2208
      %v2210 = vsel %vm1767, %v2058, 0.0
      %v2211 = vadd.f32 %v2209, %v2210
      %v2212 = vsel %vm1767, %v2059, 0.0
      %v2213 = vadd.f32 %v2211, %v2212
      %v2214 = vsel %vm1767, %v2060, 0.0
      %v2215 = vadd.f32 %v2213, %v2214
      %v2216 = vsel %vm1767, %v2061, 0.0
      %v2217 = vadd.f32 %v2215, %v2216
      %v2218 = vsel %vm1767, %v2062, 0.0
      %v2219 = vadd.f32 %v2217, %v2218
      %v2220 = vsel %vm1767, %v2063, 0.0
      %v2221 = vadd.f32 %v2219, %v2220
      %v2222 = vsel %vm1767, %v2064, 0.0
      %v2223 = vadd.f32 %v2221, %v2222
      %v2224 = vsel %vm1767, %v2065, 0.0
      %v2225 = vadd.f32 %v2223, %v2224
      %v2226 = vsel %vm1767, %v2066, 0.0
      %v2227 = vadd.f32 %v2225, %v2226
      %v2228 = vsel %vm1767, %v2067, 0.0
      %v2229 = vadd.f32 %v2227, %v2228
      %v2230 = vsel %vm1767, %v2068, 0.0
      %v2231 = vadd.f32 %v2229, %v2230
      %v2232 = vsel %vm1767, %v2069, 0.0
      %v2233 = vadd.f32 %v2231, %v2232
      %v2234 = vsel %vm1767, %v2070, 0.0
      %v2235 = vadd.f32 %v2233, %v2234
      %v2236 = vsel %vm1767, %v2071, 0.0
      %v2237 = vadd.f32 %v2235, %v2236
      %v2238 = vsel %vm1767, %v2072, 0.0
      %v2239 = vadd.f32 %v2237, %v2238
      %v2240 = vsel %vm1767, %v2073, 0.0
      %v2241 = vadd.f32 %v2239, %v2240
      %v2242 = vsel %vm1767, %v2074, 0.0
      %v2243 = vadd.f32 %v2241, %v2242
      %v2244 = vsel %vm1767, %v2075, 0.0
      %v2245 = vadd.f32 %v2243, %v2244
      %v2246 = vsel %vm1767, %v2076, 0.0
      %v2247 = vadd.f32 %v2245, %v2246
      %v2248 = vsel %vm1767, %v2077, 0.0
      %v2249 = vadd.f32 %v2247, %v2248
      %v2250 = vsel %vm1767, %v2078, 0.0
      %v2251 = vadd.f32 %v2249, %v2250
      %v2252 = vsel %vm1767, %v2079, 0.0
      %v2253 = vadd.f32 %v2251, %v2252
      %v2254 = vsel %vm1767, %v2080, 0.0
      %v2255 = vadd.f32 %v2253, %v2254
      %v2256 = vsel %vm1767, %v2081, 0.0
      %v2257 = vadd.f32 %v2255, %v2256
      %v2258 = vsel %vm1767, %v2082, 0.0
      %v2259 = vadd.f32 %v2257, %v2258
      %v2260 = vsel %vm1767, %v2083, 0.0
      %v2261 = vadd.f32 %v2259, %v2260
      %v2262 = vsel %vm1767, %v2084, 0.0
      %v2263 = vadd.f32 %v2261, %v2262
      %v2264 = vsel %vm1767, %v2085, 0.0
      %v2265 = vadd.f32 %v2263, %v2264
      %v2266 = vsel %vm1767, %v2086, 0.0
      %v2267 = vadd.f32 %v2265, %v2266
      %v2268 = vsel %vm1767, %v2087, 0.0
      %v2269 = vadd.f32 %v2267, %v2268
      %v2270 = vsel %vm1767, %v2088, 0.0
      %v2271 = vadd.f32 %v2269, %v2270
      %v2272 = vsel %vm1767, %v2089, 0.0
      %v2273 = vadd.f32 %v2271, %v2272
      %v2274 = vsel %vm1767, %v2090, 0.0
      %v2275 = vadd.f32 %v2273, %v2274
      %v2276 = vsel %vm1767, %v2091, 0.0
      %v2277 = vadd.f32 %v2275, %v2276
      %v2278 = vsel %vm1767, %v2092, 0.0
      %v2279 = vadd.f32 %v2277, %v2278
      %v2280 = vsel %vm1767, %v2093, 0.0
      %v2281 = vadd.f32 %v2279, %v2280
      %v2282 = vsel %vm1767, %v2094, 0.0
      %v2283 = vadd.f32 %v2281, %v2282
      %v2284 = vsel %vm1767, %v2095, 0.0
      %v2285 = vadd.f32 %v2283, %v2284
      %v2286 = vsel %vm1767, %v2096, 0.0
      %v2287 = vadd.f32 %v2285, %v2286
      %v2288 = vsel %vm1767, %v2097, 0.0
      %v2289 = vadd.f32 %v2287, %v2288
      %v2290 = vsel %vm1767, %v2098, 0.0
      %v2291 = vadd.f32 %v2289, %v2290
      %v2292 = vsel %vm1767, %v2099, 0.0
      %v2293 = vadd.f32 %v2291, %v2292
      %v2294 = vsel %vm1767, %v2100, 0.0
      %v2295 = vadd.f32 %v2293, %v2294
      %v2296 = vsel %vm1767, %v2101, 0.0
      %v2297 = vadd.f32 %v2295, %v2296
      %v2298 = vsel %vm1767, %v2102, 0.0
      %v2299 = vadd.f32 %v2297, %v2298
      %v2300 = vsel %vm1767, %v2103, 0.0
      %v2301 = vadd.f32 %v2299, %v2300
      %v2302 = vsel %vm1767, %v2104, 0.0
      %v2303 = vadd.f32 %v2301, %v2302
      %v2304 = vsel %vm1767, %v2105, 0.0
      %v2305 = vadd.f32 %v2303, %v2304
      %v2306 = vsel %vm1767, %v2106, 0.0
      %v2307 = vadd.f32 %v2305, %v2306
      %v2308 = vsel %vm1767, %v2107, 0.0
      %v2309 = vadd.f32 %v2307, %v2308
      %v2310 = vsel %vm1767, %v2108, 0.0
      %v2311 = vadd.f32 %v2309, %v2310
      %v2312 = vsel %vm1767, %v2109, 0.0
      %v2313 = vadd.f32 %v2311, %v2312
      %v2314 = vsel %vm1767, %v2110, 0.0
      %v2315 = vadd.f32 %v2313, %v2314
      %v2316 = vsel %vm1767, %v2111, 0.0
      %v2317 = vadd.f32 %v2315, %v2316
      %v2318 = vsel %vm1767, %v2112, 0.0
      %v2319 = vadd.f32 %v2317, %v2318
      %v2320 = vsel %vm1767, %v2113, 0.0
      %v2321 = vadd.f32 %v2319, %v2320
      %v2322 = vsel %vm1767, %v2114, 0.0
      %v2323 = vadd.f32 %v2321, %v2322
      %v2324 = vsel %vm1767, %v2115, 0.0
      %v2325 = vadd.f32 %v2323, %v2324
      %v2326 = vsel %vm1767, %v2116, 0.0
      %v2327 = vadd.f32 %v2325, %v2326
      %v2328 = vsel %vm1767, %v2117, 0.0
      %v2329 = vadd.f32 %v2327, %v2328
      %v2330 = vsel %vm1767, %v2118, 0.0
      %v2331 = vadd.f32 %v2329, %v2330
      %v2332 = vsel %vm1767, %v2119, 0.0
      %v2333 = vadd.f32 %v2331, %v2332
      %v2334 = vsel %vm1767, %v2120, 0.0
      %v2335 = vadd.f32 %v2333, %v2334
      %v2336 = vsel %vm1767, %v2121, 0.0
      %v2337 = vadd.f32 %v2335, %v2336
      %v2338 = vsel %vm1767, %v2122, 0.0
      %v2339 = vadd.f32 %v2337, %v2338
      %v2340 = vsel %vm1767, %v2123, 0.0
      %v2341 = vadd.f32 %v2339, %v2340
      %v2342 = vsel %vm1767, %v2124, 0.0
      %v2343 = vadd.f32 %v2341, %v2342
      %v2344 = vsel %vm1767, %v2125, 0.0
      %v2345 = vadd.f32 %v2343, %v2344
      %v2346 = vsel %vm1767, %v2126, 0.0
      %v2347 = vadd.f32 %v2345, %v2346
      %v2348 = vsel %vm1767, %v2127, 0.0
      %v2349 = vadd.f32 %v2347, %v2348
      %v2350 = vsel %vm1767, %v2128, 0.0
      %v2351 = vadd.f32 %v2349, %v2350
      %v2352 = vsel %vm1767, %v2129, 0.0
      %v2353 = vadd.f32 %v2351, %v2352
      %v2354 = vsel %vm1767, %v2130, 0.0
      %v2355 = vadd.f32 %v2353, %v2354
      %v2356 = vsel %vm1767, %v2131, 0.0
      %v2357 = vadd.f32 %v2355, %v2356
      %v2358 = vsel %vm1767, %v2132, 0.0
      %v2359 = vadd.f32 %v2357, %v2358
      %v2360 = vsel %vm1767, %v2133, 0.0
      %v2361 = vadd.f32 %v2359, %v2360
      %v2362 = vsel %vm1767, %v2134, 0.0
      %v2363 = vadd.f32 %v2361, %v2362
      %v2364 = vsel %vm1767, %v2135, 0.0
      %v2365 = vadd.f32 %v2363, %v2364
      %v2366 = vsel %vm1767, %v2136, 0.0
      %v2367 = vadd.f32 %v2365, %v2366
      %v2368 = vsel %vm1767, %v2137, 0.0
      %v2369 = vadd.f32 %v2367, %v2368
      %v2370 = vsel %vm1767, %v2138, 0.0
      %v2371 = vadd.f32 %v2369, %v2370
      %v2372 = vsel %vm1767, %v2139, 0.0
      %v2373 = vadd.f32 %v2371, %v2372
      %v2374 = vsel %vm1767, %v2140, 0.0
      %v2375 = vadd.f32 %v2373, %v2374
      %v2376 = vsel %vm1767, %v2141, 0.0
      %v2377 = vadd.f32 %v2375, %v2376
      %v2378 = vsel %vm1767, %v2142, 0.0
      %v2379 = vadd.f32 %v2377, %v2378
      %v2380 = vsel %vm1767, %v2143, 0.0
      %v2381 = vadd.f32 %v2379, %v2380
      %v2382 = vsel %vm1767, %v2144, 0.0
      %v2383 = vadd.f32 %v2381, %v2382
      %v2384 = vsel %vm1767, %v2145, 0.0
      %v2385 = vadd.f32 %v2383, %v2384
      %v2386 = vsel %vm1767, %v2146, 0.0
      %v2387 = vadd.f32 %v2385, %v2386
      %v2388 = vsel %vm1767, %v2147, 0.0
      %v2389 = vadd.f32 %v2387, %v2388
      %v2390 = vsel %vm1767, %v2148, 0.0
      %v2391 = vadd.f32 %v2389, %v2390
      %v2392 = vsel %vm1767, %v2149, 0.0
      %v2393 = vadd.f32 %v2391, %v2392
      %v2394 = vsel %vm1767, %v2150, 0.0
      %v2395 = vadd.f32 %v2393, %v2394
      %v2396 = vsel %vm1767, %v2151, 0.0
      %v2397 = vadd.f32 %v2395, %v2396
      %v2398 = vsel %vm1767, %v2152, 0.0
      %v2399 = vadd.f32 %v2397, %v2398
      %v2400 = vsel %vm1767, %v2153, 0.0
      %v2401 = vadd.f32 %v2399, %v2400
      %v2402 = vsel %vm1767, %v2154, 0.0
      %v2403 = vadd.f32 %v2401, %v2402
      %v2404 = vsel %vm1767, %v2155, 0.0
      %v2405 = vadd.f32 %v2403, %v2404
      %v2406 = vsel %vm1767, %v2156, 0.0
      %v2407 = vadd.f32 %v2405, %v2406
      %v2408 = vsel %vm1767, %v2157, 0.0
      %v2409 = vadd.f32 %v2407, %v2408
      %v2410 = vsel %vm1767, %v2158, 0.0
      %v2411 = vadd.f32 %v2409, %v2410
      %v2412 = vsel %vm1767, %v2159, 0.0
      %v2413 = vadd.f32 %v2411, %v2412
      %v2414 = vsel %vm1767, %v2160, 0.0
      %v2415 = vadd.f32 %v2413, %v2414
      %v2416 = vrot.slane %v2415, 4
      %v2417 = vadd.f32 %v2415, %v2416
      %v2418 = vrot.slane %v2417, 2
      %v2419 = vadd.f32 %v2417, %v2418
      %v2420 = vrot.slane %v2419, 1
      %v2421 = vadd.f32 %v2419, %v2420
      %v2422 = vadd.f32 %v2032, %v2421
      %2423 = vst.msk [vmem:[%s262 + $0x1] sm:$0x1] %vm2030, %v2422
      %s2424 = sadd.s32 %s21, %s22
      %s2425 = smul.u32 128, %s2424
      %p2426 = scmp.lt.s32.totalorder %s2425, 1023
      %s2427 = scalar_select %p2426, %s2425, 1023
      %s2428 = smul.addr %s2427, 4
      %s2429 = scalar_lea.vmem %s4, %s2428
      %p2430 = scmp.lt.s32.totalorder %s21, 7
      %s2431 = scalar_select %p2430, %s21, 7
      %s2432 = smul.addr %s2431, 2
      %s2433 = scalar_lea.vmem %s5, %s2432
      // Predicated region
      $region41: #{decoder_bottleneck_forward.6} parent=35 // pred_check
        %p2434 = pneg %p140
      $region42: #{decoder_bottleneck_forward.6} parent=35 // pred_check_branch
        %2436 = sbr.rel (%p2434) target = $region44
      $region43: #{decoder_bottleneck_forward.6} parent=35 // pred_region
        %s2437 = sadd.s32 %s21, %s22
        %s2438 = smul.u32 128, %s2437
      $region44: #{decoder_bottleneck_forward.6} parent=35 // pred_fallthru
        _
      // Predicated region
      $region45: #{decoder_bottleneck_forward.6} parent=35 // pred_check
        %p2439 = pneg %p166
      $region46: #{decoder_bottleneck_forward.6} parent=35 // pred_check_branch
        %2441 = sbr.rel (%p2439) target = $region48
      $region47: #{decoder_bottleneck_forward.6} parent=35 // pred_region
        _
      $region48: #{decoder_bottleneck_forward.6} parent=35 // pred_fallthru
        _
    $region36: #{decoder_bottleneck_forward.6} parent=5 // pred_fallthru
      _
    %p2442 = scmp.le.s32.totalorder 2, %s12
    // Predicated region
    $region49: #{decoder_bottleneck_forward.6} parent=5 // pred_check
      %p2443 = pneg %p2442
    $region50: #{decoder_bottleneck_forward.6} parent=5 // pred_check_branch
      %2445 = sbr.rel (%p2443) target = $region52
    $region51: #{decoder_bottleneck_forward.6} parent=5 // pred_region
      %s2446 = ssub.s32 %s12, 2
      // Predicated region
      $region53: #{decoder_bottleneck_forward.6} parent=51 // pred_check
        %p2447 = pneg %p146
      $region54: #{decoder_bottleneck_forward.6} parent=51 // pred_check_branch
        %2449 = sbr.rel (%p2447) target = $region56
      $region55: #{decoder_bottleneck_forward.6} parent=51 // pred_region
        %s2450 = sadd.s32 %s23, %s24
        %s2451 = smul.u32 128, %s2450
        %p2452 = scmp.lt.s32.totalorder %s2451, 1023
        %s2453 = scalar_select %p2452, %s2451, 1023
        %s2454 = smul.addr %s2453, 4
        %s2455 = scalar_lea.vmem %s4, %s2454
      $region56: #{decoder_bottleneck_forward.6} parent=51 // pred_fallthru
        _
      // Predicated region
      $region57: #{decoder_bottleneck_forward.6} parent=51 // pred_check
        %p2456 = pneg %p172
      $region58: #{decoder_bottleneck_forward.6} parent=51 // pred_check_branch
        %2458 = sbr.rel (%p2456) target = $region60
      $region59: #{decoder_bottleneck_forward.6} parent=51 // pred_region
        %p2459 = scmp.lt.s32.totalorder %s23, 7
        %s2460 = scalar_select %p2459, %s23, 7
        %s2461 = smul.addr %s2460, 2
        %s2462 = scalar_lea.vmem %s5, %s2461
      $region60: #{decoder_bottleneck_forward.6} parent=51 // pred_fallthru
        _
    $region52: #{decoder_bottleneck_forward.6} parent=5 // pred_fallthru
      _
  $region6: #{decoder_bottleneck_forward.6} parent=0 // loop_footer
    %s16 = sadd.s32 1, %s12
  $region7: #{decoder_bottleneck_forward.6} parent=0 // loop_footer_branch
    %11 = sbr.rel target = $region3
  $region8: #{decoder_bottleneck_forward.6} parent=0 // loop_exit
    _

// kernel: decoder_bottleneck_forward.5
$region0: #{decoder_bottleneck_forward.5}
  #allocation0 [shape = 'u32[]', space=smem, size = 0x4, offset = 0x4, fixed_abs, tag = 'smem constant byte address 0x4 - core index']
  #allocation1 [shape = 'u32[72,128]{1,0:T(1,128)}', space=vmem, size = 0x9000, scoped, tag = 'internal scratch']
  %s0 = inlined_call_operand.vmem [shape: bf16[2,33,33,4], index: 0, kind: input, shape index: {}, may-alias: {0,1}]
  %s1 = inlined_call_operand.vmem [shape: bf16[2,33,33,4], index: 1, kind: input, shape index: {}, may-alias: {0,1}]
  %s2 = inlined_call_operand.vmem [shape: f32[1,4], index: 2, kind: input, shape index: {}]
  %s3 = inlined_call_operand.vmem [shape: f32[1,4], index: 3, kind: input, shape index: {}]
  %s4 = inlined_call_operand.vmem [shape: bf16[16,16], index: 4, kind: input, shape index: {}]
  %s5 = inlined_call_operand.vmem [shape: bf16[2048,16], index: 5, kind: output, shape index: {0}]
  %s6 = inlined_call_operand.vmem [shape: f32[2,2,16], index: 6, kind: output, shape index: {1}]
  %7 = xla_tuple %s5, %s6
  %s8 = sld [smem:[#allocation0]]
  $region65: #{decoder_bottleneck_forward.5} parent=0
    _
  %s10 = ssub.s32 1, %s8
  %s11 = scalar_select 0, %s10, %s8
  loop: start=0, step=1, limit=4
  $region2: #{decoder_bottleneck_forward.5} parent=0 // loop_pre_header
    _
  $region3: #{decoder_bottleneck_forward.5} parent=0 // loop_header
    %s13 = sphi 0, %s17
    %p14 = scmp.ge.s32.totalorder %s13, 4
    %s20 = sphi 0, %s32
    %s21 = sphi 0, %s28
    %s22 = sphi 0, %s20
    %s23 = sphi 0, %s21
    %s24 = sphi 0, %s22
    %s25 = sphi 0, %s23
    %s37 = sphi 0, %s39
    %s40 = sphi 0, %s37
    %s41 = sphi 0, %s40
    %s57 = sphi 0, %s41
    %s69 = sphi 0, %s71
    %s72 = sphi 0, %s69
    %s73 = sphi 0, %s72
    %s89 = sphi 0, %s73
    %s93 = sphi 0, %s93
    %s95 = sphi 0, %s93
    %s96 = sphi 0, %s95
    %s110 = sphi 0, %s96
    %s114 = sphi 0, %s114
    %s116 = sphi 0, %s114
    %s117 = sphi 0, %s116
    %s131 = sphi 0, %s117
    %s135 = sphi 0, %s135
    %s137 = sphi 0, %s135
    %s138 = sphi 0, %s137
    %s152 = sphi 0, %s138
    %s160 = sphi 0, %s162
    %s163 = sphi 0, %s160
    %s164 = sphi 0, %s163
    %s180 = sphi 0, %s164
    %s186 = sphi 0, %s188
    %s189 = sphi 0, %s186
    %s190 = sphi 0, %s189
    %s206 = sphi 0, %s190
  $region4: #{decoder_bottleneck_forward.5} parent=0 // loop_header_branch
    %16 = sbr.rel (%p14) target = $region8
  $region5: #{decoder_bottleneck_forward.5} parent=0 // loop_body
    %s18 = ssub.s32 %s13, 1
    %s19 = ssub.s32 %s13, 2
    %s26 = sadd.s32 1, %s21
    %p27 = scmp.ge.s32.totalorder %s26, 1
    %s28 = scalar_select %p27, 0, %s26
    %s29 = sadd.s32 1, %s20
    %s30 = scalar_select %p27, %s29, %s20
    %p31 = scmp.ge.s32.totalorder %s30, 2
    %s32 = scalar_select %p31, 0, %s30
    %s33 = ssub.s32 %s20, %s32
    %s34 = ssub.s32 %s21, %s28
    %s35 = sor.u32 %s33, %s34
    %p36 = scmp.eq.s32.totalorder %s35, 0
    %s38 = sadd.s32 %s37, 1
    %s39 = scalar_select %p36, %s37, %s38
    %p42 = pneg %p36
    %p43 = scmp.eq.s32.totalorder %s13, 1
    %p44 = por %p42, %p43
    %p45 = scmp.ne.s32.totalorder %s37, %s40
    %p46 = scmp.eq.s32.totalorder %s13, 0
    %p47 = por %p45, %p46
    %p48 = scmp.ne.s32.totalorder %s37, %s40
    %p49 = scmp.eq.s32.totalorder %s18, 1
    %p50 = por %p48, %p49
    %p51 = scmp.ne.s32.totalorder %s40, %s41
    %p52 = scmp.eq.s32.totalorder %s18, 0
    %p53 = por %p51, %p52
    %p54 = scmp.ne.s32.totalorder %s40, %s41
    %p55 = scmp.eq.s32.totalorder %s19, 1
    %p56 = por %p54, %p55
    %p58 = scmp.ne.s32.totalorder %s41, %s57
    %p59 = scmp.eq.s32.totalorder %s19, 0
    %p60 = por %p58, %p59
    %s61 = sadd.s32 %s21, 1
    %s62 = smul.u32 %s61, 32
    %s63 = sadd.s32 %s28, 1
    %s64 = smul.u32 %s63, 32
    %s65 = ssub.s32 %s20, %s32
    %s66 = ssub.s32 %s62, %s64
    %s67 = sor.u32 %s65, %s66
    %p68 = scmp.eq.s32.totalorder %s67, 0
    %s70 = sadd.s32 %s69, 1
    %s71 = scalar_select %p68, %s69, %s70
    %p74 = pneg %p68
    %p75 = scmp.eq.s32.totalorder %s13, 1
    %p76 = por %p74, %p75
    %p77 = scmp.ne.s32.totalorder %s69, %s72
    %p78 = scmp.eq.s32.totalorder %s13, 0
    %p79 = por %p77, %p78
    %p80 = scmp.ne.s32.totalorder %s69, %s72
    %p81 = scmp.eq.s32.totalorder %s18, 1
    %p82 = por %p80, %p81
    %p83 = scmp.ne.s32.totalorder %s72, %s73
    %p84 = scmp.eq.s32.totalorder %s18, 0
    %p85 = por %p83, %p84
    %p86 = scmp.ne.s32.totalorder %s72, %s73
    %p87 = scmp.eq.s32.totalorder %s19, 1
    %p88 = por %p86, %p87
    %p90 = scmp.ne.s32.totalorder %s73, %s89
    %p91 = scmp.eq.s32.totalorder %s19, 0
    %p92 = por %p90, %p91
    %s94 = sadd.s32 %s93, 1
    %p97 = scmp.eq.s32.totalorder %s13, 1
    %p98 = scmp.ne.s32.totalorder %s93, %s95
    %p99 = scmp.eq.s32.totalorder %s13, 0
    %p100 = por %p98, %p99
    %p101 = scmp.ne.s32.totalorder %s93, %s95
    %p102 = scmp.eq.s32.totalorder %s18, 1
    %p103 = por %p101, %p102
    %p104 = scmp.ne.s32.totalorder %s95, %s96
    %p105 = scmp.eq.s32.totalorder %s18, 0
    %p106 = por %p104, %p105
    %p107 = scmp.ne.s32.totalorder %s95, %s96
    %p108 = scmp.eq.s32.totalorder %s19, 1
    %p109 = por %p107, %p108
    %p111 = scmp.ne.s32.totalorder %s96, %s110
    %p112 = scmp.eq.s32.totalorder %s19, 0
    %p113 = por %p111, %p112
    %s115 = sadd.s32 %s114, 1
    %p118 = scmp.eq.s32.totalorder %s13, 1
    %p119 = scmp.ne.s32.totalorder %s114, %s116
    %p120 = scmp.eq.s32.totalorder %s13, 0
    %p121 = por %p119, %p120
    %p122 = scmp.ne.s32.totalorder %s114, %s116
    %p123 = scmp.eq.s32.totalorder %s18, 1
    %p124 = por %p122, %p123
    %p125 = scmp.ne.s32.totalorder %s116, %s117
    %p126 = scmp.eq.s32.totalorder %s18, 0
    %p127 = por %p125, %p126
    %p128 = scmp.ne.s32.totalorder %s116, %s117
    %p129 = scmp.eq.s32.totalorder %s19, 1
    %p130 = por %p128, %p129
    %p132 = scmp.ne.s32.totalorder %s117, %s131
    %p133 = scmp.eq.s32.totalorder %s19, 0
    %p134 = por %p132, %p133
    %s136 = sadd.s32 %s135, 1
    %p139 = scmp.eq.s32.totalorder %s13, 1
    %p140 = scmp.ne.s32.totalorder %s135, %s137
    %p141 = scmp.eq.s32.totalorder %s13, 0
    %p142 = por %p140, %p141
    %p143 = scmp.ne.s32.totalorder %s135, %s137
    %p144 = scmp.eq.s32.totalorder %s18, 1
    %p145 = por %p143, %p144
    %p146 = scmp.ne.s32.totalorder %s137, %s138
    %p147 = scmp.eq.s32.totalorder %s18, 0
    %p148 = por %p146, %p147
    %p149 = scmp.ne.s32.totalorder %s137, %s138
    %p150 = scmp.eq.s32.totalorder %s19, 1
    %p151 = por %p149, %p150
    %p153 = scmp.ne.s32.totalorder %s138, %s152
    %p154 = scmp.eq.s32.totalorder %s19, 0
    %p155 = por %p153, %p154
    %s156 = sadd.s32 %s20, %s21
    %s157 = sadd.s32 %s32, %s28
    %s158 = ssub.s32 %s156, %s157
    %p159 = scmp.eq.s32.totalorder %s158, 0
    %s161 = sadd.s32 %s160, 1
    %s162 = scalar_select %p159, %s160, %s161
    %p165 = pneg %p159
    %p166 = scmp.eq.s32.totalorder %s13, 1
    %p167 = por %p165, %p166
    %p168 = scmp.ne.s32.totalorder %s160, %s163
    %p169 = scmp.eq.s32.totalorder %s13, 0
    %p170 = por %p168, %p169
    %p171 = scmp.ne.s32.totalorder %s160, %s163
    %p172 = scmp.eq.s32.totalorder %s18, 1
    %p173 = por %p171, %p172
    %p174 = scmp.ne.s32.totalorder %s163, %s164
    %p175 = scmp.eq.s32.totalorder %s18, 0
    %p176 = por %p174, %p175
    %p177 = scmp.ne.s32.totalorder %s163, %s164
    %p178 = scmp.eq.s32.totalorder %s19, 1
    %p179 = por %p177, %p178
    %p181 = scmp.ne.s32.totalorder %s164, %s180
    %p182 = scmp.eq.s32.totalorder %s19, 0
    %p183 = por %p181, %p182
    %s184 = ssub.s32 %s20, %s32
    %p185 = scmp.eq.s32.totalorder %s184, 0
    %s187 = sadd.s32 %s186, 1
    %s188 = scalar_select %p185, %s186, %s187
    %p191 = pneg %p185
    %p192 = scmp.eq.s32.totalorder %s13, 1
    %p193 = por %p191, %p192
    %p194 = scmp.ne.s32.totalorder %s186, %s189
    %p195 = scmp.eq.s32.totalorder %s13, 0
    %p196 = por %p194, %p195
    %p197 = scmp.ne.s32.totalorder %s186, %s189
    %p198 = scmp.eq.s32.totalorder %s18, 1
    %p199 = por %p197, %p198
    %p200 = scmp.ne.s32.totalorder %s189, %s190
    %p201 = scmp.eq.s32.totalorder %s18, 0
    %p202 = por %p200, %p201
    %p203 = scmp.ne.s32.totalorder %s189, %s190
    %p204 = scmp.eq.s32.totalorder %s19, 1
    %p205 = por %p203, %p204
    %p207 = scmp.ne.s32.totalorder %s190, %s206
    %p208 = scmp.eq.s32.totalorder %s19, 0
    %p209 = por %p207, %p208
    %p210 = scmp.le.s32.totalorder 1, %s13
    %p211 = scmp.lt.s32.totalorder %s13, 3
    %p212 = pnand %p210, %p211
    %p213 = pneg %p212
    // Predicated region
    $region9: #{decoder_bottleneck_forward.5} parent=5 // pred_check
      _
    $region10: #{decoder_bottleneck_forward.5} parent=5 // pred_check_branch
      %215 = sbr.rel (%p212) target = $region12
    $region11: #{decoder_bottleneck_forward.5} parent=5 // pred_region
      %s216 = ssub.s32 %s13, 1
      // Predicated region
      $region13: #{decoder_bottleneck_forward.5} parent=11 // pred_check
        %p217 = pneg %p106
      $region14: #{decoder_bottleneck_forward.5} parent=11 // pred_check_branch
        %219 = sbr.rel (%p217) target = $region16
      $region15: #{decoder_bottleneck_forward.5} parent=11 // pred_region
        _
      $region16: #{decoder_bottleneck_forward.5} parent=11 // pred_fallthru
        _
      // Predicated region
      $region17: #{decoder_bottleneck_forward.5} parent=11 // pred_check
        %p220 = pneg %p127
      $region18: #{decoder_bottleneck_forward.5} parent=11 // pred_check_branch
        %222 = sbr.rel (%p220) target = $region20
      $region19: #{decoder_bottleneck_forward.5} parent=11 // pred_region
        _
      $region20: #{decoder_bottleneck_forward.5} parent=11 // pred_fallthru
        _
      // Predicated region
      $region21: #{decoder_bottleneck_forward.5} parent=11 // pred_check
        %p223 = pneg %p148
      $region22: #{decoder_bottleneck_forward.5} parent=11 // pred_check_branch
        %225 = sbr.rel (%p223) target = $region24
      $region23: #{decoder_bottleneck_forward.5} parent=11 // pred_region
        _
      $region24: #{decoder_bottleneck_forward.5} parent=11 // pred_fallthru
        _
    $region12: #{decoder_bottleneck_forward.5} parent=5 // pred_fallthru
      _
    %p226 = scmp.lt.s32.totalorder %s13, 2
    // Predicated region
    $region25: #{decoder_bottleneck_forward.5} parent=5 // pred_check
      %p227 = pneg %p226
    $region26: #{decoder_bottleneck_forward.5} parent=5 // pred_check_branch
      %229 = sbr.rel (%p227) target = $region28
    $region27: #{decoder_bottleneck_forward.5} parent=5 // pred_region
      // Predicated region
      $region29: #{decoder_bottleneck_forward.5} parent=27 // pred_check
        %p230 = pneg %p47
      $region30: #{decoder_bottleneck_forward.5} parent=27 // pred_check_branch
        %232 = sbr.rel (%p230) target = $region32
      $region31: #{decoder_bottleneck_forward.5} parent=27 // pred_region
        %s233 = smul.u32 32, %s21
        %s234 = ssub.s32 33, %s233
        %p235 = scmp.lt.s32.totalorder %s234, 32
        %s236 = scalar_select %p235, %s234, 32
        %s237 = smul.u32 4, %s236
        %s238 = smul.u32 %s237, 5
        %p239 = scmp.lt.s32.totalorder %s20, 1
        %s240 = scalar_select %p239, %s20, 1
        %p241 = scmp.lt.s32.totalorder %s233, 32
        %s242 = scalar_select %p241, %s233, 32
        %s243 = smul.addr %s242, 5
        %s244 = smul.addr %s240, 165
        %s245 = sadd.s32 %s243, %s244
        %s246 = smul.addr %s245, 4
        %s247 = scalar_lea.vmem %s0, %s246
        %s248 = smul.u32 32, %s21
        %s249 = ssub.s32 33, %s248
        %p250 = scmp.lt.s32.totalorder %s249, 32
        %s251 = scalar_select %p250, %s249, 32
        %s252 = smul.u32 4, %s251
        %s253 = smul.u32 %s252, 5
      $region32: #{decoder_bottleneck_forward.5} parent=27 // pred_fallthru
        _
      // Predicated region
      $region33: #{decoder_bottleneck_forward.5} parent=27 // pred_check
        %p254 = pneg %p79
      $region34: #{decoder_bottleneck_forward.5} parent=27 // pred_check_branch
        %256 = sbr.rel (%p254) target = $region36
      $region35: #{decoder_bottleneck_forward.5} parent=27 // pred_region
        %s257 = sadd.s32 %s21, 1
        %s258 = smul.u32 %s257, 32
        %p259 = scmp.lt.s32.totalorder %s20, 1
        %s260 = scalar_select %p259, %s20, 1
        %p261 = scmp.lt.s32.totalorder %s258, 32
        %s262 = scalar_select %p261, %s258, 32
        %s263 = smul.addr %s262, 5
        %s264 = smul.addr %s260, 165
        %s265 = sadd.s32 %s263, %s264
        %s266 = smul.addr %s265, 4
        %s267 = scalar_lea.vmem %s1, %s266
        %s268 = sadd.s32 %s21, 1
        %s269 = smul.u32 %s268, 32
      $region36: #{decoder_bottleneck_forward.5} parent=27 // pred_fallthru
        _
    $region28: #{decoder_bottleneck_forward.5} parent=5 // pred_fallthru
      _
    %p270 = scmp.le.s32.totalorder 1, %s13
    %p271 = scmp.lt.s32.totalorder %s13, 3
    %p272 = pnand %p270, %p271
    %p273 = pneg %p272
    // Predicated region
    $region37: #{decoder_bottleneck_forward.5} parent=5 // pred_check
      _
    $region38: #{decoder_bottleneck_forward.5} parent=5 // pred_check_branch
      %275 = sbr.rel (%p272) target = $region40
    $region39: #{decoder_bottleneck_forward.5} parent=5 // pred_region
      %s276 = ssub.s32 %s13, 1
      %s277 = smul.u32 32, %s23
      %s278 = ssub.s32 33, %s277
      %p279 = scmp.lt.s32.totalorder %s278, 32
      %s280 = scalar_select %p279, %s278, 32
      %s281 = smul.u32 4, %s280
      %s282 = smul.u32 %s281, 5
      %p283 = scmp.lt.s32.totalorder %s22, 1
      %s284 = scalar_select %p283, %s22, 1
      %p285 = scmp.lt.s32.totalorder %s277, 32
      %s286 = scalar_select %p285, %s277, 32
      %s287 = smul.addr %s286, 5
      %s288 = smul.addr %s284, 165
      %s289 = sadd.s32 %s287, %s288
      %s290 = smul.addr %s289, 4
      %s291 = scalar_lea.vmem %s0, %s290
      %p292 = pneg %p53
      %p293 = pneg %p50
      %s294 = sadd.s32 %s23, 1
      %s295 = smul.u32 %s294, 32
      %p296 = scmp.lt.s32.totalorder %s22, 1
      %s297 = scalar_select %p296, %s22, 1
      %p298 = scmp.lt.s32.totalorder %s295, 32
      %s299 = scalar_select %p298, %s295, 32
      %s300 = smul.addr %s299, 5
      %s301 = smul.addr %s297, 165
      %s302 = sadd.s32 %s300, %s301
      %s303 = smul.addr %s302, 4
      %s304 = scalar_lea.vmem %s1, %s303
      %p305 = pneg %p85
      %p306 = pneg %p82
      %p307 = pneg %p106
      %p308 = pneg %p103
      %p309 = pneg %p127
      %p310 = pneg %p124
      %p311 = pneg %p148
      %p312 = pneg %p145
      %p313 = pneg %p176
      %p314 = pneg %p173
      %s315 = sadd.s32 %s22, %s23
      %s316 = smul.u32 128, %s315
      %p317 = scmp.lt.s32.totalorder %s316, 255
      %s318 = scalar_select %p317, %s316, 255
      %s319 = smul.addr %s318, 4
      %s320 = scalar_lea.vmem %s5, %s319
      %p321 = pneg %p202
      %p322 = pneg %p199
      %p323 = scmp.lt.s32.totalorder %s22, 1
      %s324 = scalar_select %p323, %s22, 1
      %s325 = smul.addr %s324, 2
      %s326 = scalar_lea.vmem %s6, %s325
      %s327 = smul.u32 32, %s23
      %s328 = ssub.s32 33, %s327
      %p329 = scmp.lt.s32.totalorder %s328, 32
      %s330 = scalar_select %p329, %s328, 32
      %s331 = smul.u32 4, %s330
      %s332 = smul.u32 %s331, 5
      %p333 = scmp.lt.s32.totalorder %s22, 1
      %s334 = scalar_select %p333, %s22, 1
      %p335 = scmp.lt.s32.totalorder %s327, 32
      %s336 = scalar_select %p335, %s327, 32
      %s337 = smul.addr %s336, 5
      %s338 = smul.addr %s334, 165
      %s339 = sadd.s32 %s337, %s338
      %s340 = smul.addr %s339, 4
      %s341 = scalar_lea.vmem %s0, %s340
      %s342 = smul.u32 32, %s23
      %s343 = ssub.s32 33, %s342
      %p344 = scmp.lt.s32.totalorder %s343, 32
      %s345 = scalar_select %p344, %s343, 32
      %s346 = smul.u32 4, %s345
      %s347 = smul.u32 %s346, 5
      %s348 = sadd.s32 %s23, 1
      %s349 = smul.u32 %s348, 32
      %p350 = scmp.lt.s32.totalorder %s22, 1
      %s351 = scalar_select %p350, %s22, 1
      %p352 = scmp.lt.s32.totalorder %s349, 32
      %s353 = scalar_select %p352, %s349, 32
      %s354 = smul.addr %s353, 5
      %s355 = smul.addr %s351, 165
      %s356 = sadd.s32 %s354, %s355
      %s357 = smul.addr %s356, 4
      %s358 = scalar_lea.vmem %s1, %s357
      %s359 = sadd.s32 %s23, 1
      %s360 = smul.u32 %s359, 32
      %s361 = sadd.s32 %s22, %s23
      %s362 = smul.u32 128, %s361
      %p363 = scmp.lt.s32.totalorder %s362, 255
      %s364 = scalar_select %p363, %s362, 255
      %s365 = smul.addr %s364, 4
      %s366 = scalar_lea.vmem %s5, %s365
      %s367 = sadd.s32 %s22, %s23
      %s368 = smul.u32 128, %s367
      %p369 = scmp.lt.s32.totalorder %s22, 1
      %s370 = scalar_select %p369, %s22, 1
      %s371 = smul.addr %s370, 2
      %s372 = scalar_lea.vmem %s6, %s371
      %v374 = vld [vmem:[%s2] sm:$0x1]
      %v375 = vld [vmem:[%s3] sm:$0x1]
      %v376 = vlaneseq
      %v377 = vshrl.u32 %v376, 7
      %v378 = vadd.s32 %v377, 8
      %v379 = vadd.s32 %v377, 16
      %v380 = vadd.s32 %v377, 24
      %v381 = vadd.s32 %v377, 32
      %vm382 = vcmp.lt.s32.totalorder %v377, 32
      %vm383 = vcmp.lt.s32.totalorder %v378, 32
      %vm384 = vcmp.lt.s32.totalorder %v379, 32
      %vm385 = vcmp.lt.s32.totalorder %v380, 32
      %vm386 = vcmp.lt.s32.totalorder %v381, 32
      %v387 = vld [vmem:[%s341] sm:$0xf]
      %v388 = vld [vmem:[%s341 + $0x4] sm:$0xf]
      %v389 = vld [vmem:[%s341 + $0x8] sm:$0xf]
      %v390 = vld [vmem:[%s341 + $0xc] sm:$0xf]
      %v391 = vld [vmem:[%s341 + $0x10] sm:$0x1]
      %v392 = vld [vmem:[%s341 + $0x14] sm:$0xf]
      %v393 = vld [vmem:[%s341 + $0x18] sm:$0xf]
      %v394 = vld [vmem:[%s341 + $0x1c] sm:$0xf]
      %v395 = vld [vmem:[%s341 + $0x20] sm:$0xf]
      %v396 = vld [vmem:[%s341 + $0x24] sm:$0x1]
      %v397 = vld [vmem:[%s341 + $0x28] sm:$0xf]
      %v398 = vld [vmem:[%s341 + $0x2c] sm:$0xf]
      %v399 = vld [vmem:[%s341 + $0x30] sm:$0xf]
      %v400 = vld [vmem:[%s341 + $0x34] sm:$0xf]
      %v401 = vld [vmem:[%s341 + $0x38] sm:$0x1]
      %v402 = vld [vmem:[%s341 + $0x3c] sm:$0xf]
      %v403 = vld [vmem:[%s341 + $0x40] sm:$0xf]
      %v404 = vld [vmem:[%s341 + $0x44] sm:$0xf]
      %v405 = vld [vmem:[%s341 + $0x48] sm:$0xf]
      %v406 = vld [vmem:[%s341 + $0x4c] sm:$0x1]
      %v407 = vld [vmem:[%s341 + $0x50] sm:$0xf]
      %v408 = vld [vmem:[%s341 + $0x54] sm:$0xf]
      %v409 = vld [vmem:[%s341 + $0x58] sm:$0xf]
      %v410 = vld [vmem:[%s341 + $0x5c] sm:$0xf]
      %v411 = vld [vmem:[%s341 + $0x60] sm:$0x1]
      %v412 = vld [vmem:[%s341 + $0x64] sm:$0xf]
      %v413 = vld [vmem:[%s341 + $0x68] sm:$0xf]
      %v414 = vld [vmem:[%s341 + $0x6c] sm:$0xf]
      %v415 = vld [vmem:[%s341 + $0x70] sm:$0xf]
      %v416 = vld [vmem:[%s341 + $0x74] sm:$0x1]
      %v417 = vld [vmem:[%s341 + $0x78] sm:$0xf]
      %v418 = vld [vmem:[%s341 + $0x7c] sm:$0xf]
      %v419 = vld [vmem:[%s341 + $0x80] sm:$0xf]
      %v420 = vld [vmem:[%s341 + $0x84] sm:$0xf]
      %v421 = vld [vmem:[%s341 + $0x88] sm:$0x1]
      %v422 = vld [vmem:[%s341 + $0x8c] sm:$0xf]
      %v423 = vld [vmem:[%s341 + $0x90] sm:$0xf]
      %v424 = vld [vmem:[%s341 + $0x94] sm:$0xf]
      %v425 = vld [vmem:[%s341 + $0x98] sm:$0xf]
      %v426 = vld [vmem:[%s341 + $0x9c] sm:$0x1]
      %v427 = vld [vmem:[%s341 + $0xa0] sm:$0xf]
      %v428 = vld [vmem:[%s341 + $0xa4] sm:$0xf]
      %v429 = vld [vmem:[%s341 + $0xa8] sm:$0xf]
      %v430 = vld [vmem:[%s341 + $0xac] sm:$0xf]
      %v431 = vld [vmem:[%s341 + $0xb0] sm:$0x1]
      %v432 = vld [vmem:[%s341 + $0xb4] sm:$0xf]
      %v433 = vld [vmem:[%s341 + $0xb8] sm:$0xf]
      %v434 = vld [vmem:[%s341 + $0xbc] sm:$0xf]
      %v435 = vld [vmem:[%s341 + $0xc0] sm:$0xf]
      %v436 = vld [vmem:[%s341 + $0xc4] sm:$0x1]
      %v437 = vld [vmem:[%s341 + $0xc8] sm:$0xf]
      %v438 = vld [vmem:[%s341 + $0xcc] sm:$0xf]
      %v439 = vld [vmem:[%s341 + $0xd0] sm:$0xf]
      %v440 = vld [vmem:[%s341 + $0xd4] sm:$0xf]
      %v441 = vld [vmem:[%s341 + $0xd8] sm:$0x1]
      %v442 = vld [vmem:[%s341 + $0xdc] sm:$0xf]
      %v443 = vld [vmem:[%s341 + $0xe0] sm:$0xf]
      %v444 = vld [vmem:[%s341 + $0xe4] sm:$0xf]
      %v445 = vld [vmem:[%s341 + $0xe8] sm:$0xf]
      %v446 = vld [vmem:[%s341 + $0xec] sm:$0x1]
      %v447 = vld [vmem:[%s341 + $0xf0] sm:$0xf]
      %v448 = vld [vmem:[%s341 + $0xf4] sm:$0xf]
      %v449 = vld [vmem:[%s341 + $0xf8] sm:$0xf]
      %v450 = vld [vmem:[%s341 + $0xfc] sm:$0xf]
      %v451 = vld [vmem:[%s341 + $0x100] sm:$0x1]
      %v452 = vld [vmem:[%s341 + $0x104] sm:$0xf]
      %v453 = vld [vmem:[%s341 + $0x108] sm:$0xf]
      %v454 = vld [vmem:[%s341 + $0x10c] sm:$0xf]
      %v455 = vld [vmem:[%s341 + $0x110] sm:$0xf]
      %v456 = vld [vmem:[%s341 + $0x114] sm:$0x1]
      %v457 = vld [vmem:[%s341 + $0x118] sm:$0xf]
      %v458 = vld [vmem:[%s341 + $0x11c] sm:$0xf]
      %v459 = vld [vmem:[%s341 + $0x120] sm:$0xf]
      %v460 = vld [vmem:[%s341 + $0x124] sm:$0xf]
      %v461 = vld [vmem:[%s341 + $0x128] sm:$0x1]
      %v462 = vld [vmem:[%s341 + $0x12c] sm:$0xf]
      %v463 = vld [vmem:[%s341 + $0x130] sm:$0xf]
      %v464 = vld [vmem:[%s341 + $0x134] sm:$0xf]
      %v465 = vld [vmem:[%s341 + $0x138] sm:$0xf]
      %v466 = vld [vmem:[%s341 + $0x13c] sm:$0x1]
      %v467 = vld [vmem:[%s341 + $0x140] sm:$0xf]
      %v468 = vld [vmem:[%s341 + $0x144] sm:$0xf]
      %v469 = vld [vmem:[%s341 + $0x148] sm:$0xf]
      %v470 = vld [vmem:[%s341 + $0x14c] sm:$0xf]
      %v471 = vld [vmem:[%s341 + $0x150] sm:$0x1]
      %v472 = vld [vmem:[%s341 + $0x154] sm:$0xf]
      %v473 = vld [vmem:[%s341 + $0x158] sm:$0xf]
      %v474 = vld [vmem:[%s341 + $0x15c] sm:$0xf]
      %v475 = vld [vmem:[%s341 + $0x160] sm:$0xf]
      %v476 = vld [vmem:[%s341 + $0x164] sm:$0x1]
      %v477 = vld [vmem:[%s341 + $0x168] sm:$0xf]
      %v478 = vld [vmem:[%s341 + $0x16c] sm:$0xf]
      %v479 = vld [vmem:[%s341 + $0x170] sm:$0xf]
      %v480 = vld [vmem:[%s341 + $0x174] sm:$0xf]
      %v481 = vld [vmem:[%s341 + $0x178] sm:$0x1]
      %v482 = vld [vmem:[%s341 + $0x17c] sm:$0xf]
      %v483 = vld [vmem:[%s341 + $0x180] sm:$0xf]
      %v484 = vld [vmem:[%s341 + $0x184] sm:$0xf]
      %v485 = vld [vmem:[%s341 + $0x188] sm:$0xf]
      %v486 = vld [vmem:[%s341 + $0x18c] sm:$0x1]
      %v487 = vld [vmem:[%s341 + $0x190] sm:$0xf]
      %v488 = vld [vmem:[%s341 + $0x194] sm:$0xf]
      %v489 = vld [vmem:[%s341 + $0x198] sm:$0xf]
      %v490 = vld [vmem:[%s341 + $0x19c] sm:$0xf]
      %v491 = vld [vmem:[%s341 + $0x1a0] sm:$0x1]
      %v492 = vld [vmem:[%s341 + $0x1a4] sm:$0xf]
      %v493 = vld [vmem:[%s341 + $0x1a8] sm:$0xf]
      %v494 = vld [vmem:[%s341 + $0x1ac] sm:$0xf]
      %v495 = vld [vmem:[%s341 + $0x1b0] sm:$0xf]
      %v496 = vld [vmem:[%s341 + $0x1b4] sm:$0x1]
      %v497 = vld [vmem:[%s341 + $0x1b8] sm:$0xf]
      %v498 = vld [vmem:[%s341 + $0x1bc] sm:$0xf]
      %v499 = vld [vmem:[%s341 + $0x1c0] sm:$0xf]
      %v500 = vld [vmem:[%s341 + $0x1c4] sm:$0xf]
      %v501 = vld [vmem:[%s341 + $0x1c8] sm:$0x1]
      %v502 = vld [vmem:[%s341 + $0x1cc] sm:$0xf]
      %v503 = vld [vmem:[%s341 + $0x1d0] sm:$0xf]
      %v504 = vld [vmem:[%s341 + $0x1d4] sm:$0xf]
      %v505 = vld [vmem:[%s341 + $0x1d8] sm:$0xf]
      %v506 = vld [vmem:[%s341 + $0x1dc] sm:$0x1]
      %v507 = vld [vmem:[%s341 + $0x1e0] sm:$0xf]
      %v508 = vld [vmem:[%s341 + $0x1e4] sm:$0xf]
      %v509 = vld [vmem:[%s341 + $0x1e8] sm:$0xf]
      %v510 = vld [vmem:[%s341 + $0x1ec] sm:$0xf]
      %v511 = vld [vmem:[%s341 + $0x1f0] sm:$0x1]
      %v512 = vld [vmem:[%s341 + $0x1f4] sm:$0xf]
      %v513 = vld [vmem:[%s341 + $0x1f8] sm:$0xf]
      %v514 = vld [vmem:[%s341 + $0x1fc] sm:$0xf]
      %v515 = vld [vmem:[%s341 + $0x200] sm:$0xf]
      %v516 = vld [vmem:[%s341 + $0x204] sm:$0x1]
      %v517 = vld [vmem:[%s341 + $0x208] sm:$0xf]
      %v518 = vld [vmem:[%s341 + $0x20c] sm:$0xf]
      %v519 = vld [vmem:[%s341 + $0x210] sm:$0xf]
      %v520 = vld [vmem:[%s341 + $0x214] sm:$0xf]
      %v521 = vld [vmem:[%s341 + $0x218] sm:$0x1]
      %v522 = vld [vmem:[%s341 + $0x21c] sm:$0xf]
      %v523 = vld [vmem:[%s341 + $0x220] sm:$0xf]
      %v524 = vld [vmem:[%s341 + $0x224] sm:$0xf]
      %v525 = vld [vmem:[%s341 + $0x228] sm:$0xf]
      %v526 = vld [vmem:[%s341 + $0x22c] sm:$0x1]
      %v527 = vld [vmem:[%s341 + $0x230] sm:$0xf]
      %v528 = vld [vmem:[%s341 + $0x234] sm:$0xf]
      %v529 = vld [vmem:[%s341 + $0x238] sm:$0xf]
      %v530 = vld [vmem:[%s341 + $0x23c] sm:$0xf]
      %v531 = vld [vmem:[%s341 + $0x240] sm:$0x1]
      %v532 = vld [vmem:[%s341 + $0x244] sm:$0xf]
      %v533 = vld [vmem:[%s341 + $0x248] sm:$0xf]
      %v534 = vld [vmem:[%s341 + $0x24c] sm:$0xf]
      %v535 = vld [vmem:[%s341 + $0x250] sm:$0xf]
      %v536 = vld [vmem:[%s341 + $0x254] sm:$0x1]
      %v537 = vld [vmem:[%s341 + $0x258] sm:$0xf]
      %v538 = vld [vmem:[%s341 + $0x25c] sm:$0xf]
      %v539 = vld [vmem:[%s341 + $0x260] sm:$0xf]
      %v540 = vld [vmem:[%s341 + $0x264] sm:$0xf]
      %v541 = vld [vmem:[%s341 + $0x268] sm:$0x1]
      %v542 = vld [vmem:[%s341 + $0x26c] sm:$0xf]
      %v543 = vld [vmem:[%s341 + $0x270] sm:$0xf]
      %v544 = vld [vmem:[%s341 + $0x274] sm:$0xf]
      %v545 = vld [vmem:[%s341 + $0x278] sm:$0xf]
      %v546 = vld [vmem:[%s341 + $0x27c] sm:$0x1]
      %v547 = vunpack.c.l.bf16 %v387
      %v548 = vunpack.c.l.bf16 %v388
      %v549 = vunpack.c.l.bf16 %v389
      %v550 = vunpack.c.l.bf16 %v390
      %v551 = vunpack.c.l.bf16 %v391
      %v552 = vunpack.c.l.bf16 %v392
      %v553 = vunpack.c.l.bf16 %v393
      %v554 = vunpack.c.l.bf16 %v394
      %v555 = vunpack.c.l.bf16 %v395
      %v556 = vunpack.c.l.bf16 %v396
      %v557 = vunpack.c.l.bf16 %v397
      %v558 = vunpack.c.l.bf16 %v398
      %v559 = vunpack.c.l.bf16 %v399
      %v560 = vunpack.c.l.bf16 %v400
      %v561 = vunpack.c.l.bf16 %v401
      %v562 = vunpack.c.l.bf16 %v402
      %v563 = vunpack.c.l.bf16 %v403
      %v564 = vunpack.c.l.bf16 %v404
      %v565 = vunpack.c.l.bf16 %v405
      %v566 = vunpack.c.l.bf16 %v406
      %v567 = vunpack.c.l.bf16 %v407
      %v568 = vunpack.c.l.bf16 %v408
      %v569 = vunpack.c.l.bf16 %v409
      %v570 = vunpack.c.l.bf16 %v410
      %v571 = vunpack.c.l.bf16 %v411
      %v572 = vunpack.c.l.bf16 %v412
      %v573 = vunpack.c.l.bf16 %v413
      %v574 = vunpack.c.l.bf16 %v414
      %v575 = vunpack.c.l.bf16 %v415
      %v576 = vunpack.c.l.bf16 %v416
      %v577 = vunpack.c.l.bf16 %v417
      %v578 = vunpack.c.l.bf16 %v418
      %v579 = vunpack.c.l.bf16 %v419
      %v580 = vunpack.c.l.bf16 %v420
      %v581 = vunpack.c.l.bf16 %v421
      %v582 = vunpack.c.l.bf16 %v422
      %v583 = vunpack.c.l.bf16 %v423
      %v584 = vunpack.c.l.bf16 %v424
      %v585 = vunpack.c.l.bf16 %v425
      %v586 = vunpack.c.l.bf16 %v426
      %v587 = vunpack.c.l.bf16 %v427
      %v588 = vunpack.c.l.bf16 %v428
      %v589 = vunpack.c.l.bf16 %v429
      %v590 = vunpack.c.l.bf16 %v430
      %v591 = vunpack.c.l.bf16 %v431
      %v592 = vunpack.c.l.bf16 %v432
      %v593 = vunpack.c.l.bf16 %v433
      %v594 = vunpack.c.l.bf16 %v434
      %v595 = vunpack.c.l.bf16 %v435
      %v596 = vunpack.c.l.bf16 %v436
      %v597 = vunpack.c.l.bf16 %v437
      %v598 = vunpack.c.l.bf16 %v438
      %v599 = vunpack.c.l.bf16 %v439
      %v600 = vunpack.c.l.bf16 %v440
      %v601 = vunpack.c.l.bf16 %v441
      %v602 = vunpack.c.l.bf16 %v442
      %v603 = vunpack.c.l.bf16 %v443
      %v604 = vunpack.c.l.bf16 %v444
      %v605 = vunpack.c.l.bf16 %v445
      %v606 = vunpack.c.l.bf16 %v446
      %v607 = vunpack.c.l.bf16 %v447
      %v608 = vunpack.c.l.bf16 %v448
      %v609 = vunpack.c.l.bf16 %v449
      %v610 = vunpack.c.l.bf16 %v450
      %v611 = vunpack.c.l.bf16 %v451
      %v612 = vunpack.c.l.bf16 %v452
      %v613 = vunpack.c.l.bf16 %v453
      %v614 = vunpack.c.l.bf16 %v454
      %v615 = vunpack.c.l.bf16 %v455
      %v616 = vunpack.c.l.bf16 %v456
      %v617 = vunpack.c.l.bf16 %v457
      %v618 = vunpack.c.l.bf16 %v458
      %v619 = vunpack.c.l.bf16 %v459
      %v620 = vunpack.c.l.bf16 %v460
      %v621 = vunpack.c.l.bf16 %v461
      %v622 = vunpack.c.l.bf16 %v462
      %v623 = vunpack.c.l.bf16 %v463
      %v624 = vunpack.c.l.bf16 %v464
      %v625 = vunpack.c.l.bf16 %v465
      %v626 = vunpack.c.l.bf16 %v466
      %v627 = vunpack.c.l.bf16 %v467
      %v628 = vunpack.c.l.bf16 %v468
      %v629 = vunpack.c.l.bf16 %v469
      %v630 = vunpack.c.l.bf16 %v470
      %v631 = vunpack.c.l.bf16 %v471
      %v632 = vunpack.c.l.bf16 %v472
      %v633 = vunpack.c.l.bf16 %v473
      %v634 = vunpack.c.l.bf16 %v474
      %v635 = vunpack.c.l.bf16 %v475
      %v636 = vunpack.c.l.bf16 %v476
      %v637 = vunpack.c.l.bf16 %v477
      %v638 = vunpack.c.l.bf16 %v478
      %v639 = vunpack.c.l.bf16 %v479
      %v640 = vunpack.c.l.bf16 %v480
      %v641 = vunpack.c.l.bf16 %v481
      %v642 = vunpack.c.l.bf16 %v482
      %v643 = vunpack.c.l.bf16 %v483
      %v644 = vunpack.c.l.bf16 %v484
      %v645 = vunpack.c.l.bf16 %v485
      %v646 = vunpack.c.l.bf16 %v486
      %v647 = vunpack.c.l.bf16 %v487
      %v648 = vunpack.c.l.bf16 %v488
      %v649 = vunpack.c.l.bf16 %v489
      %v650 = vunpack.c.l.bf16 %v490
      %v651 = vunpack.c.l.bf16 %v491
      %v652 = vunpack.c.l.bf16 %v492
      %v653 = vunpack.c.l.bf16 %v493
      %v654 = vunpack.c.l.bf16 %v494
      %v655 = vunpack.c.l.bf16 %v495
      %v656 = vunpack.c.l.bf16 %v496
      %v657 = vunpack.c.l.bf16 %v497
      %v658 = vunpack.c.l.bf16 %v498
      %v659 = vunpack.c.l.bf16 %v499
      %v660 = vunpack.c.l.bf16 %v500
      %v661 = vunpack.c.l.bf16 %v501
      %v662 = vunpack.c.l.bf16 %v502
      %v663 = vunpack.c.l.bf16 %v503
      %v664 = vunpack.c.l.bf16 %v504
      %v665 = vunpack.c.l.bf16 %v505
      %v666 = vunpack.c.l.bf16 %v506
      %v667 = vunpack.c.l.bf16 %v507
      %v668 = vunpack.c.l.bf16 %v508
      %v669 = vunpack.c.l.bf16 %v509
      %v670 = vunpack.c.l.bf16 %v510
      %v671 = vunpack.c.l.bf16 %v511
      %v672 = vunpack.c.l.bf16 %v512
      %v673 = vunpack.c.l.bf16 %v513
      %v674 = vunpack.c.l.bf16 %v514
      %v675 = vunpack.c.l.bf16 %v515
      %v676 = vunpack.c.l.bf16 %v516
      %v677 = vunpack.c.l.bf16 %v517
      %v678 = vunpack.c.l.bf16 %v518
      %v679 = vunpack.c.l.bf16 %v519
      %v680 = vunpack.c.l.bf16 %v520
      %v681 = vunpack.c.l.bf16 %v521
      %v682 = vunpack.c.l.bf16 %v522
      %v683 = vunpack.c.l.bf16 %v523
      %v684 = vunpack.c.l.bf16 %v524
      %v685 = vunpack.c.l.bf16 %v525
      %v686 = vunpack.c.l.bf16 %v526
      %v687 = vunpack.c.l.bf16 %v527
      %v688 = vunpack.c.l.bf16 %v528
      %v689 = vunpack.c.l.bf16 %v529
      %v690 = vunpack.c.l.bf16 %v530
      %v691 = vunpack.c.l.bf16 %v531
      %v692 = vunpack.c.l.bf16 %v532
      %v693 = vunpack.c.l.bf16 %v533
      %v694 = vunpack.c.l.bf16 %v534
      %v695 = vunpack.c.l.bf16 %v535
      %v696 = vunpack.c.l.bf16 %v536
      %v697 = vunpack.c.l.bf16 %v537
      %v698 = vunpack.c.l.bf16 %v538
      %v699 = vunpack.c.l.bf16 %v539
      %v700 = vunpack.c.l.bf16 %v540
      %v701 = vunpack.c.l.bf16 %v541
      %v702 = vunpack.c.l.bf16 %v542
      %v703 = vunpack.c.l.bf16 %v543
      %v704 = vunpack.c.l.bf16 %v544
      %v705 = vunpack.c.l.bf16 %v545
      %v706 = vunpack.c.l.bf16 %v546
      %v708 = vperm.slane %v374, 0
      %v710 = vmul.f32 %v547, %v708
      %v711 = vmul.f32 %v548, %v708
      %v712 = vmul.f32 %v549, %v708
      %v713 = vmul.f32 %v550, %v708
      %v714 = vmul.f32 %v551, %v708
      %v715 = vmul.f32 %v552, %v708
      %v716 = vmul.f32 %v553, %v708
      %v717 = vmul.f32 %v554, %v708
      %v718 = vmul.f32 %v555, %v708
      %v719 = vmul.f32 %v556, %v708
      %v720 = vmul.f32 %v557, %v708
      %v721 = vmul.f32 %v558, %v708
      %v722 = vmul.f32 %v559, %v708
      %v723 = vmul.f32 %v560, %v708
      %v724 = vmul.f32 %v561, %v708
      %v725 = vmul.f32 %v562, %v708
      %v726 = vmul.f32 %v563, %v708
      %v727 = vmul.f32 %v564, %v708
      %v728 = vmul.f32 %v565, %v708
      %v729 = vmul.f32 %v566, %v708
      %v730 = vmul.f32 %v567, %v708
      %v731 = vmul.f32 %v568, %v708
      %v732 = vmul.f32 %v569, %v708
      %v733 = vmul.f32 %v570, %v708
      %v734 = vmul.f32 %v571, %v708
      %v735 = vmul.f32 %v572, %v708
      %v736 = vmul.f32 %v573, %v708
      %v737 = vmul.f32 %v574, %v708
      %v738 = vmul.f32 %v575, %v708
      %v739 = vmul.f32 %v576, %v708
      %v740 = vmul.f32 %v577, %v708
      %v741 = vmul.f32 %v578, %v708
      %v742 = vmul.f32 %v579, %v708
      %v743 = vmul.f32 %v580, %v708
      %v744 = vmul.f32 %v581, %v708
      %v745 = vmul.f32 %v582, %v708
      %v746 = vmul.f32 %v583, %v708
      %v747 = vmul.f32 %v584, %v708
      %v748 = vmul.f32 %v585, %v708
      %v749 = vmul.f32 %v586, %v708
      %v750 = vmul.f32 %v587, %v708
      %v751 = vmul.f32 %v588, %v708
      %v752 = vmul.f32 %v589, %v708
      %v753 = vmul.f32 %v590, %v708
      %v754 = vmul.f32 %v591, %v708
      %v755 = vmul.f32 %v592, %v708
      %v756 = vmul.f32 %v593, %v708
      %v757 = vmul.f32 %v594, %v708
      %v758 = vmul.f32 %v595, %v708
      %v759 = vmul.f32 %v596, %v708
      %v760 = vmul.f32 %v597, %v708
      %v761 = vmul.f32 %v598, %v708
      %v762 = vmul.f32 %v599, %v708
      %v763 = vmul.f32 %v600, %v708
      %v764 = vmul.f32 %v601, %v708
      %v765 = vmul.f32 %v602, %v708
      %v766 = vmul.f32 %v603, %v708
      %v767 = vmul.f32 %v604, %v708
      %v768 = vmul.f32 %v605, %v708
      %v769 = vmul.f32 %v606, %v708
      %v770 = vmul.f32 %v607, %v708
      %v771 = vmul.f32 %v608, %v708
      %v772 = vmul.f32 %v609, %v708
      %v773 = vmul.f32 %v610, %v708
      %v774 = vmul.f32 %v611, %v708
      %v775 = vmul.f32 %v612, %v708
      %v776 = vmul.f32 %v613, %v708
      %v777 = vmul.f32 %v614, %v708
      %v778 = vmul.f32 %v615, %v708
      %v779 = vmul.f32 %v616, %v708
      %v780 = vmul.f32 %v617, %v708
      %v781 = vmul.f32 %v618, %v708
      %v782 = vmul.f32 %v619, %v708
      %v783 = vmul.f32 %v620, %v708
      %v784 = vmul.f32 %v621, %v708
      %v785 = vmul.f32 %v622, %v708
      %v786 = vmul.f32 %v623, %v708
      %v787 = vmul.f32 %v624, %v708
      %v788 = vmul.f32 %v625, %v708
      %v789 = vmul.f32 %v626, %v708
      %v790 = vmul.f32 %v627, %v708
      %v791 = vmul.f32 %v628, %v708
      %v792 = vmul.f32 %v629, %v708
      %v793 = vmul.f32 %v630, %v708
      %v794 = vmul.f32 %v631, %v708
      %v795 = vmul.f32 %v632, %v708
      %v796 = vmul.f32 %v633, %v708
      %v797 = vmul.f32 %v634, %v708
      %v798 = vmul.f32 %v635, %v708
      %v799 = vmul.f32 %v636, %v708
      %v800 = vmul.f32 %v637, %v708
      %v801 = vmul.f32 %v638, %v708
      %v802 = vmul.f32 %v639, %v708
      %v803 = vmul.f32 %v640, %v708
      %v804 = vmul.f32 %v641, %v708
      %v805 = vmul.f32 %v642, %v708
      %v806 = vmul.f32 %v643, %v708
      %v807 = vmul.f32 %v644, %v708
      %v808 = vmul.f32 %v645, %v708
      %v809 = vmul.f32 %v646, %v708
      %v810 = vmul.f32 %v647, %v708
      %v811 = vmul.f32 %v648, %v708
      %v812 = vmul.f32 %v649, %v708
      %v813 = vmul.f32 %v650, %v708
      %v814 = vmul.f32 %v651, %v708
      %v815 = vmul.f32 %v652, %v708
      %v816 = vmul.f32 %v653, %v708
      %v817 = vmul.f32 %v654, %v708
      %v818 = vmul.f32 %v655, %v708
      %v819 = vmul.f32 %v656, %v708
      %v820 = vmul.f32 %v657, %v708
      %v821 = vmul.f32 %v658, %v708
      %v822 = vmul.f32 %v659, %v708
      %v823 = vmul.f32 %v660, %v708
      %v824 = vmul.f32 %v661, %v708
      %v825 = vmul.f32 %v662, %v708
      %v826 = vmul.f32 %v663, %v708
      %v827 = vmul.f32 %v664, %v708
      %v828 = vmul.f32 %v665, %v708
      %v829 = vmul.f32 %v666, %v708
      %v830 = vmul.f32 %v667, %v708
      %v831 = vmul.f32 %v668, %v708
      %v832 = vmul.f32 %v669, %v708
      %v833 = vmul.f32 %v670, %v708
      %v834 = vmul.f32 %v671, %v708
      %v835 = vmul.f32 %v672, %v708
      %v836 = vmul.f32 %v673, %v708
      %v837 = vmul.f32 %v674, %v708
      %v838 = vmul.f32 %v675, %v708
      %v839 = vmul.f32 %v676, %v708
      %v840 = vmul.f32 %v677, %v708
      %v841 = vmul.f32 %v678, %v708
      %v842 = vmul.f32 %v679, %v708
      %v843 = vmul.f32 %v680, %v708
      %v844 = vmul.f32 %v681, %v708
      %v845 = vmul.f32 %v682, %v708
      %v846 = vmul.f32 %v683, %v708
      %v847 = vmul.f32 %v684, %v708
      %v848 = vmul.f32 %v685, %v708
      %v849 = vmul.f32 %v686, %v708
      %v850 = vmul.f32 %v687, %v708
      %v851 = vmul.f32 %v688, %v708
      %v852 = vmul.f32 %v689, %v708
      %v853 = vmul.f32 %v690, %v708
      %v854 = vmul.f32 %v691, %v708
      %v855 = vmul.f32 %v692, %v708
      %v856 = vmul.f32 %v693, %v708
      %v857 = vmul.f32 %v694, %v708
      %v858 = vmul.f32 %v695, %v708
      %v859 = vmul.f32 %v696, %v708
      %v860 = vmul.f32 %v697, %v708
      %v861 = vmul.f32 %v698, %v708
      %v862 = vmul.f32 %v699, %v708
      %v863 = vmul.f32 %v700, %v708
      %v864 = vmul.f32 %v701, %v708
      %v865 = vmul.f32 %v702, %v708
      %v866 = vmul.f32 %v703, %v708
      %v867 = vmul.f32 %v704, %v708
      %v868 = vmul.f32 %v705, %v708
      %v869 = vmul.f32 %v706, %v708
      %v871 = vperm.slane %v375, 0
      %v873 = vadd.f32 %v710, %v871
      %v874 = vadd.f32 %v711, %v871
      %v875 = vadd.f32 %v712, %v871
      %v876 = vadd.f32 %v713, %v871
      %v877 = vadd.f32 %v714, %v871
      %v878 = vadd.f32 %v715, %v871
      %v879 = vadd.f32 %v716, %v871
      %v880 = vadd.f32 %v717, %v871
      %v881 = vadd.f32 %v718, %v871
      %v882 = vadd.f32 %v719, %v871
      %v883 = vadd.f32 %v720, %v871
      %v884 = vadd.f32 %v721, %v871
      %v885 = vadd.f32 %v722, %v871
      %v886 = vadd.f32 %v723, %v871
      %v887 = vadd.f32 %v724, %v871
      %v888 = vadd.f32 %v725, %v871
      %v889 = vadd.f32 %v726, %v871
      %v890 = vadd.f32 %v727, %v871
      %v891 = vadd.f32 %v728, %v871
      %v892 = vadd.f32 %v729, %v871
      %v893 = vadd.f32 %v730, %v871
      %v894 = vadd.f32 %v731, %v871
      %v895 = vadd.f32 %v732, %v871
      %v896 = vadd.f32 %v733, %v871
      %v897 = vadd.f32 %v734, %v871
      %v898 = vadd.f32 %v735, %v871
      %v899 = vadd.f32 %v736, %v871
      %v900 = vadd.f32 %v737, %v871
      %v901 = vadd.f32 %v738, %v871
      %v902 = vadd.f32 %v739, %v871
      %v903 = vadd.f32 %v740, %v871
      %v904 = vadd.f32 %v741, %v871
      %v905 = vadd.f32 %v742, %v871
      %v906 = vadd.f32 %v743, %v871
      %v907 = vadd.f32 %v744, %v871
      %v908 = vadd.f32 %v745, %v871
      %v909 = vadd.f32 %v746, %v871
      %v910 = vadd.f32 %v747, %v871
      %v911 = vadd.f32 %v748, %v871
      %v912 = vadd.f32 %v749, %v871
      %v913 = vadd.f32 %v750, %v871
      %v914 = vadd.f32 %v751, %v871
      %v915 = vadd.f32 %v752, %v871
      %v916 = vadd.f32 %v753, %v871
      %v917 = vadd.f32 %v754, %v871
      %v918 = vadd.f32 %v755, %v871
      %v919 = vadd.f32 %v756, %v871
      %v920 = vadd.f32 %v757, %v871
      %v921 = vadd.f32 %v758, %v871
      %v922 = vadd.f32 %v759, %v871
      %v923 = vadd.f32 %v760, %v871
      %v924 = vadd.f32 %v761, %v871
      %v925 = vadd.f32 %v762, %v871
      %v926 = vadd.f32 %v763, %v871
      %v927 = vadd.f32 %v764, %v871
      %v928 = vadd.f32 %v765, %v871
      %v929 = vadd.f32 %v766, %v871
      %v930 = vadd.f32 %v767, %v871
      %v931 = vadd.f32 %v768, %v871
      %v932 = vadd.f32 %v769, %v871
      %v933 = vadd.f32 %v770, %v871
      %v934 = vadd.f32 %v771, %v871
      %v935 = vadd.f32 %v772, %v871
      %v936 = vadd.f32 %v773, %v871
      %v937 = vadd.f32 %v774, %v871
      %v938 = vadd.f32 %v775, %v871
      %v939 = vadd.f32 %v776, %v871
      %v940 = vadd.f32 %v777, %v871
      %v941 = vadd.f32 %v778, %v871
      %v942 = vadd.f32 %v779, %v871
      %v943 = vadd.f32 %v780, %v871
      %v944 = vadd.f32 %v781, %v871
      %v945 = vadd.f32 %v782, %v871
      %v946 = vadd.f32 %v783, %v871
      %v947 = vadd.f32 %v784, %v871
      %v948 = vadd.f32 %v785, %v871
      %v949 = vadd.f32 %v786, %v871
      %v950 = vadd.f32 %v787, %v871
      %v951 = vadd.f32 %v788, %v871
      %v952 = vadd.f32 %v789, %v871
      %v953 = vadd.f32 %v790, %v871
      %v954 = vadd.f32 %v791, %v871
      %v955 = vadd.f32 %v792, %v871
      %v956 = vadd.f32 %v793, %v871
      %v957 = vadd.f32 %v794, %v871
      %v958 = vadd.f32 %v795, %v871
      %v959 = vadd.f32 %v796, %v871
      %v960 = vadd.f32 %v797, %v871
      %v961 = vadd.f32 %v798, %v871
      %v962 = vadd.f32 %v799, %v871
      %v963 = vadd.f32 %v800, %v871
      %v964 = vadd.f32 %v801, %v871
      %v965 = vadd.f32 %v802, %v871
      %v966 = vadd.f32 %v803, %v871
      %v967 = vadd.f32 %v804, %v871
      %v968 = vadd.f32 %v805, %v871
      %v969 = vadd.f32 %v806, %v871
      %v970 = vadd.f32 %v807, %v871
      %v971 = vadd.f32 %v808, %v871
      %v972 = vadd.f32 %v809, %v871
      %v973 = vadd.f32 %v810, %v871
      %v974 = vadd.f32 %v811, %v871
      %v975 = vadd.f32 %v812, %v871
      %v976 = vadd.f32 %v813, %v871
      %v977 = vadd.f32 %v814, %v871
      %v978 = vadd.f32 %v815, %v871
      %v979 = vadd.f32 %v816, %v871
      %v980 = vadd.f32 %v817, %v871
      %v981 = vadd.f32 %v818, %v871
      %v982 = vadd.f32 %v819, %v871
      %v983 = vadd.f32 %v820, %v871
      %v984 = vadd.f32 %v821, %v871
      %v985 = vadd.f32 %v822, %v871
      %v986 = vadd.f32 %v823, %v871
      %v987 = vadd.f32 %v824, %v871
      %v988 = vadd.f32 %v825, %v871
      %v989 = vadd.f32 %v826, %v871
      %v990 = vadd.f32 %v827, %v871
      %v991 = vadd.f32 %v828, %v871
      %v992 = vadd.f32 %v829, %v871
      %v993 = vadd.f32 %v830, %v871
      %v994 = vadd.f32 %v831, %v871
      %v995 = vadd.f32 %v832, %v871
      %v996 = vadd.f32 %v833, %v871
      %v997 = vadd.f32 %v834, %v871
      %v998 = vadd.f32 %v835, %v871
      %v999 = vadd.f32 %v836, %v871
      %v1000 = vadd.f32 %v837, %v871
      %v1001 = vadd.f32 %v838, %v871
      %v1002 = vadd.f32 %v839, %v871
      %v1003 = vadd.f32 %v840, %v871
      %v1004 = vadd.f32 %v841, %v871
      %v1005 = vadd.f32 %v842, %v871
      %v1006 = vadd.f32 %v843, %v871
      %v1007 = vadd.f32 %v844, %v871
      %v1008 = vadd.f32 %v845, %v871
      %v1009 = vadd.f32 %v846, %v871
      %v1010 = vadd.f32 %v847, %v871
      %v1011 = vadd.f32 %v848, %v871
      %v1012 = vadd.f32 %v849, %v871
      %v1013 = vadd.f32 %v850, %v871
      %v1014 = vadd.f32 %v851, %v871
      %v1015 = vadd.f32 %v852, %v871
      %v1016 = vadd.f32 %v853, %v871
      %v1017 = vadd.f32 %v854, %v871
      %v1018 = vadd.f32 %v855, %v871
      %v1019 = vadd.f32 %v856, %v871
      %v1020 = vadd.f32 %v857, %v871
      %v1021 = vadd.f32 %v858, %v871
      %v1022 = vadd.f32 %v859, %v871
      %v1023 = vadd.f32 %v860, %v871
      %v1024 = vadd.f32 %v861, %v871
      %v1025 = vadd.f32 %v862, %v871
      %v1026 = vadd.f32 %v863, %v871
      %v1027 = vadd.f32 %v864, %v871
      %v1028 = vadd.f32 %v865, %v871
      %v1029 = vadd.f32 %v866, %v871
      %v1030 = vadd.f32 %v867, %v871
      %v1031 = vadd.f32 %v868, %v871
      %v1032 = vadd.f32 %v869, %v871
      %v1033 = vmax.f32 %v873, 0.0
      %v1034 = vmax.f32 %v874, 0.0
      %v1035 = vmax.f32 %v875, 0.0
      %v1036 = vmax.f32 %v876, 0.0
      %v1037 = vmax.f32 %v877, 0.0
      %v1038 = vmax.f32 %v878, 0.0
      %v1039 = vmax.f32 %v879, 0.0
      %v1040 = vmax.f32 %v880, 0.0
      %v1041 = vmax.f32 %v881, 0.0
      %v1042 = vmax.f32 %v882, 0.0
      %v1043 = vmax.f32 %v883, 0.0
      %v1044 = vmax.f32 %v884, 0.0
      %v1045 = vmax.f32 %v885, 0.0
      %v1046 = vmax.f32 %v886, 0.0
      %v1047 = vmax.f32 %v887, 0.0
      %v1048 = vmax.f32 %v888, 0.0
      %v1049 = vmax.f32 %v889, 0.0
      %v1050 = vmax.f32 %v890, 0.0
      %v1051 = vmax.f32 %v891, 0.0
      %v1052 = vmax.f32 %v892, 0.0
      %v1053 = vmax.f32 %v893, 0.0
      %v1054 = vmax.f32 %v894, 0.0
      %v1055 = vmax.f32 %v895, 0.0
      %v1056 = vmax.f32 %v896, 0.0
      %v1057 = vmax.f32 %v897, 0.0
      %v1058 = vmax.f32 %v898, 0.0
      %v1059 = vmax.f32 %v899, 0.0
      %v1060 = vmax.f32 %v900, 0.0
      %v1061 = vmax.f32 %v901, 0.0
      %v1062 = vmax.f32 %v902, 0.0
      %v1063 = vmax.f32 %v903, 0.0
      %v1064 = vmax.f32 %v904, 0.0
      %v1065 = vmax.f32 %v905, 0.0
      %v1066 = vmax.f32 %v906, 0.0
      %v1067 = vmax.f32 %v907, 0.0
      %v1068 = vmax.f32 %v908, 0.0
      %v1069 = vmax.f32 %v909, 0.0
      %v1070 = vmax.f32 %v910, 0.0
      %v1071 = vmax.f32 %v911, 0.0
      %v1072 = vmax.f32 %v912, 0.0
      %v1073 = vmax.f32 %v913, 0.0
      %v1074 = vmax.f32 %v914, 0.0
      %v1075 = vmax.f32 %v915, 0.0
      %v1076 = vmax.f32 %v916, 0.0
      %v1077 = vmax.f32 %v917, 0.0
      %v1078 = vmax.f32 %v918, 0.0
      %v1079 = vmax.f32 %v919, 0.0
      %v1080 = vmax.f32 %v920, 0.0
      %v1081 = vmax.f32 %v921, 0.0
      %v1082 = vmax.f32 %v922, 0.0
      %v1083 = vmax.f32 %v923, 0.0
      %v1084 = vmax.f32 %v924, 0.0
      %v1085 = vmax.f32 %v925, 0.0
      %v1086 = vmax.f32 %v926, 0.0
      %v1087 = vmax.f32 %v927, 0.0
      %v1088 = vmax.f32 %v928, 0.0
      %v1089 = vmax.f32 %v929, 0.0
      %v1090 = vmax.f32 %v930, 0.0
      %v1091 = vmax.f32 %v931, 0.0
      %v1092 = vmax.f32 %v932, 0.0
      %v1093 = vmax.f32 %v933, 0.0
      %v1094 = vmax.f32 %v934, 0.0
      %v1095 = vmax.f32 %v935, 0.0
      %v1096 = vmax.f32 %v936, 0.0
      %v1097 = vmax.f32 %v937, 0.0
      %v1098 = vmax.f32 %v938, 0.0
      %v1099 = vmax.f32 %v939, 0.0
      %v1100 = vmax.f32 %v940, 0.0
      %v1101 = vmax.f32 %v941, 0.0
      %v1102 = vmax.f32 %v942, 0.0
      %v1103 = vmax.f32 %v943, 0.0
      %v1104 = vmax.f32 %v944, 0.0
      %v1105 = vmax.f32 %v945, 0.0
      %v1106 = vmax.f32 %v946, 0.0
      %v1107 = vmax.f32 %v947, 0.0
      %v1108 = vmax.f32 %v948, 0.0
      %v1109 = vmax.f32 %v949, 0.0
      %v1110 = vmax.f32 %v950, 0.0
      %v1111 = vmax.f32 %v951, 0.0
      %v1112 = vmax.f32 %v952, 0.0
      %v1113 = vmax.f32 %v953, 0.0
      %v1114 = vmax.f32 %v954, 0.0
      %v1115 = vmax.f32 %v955, 0.0
      %v1116 = vmax.f32 %v956, 0.0
      %v1117 = vmax.f32 %v957, 0.0
      %v1118 = vmax.f32 %v958, 0.0
      %v1119 = vmax.f32 %v959, 0.0
      %v1120 = vmax.f32 %v960, 0.0
      %v1121 = vmax.f32 %v961, 0.0
      %v1122 = vmax.f32 %v962, 0.0
      %v1123 = vmax.f32 %v963, 0.0
      %v1124 = vmax.f32 %v964, 0.0
      %v1125 = vmax.f32 %v965, 0.0
      %v1126 = vmax.f32 %v966, 0.0
      %v1127 = vmax.f32 %v967, 0.0
      %v1128 = vmax.f32 %v968, 0.0
      %v1129 = vmax.f32 %v969, 0.0
      %v1130 = vmax.f32 %v970, 0.0
      %v1131 = vmax.f32 %v971, 0.0
      %v1132 = vmax.f32 %v972, 0.0
      %v1133 = vmax.f32 %v973, 0.0
      %v1134 = vmax.f32 %v974, 0.0
      %v1135 = vmax.f32 %v975, 0.0
      %v1136 = vmax.f32 %v976, 0.0
      %v1137 = vmax.f32 %v977, 0.0
      %v1138 = vmax.f32 %v978, 0.0
      %v1139 = vmax.f32 %v979, 0.0
      %v1140 = vmax.f32 %v980, 0.0
      %v1141 = vmax.f32 %v981, 0.0
      %v1142 = vmax.f32 %v982, 0.0
      %v1143 = vmax.f32 %v983, 0.0
      %v1144 = vmax.f32 %v984, 0.0
      %v1145 = vmax.f32 %v985, 0.0
      %v1146 = vmax.f32 %v986, 0.0
      %v1147 = vmax.f32 %v987, 0.0
      %v1148 = vmax.f32 %v988, 0.0
      %v1149 = vmax.f32 %v989, 0.0
      %v1150 = vmax.f32 %v990, 0.0
      %v1151 = vmax.f32 %v991, 0.0
      %v1152 = vmax.f32 %v992, 0.0
      %v1153 = vmax.f32 %v993, 0.0
      %v1154 = vmax.f32 %v994, 0.0
      %v1155 = vmax.f32 %v995, 0.0
      %v1156 = vmax.f32 %v996, 0.0
      %v1157 = vmax.f32 %v997, 0.0
      %v1158 = vmax.f32 %v998, 0.0
      %v1159 = vmax.f32 %v999, 0.0
      %v1160 = vmax.f32 %v1000, 0.0
      %v1161 = vmax.f32 %v1001, 0.0
      %v1162 = vmax.f32 %v1002, 0.0
      %v1163 = vmax.f32 %v1003, 0.0
      %v1164 = vmax.f32 %v1004, 0.0
      %v1165 = vmax.f32 %v1005, 0.0
      %v1166 = vmax.f32 %v1006, 0.0
      %v1167 = vmax.f32 %v1007, 0.0
      %v1168 = vmax.f32 %v1008, 0.0
      %v1169 = vmax.f32 %v1009, 0.0
      %v1170 = vmax.f32 %v1010, 0.0
      %v1171 = vmax.f32 %v1011, 0.0
      %v1172 = vmax.f32 %v1012, 0.0
      %v1173 = vmax.f32 %v1013, 0.0
      %v1174 = vmax.f32 %v1014, 0.0
      %v1175 = vmax.f32 %v1015, 0.0
      %v1176 = vmax.f32 %v1016, 0.0
      %v1177 = vmax.f32 %v1017, 0.0
      %v1178 = vmax.f32 %v1018, 0.0
      %v1179 = vmax.f32 %v1019, 0.0
      %v1180 = vmax.f32 %v1020, 0.0
      %v1181 = vmax.f32 %v1021, 0.0
      %v1182 = vmax.f32 %v1022, 0.0
      %v1183 = vmax.f32 %v1023, 0.0
      %v1184 = vmax.f32 %v1024, 0.0
      %v1185 = vmax.f32 %v1025, 0.0
      %v1186 = vmax.f32 %v1026, 0.0
      %v1187 = vmax.f32 %v1027, 0.0
      %v1188 = vmax.f32 %v1028, 0.0
      %v1189 = vmax.f32 %v1029, 0.0
      %v1190 = vmax.f32 %v1030, 0.0
      %v1191 = vmax.f32 %v1031, 0.0
      %v1192 = vmax.f32 %v1032, 0.0
      %v1193 = vsel %vm382, 1, 0
      %v1194 = vsel %vm383, 1, 0
      %v1195 = vsel %vm384, 1, 0
      %v1196 = vsel %vm385, 1, 0
      %v1197 = vsel %vm386, 1, 0
      %vm1198 = vcmp.eq.s32.totalorder %v1193, 1
      %vm1199 = vcmp.eq.s32.totalorder %v1194, 1
      %vm1200 = vcmp.eq.s32.totalorder %v1195, 1
      %vm1201 = vcmp.eq.s32.totalorder %v1196, 1
      %vm1202 = vcmp.eq.s32.totalorder %v1197, 1
      %v1203 = vsel %vm1198, %v1033, 0.0
      %v1204 = vsel %vm1199, %v1034, 0.0
      %v1205 = vsel %vm1200, %v1035, 0.0
      %v1206 = vsel %vm1201, %v1036, 0.0
      %v1207 = vsel %vm1202, %v1037, 0.0
      %v1208 = vsel %vm1198, %v1038, 0.0
      %v1209 = vsel %vm1199, %v1039, 0.0
      %v1210 = vsel %vm1200, %v1040, 0.0
      %v1211 = vsel %vm1201, %v1041, 0.0
      %v1212 = vsel %vm1202, %v1042, 0.0
      %v1213 = vsel %vm1198, %v1043, 0.0
      %v1214 = vsel %vm1199, %v1044, 0.0
      %v1215 = vsel %vm1200, %v1045, 0.0
      %v1216 = vsel %vm1201, %v1046, 0.0
      %v1217 = vsel %vm1202, %v1047, 0.0
      %v1218 = vsel %vm1198, %v1048, 0.0
      %v1219 = vsel %vm1199, %v1049, 0.0
      %v1220 = vsel %vm1200, %v1050, 0.0
      %v1221 = vsel %vm1201, %v1051, 0.0
      %v1222 = vsel %vm1202, %v1052, 0.0
      %v1223 = vsel %vm1198, %v1053, 0.0
      %v1224 = vsel %vm1199, %v1054, 0.0
      %v1225 = vsel %vm1200, %v1055, 0.0
      %v1226 = vsel %vm1201, %v1056, 0.0
      %v1227 = vsel %vm1202, %v1057, 0.0
      %v1228 = vsel %vm1198, %v1058, 0.0
      %v1229 = vsel %vm1199, %v1059, 0.0
      %v1230 = vsel %vm1200, %v1060, 0.0
      %v1231 = vsel %vm1201, %v1061, 0.0
      %v1232 = vsel %vm1202, %v1062, 0.0
      %v1233 = vsel %vm1198, %v1063, 0.0
      %v1234 = vsel %vm1199, %v1064, 0.0
      %v1235 = vsel %vm1200, %v1065, 0.0
      %v1236 = vsel %vm1201, %v1066, 0.0
      %v1237 = vsel %vm1202, %v1067, 0.0
      %v1238 = vsel %vm1198, %v1068, 0.0
      %v1239 = vsel %vm1199, %v1069, 0.0
      %v1240 = vsel %vm1200, %v1070, 0.0
      %v1241 = vsel %vm1201, %v1071, 0.0
      %v1242 = vsel %vm1202, %v1072, 0.0
      %v1243 = vsel %vm1198, %v1073, 0.0
      %v1244 = vsel %vm1199, %v1074, 0.0
      %v1245 = vsel %vm1200, %v1075, 0.0
      %v1246 = vsel %vm1201, %v1076, 0.0
      %v1247 = vsel %vm1202, %v1077, 0.0
      %v1248 = vsel %vm1198, %v1078, 0.0
      %v1249 = vsel %vm1199, %v1079, 0.0
      %v1250 = vsel %vm1200, %v1080, 0.0
      %v1251 = vsel %vm1201, %v1081, 0.0
      %v1252 = vsel %vm1202, %v1082, 0.0
      %v1253 = vsel %vm1198, %v1083, 0.0
      %v1254 = vsel %vm1199, %v1084, 0.0
      %v1255 = vsel %vm1200, %v1085, 0.0
      %v1256 = vsel %vm1201, %v1086, 0.0
      %v1257 = vsel %vm1202, %v1087, 0.0
      %v1258 = vsel %vm1198, %v1088, 0.0
      %v1259 = vsel %vm1199, %v1089, 0.0
      %v1260 = vsel %vm1200, %v1090, 0.0
      %v1261 = vsel %vm1201, %v1091, 0.0
      %v1262 = vsel %vm1202, %v1092, 0.0
      %v1263 = vsel %vm1198, %v1093, 0.0
      %v1264 = vsel %vm1199, %v1094, 0.0
      %v1265 = vsel %vm1200, %v1095, 0.0
      %v1266 = vsel %vm1201, %v1096, 0.0
      %v1267 = vsel %vm1202, %v1097, 0.0
      %v1268 = vsel %vm1198, %v1098, 0.0
      %v1269 = vsel %vm1199, %v1099, 0.0
      %v1270 = vsel %vm1200, %v1100, 0.0
      %v1271 = vsel %vm1201, %v1101, 0.0
      %v1272 = vsel %vm1202, %v1102, 0.0
      %v1273 = vsel %vm1198, %v1103, 0.0
      %v1274 = vsel %vm1199, %v1104, 0.0
      %v1275 = vsel %vm1200, %v1105, 0.0
      %v1276 = vsel %vm1201, %v1106, 0.0
      %v1277 = vsel %vm1202, %v1107, 0.0
      %v1278 = vsel %vm1198, %v1108, 0.0
      %v1279 = vsel %vm1199, %v1109, 0.0
      %v1280 = vsel %vm1200, %v1110, 0.0
      %v1281 = vsel %vm1201, %v1111, 0.0
      %v1282 = vsel %vm1202, %v1112, 0.0
      %v1283 = vsel %vm1198, %v1113, 0.0
      %v1284 = vsel %vm1199, %v1114, 0.0
      %v1285 = vsel %vm1200, %v1115, 0.0
      %v1286 = vsel %vm1201, %v1116, 0.0
      %v1287 = vsel %vm1202, %v1117, 0.0
      %v1288 = vsel %vm1198, %v1118, 0.0
      %v1289 = vsel %vm1199, %v1119, 0.0
      %v1290 = vsel %vm1200, %v1120, 0.0
      %v1291 = vsel %vm1201, %v1121, 0.0
      %v1292 = vsel %vm1202, %v1122, 0.0
      %v1293 = vsel %vm1198, %v1123, 0.0
      %v1294 = vsel %vm1199, %v1124, 0.0
      %v1295 = vsel %vm1200, %v1125, 0.0
      %v1296 = vsel %vm1201, %v1126, 0.0
      %v1297 = vsel %vm1202, %v1127, 0.0
      %v1298 = vsel %vm1198, %v1128, 0.0
      %v1299 = vsel %vm1199, %v1129, 0.0
      %v1300 = vsel %vm1200, %v1130, 0.0
      %v1301 = vsel %vm1201, %v1131, 0.0
      %v1302 = vsel %vm1202, %v1132, 0.0
      %v1303 = vsel %vm1198, %v1133, 0.0
      %v1304 = vsel %vm1199, %v1134, 0.0
      %v1305 = vsel %vm1200, %v1135, 0.0
      %v1306 = vsel %vm1201, %v1136, 0.0
      %v1307 = vsel %vm1202, %v1137, 0.0
      %v1308 = vsel %vm1198, %v1138, 0.0
      %v1309 = vsel %vm1199, %v1139, 0.0
      %v1310 = vsel %vm1200, %v1140, 0.0
      %v1311 = vsel %vm1201, %v1141, 0.0
      %v1312 = vsel %vm1202, %v1142, 0.0
      %v1313 = vsel %vm1198, %v1143, 0.0
      %v1314 = vsel %vm1199, %v1144, 0.0
      %v1315 = vsel %vm1200, %v1145, 0.0
      %v1316 = vsel %vm1201, %v1146, 0.0
      %v1317 = vsel %vm1202, %v1147, 0.0
      %v1318 = vsel %vm1198, %v1148, 0.0
      %v1319 = vsel %vm1199, %v1149, 0.0
      %v1320 = vsel %vm1200, %v1150, 0.0
      %v1321 = vsel %vm1201, %v1151, 0.0
      %v1322 = vsel %vm1202, %v1152, 0.0
      %v1323 = vsel %vm1198, %v1153, 0.0
      %v1324 = vsel %vm1199, %v1154, 0.0
      %v1325 = vsel %vm1200, %v1155, 0.0
      %v1326 = vsel %vm1201, %v1156, 0.0
      %v1327 = vsel %vm1202, %v1157, 0.0
      %v1328 = vsel %vm1198, %v1158, 0.0
      %v1329 = vsel %vm1199, %v1159, 0.0
      %v1330 = vsel %vm1200, %v1160, 0.0
      %v1331 = vsel %vm1201, %v1161, 0.0
      %v1332 = vsel %vm1202, %v1162, 0.0
      %v1333 = vsel %vm1198, %v1163, 0.0
      %v1334 = vsel %vm1199, %v1164, 0.0
      %v1335 = vsel %vm1200, %v1165, 0.0
      %v1336 = vsel %vm1201, %v1166, 0.0
      %v1337 = vsel %vm1202, %v1167, 0.0
      %v1338 = vsel %vm1198, %v1168, 0.0
      %v1339 = vsel %vm1199, %v1169, 0.0
      %v1340 = vsel %vm1200, %v1170, 0.0
      %v1341 = vsel %vm1201, %v1171, 0.0
      %v1342 = vsel %vm1202, %v1172, 0.0
      %v1343 = vsel %vm1198, %v1173, 0.0
      %v1344 = vsel %vm1199, %v1174, 0.0
      %v1345 = vsel %vm1200, %v1175, 0.0
      %v1346 = vsel %vm1201, %v1176, 0.0
      %v1347 = vsel %vm1202, %v1177, 0.0
      %v1348 = vsel %vm1198, %v1178, 0.0
      %v1349 = vsel %vm1199, %v1179, 0.0
      %v1350 = vsel %vm1200, %v1180, 0.0
      %v1351 = vsel %vm1201, %v1181, 0.0
      %v1352 = vsel %vm1202, %v1182, 0.0
      %v1353 = vsel %vm1198, %v1183, 0.0
      %v1354 = vsel %vm1199, %v1184, 0.0
      %v1355 = vsel %vm1200, %v1185, 0.0
      %v1356 = vsel %vm1201, %v1186, 0.0
      %v1357 = vsel %vm1202, %v1187, 0.0
      %v1358 = vsel %vm1198, %v1188, 0.0
      %v1359 = vsel %vm1199, %v1189, 0.0
      %v1360 = vsel %vm1200, %v1190, 0.0
      %v1361 = vsel %vm1201, %v1191, 0.0
      %v1362 = vsel %vm1202, %v1192, 0.0
      %v1363 = vld [vmem:[%s358] sm:$0xf]
      %v1364 = vld [vmem:[%s358 + $0x4] sm:$0xf]
      %v1365 = vld [vmem:[%s358 + $0x8] sm:$0xf]
      %v1366 = vld [vmem:[%s358 + $0xc] sm:$0xf]
      %v1367 = vld [vmem:[%s358 + $0x10] sm:$0x1]
      %v1368 = vunpack.c.l.bf16 %v1363
      %v1369 = vunpack.c.l.bf16 %v1364
      %v1370 = vunpack.c.l.bf16 %v1365
      %v1371 = vunpack.c.l.bf16 %v1366
      %v1372 = vunpack.c.l.bf16 %v1367
      %v1373 = vmul.f32 %v1368, %v708
      %v1374 = vmul.f32 %v1369, %v708
      %v1375 = vmul.f32 %v1370, %v708
      %v1376 = vmul.f32 %v1371, %v708
      %v1377 = vmul.f32 %v1372, %v708
      %v1378 = vadd.f32 %v1373, %v871
      %v1379 = vadd.f32 %v1374, %v871
      %v1380 = vadd.f32 %v1375, %v871
      %v1381 = vadd.f32 %v1376, %v871
      %v1382 = vadd.f32 %v1377, %v871
      %v1383 = vmax.f32 %v1378, 0.0
      %v1384 = vmax.f32 %v1379, 0.0
      %v1385 = vmax.f32 %v1380, 0.0
      %v1386 = vmax.f32 %v1381, 0.0
      %v1387 = vmax.f32 %v1382, 0.0
      %v1388 = vsel %vm382, %v1383, 0.0
      %v1389 = vsel %vm383, %v1384, 0.0
      %v1390 = vsel %vm384, %v1385, 0.0
      %v1391 = vsel %vm385, %v1386, 0.0
      %v1392 = vsel %vm386, %v1387, 0.0
      %p1393 = scmp.eq.s32.totalorder %s23, 0
      %s1394 = scalar_select %p1393, 1, 0
      %v1395 = vstv %s1394
      %vm1396 = vcmp.eq.s32.totalorder %v1395, 1
      %v1397 = vsel %vm1396, 0.0, %v1388
      %v1398 = vsel %vm1396, 0.0, %v1389
      %v1399 = vsel %vm1396, 0.0, %v1390
      %v1400 = vsel %vm1396, 0.0, %v1391
      %v1401 = vsel %vm1396, 0.0, %v1392
      %v1402 = vpack.c.bf16 %v1204, %v1203
      %v1403 = vpack.c.bf16 %v1206, %v1205
      %v1404 = vpack.c.bf16 %v1209, %v1208
      %v1405 = vpack.c.bf16 %v1211, %v1210
      %v1406 = vpack.c.bf16 %v1214, %v1213
      %v1407 = vpack.c.bf16 %v1216, %v1215
      %v1408 = vpack.c.bf16 %v1219, %v1218
      %v1409 = vpack.c.bf16 %v1221, %v1220
      %v1410 = vpack.c.bf16 %v1224, %v1223
      %v1411 = vpack.c.bf16 %v1226, %v1225
      %v1412 = vpack.c.bf16 %v1229, %v1228
      %v1413 = vpack.c.bf16 %v1231, %v1230
      %v1414 = vpack.c.bf16 %v1234, %v1233
      %v1415 = vpack.c.bf16 %v1236, %v1235
      %v1416 = vpack.c.bf16 %v1239, %v1238
      %v1417 = vpack.c.bf16 %v1241, %v1240
      %v1418 = vpack.c.bf16 %v1244, %v1243
      %v1419 = vpack.c.bf16 %v1246, %v1245
      %v1420 = vpack.c.bf16 %v1249, %v1248
      %v1421 = vpack.c.bf16 %v1251, %v1250
      %v1422 = vpack.c.bf16 %v1254, %v1253
      %v1423 = vpack.c.bf16 %v1256, %v1255
      %v1424 = vpack.c.bf16 %v1259, %v1258
      %v1425 = vpack.c.bf16 %v1261, %v1260
      %v1426 = vpack.c.bf16 %v1264, %v1263
      %v1427 = vpack.c.bf16 %v1266, %v1265
      %v1428 = vpack.c.bf16 %v1269, %v1268
      %v1429 = vpack.c.bf16 %v1271, %v1270
      %v1430 = vpack.c.bf16 %v1274, %v1273
      %v1431 = vpack.c.bf16 %v1276, %v1275
      %v1432 = vpack.c.bf16 %v1279, %v1278
      %v1433 = vpack.c.bf16 %v1281, %v1280
      %v1434 = vpack.c.bf16 %v1284, %v1283
      %v1435 = vpack.c.bf16 %v1286, %v1285
      %v1436 = vpack.c.bf16 %v1289, %v1288
      %v1437 = vpack.c.bf16 %v1291, %v1290
      %v1438 = vpack.c.bf16 %v1294, %v1293
      %v1439 = vpack.c.bf16 %v1296, %v1295
      %v1440 = vpack.c.bf16 %v1299, %v1298
      %v1441 = vpack.c.bf16 %v1301, %v1300
      %v1442 = vpack.c.bf16 %v1304, %v1303
      %v1443 = vpack.c.bf16 %v1306, %v1305
      %v1444 = vpack.c.bf16 %v1309, %v1308
      %v1445 = vpack.c.bf16 %v1311, %v1310
      %v1446 = vpack.c.bf16 %v1314, %v1313
      %v1447 = vpack.c.bf16 %v1316, %v1315
      %v1448 = vpack.c.bf16 %v1319, %v1318
      %v1449 = vpack.c.bf16 %v1321, %v1320
      %v1450 = vpack.c.bf16 %v1324, %v1323
      %v1451 = vpack.c.bf16 %v1326, %v1325
      %v1452 = vpack.c.bf16 %v1329, %v1328
      %v1453 = vpack.c.bf16 %v1331, %v1330
      %v1454 = vpack.c.bf16 %v1334, %v1333
      %v1455 = vpack.c.bf16 %v1336, %v1335
      %v1456 = vpack.c.bf16 %v1339, %v1338
      %v1457 = vpack.c.bf16 %v1341, %v1340
      %v1458 = vpack.c.bf16 %v1344, %v1343
      %v1459 = vpack.c.bf16 %v1346, %v1345
      %v1460 = vpack.c.bf16 %v1349, %v1348
      %v1461 = vpack.c.bf16 %v1351, %v1350
      %v1462 = vpack.c.bf16 %v1354, %v1353
      %v1463 = vpack.c.bf16 %v1356, %v1355
      %v1464 = vpack.c.bf16 %v1359, %v1358
      %v1465 = vpack.c.bf16 %v1361, %v1360
      %v1466 = vld [vmem:[%s4] sm:$0x3]
      %vm1627 = vcmask 1046528
      %v1628 = vrot.slane %v1203, 1
      %v1629 = vrot.slane %v1204, 1
      %v1630 = vsel %vm1627, %v1628, %v1629
      %v1631 = vrot.slane %v1205, 1
      %v1632 = vsel %vm1627, %v1629, %v1631
      %v1633 = vrot.slane %v1206, 1
      %v1634 = vsel %vm1627, %v1631, %v1633
      %v1635 = vrot.slane %v1207, 1
      %v1636 = vsel %vm1627, %v1633, %v1635
      %v1637 = vrot.slane %v1208, 1
      %v1638 = vrot.slane %v1209, 1
      %v1639 = vsel %vm1627, %v1637, %v1638
      %v1640 = vrot.slane %v1210, 1
      %v1641 = vsel %vm1627, %v1638, %v1640
      %v1642 = vrot.slane %v1211, 1
      %v1643 = vsel %vm1627, %v1640, %v1642
      %v1644 = vrot.slane %v1212, 1
      %v1645 = vsel %vm1627, %v1642, %v1644
      %v1646 = vrot.slane %v1213, 1
      %v1647 = vrot.slane %v1214, 1
      %v1648 = vsel %vm1627, %v1646, %v1647
      %v1649 = vrot.slane %v1215, 1
      %v1650 = vsel %vm1627, %v1647, %v1649
      %v1651 = vrot.slane %v1216, 1
      %v1652 = vsel %vm1627, %v1649, %v1651
      %v1653 = vrot.slane %v1217, 1
      %v1654 = vsel %vm1627, %v1651, %v1653
      %v1655 = vrot.slane %v1218, 1
      %v1656 = vrot.slane %v1219, 1
      %v1657 = vsel %vm1627, %v1655, %v1656
      %v1658 = vrot.slane %v1220, 1
      %v1659 = vsel %vm1627, %v1656, %v1658
      %v1660 = vrot.slane %v1221, 1
      %v1661 = vsel %vm1627, %v1658, %v1660
      %v1662 = vrot.slane %v1222, 1
      %v1663 = vsel %vm1627, %v1660, %v1662
      %v1664 = vrot.slane %v1223, 1
      %v1665 = vrot.slane %v1224, 1
      %v1666 = vsel %vm1627, %v1664, %v1665
      %v1667 = vrot.slane %v1225, 1
      %v1668 = vsel %vm1627, %v1665, %v1667
      %v1669 = vrot.slane %v1226, 1
      %v1670 = vsel %vm1627, %v1667, %v1669
      %v1671 = vrot.slane %v1227, 1
      %v1672 = vsel %vm1627, %v1669, %v1671
      %v1673 = vrot.slane %v1228, 1
      %v1674 = vrot.slane %v1229, 1
      %v1675 = vsel %vm1627, %v1673, %v1674
      %v1676 = vrot.slane %v1230, 1
      %v1677 = vsel %vm1627, %v1674, %v1676
      %v1678 = vrot.slane %v1231, 1
      %v1679 = vsel %vm1627, %v1676, %v1678
      %v1680 = vrot.slane %v1232, 1
      %v1681 = vsel %vm1627, %v1678, %v1680
      %v1682 = vrot.slane %v1233, 1
      %v1683 = vrot.slane %v1234, 1
      %v1684 = vsel %vm1627, %v1682, %v1683
      %v1685 = vrot.slane %v1235, 1
      %v1686 = vsel %vm1627, %v1683, %v1685
      %v1687 = vrot.slane %v1236, 1
      %v1688 = vsel %vm1627, %v1685, %v1687
      %v1689 = vrot.slane %v1237, 1
      %v1690 = vsel %vm1627, %v1687, %v1689
      %v1691 = vrot.slane %v1238, 1
      %v1692 = vrot.slane %v1239, 1
      %v1693 = vsel %vm1627, %v1691, %v1692
      %v1694 = vrot.slane %v1240, 1
      %v1695 = vsel %vm1627, %v1692, %v1694
      %v1696 = vrot.slane %v1241, 1
      %v1697 = vsel %vm1627, %v1694, %v1696
      %v1698 = vrot.slane %v1242, 1
      %v1699 = vsel %vm1627, %v1696, %v1698
      %v1700 = vrot.slane %v1243, 1
      %v1701 = vrot.slane %v1244, 1
      %v1702 = vsel %vm1627, %v1700, %v1701
      %v1703 = vrot.slane %v1245, 1
      %v1704 = vsel %vm1627, %v1701, %v1703
      %v1705 = vrot.slane %v1246, 1
      %v1706 = vsel %vm1627, %v1703, %v1705
      %v1707 = vrot.slane %v1247, 1
      %v1708 = vsel %vm1627, %v1705, %v1707
      %v1709 = vrot.slane %v1248, 1
      %v1710 = vrot.slane %v1249, 1
      %v1711 = vsel %vm1627, %v1709, %v1710
      %v1712 = vrot.slane %v1250, 1
      %v1713 = vsel %vm1627, %v1710, %v1712
      %v1714 = vrot.slane %v1251, 1
      %v1715 = vsel %vm1627, %v1712, %v1714
      %v1716 = vrot.slane %v1252, 1
      %v1717 = vsel %vm1627, %v1714, %v1716
      %v1718 = vrot.slane %v1253, 1
      %v1719 = vrot.slane %v1254, 1
      %v1720 = vsel %vm1627, %v1718, %v1719
      %v1721 = vrot.slane %v1255, 1
      %v1722 = vsel %vm1627, %v1719, %v1721
      %v1723 = vrot.slane %v1256, 1
      %v1724 = vsel %vm1627, %v1721, %v1723
      %v1725 = vrot.slane %v1257, 1
      %v1726 = vsel %vm1627, %v1723, %v1725
      %v1727 = vrot.slane %v1258, 1
      %v1728 = vrot.slane %v1259, 1
      %v1729 = vsel %vm1627, %v1727, %v1728
      %v1730 = vrot.slane %v1260, 1
      %v1731 = vsel %vm1627, %v1728, %v1730
      %v1732 = vrot.slane %v1261, 1
      %v1733 = vsel %vm1627, %v1730, %v1732
      %v1734 = vrot.slane %v1262, 1
      %v1735 = vsel %vm1627, %v1732, %v1734
      %v1736 = vrot.slane %v1263, 1
      %v1737 = vrot.slane %v1264, 1
      %v1738 = vsel %vm1627, %v1736, %v1737
      %v1739 = vrot.slane %v1265, 1
      %v1740 = vsel %vm1627, %v1737, %v1739
      %v1741 = vrot.slane %v1266, 1
      %v1742 = vsel %vm1627, %v1739, %v1741
      %v1743 = vrot.slane %v1267, 1
      %v1744 = vsel %vm1627, %v1741, %v1743
      %v1745 = vrot.slane %v1268, 1
      %v1746 = vrot.slane %v1269, 1
      %v1747 = vsel %vm1627, %v1745, %v1746
      %v1748 = vrot.slane %v1270, 1
      %v1749 = vsel %vm1627, %v1746, %v1748
      %v1750 = vrot.slane %v1271, 1
      %v1751 = vsel %vm1627, %v1748, %v1750
      %v1752 = vrot.slane %v1272, 1
      %v1753 = vsel %vm1627, %v1750, %v1752
      %v1754 = vrot.slane %v1273, 1
      %v1755 = vrot.slane %v1274, 1
      %v1756 = vsel %vm1627, %v1754, %v1755
      %v1757 = vrot.slane %v1275, 1
      %v1758 = vsel %vm1627, %v1755, %v1757
      %v1759 = vrot.slane %v1276, 1
      %v1760 = vsel %vm1627, %v1757, %v1759
      %v1761 = vrot.slane %v1277, 1
      %v1762 = vsel %vm1627, %v1759, %v1761
      %v1763 = vrot.slane %v1278, 1
      %v1764 = vrot.slane %v1279, 1
      %v1765 = vsel %vm1627, %v1763, %v1764
      %v1766 = vrot.slane %v1280, 1
      %v1767 = vsel %vm1627, %v1764, %v1766
      %v1768 = vrot.slane %v1281, 1
      %v1769 = vsel %vm1627, %v1766, %v1768
      %v1770 = vrot.slane %v1282, 1
      %v1771 = vsel %vm1627, %v1768, %v1770
      %v1772 = vrot.slane %v1283, 1
      %v1773 = vrot.slane %v1284, 1
      %v1774 = vsel %vm1627, %v1772, %v1773
      %v1775 = vrot.slane %v1285, 1
      %v1776 = vsel %vm1627, %v1773, %v1775
      %v1777 = vrot.slane %v1286, 1
      %v1778 = vsel %vm1627, %v1775, %v1777
      %v1779 = vrot.slane %v1287, 1
      %v1780 = vsel %vm1627, %v1777, %v1779
      %v1781 = vrot.slane %v1288, 1
      %v1782 = vrot.slane %v1289, 1
      %v1783 = vsel %vm1627, %v1781, %v1782
      %v1784 = vrot.slane %v1290, 1
      %v1785 = vsel %vm1627, %v1782, %v1784
      %v1786 = vrot.slane %v1291, 1
      %v1787 = vsel %vm1627, %v1784, %v1786
      %v1788 = vrot.slane %v1292, 1
      %v1789 = vsel %vm1627, %v1786, %v1788
      %v1790 = vrot.slane %v1293, 1
      %v1791 = vrot.slane %v1294, 1
      %v1792 = vsel %vm1627, %v1790, %v1791
      %v1793 = vrot.slane %v1295, 1
      %v1794 = vsel %vm1627, %v1791, %v1793
      %v1795 = vrot.slane %v1296, 1
      %v1796 = vsel %vm1627, %v1793, %v1795
      %v1797 = vrot.slane %v1297, 1
      %v1798 = vsel %vm1627, %v1795, %v1797
      %v1799 = vrot.slane %v1298, 1
      %v1800 = vrot.slane %v1299, 1
      %v1801 = vsel %vm1627, %v1799, %v1800
      %v1802 = vrot.slane %v1300, 1
      %v1803 = vsel %vm1627, %v1800, %v1802
      %v1804 = vrot.slane %v1301, 1
      %v1805 = vsel %vm1627, %v1802, %v1804
      %v1806 = vrot.slane %v1302, 1
      %v1807 = vsel %vm1627, %v1804, %v1806
      %v1808 = vrot.slane %v1303, 1
      %v1809 = vrot.slane %v1304, 1
      %v1810 = vsel %vm1627, %v1808, %v1809
      %v1811 = vrot.slane %v1305, 1
      %v1812 = vsel %vm1627, %v1809, %v1811
      %v1813 = vrot.slane %v1306, 1
      %v1814 = vsel %vm1627, %v1811, %v1813
      %v1815 = vrot.slane %v1307, 1
      %v1816 = vsel %vm1627, %v1813, %v1815
      %v1817 = vrot.slane %v1308, 1
      %v1818 = vrot.slane %v1309, 1
      %v1819 = vsel %vm1627, %v1817, %v1818
      %v1820 = vrot.slane %v1310, 1
      %v1821 = vsel %vm1627, %v1818, %v1820
      %v1822 = vrot.slane %v1311, 1
      %v1823 = vsel %vm1627, %v1820, %v1822
      %v1824 = vrot.slane %v1312, 1
      %v1825 = vsel %vm1627, %v1822, %v1824
      %v1826 = vrot.slane %v1313, 1
      %v1827 = vrot.slane %v1314, 1
      %v1828 = vsel %vm1627, %v1826, %v1827
      %v1829 = vrot.slane %v1315, 1
      %v1830 = vsel %vm1627, %v1827, %v1829
      %v1831 = vrot.slane %v1316, 1
      %v1832 = vsel %vm1627, %v1829, %v1831
      %v1833 = vrot.slane %v1317, 1
      %v1834 = vsel %vm1627, %v1831, %v1833
      %v1835 = vrot.slane %v1318, 1
      %v1836 = vrot.slane %v1319, 1
      %v1837 = vsel %vm1627, %v1835, %v1836
      %v1838 = vrot.slane %v1320, 1
      %v1839 = vsel %vm1627, %v1836, %v1838
      %v1840 = vrot.slane %v1321, 1
      %v1841 = vsel %vm1627, %v1838, %v1840
      %v1842 = vrot.slane %v1322, 1
      %v1843 = vsel %vm1627, %v1840, %v1842
      %v1844 = vrot.slane %v1323, 1
      %v1845 = vrot.slane %v1324, 1
      %v1846 = vsel %vm1627, %v1844, %v1845
      %v1847 = vrot.slane %v1325, 1
      %v1848 = vsel %vm1627, %v1845, %v1847
      %v1849 = vrot.slane %v1326, 1
      %v1850 = vsel %vm1627, %v1847, %v1849
      %v1851 = vrot.slane %v1327, 1
      %v1852 = vsel %vm1627, %v1849, %v1851
      %v1853 = vrot.slane %v1328, 1
      %v1854 = vrot.slane %v1329, 1
      %v1855 = vsel %vm1627, %v1853, %v1854
      %v1856 = vrot.slane %v1330, 1
      %v1857 = vsel %vm1627, %v1854, %v1856
      %v1858 = vrot.slane %v1331, 1
      %v1859 = vsel %vm1627, %v1856, %v1858
      %v1860 = vrot.slane %v1332, 1
      %v1861 = vsel %vm1627, %v1858, %v1860
      %v1862 = vrot.slane %v1333, 1
      %v1863 = vrot.slane %v1334, 1
      %v1864 = vsel %vm1627, %v1862, %v1863
      %v1865 = vrot.slane %v1335, 1
      %v1866 = vsel %vm1627, %v1863, %v1865
      %v1867 = vrot.slane %v1336, 1
      %v1868 = vsel %vm1627, %v1865, %v1867
      %v1869 = vrot.slane %v1337, 1
      %v1870 = vsel %vm1627, %v1867, %v1869
      %v1871 = vrot.slane %v1338, 1
      %v1872 = vrot.slane %v1339, 1
      %v1873 = vsel %vm1627, %v1871, %v1872
      %v1874 = vrot.slane %v1340, 1
      %v1875 = vsel %vm1627, %v1872, %v1874
      %v1876 = vrot.slane %v1341, 1
      %v1877 = vsel %vm1627, %v1874, %v1876
      %v1878 = vrot.slane %v1342, 1
      %v1879 = vsel %vm1627, %v1876, %v1878
      %v1880 = vrot.slane %v1343, 1
      %v1881 = vrot.slane %v1344, 1
      %v1882 = vsel %vm1627, %v1880, %v1881
      %v1883 = vrot.slane %v1345, 1
      %v1884 = vsel %vm1627, %v1881, %v1883
      %v1885 = vrot.slane %v1346, 1
      %v1886 = vsel %vm1627, %v1883, %v1885
      %v1887 = vrot.slane %v1347, 1
      %v1888 = vsel %vm1627, %v1885, %v1887
      %v1889 = vrot.slane %v1348, 1
      %v1890 = vrot.slane %v1349, 1
      %v1891 = vsel %vm1627, %v1889, %v1890
      %v1892 = vrot.slane %v1350, 1
      %v1893 = vsel %vm1627, %v1890, %v1892
      %v1894 = vrot.slane %v1351, 1
      %v1895 = vsel %vm1627, %v1892, %v1894
      %v1896 = vrot.slane %v1352, 1
      %v1897 = vsel %vm1627, %v1894, %v1896
      %v1898 = vrot.slane %v1353, 1
      %v1899 = vrot.slane %v1354, 1
      %v1900 = vsel %vm1627, %v1898, %v1899
      %v1901 = vrot.slane %v1355, 1
      %v1902 = vsel %vm1627, %v1899, %v1901
      %v1903 = vrot.slane %v1356, 1
      %v1904 = vsel %vm1627, %v1901, %v1903
      %v1905 = vrot.slane %v1357, 1
      %v1906 = vsel %vm1627, %v1903, %v1905
      %v1907 = vrot.slane %v1358, 1
      %v1908 = vrot.slane %v1359, 1
      %v1909 = vsel %vm1627, %v1907, %v1908
      %v1910 = vrot.slane %v1360, 1
      %v1911 = vsel %vm1627, %v1908, %v1910
      %v1912 = vrot.slane %v1361, 1
      %v1913 = vsel %vm1627, %v1910, %v1912
      %v1914 = vrot.slane %v1362, 1
      %v1915 = vsel %vm1627, %v1912, %v1914
      %v2044 = vpack.c.bf16 %v1632, %v1630
      %v2045 = vpack.c.bf16 %v1636, %v1634
      %v2046 = vpack.c.bf16 %v1641, %v1639
      %v2047 = vpack.c.bf16 %v1645, %v1643
      %v2048 = vpack.c.bf16 %v1650, %v1648
      %v2049 = vpack.c.bf16 %v1654, %v1652
      %v2050 = vpack.c.bf16 %v1659, %v1657
      %v2051 = vpack.c.bf16 %v1663, %v1661
      %v2052 = vpack.c.bf16 %v1668, %v1666
      %v2053 = vpack.c.bf16 %v1672, %v1670
      %v2054 = vpack.c.bf16 %v1677, %v1675
      %v2055 = vpack.c.bf16 %v1681, %v1679
      %v2056 = vpack.c.bf16 %v1686, %v1684
      %v2057 = vpack.c.bf16 %v1690, %v1688
      %v2058 = vpack.c.bf16 %v1695, %v1693
      %v2059 = vpack.c.bf16 %v1699, %v1697
      %v2060 = vpack.c.bf16 %v1704, %v1702
      %v2061 = vpack.c.bf16 %v1708, %v1706
      %v2062 = vpack.c.bf16 %v1713, %v1711
      %v2063 = vpack.c.bf16 %v1717, %v1715
      %v2064 = vpack.c.bf16 %v1722, %v1720
      %v2065 = vpack.c.bf16 %v1726, %v1724
      %v2066 = vpack.c.bf16 %v1731, %v1729
      %v2067 = vpack.c.bf16 %v1735, %v1733
      %v2068 = vpack.c.bf16 %v1740, %v1738
      %v2069 = vpack.c.bf16 %v1744, %v1742
      %v2070 = vpack.c.bf16 %v1749, %v1747
      %v2071 = vpack.c.bf16 %v1753, %v1751
      %v2072 = vpack.c.bf16 %v1758, %v1756
      %v2073 = vpack.c.bf16 %v1762, %v1760
      %v2074 = vpack.c.bf16 %v1767, %v1765
      %v2075 = vpack.c.bf16 %v1771, %v1769
      %v2076 = vpack.c.bf16 %v1776, %v1774
      %v2077 = vpack.c.bf16 %v1780, %v1778
      %v2078 = vpack.c.bf16 %v1785, %v1783
      %v2079 = vpack.c.bf16 %v1789, %v1787
      %v2080 = vpack.c.bf16 %v1794, %v1792
      %v2081 = vpack.c.bf16 %v1798, %v1796
      %v2082 = vpack.c.bf16 %v1803, %v1801
      %v2083 = vpack.c.bf16 %v1807, %v1805
      %v2084 = vpack.c.bf16 %v1812, %v1810
      %v2085 = vpack.c.bf16 %v1816, %v1814
      %v2086 = vpack.c.bf16 %v1821, %v1819
      %v2087 = vpack.c.bf16 %v1825, %v1823
      %v2088 = vpack.c.bf16 %v1830, %v1828
      %v2089 = vpack.c.bf16 %v1834, %v1832
      %v2090 = vpack.c.bf16 %v1839, %v1837
      %v2091 = vpack.c.bf16 %v1843, %v1841
      %v2092 = vpack.c.bf16 %v1848, %v1846
      %v2093 = vpack.c.bf16 %v1852, %v1850
      %v2094 = vpack.c.bf16 %v1857, %v1855
      %v2095 = vpack.c.bf16 %v1861, %v1859
      %v2096 = vpack.c.bf16 %v1866, %v1864
      %v2097 = vpack.c.bf16 %v1870, %v1868
      %v2098 = vpack.c.bf16 %v1875, %v1873
      %v2099 = vpack.c.bf16 %v1879, %v1877
      %v2100 = vpack.c.bf16 %v1884, %v1882
      %v2101 = vpack.c.bf16 %v1888, %v1886
      %v2102 = vpack.c.bf16 %v1893, %v1891
      %v2103 = vpack.c.bf16 %v1897, %v1895
      %v2104 = vpack.c.bf16 %v1902, %v1900
      %v2105 = vpack.c.bf16 %v1906, %v1904
      %v2106 = vpack.c.bf16 %v1911, %v1909
      %v2107 = vpack.c.bf16 %v1915, %v1913
      %v2108 = vld [vmem:[%s4] sm:$0xc]
      %v2110 = vunpack.c.l.b16 %v2108
      %v2111 = vpack.c.b16 %v2110, %v2110
      %v2112 = vrot.slane %v2111, 2
      %vm2113 = vcmask 31744
      %v2115 = vsel %vm2113, %v2044, 0
      %v2118 = vsel %vm2113, %v2045, 0
      %v2121 = vsel %vm2113, %v2046, 0
      %v2124 = vsel %vm2113, %v2047, 0
      %v2127 = vsel %vm2113, %v2048, 0
      %v2130 = vsel %vm2113, %v2049, 0
      %v2133 = vsel %vm2113, %v2050, 0
      %v2136 = vsel %vm2113, %v2051, 0
      %v2139 = vsel %vm2113, %v2052, 0
      %v2142 = vsel %vm2113, %v2053, 0
      %v2145 = vsel %vm2113, %v2054, 0
      %v2148 = vsel %vm2113, %v2055, 0
      %v2151 = vsel %vm2113, %v2056, 0
      %v2154 = vsel %vm2113, %v2057, 0
      %v2157 = vsel %vm2113, %v2058, 0
      %v2160 = vsel %vm2113, %v2059, 0
      %v2163 = vsel %vm2113, %v2060, 0
      %v2166 = vsel %vm2113, %v2061, 0
      %v2169 = vsel %vm2113, %v2062, 0
      %v2172 = vsel %vm2113, %v2063, 0
      %v2175 = vsel %vm2113, %v2064, 0
      %v2178 = vsel %vm2113, %v2065, 0
      %v2181 = vsel %vm2113, %v2066, 0
      %v2184 = vsel %vm2113, %v2067, 0
      %v2187 = vsel %vm2113, %v2068, 0
      %v2190 = vsel %vm2113, %v2069, 0
      %v2193 = vsel %vm2113, %v2070, 0
      %v2196 = vsel %vm2113, %v2071, 0
      %v2199 = vsel %vm2113, %v2072, 0
      %v2202 = vsel %vm2113, %v2073, 0
      %v2205 = vsel %vm2113, %v2074, 0
      %v2208 = vsel %vm2113, %v2075, 0
      %v2211 = vsel %vm2113, %v2076, 0
      %v2214 = vsel %vm2113, %v2077, 0
      %v2217 = vsel %vm2113, %v2078, 0
      %v2220 = vsel %vm2113, %v2079, 0
      %v2223 = vsel %vm2113, %v2080, 0
      %v2226 = vsel %vm2113, %v2081, 0
      %v2229 = vsel %vm2113, %v2082, 0
      %v2232 = vsel %vm2113, %v2083, 0
      %v2235 = vsel %vm2113, %v2084, 0
      %v2238 = vsel %vm2113, %v2085, 0
      %v2241 = vsel %vm2113, %v2086, 0
      %v2244 = vsel %vm2113, %v2087, 0
      %v2247 = vsel %vm2113, %v2088, 0
      %v2250 = vsel %vm2113, %v2089, 0
      %v2253 = vsel %vm2113, %v2090, 0
      %v2256 = vsel %vm2113, %v2091, 0
      %v2259 = vsel %vm2113, %v2092, 0
      %v2262 = vsel %vm2113, %v2093, 0
      %v2265 = vsel %vm2113, %v2094, 0
      %v2268 = vsel %vm2113, %v2095, 0
      %v2271 = vsel %vm2113, %v2096, 0
      %v2274 = vsel %vm2113, %v2097, 0
      %v2277 = vsel %vm2113, %v2098, 0
      %v2280 = vsel %vm2113, %v2099, 0
      %v2283 = vsel %vm2113, %v2100, 0
      %v2286 = vsel %vm2113, %v2101, 0
      %v2289 = vsel %vm2113, %v2102, 0
      %v2292 = vsel %vm2113, %v2103, 0
      %v2295 = vsel %vm2113, %v2104, 0
      %v2298 = vsel %vm2113, %v2105, 0
      %v2301 = vsel %vm2113, %v2106, 0
      %v2304 = vsel %vm2113, %v2107, 0
      %vm2306 = vcmask 1041408
      %v2308 = vsel %vm2306, %v2112, 0
      %2310 = vmatpush.bf16.msra.mxu0 0
      %2311 = vmatpush.bf16.msra.mxu0 0
      %2312 = vmatpush.bf16.msra.mxu0 0
      %2313 = vmatpush.bf16.msra.mxu0 0
      %2314 = vmatpush.bf16.msra.mxu0 0
      %2315 = vmatpush.bf16.msra.mxu0 0
      %2316 = vmatpush.bf16.msra.mxu0 0
      %2317 = vmatpush.bf16.msra.mxu0 %v2308
      %2318 = vmatmul.bf16.gmra.mxu0 %v2115
      %v2319 = vpop.f32.mrf.mxu0
      %v2320 = vadd.f32 0.0, %v2319
      %v2321 = vpop.f32.mrf.mxu0
      %v2322 = vadd.f32 0.0, %v2321
      %2323 = vmatmul.bf16.gmra.mxu0 %v2118
      %v2324 = vpop.f32.mrf.mxu0
      %v2325 = vadd.f32 0.0, %v2324
      %v2326 = vpop.f32.mrf.mxu0
      %v2327 = vadd.f32 0.0, %v2326
      %2328 = vmatmul.bf16.gmra.mxu0 %v2121
      %v2329 = vpop.f32.mrf.mxu0
      %v2330 = vadd.f32 0.0, %v2329
      %v2331 = vpop.f32.mrf.mxu0
      %v2332 = vadd.f32 0.0, %v2331
      %2333 = vmatmul.bf16.gmra.mxu0 %v2124
      %v2334 = vpop.f32.mrf.mxu0
      %v2335 = vadd.f32 0.0, %v2334
      %v2336 = vpop.f32.mrf.mxu0
      %v2337 = vadd.f32 0.0, %v2336
      %2338 = vmatmul.bf16.gmra.mxu0 %v2127
      %v2339 = vpop.f32.mrf.mxu0
      %v2340 = vadd.f32 0.0, %v2339
      %v2341 = vpop.f32.mrf.mxu0
      %v2342 = vadd.f32 0.0, %v2341
      %2343 = vmatmul.bf16.gmra.mxu0 %v2130
      %v2344 = vpop.f32.mrf.mxu0
      %v2345 = vadd.f32 0.0, %v2344
      %v2346 = vpop.f32.mrf.mxu0
      %v2347 = vadd.f32 0.0, %v2346
      %2348 = vmatmul.bf16.gmra.mxu0 %v2133
      %v2349 = vpop.f32.mrf.mxu0
      %v2350 = vadd.f32 0.0, %v2349
      %v2351 = vpop.f32.mrf.mxu0
      %v2352 = vadd.f32 0.0, %v2351
      %2353 = vmatmul.bf16.gmra.mxu0 %v2136
      %v2354 = vpop.f32.mrf.mxu0
      %v2355 = vadd.f32 0.0, %v2354
      %v2356 = vpop.f32.mrf.mxu0
      %v2357 = vadd.f32 0.0, %v2356
      %2358 = vmatmul.bf16.gmra.mxu0 %v2139
      %v2359 = vpop.f32.mrf.mxu0
      %v2360 = vadd.f32 0.0, %v2359
      %v2361 = vpop.f32.mrf.mxu0
      %v2362 = vadd.f32 0.0, %v2361
      %2363 = vmatmul.bf16.gmra.mxu0 %v2142
      %v2364 = vpop.f32.mrf.mxu0
      %v2365 = vadd.f32 0.0, %v2364
      %v2366 = vpop.f32.mrf.mxu0
      %v2367 = vadd.f32 0.0, %v2366
      %2368 = vmatmul.bf16.gmra.mxu0 %v2145
      %v2369 = vpop.f32.mrf.mxu0
      %v2370 = vadd.f32 0.0, %v2369
      %v2371 = vpop.f32.mrf.mxu0
      %v2372 = vadd.f32 0.0, %v2371
      %2373 = vmatmul.bf16.gmra.mxu0 %v2148
      %v2374 = vpop.f32.mrf.mxu0
      %v2375 = vadd.f32 0.0, %v2374
      %v2376 = vpop.f32.mrf.mxu0
      %v2377 = vadd.f32 0.0, %v2376
      %2378 = vmatmul.bf16.gmra.mxu0 %v2151
      %v2379 = vpop.f32.mrf.mxu0
      %v2380 = vadd.f32 0.0, %v2379
      %v2381 = vpop.f32.mrf.mxu0
      %v2382 = vadd.f32 0.0, %v2381
      %2383 = vmatmul.bf16.gmra.mxu0 %v2154
      %v2384 = vpop.f32.mrf.mxu0
      %v2385 = vadd.f32 0.0, %v2384
      %v2386 = vpop.f32.mrf.mxu0
      %v2387 = vadd.f32 0.0, %v2386
      %2388 = vmatmul.bf16.gmra.mxu0 %v2157
      %v2389 = vpop.f32.mrf.mxu0
      %v2390 = vadd.f32 0.0, %v2389
      %v2391 = vpop.f32.mrf.mxu0
      %v2392 = vadd.f32 0.0, %v2391
      %2393 = vmatmul.bf16.gmra.mxu0 %v2160
      %v2394 = vpop.f32.mrf.mxu0
      %v2395 = vadd.f32 0.0, %v2394
      %v2396 = vpop.f32.mrf.mxu0
      %v2397 = vadd.f32 0.0, %v2396
      %2398 = vmatmul.bf16.gmra.mxu0 %v2163
      %v2399 = vpop.f32.mrf.mxu0
      %v2400 = vadd.f32 0.0, %v2399
      %v2401 = vpop.f32.mrf.mxu0
      %v2402 = vadd.f32 0.0, %v2401
      %2403 = vmatmul.bf16.gmra.mxu0 %v2166
      %v2404 = vpop.f32.mrf.mxu0
      %v2405 = vadd.f32 0.0, %v2404
      %v2406 = vpop.f32.mrf.mxu0
      %v2407 = vadd.f32 0.0, %v2406
      %2408 = vmatmul.bf16.gmra.mxu0 %v2169
      %v2409 = vpop.f32.mrf.mxu0
      %v2410 = vadd.f32 0.0, %v2409
      %v2411 = vpop.f32.mrf.mxu0
      %v2412 = vadd.f32 0.0, %v2411
      %2413 = vmatmul.bf16.gmra.mxu0 %v2172
      %v2414 = vpop.f32.mrf.mxu0
      %v2415 = vadd.f32 0.0, %v2414
      %v2416 = vpop.f32.mrf.mxu0
      %v2417 = vadd.f32 0.0, %v2416
      %2418 = vmatmul.bf16.gmra.mxu0 %v2175
      %v2419 = vpop.f32.mrf.mxu0
      %v2420 = vadd.f32 0.0, %v2419
      %v2421 = vpop.f32.mrf.mxu0
      %v2422 = vadd.f32 0.0, %v2421
      %2423 = vmatmul.bf16.gmra.mxu0 %v2178
      %v2424 = vpop.f32.mrf.mxu0
      %v2425 = vadd.f32 0.0, %v2424
      %v2426 = vpop.f32.mrf.mxu0
      %v2427 = vadd.f32 0.0, %v2426
      %2428 = vmatmul.bf16.gmra.mxu0 %v2181
      %v2429 = vpop.f32.mrf.mxu0
      %v2430 = vadd.f32 0.0, %v2429
      %v2431 = vpop.f32.mrf.mxu0
      %v2432 = vadd.f32 0.0, %v2431
      %2433 = vmatmul.bf16.gmra.mxu0 %v2184
      %v2434 = vpop.f32.mrf.mxu0
      %v2435 = vadd.f32 0.0, %v2434
      %v2436 = vpop.f32.mrf.mxu0
      %v2437 = vadd.f32 0.0, %v2436
      %2438 = vmatmul.bf16.gmra.mxu0 %v2187
      %v2439 = vpop.f32.mrf.mxu0
      %v2440 = vadd.f32 0.0, %v2439
      %v2441 = vpop.f32.mrf.mxu0
      %v2442 = vadd.f32 0.0, %v2441
      %2443 = vmatmul.bf16.gmra.mxu0 %v2190
      %v2444 = vpop.f32.mrf.mxu0
      %v2445 = vadd.f32 0.0, %v2444
      %v2446 = vpop.f32.mrf.mxu0
      %v2447 = vadd.f32 0.0, %v2446
      %2448 = vmatmul.bf16.gmra.mxu0 %v2193
      %v2449 = vpop.f32.mrf.mxu0
      %v2450 = vadd.f32 0.0, %v2449
      %v2451 = vpop.f32.mrf.mxu0
      %v2452 = vadd.f32 0.0, %v2451
      %2453 = vmatmul.bf16.gmra.mxu0 %v2196
      %v2454 = vpop.f32.mrf.mxu0
      %v2455 = vadd.f32 0.0, %v2454
      %v2456 = vpop.f32.mrf.mxu0
      %v2457 = vadd.f32 0.0, %v2456
      %2458 = vmatmul.bf16.gmra.mxu0 %v2199
      %v2459 = vpop.f32.mrf.mxu0
      %v2460 = vadd.f32 0.0, %v2459
      %v2461 = vpop.f32.mrf.mxu0
      %v2462 = vadd.f32 0.0, %v2461
      %2463 = vmatmul.bf16.gmra.mxu0 %v2202
      %v2464 = vpop.f32.mrf.mxu0
      %v2465 = vadd.f32 0.0, %v2464
      %v2466 = vpop.f32.mrf.mxu0
      %v2467 = vadd.f32 0.0, %v2466
      %2468 = vmatmul.bf16.gmra.mxu0 %v2205
      %v2469 = vpop.f32.mrf.mxu0
      %v2470 = vadd.f32 0.0, %v2469
      %v2471 = vpop.f32.mrf.mxu0
      %v2472 = vadd.f32 0.0, %v2471
      %2473 = vmatmul.bf16.gmra.mxu0 %v2208
      %v2474 = vpop.f32.mrf.mxu0
      %v2475 = vadd.f32 0.0, %v2474
      %v2476 = vpop.f32.mrf.mxu0
      %v2477 = vadd.f32 0.0, %v2476
      %2478 = vmatmul.bf16.gmra.mxu0 %v2211
      %v2479 = vpop.f32.mrf.mxu0
      %v2480 = vadd.f32 0.0, %v2479
      %v2481 = vpop.f32.mrf.mxu0
      %v2482 = vadd.f32 0.0, %v2481
      %2483 = vmatmul.bf16.gmra.mxu0 %v2214
      %v2484 = vpop.f32.mrf.mxu0
      %v2485 = vadd.f32 0.0, %v2484
      %v2486 = vpop.f32.mrf.mxu0
      %v2487 = vadd.f32 0.0, %v2486
      %2488 = vmatmul.bf16.gmra.mxu0 %v2217
      %v2489 = vpop.f32.mrf.mxu0
      %v2490 = vadd.f32 0.0, %v2489
      %v2491 = vpop.f32.mrf.mxu0
      %v2492 = vadd.f32 0.0, %v2491
      %2493 = vmatmul.bf16.gmra.mxu0 %v2220
      %v2494 = vpop.f32.mrf.mxu0
      %v2495 = vadd.f32 0.0, %v2494
      %v2496 = vpop.f32.mrf.mxu0
      %v2497 = vadd.f32 0.0, %v2496
      %2498 = vmatmul.bf16.gmra.mxu0 %v2223
      %v2499 = vpop.f32.mrf.mxu0
      %v2500 = vadd.f32 0.0, %v2499
      %v2501 = vpop.f32.mrf.mxu0
      %v2502 = vadd.f32 0.0, %v2501
      %2503 = vmatmul.bf16.gmra.mxu0 %v2226
      %v2504 = vpop.f32.mrf.mxu0
      %v2505 = vadd.f32 0.0, %v2504
      %v2506 = vpop.f32.mrf.mxu0
      %v2507 = vadd.f32 0.0, %v2506
      %2508 = vmatmul.bf16.gmra.mxu0 %v2229
      %v2509 = vpop.f32.mrf.mxu0
      %v2510 = vadd.f32 0.0, %v2509
      %v2511 = vpop.f32.mrf.mxu0
      %v2512 = vadd.f32 0.0, %v2511
      %2513 = vmatmul.bf16.gmra.mxu0 %v2232
      %v2514 = vpop.f32.mrf.mxu0
      %v2515 = vadd.f32 0.0, %v2514
      %v2516 = vpop.f32.mrf.mxu0
      %v2517 = vadd.f32 0.0, %v2516
      %2518 = vmatmul.bf16.gmra.mxu0 %v2235
      %v2519 = vpop.f32.mrf.mxu0
      %v2520 = vadd.f32 0.0, %v2519
      %v2521 = vpop.f32.mrf.mxu0
      %v2522 = vadd.f32 0.0, %v2521
      %2523 = vmatmul.bf16.gmra.mxu0 %v2238
      %v2524 = vpop.f32.mrf.mxu0
      %v2525 = vadd.f32 0.0, %v2524
      %v2526 = vpop.f32.mrf.mxu0
      %v2527 = vadd.f32 0.0, %v2526
      %2528 = vmatmul.bf16.gmra.mxu0 %v2241
      %v2529 = vpop.f32.mrf.mxu0
      %v2530 = vadd.f32 0.0, %v2529
      %v2531 = vpop.f32.mrf.mxu0
      %v2532 = vadd.f32 0.0, %v2531
      %2533 = vmatmul.bf16.gmra.mxu0 %v2244
      %v2534 = vpop.f32.mrf.mxu0
      %v2535 = vadd.f32 0.0, %v2534
      %v2536 = vpop.f32.mrf.mxu0
      %v2537 = vadd.f32 0.0, %v2536
      %2538 = vmatmul.bf16.gmra.mxu0 %v2247
      %v2539 = vpop.f32.mrf.mxu0
      %v2540 = vadd.f32 0.0, %v2539
      %v2541 = vpop.f32.mrf.mxu0
      %v2542 = vadd.f32 0.0, %v2541
      %2543 = vmatmul.bf16.gmra.mxu0 %v2250
      %v2544 = vpop.f32.mrf.mxu0
      %v2545 = vadd.f32 0.0, %v2544
      %v2546 = vpop.f32.mrf.mxu0
      %v2547 = vadd.f32 0.0, %v2546
      %2548 = vmatmul.bf16.gmra.mxu0 %v2253
      %v2549 = vpop.f32.mrf.mxu0
      %v2550 = vadd.f32 0.0, %v2549
      %v2551 = vpop.f32.mrf.mxu0
      %v2552 = vadd.f32 0.0, %v2551
      %2553 = vmatmul.bf16.gmra.mxu0 %v2256
      %v2554 = vpop.f32.mrf.mxu0
      %v2555 = vadd.f32 0.0, %v2554
      %v2556 = vpop.f32.mrf.mxu0
      %v2557 = vadd.f32 0.0, %v2556
      %2558 = vmatmul.bf16.gmra.mxu0 %v2259
      %v2559 = vpop.f32.mrf.mxu0
      %v2560 = vadd.f32 0.0, %v2559
      %v2561 = vpop.f32.mrf.mxu0
      %v2562 = vadd.f32 0.0, %v2561
      %2563 = vmatmul.bf16.gmra.mxu0 %v2262
      %v2564 = vpop.f32.mrf.mxu0
      %v2565 = vadd.f32 0.0, %v2564
      %v2566 = vpop.f32.mrf.mxu0
      %v2567 = vadd.f32 0.0, %v2566
      %2568 = vmatmul.bf16.gmra.mxu0 %v2265
      %v2569 = vpop.f32.mrf.mxu0
      %v2570 = vadd.f32 0.0, %v2569
      %v2571 = vpop.f32.mrf.mxu0
      %v2572 = vadd.f32 0.0, %v2571
      %2573 = vmatmul.bf16.gmra.mxu0 %v2268
      %v2574 = vpop.f32.mrf.mxu0
      %v2575 = vadd.f32 0.0, %v2574
      %v2576 = vpop.f32.mrf.mxu0
      %v2577 = vadd.f32 0.0, %v2576
      %2578 = vmatmul.bf16.gmra.mxu0 %v2271
      %v2579 = vpop.f32.mrf.mxu0
      %v2580 = vadd.f32 0.0, %v2579
      %v2581 = vpop.f32.mrf.mxu0
      %v2582 = vadd.f32 0.0, %v2581
      %2583 = vmatmul.bf16.gmra.mxu0 %v2274
      %v2584 = vpop.f32.mrf.mxu0
      %v2585 = vadd.f32 0.0, %v2584
      %v2586 = vpop.f32.mrf.mxu0
      %v2587 = vadd.f32 0.0, %v2586
      %2588 = vmatmul.bf16.gmra.mxu0 %v2277
      %v2589 = vpop.f32.mrf.mxu0
      %v2590 = vadd.f32 0.0, %v2589
      %v2591 = vpop.f32.mrf.mxu0
      %v2592 = vadd.f32 0.0, %v2591
      %2593 = vmatmul.bf16.gmra.mxu0 %v2280
      %v2594 = vpop.f32.mrf.mxu0
      %v2595 = vadd.f32 0.0, %v2594
      %v2596 = vpop.f32.mrf.mxu0
      %v2597 = vadd.f32 0.0, %v2596
      %2598 = vmatmul.bf16.gmra.mxu0 %v2283
      %v2599 = vpop.f32.mrf.mxu0
      %v2600 = vadd.f32 0.0, %v2599
      %v2601 = vpop.f32.mrf.mxu0
      %v2602 = vadd.f32 0.0, %v2601
      %2603 = vmatmul.bf16.gmra.mxu0 %v2286
      %v2604 = vpop.f32.mrf.mxu0
      %v2605 = vadd.f32 0.0, %v2604
      %v2606 = vpop.f32.mrf.mxu0
      %v2607 = vadd.f32 0.0, %v2606
      %2608 = vmatmul.bf16.gmra.mxu0 %v2289
      %v2609 = vpop.f32.mrf.mxu0
      %v2610 = vadd.f32 0.0, %v2609
      %v2611 = vpop.f32.mrf.mxu0
      %v2612 = vadd.f32 0.0, %v2611
      %2613 = vmatmul.bf16.gmra.mxu0 %v2292
      %v2614 = vpop.f32.mrf.mxu0
      %v2615 = vadd.f32 0.0, %v2614
      %v2616 = vpop.f32.mrf.mxu0
      %v2617 = vadd.f32 0.0, %v2616
      %2618 = vmatmul.bf16.gmra.mxu0 %v2295
      %v2619 = vpop.f32.mrf.mxu0
      %v2620 = vadd.f32 0.0, %v2619
      %v2621 = vpop.f32.mrf.mxu0
      %v2622 = vadd.f32 0.0, %v2621
      %2623 = vmatmul.bf16.gmra.mxu0 %v2298
      %v2624 = vpop.f32.mrf.mxu0
      %v2625 = vadd.f32 0.0, %v2624
      %v2626 = vpop.f32.mrf.mxu0
      %v2627 = vadd.f32 0.0, %v2626
      %2628 = vmatmul.bf16.gmra.mxu0 %v2301
      %v2629 = vpop.f32.mrf.mxu0
      %v2630 = vadd.f32 0.0, %v2629
      %v2631 = vpop.f32.mrf.mxu0
      %v2632 = vadd.f32 0.0, %v2631
      %2633 = vmatmul.bf16.gmra.mxu0 %v2304
      %v2634 = vpop.f32.mrf.mxu0
      %v2635 = vadd.f32 0.0, %v2634
      %v2636 = vpop.f32.mrf.mxu0
      %v2637 = vadd.f32 0.0, %v2636
      %2638 = vdwg.mxu0
      %v2640 = vsel %vm2113, %v1402, 0
      %v2643 = vsel %vm2113, %v1403, 0
      %v2646 = vsel %vm2113, %v1404, 0
      %v2649 = vsel %vm2113, %v1405, 0
      %v2652 = vsel %vm2113, %v1406, 0
      %v2655 = vsel %vm2113, %v1407, 0
      %v2658 = vsel %vm2113, %v1408, 0
      %v2661 = vsel %vm2113, %v1409, 0
      %v2664 = vsel %vm2113, %v1410, 0
      %v2667 = vsel %vm2113, %v1411, 0
      %v2670 = vsel %vm2113, %v1412, 0
      %v2673 = vsel %vm2113, %v1413, 0
      %v2676 = vsel %vm2113, %v1414, 0
      %v2679 = vsel %vm2113, %v1415, 0
      %v2682 = vsel %vm2113, %v1416, 0
      %v2685 = vsel %vm2113, %v1417, 0
      %v2688 = vsel %vm2113, %v1418, 0
      %v2691 = vsel %vm2113, %v1419, 0
      %v2694 = vsel %vm2113, %v1420, 0
      %v2697 = vsel %vm2113, %v1421, 0
      %v2700 = vsel %vm2113, %v1422, 0
      %v2703 = vsel %vm2113, %v1423, 0
      %v2706 = vsel %vm2113, %v1424, 0
      %v2709 = vsel %vm2113, %v1425, 0
      %v2712 = vsel %vm2113, %v1426, 0
      %v2715 = vsel %vm2113, %v1427, 0
      %v2718 = vsel %vm2113, %v1428, 0
      %v2721 = vsel %vm2113, %v1429, 0
      %v2724 = vsel %vm2113, %v1430, 0
      %v2727 = vsel %vm2113, %v1431, 0
      %v2730 = vsel %vm2113, %v1432, 0
      %v2733 = vsel %vm2113, %v1433, 0
      %v2736 = vsel %vm2113, %v1434, 0
      %v2739 = vsel %vm2113, %v1435, 0
      %v2742 = vsel %vm2113, %v1436, 0
      %v2745 = vsel %vm2113, %v1437, 0
      %v2748 = vsel %vm2113, %v1438, 0
      %v2751 = vsel %vm2113, %v1439, 0
      %v2754 = vsel %vm2113, %v1440, 0
      %v2757 = vsel %vm2113, %v1441, 0
      %v2760 = vsel %vm2113, %v1442, 0
      %v2763 = vsel %vm2113, %v1443, 0
      %v2766 = vsel %vm2113, %v1444, 0
      %v2769 = vsel %vm2113, %v1445, 0
      %v2772 = vsel %vm2113, %v1446, 0
      %v2775 = vsel %vm2113, %v1447, 0
      %v2778 = vsel %vm2113, %v1448, 0
      %v2781 = vsel %vm2113, %v1449, 0
      %v2784 = vsel %vm2113, %v1450, 0
      %v2787 = vsel %vm2113, %v1451, 0
      %v2790 = vsel %vm2113, %v1452, 0
      %v2793 = vsel %vm2113, %v1453, 0
      %v2796 = vsel %vm2113, %v1454, 0
      %v2799 = vsel %vm2113, %v1455, 0
      %v2802 = vsel %vm2113, %v1456, 0
      %v2805 = vsel %vm2113, %v1457, 0
      %v2808 = vsel %vm2113, %v1458, 0
      %v2811 = vsel %vm2113, %v1459, 0
      %v2814 = vsel %vm2113, %v1460, 0
      %v2817 = vsel %vm2113, %v1461, 0
      %v2820 = vsel %vm2113, %v1462, 0
      %v2823 = vsel %vm2113, %v1463, 0
      %v2826 = vsel %vm2113, %v1464, 0
      %v2829 = vsel %vm2113, %v1465, 0
      %v2832 = vsel %vm2306, %v1466, 0
      %2834 = vmatpush.bf16.msra.mxu0 0
      %2835 = vmatpush.bf16.msra.mxu0 0
      %2836 = vmatpush.bf16.msra.mxu0 0
      %2837 = vmatpush.bf16.msra.mxu0 0
      %2838 = vmatpush.bf16.msra.mxu0 0
      %2839 = vmatpush.bf16.msra.mxu0 0
      %2840 = vmatpush.bf16.msra.mxu0 0
      %2841 = vmatpush.bf16.msra.mxu0 %v2832
      %2842 = vmatmul.bf16.gmra.mxu0 %v2640
      %v2843 = vpop.f32.mrf.mxu0
      %v2844 = vadd.f32 %v2320, %v2843
      %v2845 = vpop.f32.mrf.mxu0
      %v2846 = vadd.f32 %v2322, %v2845
      %2847 = vmatmul.bf16.gmra.mxu0 %v2643
      %v2848 = vpop.f32.mrf.mxu0
      %v2849 = vadd.f32 %v2325, %v2848
      %v2850 = vpop.f32.mrf.mxu0
      %v2851 = vadd.f32 %v2327, %v2850
      %2852 = vmatmul.bf16.gmra.mxu0 %v2646
      %v2853 = vpop.f32.mrf.mxu0
      %v2854 = vadd.f32 %v2330, %v2853
      %v2855 = vpop.f32.mrf.mxu0
      %v2856 = vadd.f32 %v2332, %v2855
      %2857 = vmatmul.bf16.gmra.mxu0 %v2649
      %v2858 = vpop.f32.mrf.mxu0
      %v2859 = vadd.f32 %v2335, %v2858
      %v2860 = vpop.f32.mrf.mxu0
      %v2861 = vadd.f32 %v2337, %v2860
      %2862 = vmatmul.bf16.gmra.mxu0 %v2652
      %v2863 = vpop.f32.mrf.mxu0
      %v2864 = vadd.f32 %v2340, %v2863
      %v2865 = vpop.f32.mrf.mxu0
      %v2866 = vadd.f32 %v2342, %v2865
      %2867 = vmatmul.bf16.gmra.mxu0 %v2655
      %v2868 = vpop.f32.mrf.mxu0
      %v2869 = vadd.f32 %v2345, %v2868
      %v2870 = vpop.f32.mrf.mxu0
      %v2871 = vadd.f32 %v2347, %v2870
      %2872 = vmatmul.bf16.gmra.mxu0 %v2658
      %v2873 = vpop.f32.mrf.mxu0
      %v2874 = vadd.f32 %v2350, %v2873
      %v2875 = vpop.f32.mrf.mxu0
      %v2876 = vadd.f32 %v2352, %v2875
      %2877 = vmatmul.bf16.gmra.mxu0 %v2661
      %v2878 = vpop.f32.mrf.mxu0
      %v2879 = vadd.f32 %v2355, %v2878
      %v2880 = vpop.f32.mrf.mxu0
      %v2881 = vadd.f32 %v2357, %v2880
      %2882 = vmatmul.bf16.gmra.mxu0 %v2664
      %v2883 = vpop.f32.mrf.mxu0
      %v2884 = vadd.f32 %v2360, %v2883
      %v2885 = vpop.f32.mrf.mxu0
      %v2886 = vadd.f32 %v2362, %v2885
      %2887 = vmatmul.bf16.gmra.mxu0 %v2667
      %v2888 = vpop.f32.mrf.mxu0
      %v2889 = vadd.f32 %v2365, %v2888
      %v2890 = vpop.f32.mrf.mxu0
      %v2891 = vadd.f32 %v2367, %v2890
      %2892 = vmatmul.bf16.gmra.mxu0 %v2670
      %v2893 = vpop.f32.mrf.mxu0
      %v2894 = vadd.f32 %v2370, %v2893
      %v2895 = vpop.f32.mrf.mxu0
      %v2896 = vadd.f32 %v2372, %v2895
      %2897 = vmatmul.bf16.gmra.mxu0 %v2673
      %v2898 = vpop.f32.mrf.mxu0
      %v2899 = vadd.f32 %v2375, %v2898
      %v2900 = vpop.f32.mrf.mxu0
      %v2901 = vadd.f32 %v2377, %v2900
      %2902 = vmatmul.bf16.gmra.mxu0 %v2676
      %v2903 = vpop.f32.mrf.mxu0
      %v2904 = vadd.f32 %v2380, %v2903
      %v2905 = vpop.f32.mrf.mxu0
      %v2906 = vadd.f32 %v2382, %v2905
      %2907 = vmatmul.bf16.gmra.mxu0 %v2679
      %v2908 = vpop.f32.mrf.mxu0
      %v2909 = vadd.f32 %v2385, %v2908
      %v2910 = vpop.f32.mrf.mxu0
      %v2911 = vadd.f32 %v2387, %v2910
      %2912 = vmatmul.bf16.gmra.mxu0 %v2682
      %v2913 = vpop.f32.mrf.mxu0
      %v2914 = vadd.f32 %v2390, %v2913
      %v2915 = vpop.f32.mrf.mxu0
      %v2916 = vadd.f32 %v2392, %v2915
      %2917 = vmatmul.bf16.gmra.mxu0 %v2685
      %v2918 = vpop.f32.mrf.mxu0
      %v2919 = vadd.f32 %v2395, %v2918
      %v2920 = vpop.f32.mrf.mxu0
      %v2921 = vadd.f32 %v2397, %v2920
      %2922 = vmatmul.bf16.gmra.mxu0 %v2688
      %v2923 = vpop.f32.mrf.mxu0
      %v2924 = vadd.f32 %v2400, %v2923
      %v2925 = vpop.f32.mrf.mxu0
      %v2926 = vadd.f32 %v2402, %v2925
      %2927 = vmatmul.bf16.gmra.mxu0 %v2691
      %v2928 = vpop.f32.mrf.mxu0
      %v2929 = vadd.f32 %v2405, %v2928
      %v2930 = vpop.f32.mrf.mxu0
      %v2931 = vadd.f32 %v2407, %v2930
      %2932 = vmatmul.bf16.gmra.mxu0 %v2694
      %v2933 = vpop.f32.mrf.mxu0
      %v2934 = vadd.f32 %v2410, %v2933
      %v2935 = vpop.f32.mrf.mxu0
      %v2936 = vadd.f32 %v2412, %v2935
      %2937 = vmatmul.bf16.gmra.mxu0 %v2697
      %v2938 = vpop.f32.mrf.mxu0
      %v2939 = vadd.f32 %v2415, %v2938
      %v2940 = vpop.f32.mrf.mxu0
      %v2941 = vadd.f32 %v2417, %v2940
      %2942 = vmatmul.bf16.gmra.mxu0 %v2700
      %v2943 = vpop.f32.mrf.mxu0
      %v2944 = vadd.f32 %v2420, %v2943
      %v2945 = vpop.f32.mrf.mxu0
      %v2946 = vadd.f32 %v2422, %v2945
      %2947 = vmatmul.bf16.gmra.mxu0 %v2703
      %v2948 = vpop.f32.mrf.mxu0
      %v2949 = vadd.f32 %v2425, %v2948
      %v2950 = vpop.f32.mrf.mxu0
      %v2951 = vadd.f32 %v2427, %v2950
      %2952 = vmatmul.bf16.gmra.mxu0 %v2706
      %v2953 = vpop.f32.mrf.mxu0
      %v2954 = vadd.f32 %v2430, %v2953
      %v2955 = vpop.f32.mrf.mxu0
      %v2956 = vadd.f32 %v2432, %v2955
      %2957 = vmatmul.bf16.gmra.mxu0 %v2709
      %v2958 = vpop.f32.mrf.mxu0
      %v2959 = vadd.f32 %v2435, %v2958
      %v2960 = vpop.f32.mrf.mxu0
      %v2961 = vadd.f32 %v2437, %v2960
      %2962 = vmatmul.bf16.gmra.mxu0 %v2712
      %v2963 = vpop.f32.mrf.mxu0
      %v2964 = vadd.f32 %v2440, %v2963
      %v2965 = vpop.f32.mrf.mxu0
      %v2966 = vadd.f32 %v2442, %v2965
      %2967 = vmatmul.bf16.gmra.mxu0 %v2715
      %v2968 = vpop.f32.mrf.mxu0
      %v2969 = vadd.f32 %v2445, %v2968
      %v2970 = vpop.f32.mrf.mxu0
      %v2971 = vadd.f32 %v2447, %v2970
      %2972 = vmatmul.bf16.gmra.mxu0 %v2718
      %v2973 = vpop.f32.mrf.mxu0
      %v2974 = vadd.f32 %v2450, %v2973
      %v2975 = vpop.f32.mrf.mxu0
      %v2976 = vadd.f32 %v2452, %v2975
      %2977 = vmatmul.bf16.gmra.mxu0 %v2721
      %v2978 = vpop.f32.mrf.mxu0
      %v2979 = vadd.f32 %v2455, %v2978
      %v2980 = vpop.f32.mrf.mxu0
      %v2981 = vadd.f32 %v2457, %v2980
      %2982 = vmatmul.bf16.gmra.mxu0 %v2724
      %v2983 = vpop.f32.mrf.mxu0
      %v2984 = vadd.f32 %v2460, %v2983
      %v2985 = vpop.f32.mrf.mxu0
      %v2986 = vadd.f32 %v2462, %v2985
      %2987 = vmatmul.bf16.gmra.mxu0 %v2727
      %v2988 = vpop.f32.mrf.mxu0
      %v2989 = vadd.f32 %v2465, %v2988
      %v2990 = vpop.f32.mrf.mxu0
      %v2991 = vadd.f32 %v2467, %v2990
      %2992 = vmatmul.bf16.gmra.mxu0 %v2730
      %v2993 = vpop.f32.mrf.mxu0
      %v2994 = vadd.f32 %v2470, %v2993
      %v2995 = vpop.f32.mrf.mxu0
      %v2996 = vadd.f32 %v2472, %v2995
      %2997 = vmatmul.bf16.gmra.mxu0 %v2733
      %v2998 = vpop.f32.mrf.mxu0
      %v2999 = vadd.f32 %v2475, %v2998
      %v3000 = vpop.f32.mrf.mxu0
      %v3001 = vadd.f32 %v2477, %v3000
      %3002 = vmatmul.bf16.gmra.mxu0 %v2736
      %v3003 = vpop.f32.mrf.mxu0
      %v3004 = vadd.f32 %v2480, %v3003
      %v3005 = vpop.f32.mrf.mxu0
      %v3006 = vadd.f32 %v2482, %v3005
      %3007 = vmatmul.bf16.gmra.mxu0 %v2739
      %v3008 = vpop.f32.mrf.mxu0
      %v3009 = vadd.f32 %v2485, %v3008
      %v3010 = vpop.f32.mrf.mxu0
      %v3011 = vadd.f32 %v2487, %v3010
      %3012 = vmatmul.bf16.gmra.mxu0 %v2742
      %v3013 = vpop.f32.mrf.mxu0
      %v3014 = vadd.f32 %v2490, %v3013
      %v3015 = vpop.f32.mrf.mxu0
      %v3016 = vadd.f32 %v2492, %v3015
      %3017 = vmatmul.bf16.gmra.mxu0 %v2745
      %v3018 = vpop.f32.mrf.mxu0
      %v3019 = vadd.f32 %v2495, %v3018
      %v3020 = vpop.f32.mrf.mxu0
      %v3021 = vadd.f32 %v2497, %v3020
      %3022 = vmatmul.bf16.gmra.mxu0 %v2748
      %v3023 = vpop.f32.mrf.mxu0
      %v3024 = vadd.f32 %v2500, %v3023
      %v3025 = vpop.f32.mrf.mxu0
      %v3026 = vadd.f32 %v2502, %v3025
      %3027 = vmatmul.bf16.gmra.mxu0 %v2751
      %v3028 = vpop.f32.mrf.mxu0
      %v3029 = vadd.f32 %v2505, %v3028
      %v3030 = vpop.f32.mrf.mxu0
      %v3031 = vadd.f32 %v2507, %v3030
      %3032 = vmatmul.bf16.gmra.mxu0 %v2754
      %v3033 = vpop.f32.mrf.mxu0
      %v3034 = vadd.f32 %v2510, %v3033
      %v3035 = vpop.f32.mrf.mxu0
      %v3036 = vadd.f32 %v2512, %v3035
      %3037 = vmatmul.bf16.gmra.mxu0 %v2757
      %v3038 = vpop.f32.mrf.mxu0
      %v3039 = vadd.f32 %v2515, %v3038
      %v3040 = vpop.f32.mrf.mxu0
      %v3041 = vadd.f32 %v2517, %v3040
      %3042 = vmatmul.bf16.gmra.mxu0 %v2760
      %v3043 = vpop.f32.mrf.mxu0
      %v3044 = vadd.f32 %v2520, %v3043
      %v3045 = vpop.f32.mrf.mxu0
      %v3046 = vadd.f32 %v2522, %v3045
      %3047 = vmatmul.bf16.gmra.mxu0 %v2763
      %v3048 = vpop.f32.mrf.mxu0
      %v3049 = vadd.f32 %v2525, %v3048
      %v3050 = vpop.f32.mrf.mxu0
      %v3051 = vadd.f32 %v2527, %v3050
      %3052 = vmatmul.bf16.gmra.mxu0 %v2766
      %v3053 = vpop.f32.mrf.mxu0
      %v3054 = vadd.f32 %v2530, %v3053
      %v3055 = vpop.f32.mrf.mxu0
      %v3056 = vadd.f32 %v2532, %v3055
      %3057 = vmatmul.bf16.gmra.mxu0 %v2769
      %v3058 = vpop.f32.mrf.mxu0
      %v3059 = vadd.f32 %v2535, %v3058
      %v3060 = vpop.f32.mrf.mxu0
      %v3061 = vadd.f32 %v2537, %v3060
      %3062 = vmatmul.bf16.gmra.mxu0 %v2772
      %v3063 = vpop.f32.mrf.mxu0
      %v3064 = vadd.f32 %v2540, %v3063
      %v3065 = vpop.f32.mrf.mxu0
      %v3066 = vadd.f32 %v2542, %v3065
      %3067 = vmatmul.bf16.gmra.mxu0 %v2775
      %v3068 = vpop.f32.mrf.mxu0
      %v3069 = vadd.f32 %v2545, %v3068
      %v3070 = vpop.f32.mrf.mxu0
      %v3071 = vadd.f32 %v2547, %v3070
      %3072 = vmatmul.bf16.gmra.mxu0 %v2778
      %v3073 = vpop.f32.mrf.mxu0
      %v3074 = vadd.f32 %v2550, %v3073
      %v3075 = vpop.f32.mrf.mxu0
      %v3076 = vadd.f32 %v2552, %v3075
      %3077 = vmatmul.bf16.gmra.mxu0 %v2781
      %v3078 = vpop.f32.mrf.mxu0
      %v3079 = vadd.f32 %v2555, %v3078
      %v3080 = vpop.f32.mrf.mxu0
      %v3081 = vadd.f32 %v2557, %v3080
      %3082 = vmatmul.bf16.gmra.mxu0 %v2784
      %v3083 = vpop.f32.mrf.mxu0
      %v3084 = vadd.f32 %v2560, %v3083
      %v3085 = vpop.f32.mrf.mxu0
      %v3086 = vadd.f32 %v2562, %v3085
      %3087 = vmatmul.bf16.gmra.mxu0 %v2787
      %v3088 = vpop.f32.mrf.mxu0
      %v3089 = vadd.f32 %v2565, %v3088
      %v3090 = vpop.f32.mrf.mxu0
      %v3091 = vadd.f32 %v2567, %v3090
      %3092 = vmatmul.bf16.gmra.mxu0 %v2790
      %v3093 = vpop.f32.mrf.mxu0
      %v3094 = vadd.f32 %v2570, %v3093
      %v3095 = vpop.f32.mrf.mxu0
      %v3096 = vadd.f32 %v2572, %v3095
      %3097 = vmatmul.bf16.gmra.mxu0 %v2793
      %v3098 = vpop.f32.mrf.mxu0
      %v3099 = vadd.f32 %v2575, %v3098
      %v3100 = vpop.f32.mrf.mxu0
      %v3101 = vadd.f32 %v2577, %v3100
      %3102 = vmatmul.bf16.gmra.mxu0 %v2796
      %v3103 = vpop.f32.mrf.mxu0
      %v3104 = vadd.f32 %v2580, %v3103
      %v3105 = vpop.f32.mrf.mxu0
      %v3106 = vadd.f32 %v2582, %v3105
      %3107 = vmatmul.bf16.gmra.mxu0 %v2799
      %v3108 = vpop.f32.mrf.mxu0
      %v3109 = vadd.f32 %v2585, %v3108
      %v3110 = vpop.f32.mrf.mxu0
      %v3111 = vadd.f32 %v2587, %v3110
      %3112 = vmatmul.bf16.gmra.mxu0 %v2802
      %v3113 = vpop.f32.mrf.mxu0
      %v3114 = vadd.f32 %v2590, %v3113
      %v3115 = vpop.f32.mrf.mxu0
      %v3116 = vadd.f32 %v2592, %v3115
      %3117 = vmatmul.bf16.gmra.mxu0 %v2805
      %v3118 = vpop.f32.mrf.mxu0
      %v3119 = vadd.f32 %v2595, %v3118
      %v3120 = vpop.f32.mrf.mxu0
      %v3121 = vadd.f32 %v2597, %v3120
      %3122 = vmatmul.bf16.gmra.mxu0 %v2808
      %v3123 = vpop.f32.mrf.mxu0
      %v3124 = vadd.f32 %v2600, %v3123
      %v3125 = vpop.f32.mrf.mxu0
      %v3126 = vadd.f32 %v2602, %v3125
      %3127 = vmatmul.bf16.gmra.mxu0 %v2811
      %v3128 = vpop.f32.mrf.mxu0
      %v3129 = vadd.f32 %v2605, %v3128
      %v3130 = vpop.f32.mrf.mxu0
      %v3131 = vadd.f32 %v2607, %v3130
      %3132 = vmatmul.bf16.gmra.mxu0 %v2814
      %v3133 = vpop.f32.mrf.mxu0
      %v3134 = vadd.f32 %v2610, %v3133
      %v3135 = vpop.f32.mrf.mxu0
      %v3136 = vadd.f32 %v2612, %v3135
      %3137 = vmatmul.bf16.gmra.mxu0 %v2817
      %v3138 = vpop.f32.mrf.mxu0
      %v3139 = vadd.f32 %v2615, %v3138
      %v3140 = vpop.f32.mrf.mxu0
      %v3141 = vadd.f32 %v2617, %v3140
      %3142 = vmatmul.bf16.gmra.mxu0 %v2820
      %v3143 = vpop.f32.mrf.mxu0
      %v3144 = vadd.f32 %v2620, %v3143
      %v3145 = vpop.f32.mrf.mxu0
      %v3146 = vadd.f32 %v2622, %v3145
      %3147 = vmatmul.bf16.gmra.mxu0 %v2823
      %v3148 = vpop.f32.mrf.mxu0
      %v3149 = vadd.f32 %v2625, %v3148
      %v3150 = vpop.f32.mrf.mxu0
      %v3151 = vadd.f32 %v2627, %v3150
      %3152 = vmatmul.bf16.gmra.mxu0 %v2826
      %v3153 = vpop.f32.mrf.mxu0
      %v3154 = vadd.f32 %v2630, %v3153
      %v3155 = vpop.f32.mrf.mxu0
      %v3156 = vadd.f32 %v2632, %v3155
      %3157 = vmatmul.bf16.gmra.mxu0 %v2829
      %v3158 = vpop.f32.mrf.mxu0
      %v3159 = vadd.f32 %v2635, %v3158
      %v3160 = vpop.f32.mrf.mxu0
      %v3161 = vadd.f32 %v2637, %v3160
      %3162 = vdwg.mxu0
      %v3163 = vpack.c.bf16 %v1398, %v1397
      %v3164 = vpack.c.bf16 %v1400, %v1399
      %v3165 = vld [vmem:[%s4 + $0x4] sm:$0x3]
      %v3167 = vsel %vm2113, %v3163, 0
      %v3170 = vsel %vm2113, %v3164, 0
      %v3173 = vsel %vm2306, %v3165, 0
      %3175 = vmatpush.bf16.msra.mxu0 0
      %3176 = vmatpush.bf16.msra.mxu0 0
      %3177 = vmatpush.bf16.msra.mxu0 0
      %3178 = vmatpush.bf16.msra.mxu0 0
      %3179 = vmatpush.bf16.msra.mxu0 0
      %3180 = vmatpush.bf16.msra.mxu0 0
      %3181 = vmatpush.bf16.msra.mxu0 0
      %3182 = vmatpush.bf16.msra.mxu0 %v3173
      %3183 = vmatmul.bf16.gmra.mxu0 %v2646
      %v3184 = vpop.f32.mrf.mxu0
      %v3185 = vadd.f32 0.0, %v3184
      %v3186 = vpop.f32.mrf.mxu0
      %v3187 = vadd.f32 0.0, %v3186
      %3188 = vmatmul.bf16.gmra.mxu0 %v2649
      %v3189 = vpop.f32.mrf.mxu0
      %v3190 = vadd.f32 0.0, %v3189
      %v3191 = vpop.f32.mrf.mxu0
      %v3192 = vadd.f32 0.0, %v3191
      %3193 = vmatmul.bf16.gmra.mxu0 %v2652
      %v3194 = vpop.f32.mrf.mxu0
      %v3195 = vadd.f32 0.0, %v3194
      %v3196 = vpop.f32.mrf.mxu0
      %v3197 = vadd.f32 0.0, %v3196
      %3198 = vmatmul.bf16.gmra.mxu0 %v2655
      %v3199 = vpop.f32.mrf.mxu0
      %v3200 = vadd.f32 0.0, %v3199
      %v3201 = vpop.f32.mrf.mxu0
      %v3202 = vadd.f32 0.0, %v3201
      %3203 = vmatmul.bf16.gmra.mxu0 %v2658
      %v3204 = vpop.f32.mrf.mxu0
      %v3205 = vadd.f32 0.0, %v3204
      %v3206 = vpop.f32.mrf.mxu0
      %v3207 = vadd.f32 0.0, %v3206
      %3208 = vmatmul.bf16.gmra.mxu0 %v2661
      %v3209 = vpop.f32.mrf.mxu0
      %v3210 = vadd.f32 0.0, %v3209
      %v3211 = vpop.f32.mrf.mxu0
      %v3212 = vadd.f32 0.0, %v3211
      %3213 = vmatmul.bf16.gmra.mxu0 %v2664
      %v3214 = vpop.f32.mrf.mxu0
      %v3215 = vadd.f32 0.0, %v3214
      %v3216 = vpop.f32.mrf.mxu0
      %v3217 = vadd.f32 0.0, %v3216
      %3218 = vmatmul.bf16.gmra.mxu0 %v2667
      %v3219 = vpop.f32.mrf.mxu0
      %v3220 = vadd.f32 0.0, %v3219
      %v3221 = vpop.f32.mrf.mxu0
      %v3222 = vadd.f32 0.0, %v3221
      %3223 = vmatmul.bf16.gmra.mxu0 %v2670
      %v3224 = vpop.f32.mrf.mxu0
      %v3225 = vadd.f32 0.0, %v3224
      %v3226 = vpop.f32.mrf.mxu0
      %v3227 = vadd.f32 0.0, %v3226
      %3228 = vmatmul.bf16.gmra.mxu0 %v2673
      %v3229 = vpop.f32.mrf.mxu0
      %v3230 = vadd.f32 0.0, %v3229
      %v3231 = vpop.f32.mrf.mxu0
      %v3232 = vadd.f32 0.0, %v3231
      %3233 = vmatmul.bf16.gmra.mxu0 %v2676
      %v3234 = vpop.f32.mrf.mxu0
      %v3235 = vadd.f32 0.0, %v3234
      %v3236 = vpop.f32.mrf.mxu0
      %v3237 = vadd.f32 0.0, %v3236
      %3238 = vmatmul.bf16.gmra.mxu0 %v2679
      %v3239 = vpop.f32.mrf.mxu0
      %v3240 = vadd.f32 0.0, %v3239
      %v3241 = vpop.f32.mrf.mxu0
      %v3242 = vadd.f32 0.0, %v3241
      %3243 = vmatmul.bf16.gmra.mxu0 %v2682
      %v3244 = vpop.f32.mrf.mxu0
      %v3245 = vadd.f32 0.0, %v3244
      %v3246 = vpop.f32.mrf.mxu0
      %v3247 = vadd.f32 0.0, %v3246
      %3248 = vmatmul.bf16.gmra.mxu0 %v2685
      %v3249 = vpop.f32.mrf.mxu0
      %v3250 = vadd.f32 0.0, %v3249
      %v3251 = vpop.f32.mrf.mxu0
      %v3252 = vadd.f32 0.0, %v3251
      %3253 = vmatmul.bf16.gmra.mxu0 %v2688
      %v3254 = vpop.f32.mrf.mxu0
      %v3255 = vadd.f32 0.0, %v3254
      %v3256 = vpop.f32.mrf.mxu0
      %v3257 = vadd.f32 0.0, %v3256
      %3258 = vmatmul.bf16.gmra.mxu0 %v2691
      %v3259 = vpop.f32.mrf.mxu0
      %v3260 = vadd.f32 0.0, %v3259
      %v3261 = vpop.f32.mrf.mxu0
      %v3262 = vadd.f32 0.0, %v3261
      %3263 = vmatmul.bf16.gmra.mxu0 %v2694
      %v3264 = vpop.f32.mrf.mxu0
      %v3265 = vadd.f32 0.0, %v3264
      %v3266 = vpop.f32.mrf.mxu0
      %v3267 = vadd.f32 0.0, %v3266
      %3268 = vmatmul.bf16.gmra.mxu0 %v2697
      %v3269 = vpop.f32.mrf.mxu0
      %v3270 = vadd.f32 0.0, %v3269
      %v3271 = vpop.f32.mrf.mxu0
      %v3272 = vadd.f32 0.0, %v3271
      %3273 = vmatmul.bf16.gmra.mxu0 %v2700
      %v3274 = vpop.f32.mrf.mxu0
      %v3275 = vadd.f32 0.0, %v3274
      %v3276 = vpop.f32.mrf.mxu0
      %v3277 = vadd.f32 0.0, %v3276
      %3278 = vmatmul.bf16.gmra.mxu0 %v2703
      %v3279 = vpop.f32.mrf.mxu0
      %v3280 = vadd.f32 0.0, %v3279
      %v3281 = vpop.f32.mrf.mxu0
      %v3282 = vadd.f32 0.0, %v3281
      %3283 = vmatmul.bf16.gmra.mxu0 %v2706
      %v3284 = vpop.f32.mrf.mxu0
      %v3285 = vadd.f32 0.0, %v3284
      %v3286 = vpop.f32.mrf.mxu0
      %v3287 = vadd.f32 0.0, %v3286
      %3288 = vmatmul.bf16.gmra.mxu0 %v2709
      %v3289 = vpop.f32.mrf.mxu0
      %v3290 = vadd.f32 0.0, %v3289
      %v3291 = vpop.f32.mrf.mxu0
      %v3292 = vadd.f32 0.0, %v3291
      %3293 = vmatmul.bf16.gmra.mxu0 %v2712
      %v3294 = vpop.f32.mrf.mxu0
      %v3295 = vadd.f32 0.0, %v3294
      %v3296 = vpop.f32.mrf.mxu0
      %v3297 = vadd.f32 0.0, %v3296
      %3298 = vmatmul.bf16.gmra.mxu0 %v2715
      %v3299 = vpop.f32.mrf.mxu0
      %v3300 = vadd.f32 0.0, %v3299
      %v3301 = vpop.f32.mrf.mxu0
      %v3302 = vadd.f32 0.0, %v3301
      %3303 = vmatmul.bf16.gmra.mxu0 %v2718
      %v3304 = vpop.f32.mrf.mxu0
      %v3305 = vadd.f32 0.0, %v3304
      %v3306 = vpop.f32.mrf.mxu0
      %v3307 = vadd.f32 0.0, %v3306
      %3308 = vmatmul.bf16.gmra.mxu0 %v2721
      %v3309 = vpop.f32.mrf.mxu0
      %v3310 = vadd.f32 0.0, %v3309
      %v3311 = vpop.f32.mrf.mxu0
      %v3312 = vadd.f32 0.0, %v3311
      %3313 = vmatmul.bf16.gmra.mxu0 %v2724
      %v3314 = vpop.f32.mrf.mxu0
      %v3315 = vadd.f32 0.0, %v3314
      %v3316 = vpop.f32.mrf.mxu0
      %v3317 = vadd.f32 0.0, %v3316
      %3318 = vmatmul.bf16.gmra.mxu0 %v2727
      %v3319 = vpop.f32.mrf.mxu0
      %v3320 = vadd.f32 0.0, %v3319
      %v3321 = vpop.f32.mrf.mxu0
      %v3322 = vadd.f32 0.0, %v3321
      %3323 = vmatmul.bf16.gmra.mxu0 %v2730
      %v3324 = vpop.f32.mrf.mxu0
      %v3325 = vadd.f32 0.0, %v3324
      %v3326 = vpop.f32.mrf.mxu0
      %v3327 = vadd.f32 0.0, %v3326
      %3328 = vmatmul.bf16.gmra.mxu0 %v2733
      %v3329 = vpop.f32.mrf.mxu0
      %v3330 = vadd.f32 0.0, %v3329
      %v3331 = vpop.f32.mrf.mxu0
      %v3332 = vadd.f32 0.0, %v3331
      %3333 = vmatmul.bf16.gmra.mxu0 %v2736
      %v3334 = vpop.f32.mrf.mxu0
      %v3335 = vadd.f32 0.0, %v3334
      %v3336 = vpop.f32.mrf.mxu0
      %v3337 = vadd.f32 0.0, %v3336
      %3338 = vmatmul.bf16.gmra.mxu0 %v2739
      %v3339 = vpop.f32.mrf.mxu0
      %v3340 = vadd.f32 0.0, %v3339
      %v3341 = vpop.f32.mrf.mxu0
      %v3342 = vadd.f32 0.0, %v3341
      %3343 = vmatmul.bf16.gmra.mxu0 %v2742
      %v3344 = vpop.f32.mrf.mxu0
      %v3345 = vadd.f32 0.0, %v3344
      %v3346 = vpop.f32.mrf.mxu0
      %v3347 = vadd.f32 0.0, %v3346
      %3348 = vmatmul.bf16.gmra.mxu0 %v2745
      %v3349 = vpop.f32.mrf.mxu0
      %v3350 = vadd.f32 0.0, %v3349
      %v3351 = vpop.f32.mrf.mxu0
      %v3352 = vadd.f32 0.0, %v3351
      %3353 = vmatmul.bf16.gmra.mxu0 %v2748
      %v3354 = vpop.f32.mrf.mxu0
      %v3355 = vadd.f32 0.0, %v3354
      %v3356 = vpop.f32.mrf.mxu0
      %v3357 = vadd.f32 0.0, %v3356
      %3358 = vmatmul.bf16.gmra.mxu0 %v2751
      %v3359 = vpop.f32.mrf.mxu0
      %v3360 = vadd.f32 0.0, %v3359
      %v3361 = vpop.f32.mrf.mxu0
      %v3362 = vadd.f32 0.0, %v3361
      %3363 = vmatmul.bf16.gmra.mxu0 %v2754
      %v3364 = vpop.f32.mrf.mxu0
      %v3365 = vadd.f32 0.0, %v3364
      %v3366 = vpop.f32.mrf.mxu0
      %v3367 = vadd.f32 0.0, %v3366
      %3368 = vmatmul.bf16.gmra.mxu0 %v2757
      %v3369 = vpop.f32.mrf.mxu0
      %v3370 = vadd.f32 0.0, %v3369
      %v3371 = vpop.f32.mrf.mxu0
      %v3372 = vadd.f32 0.0, %v3371
      %3373 = vmatmul.bf16.gmra.mxu0 %v2760
      %v3374 = vpop.f32.mrf.mxu0
      %v3375 = vadd.f32 0.0, %v3374
      %v3376 = vpop.f32.mrf.mxu0
      %v3377 = vadd.f32 0.0, %v3376
      %3378 = vmatmul.bf16.gmra.mxu0 %v2763
      %v3379 = vpop.f32.mrf.mxu0
      %v3380 = vadd.f32 0.0, %v3379
      %v3381 = vpop.f32.mrf.mxu0
      %v3382 = vadd.f32 0.0, %v3381
      %3383 = vmatmul.bf16.gmra.mxu0 %v2766
      %v3384 = vpop.f32.mrf.mxu0
      %v3385 = vadd.f32 0.0, %v3384
      %v3386 = vpop.f32.mrf.mxu0
      %v3387 = vadd.f32 0.0, %v3386
      %3388 = vmatmul.bf16.gmra.mxu0 %v2769
      %v3389 = vpop.f32.mrf.mxu0
      %v3390 = vadd.f32 0.0, %v3389
      %v3391 = vpop.f32.mrf.mxu0
      %v3392 = vadd.f32 0.0, %v3391
      %3393 = vmatmul.bf16.gmra.mxu0 %v2772
      %v3394 = vpop.f32.mrf.mxu0
      %v3395 = vadd.f32 0.0, %v3394
      %v3396 = vpop.f32.mrf.mxu0
      %v3397 = vadd.f32 0.0, %v3396
      %3398 = vmatmul.bf16.gmra.mxu0 %v2775
      %v3399 = vpop.f32.mrf.mxu0
      %v3400 = vadd.f32 0.0, %v3399
      %v3401 = vpop.f32.mrf.mxu0
      %v3402 = vadd.f32 0.0, %v3401
      %3403 = vmatmul.bf16.gmra.mxu0 %v2778
      %v3404 = vpop.f32.mrf.mxu0
      %v3405 = vadd.f32 0.0, %v3404
      %v3406 = vpop.f32.mrf.mxu0
      %v3407 = vadd.f32 0.0, %v3406
      %3408 = vmatmul.bf16.gmra.mxu0 %v2781
      %v3409 = vpop.f32.mrf.mxu0
      %v3410 = vadd.f32 0.0, %v3409
      %v3411 = vpop.f32.mrf.mxu0
      %v3412 = vadd.f32 0.0, %v3411
      %3413 = vmatmul.bf16.gmra.mxu0 %v2784
      %v3414 = vpop.f32.mrf.mxu0
      %v3415 = vadd.f32 0.0, %v3414
      %v3416 = vpop.f32.mrf.mxu0
      %v3417 = vadd.f32 0.0, %v3416
      %3418 = vmatmul.bf16.gmra.mxu0 %v2787
      %v3419 = vpop.f32.mrf.mxu0
      %v3420 = vadd.f32 0.0, %v3419
      %v3421 = vpop.f32.mrf.mxu0
      %v3422 = vadd.f32 0.0, %v3421
      %3423 = vmatmul.bf16.gmra.mxu0 %v2790
      %v3424 = vpop.f32.mrf.mxu0
      %v3425 = vadd.f32 0.0, %v3424
      %v3426 = vpop.f32.mrf.mxu0
      %v3427 = vadd.f32 0.0, %v3426
      %3428 = vmatmul.bf16.gmra.mxu0 %v2793
      %v3429 = vpop.f32.mrf.mxu0
      %v3430 = vadd.f32 0.0, %v3429
      %v3431 = vpop.f32.mrf.mxu0
      %v3432 = vadd.f32 0.0, %v3431
      %3433 = vmatmul.bf16.gmra.mxu0 %v2796
      %v3434 = vpop.f32.mrf.mxu0
      %v3435 = vadd.f32 0.0, %v3434
      %v3436 = vpop.f32.mrf.mxu0
      %v3437 = vadd.f32 0.0, %v3436
      %3438 = vmatmul.bf16.gmra.mxu0 %v2799
      %v3439 = vpop.f32.mrf.mxu0
      %v3440 = vadd.f32 0.0, %v3439
      %v3441 = vpop.f32.mrf.mxu0
      %v3442 = vadd.f32 0.0, %v3441
      %3443 = vmatmul.bf16.gmra.mxu0 %v2802
      %v3444 = vpop.f32.mrf.mxu0
      %v3445 = vadd.f32 0.0, %v3444
      %v3446 = vpop.f32.mrf.mxu0
      %v3447 = vadd.f32 0.0, %v3446
      %3448 = vmatmul.bf16.gmra.mxu0 %v2805
      %v3449 = vpop.f32.mrf.mxu0
      %v3450 = vadd.f32 0.0, %v3449
      %v3451 = vpop.f32.mrf.mxu0
      %v3452 = vadd.f32 0.0, %v3451
      %3453 = vmatmul.bf16.gmra.mxu0 %v2808
      %v3454 = vpop.f32.mrf.mxu0
      %v3455 = vadd.f32 0.0, %v3454
      %v3456 = vpop.f32.mrf.mxu0
      %v3457 = vadd.f32 0.0, %v3456
      %3458 = vmatmul.bf16.gmra.mxu0 %v2811
      %v3459 = vpop.f32.mrf.mxu0
      %v3460 = vadd.f32 0.0, %v3459
      %v3461 = vpop.f32.mrf.mxu0
      %v3462 = vadd.f32 0.0, %v3461
      %3463 = vmatmul.bf16.gmra.mxu0 %v2814
      %v3464 = vpop.f32.mrf.mxu0
      %v3465 = vadd.f32 0.0, %v3464
      %v3466 = vpop.f32.mrf.mxu0
      %v3467 = vadd.f32 0.0, %v3466
      %3468 = vmatmul.bf16.gmra.mxu0 %v2817
      %v3469 = vpop.f32.mrf.mxu0
      %v3470 = vadd.f32 0.0, %v3469
      %v3471 = vpop.f32.mrf.mxu0
      %v3472 = vadd.f32 0.0, %v3471
      %3473 = vmatmul.bf16.gmra.mxu0 %v2820
      %v3474 = vpop.f32.mrf.mxu0
      %v3475 = vadd.f32 0.0, %v3474
      %v3476 = vpop.f32.mrf.mxu0
      %v3477 = vadd.f32 0.0, %v3476
      %3478 = vmatmul.bf16.gmra.mxu0 %v2823
      %v3479 = vpop.f32.mrf.mxu0
      %v3480 = vadd.f32 0.0, %v3479
      %v3481 = vpop.f32.mrf.mxu0
      %v3482 = vadd.f32 0.0, %v3481
      %3483 = vmatmul.bf16.gmra.mxu0 %v2826
      %v3484 = vpop.f32.mrf.mxu0
      %v3485 = vadd.f32 0.0, %v3484
      %v3486 = vpop.f32.mrf.mxu0
      %v3487 = vadd.f32 0.0, %v3486
      %3488 = vmatmul.bf16.gmra.mxu0 %v2829
      %v3489 = vpop.f32.mrf.mxu0
      %v3490 = vadd.f32 0.0, %v3489
      %v3491 = vpop.f32.mrf.mxu0
      %v3492 = vadd.f32 0.0, %v3491
      %3493 = vmatmul.bf16.gmra.mxu0 %v3167
      %v3494 = vpop.f32.mrf.mxu0
      %v3495 = vadd.f32 0.0, %v3494
      %v3496 = vpop.f32.mrf.mxu0
      %v3497 = vadd.f32 0.0, %v3496
      %3498 = vmatmul.bf16.gmra.mxu0 %v3170
      %v3499 = vpop.f32.mrf.mxu0
      %v3500 = vadd.f32 0.0, %v3499
      %v3501 = vpop.f32.mrf.mxu0
      %v3502 = vadd.f32 0.0, %v3501
      %3503 = vdwg.mxu0
      %v3504 = vadd.f32 %v2844, %v3185
      %v3505 = vadd.f32 %v2846, %v3187
      %v3506 = vadd.f32 %v2849, %v3190
      %v3507 = vadd.f32 %v2851, %v3192
      %v3508 = vadd.f32 %v2854, %v3195
      %v3509 = vadd.f32 %v2856, %v3197
      %v3510 = vadd.f32 %v2859, %v3200
      %v3511 = vadd.f32 %v2861, %v3202
      %v3512 = vadd.f32 %v2864, %v3205
      %v3513 = vadd.f32 %v2866, %v3207
      %v3514 = vadd.f32 %v2869, %v3210
      %v3515 = vadd.f32 %v2871, %v3212
      %v3516 = vadd.f32 %v2874, %v3215
      %v3517 = vadd.f32 %v2876, %v3217
      %v3518 = vadd.f32 %v2879, %v3220
      %v3519 = vadd.f32 %v2881, %v3222
      %v3520 = vadd.f32 %v2884, %v3225
      %v3521 = vadd.f32 %v2886, %v3227
      %v3522 = vadd.f32 %v2889, %v3230
      %v3523 = vadd.f32 %v2891, %v3232
      %v3524 = vadd.f32 %v2894, %v3235
      %v3525 = vadd.f32 %v2896, %v3237
      %v3526 = vadd.f32 %v2899, %v3240
      %v3527 = vadd.f32 %v2901, %v3242
      %v3528 = vadd.f32 %v2904, %v3245
      %v3529 = vadd.f32 %v2906, %v3247
      %v3530 = vadd.f32 %v2909, %v3250
      %v3531 = vadd.f32 %v2911, %v3252
      %v3532 = vadd.f32 %v2914, %v3255
      %v3533 = vadd.f32 %v2916, %v3257
      %v3534 = vadd.f32 %v2919, %v3260
      %v3535 = vadd.f32 %v2921, %v3262
      %v3536 = vadd.f32 %v2924, %v3265
      %v3537 = vadd.f32 %v2926, %v3267
      %v3538 = vadd.f32 %v2929, %v3270
      %v3539 = vadd.f32 %v2931, %v3272
      %v3540 = vadd.f32 %v2934, %v3275
      %v3541 = vadd.f32 %v2936, %v3277
      %v3542 = vadd.f32 %v2939, %v3280
      %v3543 = vadd.f32 %v2941, %v3282
      %v3544 = vadd.f32 %v2944, %v3285
      %v3545 = vadd.f32 %v2946, %v3287
      %v3546 = vadd.f32 %v2949, %v3290
      %v3547 = vadd.f32 %v2951, %v3292
      %v3548 = vadd.f32 %v2954, %v3295
      %v3549 = vadd.f32 %v2956, %v3297
      %v3550 = vadd.f32 %v2959, %v3300
      %v3551 = vadd.f32 %v2961, %v3302
      %v3552 = vadd.f32 %v2964, %v3305
      %v3553 = vadd.f32 %v2966, %v3307
      %v3554 = vadd.f32 %v2969, %v3310
      %v3555 = vadd.f32 %v2971, %v3312
      %v3556 = vadd.f32 %v2974, %v3315
      %v3557 = vadd.f32 %v2976, %v3317
      %v3558 = vadd.f32 %v2979, %v3320
      %v3559 = vadd.f32 %v2981, %v3322
      %v3560 = vadd.f32 %v2984, %v3325
      %v3561 = vadd.f32 %v2986, %v3327
      %v3562 = vadd.f32 %v2989, %v3330
      %v3563 = vadd.f32 %v2991, %v3332
      %v3564 = vadd.f32 %v2994, %v3335
      %v3565 = vadd.f32 %v2996, %v3337
      %v3566 = vadd.f32 %v2999, %v3340
      %v3567 = vadd.f32 %v3001, %v3342
      %v3568 = vadd.f32 %v3004, %v3345
      %v3569 = vadd.f32 %v3006, %v3347
      %v3570 = vadd.f32 %v3009, %v3350
      %v3571 = vadd.f32 %v3011, %v3352
      %v3572 = vadd.f32 %v3014, %v3355
      %v3573 = vadd.f32 %v3016, %v3357
      %v3574 = vadd.f32 %v3019, %v3360
      %v3575 = vadd.f32 %v3021, %v3362
      %v3576 = vadd.f32 %v3024, %v3365
      %v3577 = vadd.f32 %v3026, %v3367
      %v3578 = vadd.f32 %v3029, %v3370
      %v3579 = vadd.f32 %v3031, %v3372
      %v3580 = vadd.f32 %v3034, %v3375
      %v3581 = vadd.f32 %v3036, %v3377
      %v3582 = vadd.f32 %v3039, %v3380
      %v3583 = vadd.f32 %v3041, %v3382
      %v3584 = vadd.f32 %v3044, %v3385
      %v3585 = vadd.f32 %v3046, %v3387
      %v3586 = vadd.f32 %v3049, %v3390
      %v3587 = vadd.f32 %v3051, %v3392
      %v3588 = vadd.f32 %v3054, %v3395
      %v3589 = vadd.f32 %v3056, %v3397
      %v3590 = vadd.f32 %v3059, %v3400
      %v3591 = vadd.f32 %v3061, %v3402
      %v3592 = vadd.f32 %v3064, %v3405
      %v3593 = vadd.f32 %v3066, %v3407
      %v3594 = vadd.f32 %v3069, %v3410
      %v3595 = vadd.f32 %v3071, %v3412
      %v3596 = vadd.f32 %v3074, %v3415
      %v3597 = vadd.f32 %v3076, %v3417
      %v3598 = vadd.f32 %v3079, %v3420
      %v3599 = vadd.f32 %v3081, %v3422
      %v3600 = vadd.f32 %v3084, %v3425
      %v3601 = vadd.f32 %v3086, %v3427
      %v3602 = vadd.f32 %v3089, %v3430
      %v3603 = vadd.f32 %v3091, %v3432
      %v3604 = vadd.f32 %v3094, %v3435
      %v3605 = vadd.f32 %v3096, %v3437
      %v3606 = vadd.f32 %v3099, %v3440
      %v3607 = vadd.f32 %v3101, %v3442
      %v3608 = vadd.f32 %v3104, %v3445
      %v3609 = vadd.f32 %v3106, %v3447
      %v3610 = vadd.f32 %v3109, %v3450
      %v3611 = vadd.f32 %v3111, %v3452
      %v3612 = vadd.f32 %v3114, %v3455
      %v3613 = vadd.f32 %v3116, %v3457
      %v3614 = vadd.f32 %v3119, %v3460
      %v3615 = vadd.f32 %v3121, %v3462
      %v3616 = vadd.f32 %v3124, %v3465
      %v3617 = vadd.f32 %v3126, %v3467
      %v3618 = vadd.f32 %v3129, %v3470
      %v3619 = vadd.f32 %v3131, %v3472
      %v3620 = vadd.f32 %v3134, %v3475
      %v3621 = vadd.f32 %v3136, %v3477
      %v3622 = vadd.f32 %v3139, %v3480
      %v3623 = vadd.f32 %v3141, %v3482
      %v3624 = vadd.f32 %v3144, %v3485
      %v3625 = vadd.f32 %v3146, %v3487
      %v3626 = vadd.f32 %v3149, %v3490
      %v3627 = vadd.f32 %v3151, %v3492
      %v3628 = vadd.f32 %v3154, %v3495
      %v3629 = vadd.f32 %v3156, %v3497
      %v3630 = vadd.f32 %v3159, %v3500
      %v3631 = vadd.f32 %v3161, %v3502
      %v3637 = vrot.slane %v1397, 1
      %v3638 = vrot.slane %v1398, 1
      %v3639 = vsel %vm1627, %v3637, %v3638
      %v3640 = vrot.slane %v1399, 1
      %v3641 = vsel %vm1627, %v3638, %v3640
      %v3642 = vrot.slane %v1400, 1
      %v3643 = vsel %vm1627, %v3640, %v3642
      %v3644 = vrot.slane %v1401, 1
      %v3645 = vsel %vm1627, %v3642, %v3644
      %v3650 = vpack.c.bf16 %v3641, %v3639
      %v3651 = vpack.c.bf16 %v3645, %v3643
      %v3652 = vld [vmem:[%s4 + $0x4] sm:$0xc]
      %v3654 = vunpack.c.l.b16 %v3652
      %v3655 = vpack.c.b16 %v3654, %v3654
      %v3656 = vrot.slane %v3655, 2
      %v3658 = vsel %vm2113, %v3650, 0
      %v3661 = vsel %vm2113, %v3651, 0
      %v3664 = vsel %vm2306, %v3656, 0
      %3666 = vmatpush.bf16.msra.mxu0 0
      %3667 = vmatpush.bf16.msra.mxu0 0
      %3668 = vmatpush.bf16.msra.mxu0 0
      %3669 = vmatpush.bf16.msra.mxu0 0
      %3670 = vmatpush.bf16.msra.mxu0 0
      %3671 = vmatpush.bf16.msra.mxu0 0
      %3672 = vmatpush.bf16.msra.mxu0 0
      %3673 = vmatpush.bf16.msra.mxu0 %v3664
      %3674 = vmatmul.bf16.gmra.mxu0 %v2121
      %v3675 = vpop.f32.mrf.mxu0
      %v3676 = vadd.f32 0.0, %v3675
      %v3677 = vpop.f32.mrf.mxu0
      %v3678 = vadd.f32 0.0, %v3677
      %3679 = vmatmul.bf16.gmra.mxu0 %v2124
      %v3680 = vpop.f32.mrf.mxu0
      %v3681 = vadd.f32 0.0, %v3680
      %v3682 = vpop.f32.mrf.mxu0
      %v3683 = vadd.f32 0.0, %v3682
      %3684 = vmatmul.bf16.gmra.mxu0 %v2127
      %v3685 = vpop.f32.mrf.mxu0
      %v3686 = vadd.f32 0.0, %v3685
      %v3687 = vpop.f32.mrf.mxu0
      %v3688 = vadd.f32 0.0, %v3687
      %3689 = vmatmul.bf16.gmra.mxu0 %v2130
      %v3690 = vpop.f32.mrf.mxu0
      %v3691 = vadd.f32 0.0, %v3690
      %v3692 = vpop.f32.mrf.mxu0
      %v3693 = vadd.f32 0.0, %v3692
      %3694 = vmatmul.bf16.gmra.mxu0 %v2133
      %v3695 = vpop.f32.mrf.mxu0
      %v3696 = vadd.f32 0.0, %v3695
      %v3697 = vpop.f32.mrf.mxu0
      %v3698 = vadd.f32 0.0, %v3697
      %3699 = vmatmul.bf16.gmra.mxu0 %v2136
      %v3700 = vpop.f32.mrf.mxu0
      %v3701 = vadd.f32 0.0, %v3700
      %v3702 = vpop.f32.mrf.mxu0
      %v3703 = vadd.f32 0.0, %v3702
      %3704 = vmatmul.bf16.gmra.mxu0 %v2139
      %v3705 = vpop.f32.mrf.mxu0
      %v3706 = vadd.f32 0.0, %v3705
      %v3707 = vpop.f32.mrf.mxu0
      %v3708 = vadd.f32 0.0, %v3707
      %3709 = vmatmul.bf16.gmra.mxu0 %v2142
      %v3710 = vpop.f32.mrf.mxu0
      %v3711 = vadd.f32 0.0, %v3710
      %v3712 = vpop.f32.mrf.mxu0
      %v3713 = vadd.f32 0.0, %v3712
      %3714 = vmatmul.bf16.gmra.mxu0 %v2145
      %v3715 = vpop.f32.mrf.mxu0
      %v3716 = vadd.f32 0.0, %v3715
      %v3717 = vpop.f32.mrf.mxu0
      %v3718 = vadd.f32 0.0, %v3717
      %3719 = vmatmul.bf16.gmra.mxu0 %v2148
      %v3720 = vpop.f32.mrf.mxu0
      %v3721 = vadd.f32 0.0, %v3720
      %v3722 = vpop.f32.mrf.mxu0
      %v3723 = vadd.f32 0.0, %v3722
      %3724 = vmatmul.bf16.gmra.mxu0 %v2151
      %v3725 = vpop.f32.mrf.mxu0
      %v3726 = vadd.f32 0.0, %v3725
      %v3727 = vpop.f32.mrf.mxu0
      %v3728 = vadd.f32 0.0, %v3727
      %3729 = vmatmul.bf16.gmra.mxu0 %v2154
      %v3730 = vpop.f32.mrf.mxu0
      %v3731 = vadd.f32 0.0, %v3730
      %v3732 = vpop.f32.mrf.mxu0
      %v3733 = vadd.f32 0.0, %v3732
      %3734 = vmatmul.bf16.gmra.mxu0 %v2157
      %v3735 = vpop.f32.mrf.mxu0
      %v3736 = vadd.f32 0.0, %v3735
      %v3737 = vpop.f32.mrf.mxu0
      %v3738 = vadd.f32 0.0, %v3737
      %3739 = vmatmul.bf16.gmra.mxu0 %v2160
      %v3740 = vpop.f32.mrf.mxu0
      %v3741 = vadd.f32 0.0, %v3740
      %v3742 = vpop.f32.mrf.mxu0
      %v3743 = vadd.f32 0.0, %v3742
      %3744 = vmatmul.bf16.gmra.mxu0 %v2163
      %v3745 = vpop.f32.mrf.mxu0
      %v3746 = vadd.f32 0.0, %v3745
      %v3747 = vpop.f32.mrf.mxu0
      %v3748 = vadd.f32 0.0, %v3747
      %3749 = vmatmul.bf16.gmra.mxu0 %v2166
      %v3750 = vpop.f32.mrf.mxu0
      %v3751 = vadd.f32 0.0, %v3750
      %v3752 = vpop.f32.mrf.mxu0
      %v3753 = vadd.f32 0.0, %v3752
      %3754 = vmatmul.bf16.gmra.mxu0 %v2169
      %v3755 = vpop.f32.mrf.mxu0
      %v3756 = vadd.f32 0.0, %v3755
      %v3757 = vpop.f32.mrf.mxu0
      %v3758 = vadd.f32 0.0, %v3757
      %3759 = vmatmul.bf16.gmra.mxu0 %v2172
      %v3760 = vpop.f32.mrf.mxu0
      %v3761 = vadd.f32 0.0, %v3760
      %v3762 = vpop.f32.mrf.mxu0
      %v3763 = vadd.f32 0.0, %v3762
      %3764 = vmatmul.bf16.gmra.mxu0 %v2175
      %v3765 = vpop.f32.mrf.mxu0
      %v3766 = vadd.f32 0.0, %v3765
      %v3767 = vpop.f32.mrf.mxu0
      %v3768 = vadd.f32 0.0, %v3767
      %3769 = vmatmul.bf16.gmra.mxu0 %v2178
      %v3770 = vpop.f32.mrf.mxu0
      %v3771 = vadd.f32 0.0, %v3770
      %v3772 = vpop.f32.mrf.mxu0
      %v3773 = vadd.f32 0.0, %v3772
      %3774 = vmatmul.bf16.gmra.mxu0 %v2181
      %v3775 = vpop.f32.mrf.mxu0
      %v3776 = vadd.f32 0.0, %v3775
      %v3777 = vpop.f32.mrf.mxu0
      %v3778 = vadd.f32 0.0, %v3777
      %3779 = vmatmul.bf16.gmra.mxu0 %v2184
      %v3780 = vpop.f32.mrf.mxu0
      %v3781 = vadd.f32 0.0, %v3780
      %v3782 = vpop.f32.mrf.mxu0
      %v3783 = vadd.f32 0.0, %v3782
      %3784 = vmatmul.bf16.gmra.mxu0 %v2187
      %v3785 = vpop.f32.mrf.mxu0
      %v3786 = vadd.f32 0.0, %v3785
      %v3787 = vpop.f32.mrf.mxu0
      %v3788 = vadd.f32 0.0, %v3787
      %3789 = vmatmul.bf16.gmra.mxu0 %v2190
      %v3790 = vpop.f32.mrf.mxu0
      %v3791 = vadd.f32 0.0, %v3790
      %v3792 = vpop.f32.mrf.mxu0
      %v3793 = vadd.f32 0.0, %v3792
      %3794 = vmatmul.bf16.gmra.mxu0 %v2193
      %v3795 = vpop.f32.mrf.mxu0
      %v3796 = vadd.f32 0.0, %v3795
      %v3797 = vpop.f32.mrf.mxu0
      %v3798 = vadd.f32 0.0, %v3797
      %3799 = vmatmul.bf16.gmra.mxu0 %v2196
      %v3800 = vpop.f32.mrf.mxu0
      %v3801 = vadd.f32 0.0, %v3800
      %v3802 = vpop.f32.mrf.mxu0
      %v3803 = vadd.f32 0.0, %v3802
      %3804 = vmatmul.bf16.gmra.mxu0 %v2199
      %v3805 = vpop.f32.mrf.mxu0
      %v3806 = vadd.f32 0.0, %v3805
      %v3807 = vpop.f32.mrf.mxu0
      %v3808 = vadd.f32 0.0, %v3807
      %3809 = vmatmul.bf16.gmra.mxu0 %v2202
      %v3810 = vpop.f32.mrf.mxu0
      %v3811 = vadd.f32 0.0, %v3810
      %v3812 = vpop.f32.mrf.mxu0
      %v3813 = vadd.f32 0.0, %v3812
      %3814 = vmatmul.bf16.gmra.mxu0 %v2205
      %v3815 = vpop.f32.mrf.mxu0
      %v3816 = vadd.f32 0.0, %v3815
      %v3817 = vpop.f32.mrf.mxu0
      %v3818 = vadd.f32 0.0, %v3817
      %3819 = vmatmul.bf16.gmra.mxu0 %v2208
      %v3820 = vpop.f32.mrf.mxu0
      %v3821 = vadd.f32 0.0, %v3820
      %v3822 = vpop.f32.mrf.mxu0
      %v3823 = vadd.f32 0.0, %v3822
      %3824 = vmatmul.bf16.gmra.mxu0 %v2211
      %v3825 = vpop.f32.mrf.mxu0
      %v3826 = vadd.f32 0.0, %v3825
      %v3827 = vpop.f32.mrf.mxu0
      %v3828 = vadd.f32 0.0, %v3827
      %3829 = vmatmul.bf16.gmra.mxu0 %v2214
      %v3830 = vpop.f32.mrf.mxu0
      %v3831 = vadd.f32 0.0, %v3830
      %v3832 = vpop.f32.mrf.mxu0
      %v3833 = vadd.f32 0.0, %v3832
      %3834 = vmatmul.bf16.gmra.mxu0 %v2217
      %v3835 = vpop.f32.mrf.mxu0
      %v3836 = vadd.f32 0.0, %v3835
      %v3837 = vpop.f32.mrf.mxu0
      %v3838 = vadd.f32 0.0, %v3837
      %3839 = vmatmul.bf16.gmra.mxu0 %v2220
      %v3840 = vpop.f32.mrf.mxu0
      %v3841 = vadd.f32 0.0, %v3840
      %v3842 = vpop.f32.mrf.mxu0
      %v3843 = vadd.f32 0.0, %v3842
      %3844 = vmatmul.bf16.gmra.mxu0 %v2223
      %v3845 = vpop.f32.mrf.mxu0
      %v3846 = vadd.f32 0.0, %v3845
      %v3847 = vpop.f32.mrf.mxu0
      %v3848 = vadd.f32 0.0, %v3847
      %3849 = vmatmul.bf16.gmra.mxu0 %v2226
      %v3850 = vpop.f32.mrf.mxu0
      %v3851 = vadd.f32 0.0, %v3850
      %v3852 = vpop.f32.mrf.mxu0
      %v3853 = vadd.f32 0.0, %v3852
      %3854 = vmatmul.bf16.gmra.mxu0 %v2229
      %v3855 = vpop.f32.mrf.mxu0
      %v3856 = vadd.f32 0.0, %v3855
      %v3857 = vpop.f32.mrf.mxu0
      %v3858 = vadd.f32 0.0, %v3857
      %3859 = vmatmul.bf16.gmra.mxu0 %v2232
      %v3860 = vpop.f32.mrf.mxu0
      %v3861 = vadd.f32 0.0, %v3860
      %v3862 = vpop.f32.mrf.mxu0
      %v3863 = vadd.f32 0.0, %v3862
      %3864 = vmatmul.bf16.gmra.mxu0 %v2235
      %v3865 = vpop.f32.mrf.mxu0
      %v3866 = vadd.f32 0.0, %v3865
      %v3867 = vpop.f32.mrf.mxu0
      %v3868 = vadd.f32 0.0, %v3867
      %3869 = vmatmul.bf16.gmra.mxu0 %v2238
      %v3870 = vpop.f32.mrf.mxu0
      %v3871 = vadd.f32 0.0, %v3870
      %v3872 = vpop.f32.mrf.mxu0
      %v3873 = vadd.f32 0.0, %v3872
      %3874 = vmatmul.bf16.gmra.mxu0 %v2241
      %v3875 = vpop.f32.mrf.mxu0
      %v3876 = vadd.f32 0.0, %v3875
      %v3877 = vpop.f32.mrf.mxu0
      %v3878 = vadd.f32 0.0, %v3877
      %3879 = vmatmul.bf16.gmra.mxu0 %v2244
      %v3880 = vpop.f32.mrf.mxu0
      %v3881 = vadd.f32 0.0, %v3880
      %v3882 = vpop.f32.mrf.mxu0
      %v3883 = vadd.f32 0.0, %v3882
      %3884 = vmatmul.bf16.gmra.mxu0 %v2247
      %v3885 = vpop.f32.mrf.mxu0
      %v3886 = vadd.f32 0.0, %v3885
      %v3887 = vpop.f32.mrf.mxu0
      %v3888 = vadd.f32 0.0, %v3887
      %3889 = vmatmul.bf16.gmra.mxu0 %v2250
      %v3890 = vpop.f32.mrf.mxu0
      %v3891 = vadd.f32 0.0, %v3890
      %v3892 = vpop.f32.mrf.mxu0
      %v3893 = vadd.f32 0.0, %v3892
      %3894 = vmatmul.bf16.gmra.mxu0 %v2253
      %v3895 = vpop.f32.mrf.mxu0
      %v3896 = vadd.f32 0.0, %v3895
      %v3897 = vpop.f32.mrf.mxu0
      %v3898 = vadd.f32 0.0, %v3897
      %3899 = vmatmul.bf16.gmra.mxu0 %v2256
      %v3900 = vpop.f32.mrf.mxu0
      %v3901 = vadd.f32 0.0, %v3900
      %v3902 = vpop.f32.mrf.mxu0
      %v3903 = vadd.f32 0.0, %v3902
      %3904 = vmatmul.bf16.gmra.mxu0 %v2259
      %v3905 = vpop.f32.mrf.mxu0
      %v3906 = vadd.f32 0.0, %v3905
      %v3907 = vpop.f32.mrf.mxu0
      %v3908 = vadd.f32 0.0, %v3907
      %3909 = vmatmul.bf16.gmra.mxu0 %v2262
      %v3910 = vpop.f32.mrf.mxu0
      %v3911 = vadd.f32 0.0, %v3910
      %v3912 = vpop.f32.mrf.mxu0
      %v3913 = vadd.f32 0.0, %v3912
      %3914 = vmatmul.bf16.gmra.mxu0 %v2265
      %v3915 = vpop.f32.mrf.mxu0
      %v3916 = vadd.f32 0.0, %v3915
      %v3917 = vpop.f32.mrf.mxu0
      %v3918 = vadd.f32 0.0, %v3917
      %3919 = vmatmul.bf16.gmra.mxu0 %v2268
      %v3920 = vpop.f32.mrf.mxu0
      %v3921 = vadd.f32 0.0, %v3920
      %v3922 = vpop.f32.mrf.mxu0
      %v3923 = vadd.f32 0.0, %v3922
      %3924 = vmatmul.bf16.gmra.mxu0 %v2271
      %v3925 = vpop.f32.mrf.mxu0
      %v3926 = vadd.f32 0.0, %v3925
      %v3927 = vpop.f32.mrf.mxu0
      %v3928 = vadd.f32 0.0, %v3927
      %3929 = vmatmul.bf16.gmra.mxu0 %v2274
      %v3930 = vpop.f32.mrf.mxu0
      %v3931 = vadd.f32 0.0, %v3930
      %v3932 = vpop.f32.mrf.mxu0
      %v3933 = vadd.f32 0.0, %v3932
      %3934 = vmatmul.bf16.gmra.mxu0 %v2277
      %v3935 = vpop.f32.mrf.mxu0
      %v3936 = vadd.f32 0.0, %v3935
      %v3937 = vpop.f32.mrf.mxu0
      %v3938 = vadd.f32 0.0, %v3937
      %3939 = vmatmul.bf16.gmra.mxu0 %v2280
      %v3940 = vpop.f32.mrf.mxu0
      %v3941 = vadd.f32 0.0, %v3940
      %v3942 = vpop.f32.mrf.mxu0
      %v3943 = vadd.f32 0.0, %v3942
      %3944 = vmatmul.bf16.gmra.mxu0 %v2283
      %v3945 = vpop.f32.mrf.mxu0
      %v3946 = vadd.f32 0.0, %v3945
      %v3947 = vpop.f32.mrf.mxu0
      %v3948 = vadd.f32 0.0, %v3947
      %3949 = vmatmul.bf16.gmra.mxu0 %v2286
      %v3950 = vpop.f32.mrf.mxu0
      %v3951 = vadd.f32 0.0, %v3950
      %v3952 = vpop.f32.mrf.mxu0
      %v3953 = vadd.f32 0.0, %v3952
      %3954 = vmatmul.bf16.gmra.mxu0 %v2289
      %v3955 = vpop.f32.mrf.mxu0
      %v3956 = vadd.f32 0.0, %v3955
      %v3957 = vpop.f32.mrf.mxu0
      %v3958 = vadd.f32 0.0, %v3957
      %3959 = vmatmul.bf16.gmra.mxu0 %v2292
      %v3960 = vpop.f32.mrf.mxu0
      %v3961 = vadd.f32 0.0, %v3960
      %v3962 = vpop.f32.mrf.mxu0
      %v3963 = vadd.f32 0.0, %v3962
      %3964 = vmatmul.bf16.gmra.mxu0 %v2295
      %v3965 = vpop.f32.mrf.mxu0
      %v3966 = vadd.f32 0.0, %v3965
      %v3967 = vpop.f32.mrf.mxu0
      %v3968 = vadd.f32 0.0, %v3967
      %3969 = vmatmul.bf16.gmra.mxu0 %v2298
      %v3970 = vpop.f32.mrf.mxu0
      %v3971 = vadd.f32 0.0, %v3970
      %v3972 = vpop.f32.mrf.mxu0
      %v3973 = vadd.f32 0.0, %v3972
      %3974 = vmatmul.bf16.gmra.mxu0 %v2301
      %v3975 = vpop.f32.mrf.mxu0
      %v3976 = vadd.f32 0.0, %v3975
      %v3977 = vpop.f32.mrf.mxu0
      %v3978 = vadd.f32 0.0, %v3977
      %3979 = vmatmul.bf16.gmra.mxu0 %v2304
      %v3980 = vpop.f32.mrf.mxu0
      %v3981 = vadd.f32 0.0, %v3980
      %v3982 = vpop.f32.mrf.mxu0
      %v3983 = vadd.f32 0.0, %v3982
      %3984 = vmatmul.bf16.gmra.mxu0 %v3658
      %v3985 = vpop.f32.mrf.mxu0
      %v3986 = vadd.f32 0.0, %v3985
      %v3987 = vpop.f32.mrf.mxu0
      %v3988 = vadd.f32 0.0, %v3987
      %3989 = vmatmul.bf16.gmra.mxu0 %v3661
      %v3990 = vpop.f32.mrf.mxu0
      %v3991 = vadd.f32 0.0, %v3990
      %v3992 = vpop.f32.mrf.mxu0
      %v3993 = vadd.f32 0.0, %v3992
      %3994 = vdwg.mxu0
      %v3995 = vadd.f32 %v3504, %v3676
      %v3996 = vadd.f32 %v3505, %v3678
      %v3997 = vadd.f32 %v3506, %v3681
      %v3998 = vadd.f32 %v3507, %v3683
      %v3999 = vadd.f32 %v3508, %v3686
      %v4000 = vadd.f32 %v3509, %v3688
      %v4001 = vadd.f32 %v3510, %v3691
      %v4002 = vadd.f32 %v3511, %v3693
      %v4003 = vadd.f32 %v3512, %v3696
      %v4004 = vadd.f32 %v3513, %v3698
      %v4005 = vadd.f32 %v3514, %v3701
      %v4006 = vadd.f32 %v3515, %v3703
      %v4007 = vadd.f32 %v3516, %v3706
      %v4008 = vadd.f32 %v3517, %v3708
      %v4009 = vadd.f32 %v3518, %v3711
      %v4010 = vadd.f32 %v3519, %v3713
      %v4011 = vadd.f32 %v3520, %v3716
      %v4012 = vadd.f32 %v3521, %v3718
      %v4013 = vadd.f32 %v3522, %v3721
      %v4014 = vadd.f32 %v3523, %v3723
      %v4015 = vadd.f32 %v3524, %v3726
      %v4016 = vadd.f32 %v3525, %v3728
      %v4017 = vadd.f32 %v3526, %v3731
      %v4018 = vadd.f32 %v3527, %v3733
      %v4019 = vadd.f32 %v3528, %v3736
      %v4020 = vadd.f32 %v3529, %v3738
      %v4021 = vadd.f32 %v3530, %v3741
      %v4022 = vadd.f32 %v3531, %v3743
      %v4023 = vadd.f32 %v3532, %v3746
      %v4024 = vadd.f32 %v3533, %v3748
      %v4025 = vadd.f32 %v3534, %v3751
      %v4026 = vadd.f32 %v3535, %v3753
      %v4027 = vadd.f32 %v3536, %v3756
      %v4028 = vadd.f32 %v3537, %v3758
      %v4029 = vadd.f32 %v3538, %v3761
      %v4030 = vadd.f32 %v3539, %v3763
      %v4031 = vadd.f32 %v3540, %v3766
      %v4032 = vadd.f32 %v3541, %v3768
      %v4033 = vadd.f32 %v3542, %v3771
      %v4034 = vadd.f32 %v3543, %v3773
      %v4035 = vadd.f32 %v3544, %v3776
      %v4036 = vadd.f32 %v3545, %v3778
      %v4037 = vadd.f32 %v3546, %v3781
      %v4038 = vadd.f32 %v3547, %v3783
      %v4039 = vadd.f32 %v3548, %v3786
      %v4040 = vadd.f32 %v3549, %v3788
      %v4041 = vadd.f32 %v3550, %v3791
      %v4042 = vadd.f32 %v3551, %v3793
      %v4043 = vadd.f32 %v3552, %v3796
      %v4044 = vadd.f32 %v3553, %v3798
      %v4045 = vadd.f32 %v3554, %v3801
      %v4046 = vadd.f32 %v3555, %v3803
      %v4047 = vadd.f32 %v3556, %v3806
      %v4048 = vadd.f32 %v3557, %v3808
      %v4049 = vadd.f32 %v3558, %v3811
      %v4050 = vadd.f32 %v3559, %v3813
      %v4051 = vadd.f32 %v3560, %v3816
      %v4052 = vadd.f32 %v3561, %v3818
      %v4053 = vadd.f32 %v3562, %v3821
      %v4054 = vadd.f32 %v3563, %v3823
      %v4055 = vadd.f32 %v3564, %v3826
      %v4056 = vadd.f32 %v3565, %v3828
      %v4057 = vadd.f32 %v3566, %v3831
      %v4058 = vadd.f32 %v3567, %v3833
      %v4059 = vadd.f32 %v3568, %v3836
      %v4060 = vadd.f32 %v3569, %v3838
      %v4061 = vadd.f32 %v3570, %v3841
      %v4062 = vadd.f32 %v3571, %v3843
      %v4063 = vadd.f32 %v3572, %v3846
      %v4064 = vadd.f32 %v3573, %v3848
      %v4065 = vadd.f32 %v3574, %v3851
      %v4066 = vadd.f32 %v3575, %v3853
      %v4067 = vadd.f32 %v3576, %v3856
      %v4068 = vadd.f32 %v3577, %v3858
      %v4069 = vadd.f32 %v3578, %v3861
      %v4070 = vadd.f32 %v3579, %v3863
      %v4071 = vadd.f32 %v3580, %v3866
      %v4072 = vadd.f32 %v3581, %v3868
      %v4073 = vadd.f32 %v3582, %v3871
      %v4074 = vadd.f32 %v3583, %v3873
      %v4075 = vadd.f32 %v3584, %v3876
      %v4076 = vadd.f32 %v3585, %v3878
      %v4077 = vadd.f32 %v3586, %v3881
      %v4078 = vadd.f32 %v3587, %v3883
      %v4079 = vadd.f32 %v3588, %v3886
      %v4080 = vadd.f32 %v3589, %v3888
      %v4081 = vadd.f32 %v3590, %v3891
      %v4082 = vadd.f32 %v3591, %v3893
      %v4083 = vadd.f32 %v3592, %v3896
      %v4084 = vadd.f32 %v3593, %v3898
      %v4085 = vadd.f32 %v3594, %v3901
      %v4086 = vadd.f32 %v3595, %v3903
      %v4087 = vadd.f32 %v3596, %v3906
      %v4088 = vadd.f32 %v3597, %v3908
      %v4089 = vadd.f32 %v3598, %v3911
      %v4090 = vadd.f32 %v3599, %v3913
      %v4091 = vadd.f32 %v3600, %v3916
      %v4092 = vadd.f32 %v3601, %v3918
      %v4093 = vadd.f32 %v3602, %v3921
      %v4094 = vadd.f32 %v3603, %v3923
      %v4095 = vadd.f32 %v3604, %v3926
      %v4096 = vadd.f32 %v3605, %v3928
      %v4097 = vadd.f32 %v3606, %v3931
      %v4098 = vadd.f32 %v3607, %v3933
      %v4099 = vadd.f32 %v3608, %v3936
      %v4100 = vadd.f32 %v3609, %v3938
      %v4101 = vadd.f32 %v3610, %v3941
      %v4102 = vadd.f32 %v3611, %v3943
      %v4103 = vadd.f32 %v3612, %v3946
      %v4104 = vadd.f32 %v3613, %v3948
      %v4105 = vadd.f32 %v3614, %v3951
      %v4106 = vadd.f32 %v3615, %v3953
      %v4107 = vadd.f32 %v3616, %v3956
      %v4108 = vadd.f32 %v3617, %v3958
      %v4109 = vadd.f32 %v3618, %v3961
      %v4110 = vadd.f32 %v3619, %v3963
      %v4111 = vadd.f32 %v3620, %v3966
      %v4112 = vadd.f32 %v3621, %v3968
      %v4113 = vadd.f32 %v3622, %v3971
      %v4114 = vadd.f32 %v3623, %v3973
      %v4115 = vadd.f32 %v3624, %v3976
      %v4116 = vadd.f32 %v3625, %v3978
      %v4117 = vadd.f32 %v3626, %v3981
      %v4118 = vadd.f32 %v3627, %v3983
      %v4119 = vadd.f32 %v3628, %v3986
      %v4120 = vadd.f32 %v3629, %v3988
      %v4121 = vadd.f32 %v3630, %v3991
      %v4122 = vadd.f32 %v3631, %v3993
      %v4123 = vpack.c.bf16 %v3995, %v3995
      %v4124 = vpack.c.bf16 %v3996, %v3996
      %v4125 = vpack.c.bf16 %v3997, %v3997
      %v4126 = vpack.c.bf16 %v3998, %v3998
      %v4127 = vpack.c.bf16 %v3999, %v3999
      %v4128 = vpack.c.bf16 %v4000, %v4000
      %v4129 = vpack.c.bf16 %v4001, %v4001
      %v4130 = vpack.c.bf16 %v4002, %v4002
      %v4131 = vpack.c.bf16 %v4003, %v4003
      %v4132 = vpack.c.bf16 %v4004, %v4004
      %v4133 = vpack.c.bf16 %v4005, %v4005
      %v4134 = vpack.c.bf16 %v4006, %v4006
      %v4135 = vpack.c.bf16 %v4007, %v4007
      %v4136 = vpack.c.bf16 %v4008, %v4008
      %v4137 = vpack.c.bf16 %v4009, %v4009
      %v4138 = vpack.c.bf16 %v4010, %v4010
      %v4139 = vpack.c.bf16 %v4011, %v4011
      %v4140 = vpack.c.bf16 %v4012, %v4012
      %v4141 = vpack.c.bf16 %v4013, %v4013
      %v4142 = vpack.c.bf16 %v4014, %v4014
      %v4143 = vpack.c.bf16 %v4015, %v4015
      %v4144 = vpack.c.bf16 %v4016, %v4016
      %v4145 = vpack.c.bf16 %v4017, %v4017
      %v4146 = vpack.c.bf16 %v4018, %v4018
      %v4147 = vpack.c.bf16 %v4019, %v4019
      %v4148 = vpack.c.bf16 %v4020, %v4020
      %v4149 = vpack.c.bf16 %v4021, %v4021
      %v4150 = vpack.c.bf16 %v4022, %v4022
      %v4151 = vpack.c.bf16 %v4023, %v4023
      %v4152 = vpack.c.bf16 %v4024, %v4024
      %v4153 = vpack.c.bf16 %v4025, %v4025
      %v4154 = vpack.c.bf16 %v4026, %v4026
      %v4155 = vpack.c.bf16 %v4027, %v4027
      %v4156 = vpack.c.bf16 %v4028, %v4028
      %v4157 = vpack.c.bf16 %v4029, %v4029
      %v4158 = vpack.c.bf16 %v4030, %v4030
      %v4159 = vpack.c.bf16 %v4031, %v4031
      %v4160 = vpack.c.bf16 %v4032, %v4032
      %v4161 = vpack.c.bf16 %v4033, %v4033
      %v4162 = vpack.c.bf16 %v4034, %v4034
      %v4163 = vpack.c.bf16 %v4035, %v4035
      %v4164 = vpack.c.bf16 %v4036, %v4036
      %v4165 = vpack.c.bf16 %v4037, %v4037
      %v4166 = vpack.c.bf16 %v4038, %v4038
      %v4167 = vpack.c.bf16 %v4039, %v4039
      %v4168 = vpack.c.bf16 %v4040, %v4040
      %v4169 = vpack.c.bf16 %v4041, %v4041
      %v4170 = vpack.c.bf16 %v4042, %v4042
      %v4171 = vpack.c.bf16 %v4043, %v4043
      %v4172 = vpack.c.bf16 %v4044, %v4044
      %v4173 = vpack.c.bf16 %v4045, %v4045
      %v4174 = vpack.c.bf16 %v4046, %v4046
      %v4175 = vpack.c.bf16 %v4047, %v4047
      %v4176 = vpack.c.bf16 %v4048, %v4048
      %v4177 = vpack.c.bf16 %v4049, %v4049
      %v4178 = vpack.c.bf16 %v4050, %v4050
      %v4179 = vpack.c.bf16 %v4051, %v4051
      %v4180 = vpack.c.bf16 %v4052, %v4052
      %v4181 = vpack.c.bf16 %v4053, %v4053
      %v4182 = vpack.c.bf16 %v4054, %v4054
      %v4183 = vpack.c.bf16 %v4055, %v4055
      %v4184 = vpack.c.bf16 %v4056, %v4056
      %v4185 = vpack.c.bf16 %v4057, %v4057
      %v4186 = vpack.c.bf16 %v4058, %v4058
      %v4187 = vpack.c.bf16 %v4059, %v4059
      %v4188 = vpack.c.bf16 %v4060, %v4060
      %v4189 = vpack.c.bf16 %v4061, %v4061
      %v4190 = vpack.c.bf16 %v4062, %v4062
      %v4191 = vpack.c.bf16 %v4063, %v4063
      %v4192 = vpack.c.bf16 %v4064, %v4064
      %v4193 = vpack.c.bf16 %v4065, %v4065
      %v4194 = vpack.c.bf16 %v4066, %v4066
      %v4195 = vpack.c.bf16 %v4067, %v4067
      %v4196 = vpack.c.bf16 %v4068, %v4068
      %v4197 = vpack.c.bf16 %v4069, %v4069
      %v4198 = vpack.c.bf16 %v4070, %v4070
      %v4199 = vpack.c.bf16 %v4071, %v4071
      %v4200 = vpack.c.bf16 %v4072, %v4072
      %v4201 = vpack.c.bf16 %v4073, %v4073
      %v4202 = vpack.c.bf16 %v4074, %v4074
      %v4203 = vpack.c.bf16 %v4075, %v4075
      %v4204 = vpack.c.bf16 %v4076, %v4076
      %v4205 = vpack.c.bf16 %v4077, %v4077
      %v4206 = vpack.c.bf16 %v4078, %v4078
      %v4207 = vpack.c.bf16 %v4079, %v4079
      %v4208 = vpack.c.bf16 %v4080, %v4080
      %v4209 = vpack.c.bf16 %v4081, %v4081
      %v4210 = vpack.c.bf16 %v4082, %v4082
      %v4211 = vpack.c.bf16 %v4083, %v4083
      %v4212 = vpack.c.bf16 %v4084, %v4084
      %v4213 = vpack.c.bf16 %v4085, %v4085
      %v4214 = vpack.c.bf16 %v4086, %v4086
      %v4215 = vpack.c.bf16 %v4087, %v4087
      %v4216 = vpack.c.bf16 %v4088, %v4088
      %v4217 = vpack.c.bf16 %v4089, %v4089
      %v4218 = vpack.c.bf16 %v4090, %v4090
      %v4219 = vpack.c.bf16 %v4091, %v4091
      %v4220 = vpack.c.bf16 %v4092, %v4092
      %v4221 = vpack.c.bf16 %v4093, %v4093
      %v4222 = vpack.c.bf16 %v4094, %v4094
      %v4223 = vpack.c.bf16 %v4095, %v4095
      %v4224 = vpack.c.bf16 %v4096, %v4096
      %v4225 = vpack.c.bf16 %v4097, %v4097
      %v4226 = vpack.c.bf16 %v4098, %v4098
      %v4227 = vpack.c.bf16 %v4099, %v4099
      %v4228 = vpack.c.bf16 %v4100, %v4100
      %v4229 = vpack.c.bf16 %v4101, %v4101
      %v4230 = vpack.c.bf16 %v4102, %v4102
      %v4231 = vpack.c.bf16 %v4103, %v4103
      %v4232 = vpack.c.bf16 %v4104, %v4104
      %v4233 = vpack.c.bf16 %v4105, %v4105
      %v4234 = vpack.c.bf16 %v4106, %v4106
      %v4235 = vpack.c.bf16 %v4107, %v4107
      %v4236 = vpack.c.bf16 %v4108, %v4108
      %v4237 = vpack.c.bf16 %v4109, %v4109
      %v4238 = vpack.c.bf16 %v4110, %v4110
      %v4239 = vpack.c.bf16 %v4111, %v4111
      %v4240 = vpack.c.bf16 %v4112, %v4112
      %v4241 = vpack.c.bf16 %v4113, %v4113
      %v4242 = vpack.c.bf16 %v4114, %v4114
      %v4243 = vpack.c.bf16 %v4115, %v4115
      %v4244 = vpack.c.bf16 %v4116, %v4116
      %v4245 = vpack.c.bf16 %v4117, %v4117
      %v4246 = vpack.c.bf16 %v4118, %v4118
      %v4247 = vpack.c.bf16 %v4119, %v4119
      %v4248 = vpack.c.bf16 %v4120, %v4120
      %v4249 = vpack.c.bf16 %v4121, %v4121
      %v4250 = vpack.c.bf16 %v4122, %v4122
      %vm4251 = vcmask 125952
      %4252 = vst.msk [vmem:[%s366] sm:$0xf] %vm4251, %v4123
      %4253 = vst.msk [vmem:[%s366 + $0x4] sm:$0xf] %vm4251, %v4124
      %4254 = vst.msk [vmem:[%s366 + $0x8] sm:$0xf] %vm4251, %v4125
      %4255 = vst.msk [vmem:[%s366 + $0xc] sm:$0xf] %vm4251, %v4126
      %4256 = vst.msk [vmem:[%s366 + $0x10] sm:$0xf] %vm4251, %v4127
      %4257 = vst.msk [vmem:[%s366 + $0x14] sm:$0xf] %vm4251, %v4128
      %4258 = vst.msk [vmem:[%s366 + $0x18] sm:$0xf] %vm4251, %v4129
      %4259 = vst.msk [vmem:[%s366 + $0x1c] sm:$0xf] %vm4251, %v4130
      %4260 = vst.msk [vmem:[%s366 + $0x20] sm:$0xf] %vm4251, %v4131
      %4261 = vst.msk [vmem:[%s366 + $0x24] sm:$0xf] %vm4251, %v4132
      %4262 = vst.msk [vmem:[%s366 + $0x28] sm:$0xf] %vm4251, %v4133
      %4263 = vst.msk [vmem:[%s366 + $0x2c] sm:$0xf] %vm4251, %v4134
      %4264 = vst.msk [vmem:[%s366 + $0x30] sm:$0xf] %vm4251, %v4135
      %4265 = vst.msk [vmem:[%s366 + $0x34] sm:$0xf] %vm4251, %v4136
      %4266 = vst.msk [vmem:[%s366 + $0x38] sm:$0xf] %vm4251, %v4137
      %4267 = vst.msk [vmem:[%s366 + $0x3c] sm:$0xf] %vm4251, %v4138
      %4268 = vst.msk [vmem:[%s366 + $0x40] sm:$0xf] %vm4251, %v4139
      %4269 = vst.msk [vmem:[%s366 + $0x44] sm:$0xf] %vm4251, %v4140
      %4270 = vst.msk [vmem:[%s366 + $0x48] sm:$0xf] %vm4251, %v4141
      %4271 = vst.msk [vmem:[%s366 + $0x4c] sm:$0xf] %vm4251, %v4142
      %4272 = vst.msk [vmem:[%s366 + $0x50] sm:$0xf] %vm4251, %v4143
      %4273 = vst.msk [vmem:[%s366 + $0x54] sm:$0xf] %vm4251, %v4144
      %4274 = vst.msk [vmem:[%s366 + $0x58] sm:$0xf] %vm4251, %v4145
      %4275 = vst.msk [vmem:[%s366 + $0x5c] sm:$0xf] %vm4251, %v4146
      %4276 = vst.msk [vmem:[%s366 + $0x60] sm:$0xf] %vm4251, %v4147
      %4277 = vst.msk [vmem:[%s366 + $0x64] sm:$0xf] %vm4251, %v4148
      %4278 = vst.msk [vmem:[%s366 + $0x68] sm:$0xf] %vm4251, %v4149
      %4279 = vst.msk [vmem:[%s366 + $0x6c] sm:$0xf] %vm4251, %v4150
      %4280 = vst.msk [vmem:[%s366 + $0x70] sm:$0xf] %vm4251, %v4151
      %4281 = vst.msk [vmem:[%s366 + $0x74] sm:$0xf] %vm4251, %v4152
      %4282 = vst.msk [vmem:[%s366 + $0x78] sm:$0xf] %vm4251, %v4153
      %4283 = vst.msk [vmem:[%s366 + $0x7c] sm:$0xf] %vm4251, %v4154
      %4284 = vst.msk [vmem:[%s366 + $0x80] sm:$0xf] %vm4251, %v4155
      %4285 = vst.msk [vmem:[%s366 + $0x84] sm:$0xf] %vm4251, %v4156
      %4286 = vst.msk [vmem:[%s366 + $0x88] sm:$0xf] %vm4251, %v4157
      %4287 = vst.msk [vmem:[%s366 + $0x8c] sm:$0xf] %vm4251, %v4158
      %4288 = vst.msk [vmem:[%s366 + $0x90] sm:$0xf] %vm4251, %v4159
      %4289 = vst.msk [vmem:[%s366 + $0x94] sm:$0xf] %vm4251, %v4160
      %4290 = vst.msk [vmem:[%s366 + $0x98] sm:$0xf] %vm4251, %v4161
      %4291 = vst.msk [vmem:[%s366 + $0x9c] sm:$0xf] %vm4251, %v4162
      %4292 = vst.msk [vmem:[%s366 + $0xa0] sm:$0xf] %vm4251, %v4163
      %4293 = vst.msk [vmem:[%s366 + $0xa4] sm:$0xf] %vm4251, %v4164
      %4294 = vst.msk [vmem:[%s366 + $0xa8] sm:$0xf] %vm4251, %v4165
      %4295 = vst.msk [vmem:[%s366 + $0xac] sm:$0xf] %vm4251, %v4166
      %4296 = vst.msk [vmem:[%s366 + $0xb0] sm:$0xf] %vm4251, %v4167
      %4297 = vst.msk [vmem:[%s366 + $0xb4] sm:$0xf] %vm4251, %v4168
      %4298 = vst.msk [vmem:[%s366 + $0xb8] sm:$0xf] %vm4251, %v4169
      %4299 = vst.msk [vmem:[%s366 + $0xbc] sm:$0xf] %vm4251, %v4170
      %4300 = vst.msk [vmem:[%s366 + $0xc0] sm:$0xf] %vm4251, %v4171
      %4301 = vst.msk [vmem:[%s366 + $0xc4] sm:$0xf] %vm4251, %v4172
      %4302 = vst.msk [vmem:[%s366 + $0xc8] sm:$0xf] %vm4251, %v4173
      %4303 = vst.msk [vmem:[%s366 + $0xcc] sm:$0xf] %vm4251, %v4174
      %4304 = vst.msk [vmem:[%s366 + $0xd0] sm:$0xf] %vm4251, %v4175
      %4305 = vst.msk [vmem:[%s366 + $0xd4] sm:$0xf] %vm4251, %v4176
      %4306 = vst.msk [vmem:[%s366 + $0xd8] sm:$0xf] %vm4251, %v4177
      %4307 = vst.msk [vmem:[%s366 + $0xdc] sm:$0xf] %vm4251, %v4178
      %4308 = vst.msk [vmem:[%s366 + $0xe0] sm:$0xf] %vm4251, %v4179
      %4309 = vst.msk [vmem:[%s366 + $0xe4] sm:$0xf] %vm4251, %v4180
      %4310 = vst.msk [vmem:[%s366 + $0xe8] sm:$0xf] %vm4251, %v4181
      %4311 = vst.msk [vmem:[%s366 + $0xec] sm:$0xf] %vm4251, %v4182
      %4312 = vst.msk [vmem:[%s366 + $0xf0] sm:$0xf] %vm4251, %v4183
      %4313 = vst.msk [vmem:[%s366 + $0xf4] sm:$0xf] %vm4251, %v4184
      %4314 = vst.msk [vmem:[%s366 + $0xf8] sm:$0xf] %vm4251, %v4185
      %4315 = vst.msk [vmem:[%s366 + $0xfc] sm:$0xf] %vm4251, %v4186
      %4316 = vst.msk [vmem:[%s366 + $0x100] sm:$0xf] %vm4251, %v4187
      %4317 = vst.msk [vmem:[%s366 + $0x104] sm:$0xf] %vm4251, %v4188
      %4318 = vst.msk [vmem:[%s366 + $0x108] sm:$0xf] %vm4251, %v4189
      %4319 = vst.msk [vmem:[%s366 + $0x10c] sm:$0xf] %vm4251, %v4190
      %4320 = vst.msk [vmem:[%s366 + $0x110] sm:$0xf] %vm4251, %v4191
      %4321 = vst.msk [vmem:[%s366 + $0x114] sm:$0xf] %vm4251, %v4192
      %4322 = vst.msk [vmem:[%s366 + $0x118] sm:$0xf] %vm4251, %v4193
      %4323 = vst.msk [vmem:[%s366 + $0x11c] sm:$0xf] %vm4251, %v4194
      %4324 = vst.msk [vmem:[%s366 + $0x120] sm:$0xf] %vm4251, %v4195
      %4325 = vst.msk [vmem:[%s366 + $0x124] sm:$0xf] %vm4251, %v4196
      %4326 = vst.msk [vmem:[%s366 + $0x128] sm:$0xf] %vm4251, %v4197
      %4327 = vst.msk [vmem:[%s366 + $0x12c] sm:$0xf] %vm4251, %v4198
      %4328 = vst.msk [vmem:[%s366 + $0x130] sm:$0xf] %vm4251, %v4199
      %4329 = vst.msk [vmem:[%s366 + $0x134] sm:$0xf] %vm4251, %v4200
      %4330 = vst.msk [vmem:[%s366 + $0x138] sm:$0xf] %vm4251, %v4201
      %4331 = vst.msk [vmem:[%s366 + $0x13c] sm:$0xf] %vm4251, %v4202
      %4332 = vst.msk [vmem:[%s366 + $0x140] sm:$0xf] %vm4251, %v4203
      %4333 = vst.msk [vmem:[%s366 + $0x144] sm:$0xf] %vm4251, %v4204
      %4334 = vst.msk [vmem:[%s366 + $0x148] sm:$0xf] %vm4251, %v4205
      %4335 = vst.msk [vmem:[%s366 + $0x14c] sm:$0xf] %vm4251, %v4206
      %4336 = vst.msk [vmem:[%s366 + $0x150] sm:$0xf] %vm4251, %v4207
      %4337 = vst.msk [vmem:[%s366 + $0x154] sm:$0xf] %vm4251, %v4208
      %4338 = vst.msk [vmem:[%s366 + $0x158] sm:$0xf] %vm4251, %v4209
      %4339 = vst.msk [vmem:[%s366 + $0x15c] sm:$0xf] %vm4251, %v4210
      %4340 = vst.msk [vmem:[%s366 + $0x160] sm:$0xf] %vm4251, %v4211
      %4341 = vst.msk [vmem:[%s366 + $0x164] sm:$0xf] %vm4251, %v4212
      %4342 = vst.msk [vmem:[%s366 + $0x168] sm:$0xf] %vm4251, %v4213
      %4343 = vst.msk [vmem:[%s366 + $0x16c] sm:$0xf] %vm4251, %v4214
      %4344 = vst.msk [vmem:[%s366 + $0x170] sm:$0xf] %vm4251, %v4215
      %4345 = vst.msk [vmem:[%s366 + $0x174] sm:$0xf] %vm4251, %v4216
      %4346 = vst.msk [vmem:[%s366 + $0x178] sm:$0xf] %vm4251, %v4217
      %4347 = vst.msk [vmem:[%s366 + $0x17c] sm:$0xf] %vm4251, %v4218
      %4348 = vst.msk [vmem:[%s366 + $0x180] sm:$0xf] %vm4251, %v4219
      %4349 = vst.msk [vmem:[%s366 + $0x184] sm:$0xf] %vm4251, %v4220
      %4350 = vst.msk [vmem:[%s366 + $0x188] sm:$0xf] %vm4251, %v4221
      %4351 = vst.msk [vmem:[%s366 + $0x18c] sm:$0xf] %vm4251, %v4222
      %4352 = vst.msk [vmem:[%s366 + $0x190] sm:$0xf] %vm4251, %v4223
      %4353 = vst.msk [vmem:[%s366 + $0x194] sm:$0xf] %vm4251, %v4224
      %4354 = vst.msk [vmem:[%s366 + $0x198] sm:$0xf] %vm4251, %v4225
      %4355 = vst.msk [vmem:[%s366 + $0x19c] sm:$0xf] %vm4251, %v4226
      %4356 = vst.msk [vmem:[%s366 + $0x1a0] sm:$0xf] %vm4251, %v4227
      %4357 = vst.msk [vmem:[%s366 + $0x1a4] sm:$0xf] %vm4251, %v4228
      %4358 = vst.msk [vmem:[%s366 + $0x1a8] sm:$0xf] %vm4251, %v4229
      %4359 = vst.msk [vmem:[%s366 + $0x1ac] sm:$0xf] %vm4251, %v4230
      %4360 = vst.msk [vmem:[%s366 + $0x1b0] sm:$0xf] %vm4251, %v4231
      %4361 = vst.msk [vmem:[%s366 + $0x1b4] sm:$0xf] %vm4251, %v4232
      %4362 = vst.msk [vmem:[%s366 + $0x1b8] sm:$0xf] %vm4251, %v4233
      %4363 = vst.msk [vmem:[%s366 + $0x1bc] sm:$0xf] %vm4251, %v4234
      %4364 = vst.msk [vmem:[%s366 + $0x1c0] sm:$0xf] %vm4251, %v4235
      %4365 = vst.msk [vmem:[%s366 + $0x1c4] sm:$0xf] %vm4251, %v4236
      %4366 = vst.msk [vmem:[%s366 + $0x1c8] sm:$0xf] %vm4251, %v4237
      %4367 = vst.msk [vmem:[%s366 + $0x1cc] sm:$0xf] %vm4251, %v4238
      %4368 = vst.msk [vmem:[%s366 + $0x1d0] sm:$0xf] %vm4251, %v4239
      %4369 = vst.msk [vmem:[%s366 + $0x1d4] sm:$0xf] %vm4251, %v4240
      %4370 = vst.msk [vmem:[%s366 + $0x1d8] sm:$0xf] %vm4251, %v4241
      %4371 = vst.msk [vmem:[%s366 + $0x1dc] sm:$0xf] %vm4251, %v4242
      %4372 = vst.msk [vmem:[%s366 + $0x1e0] sm:$0xf] %vm4251, %v4243
      %4373 = vst.msk [vmem:[%s366 + $0x1e4] sm:$0xf] %vm4251, %v4244
      %4374 = vst.msk [vmem:[%s366 + $0x1e8] sm:$0xf] %vm4251, %v4245
      %4375 = vst.msk [vmem:[%s366 + $0x1ec] sm:$0xf] %vm4251, %v4246
      %4376 = vst.msk [vmem:[%s366 + $0x1f0] sm:$0xf] %vm4251, %v4247
      %4377 = vst.msk [vmem:[%s366 + $0x1f4] sm:$0xf] %vm4251, %v4248
      %4378 = vst.msk [vmem:[%s366 + $0x1f8] sm:$0xf] %vm4251, %v4249
      %4379 = vst.msk [vmem:[%s366 + $0x1fc] sm:$0xf] %vm4251, %v4250
      // Predicated region
      $region41: #{decoder_bottleneck_forward.5} parent=39 // pred_check
        %p4380 = pneg %p1393
      $region42: #{decoder_bottleneck_forward.5} parent=39 // pred_check_branch
        %4382 = sbr.rel (%p4380) target = $region44
      $region43: #{decoder_bottleneck_forward.5} parent=39 // pred_region
        %vm4383 = vcmask 123904
        %4384 = vst.msk [vmem:[%s372] sm:$0x3] %vm4383, 0.0
      $region44: #{decoder_bottleneck_forward.5} parent=39 // pred_fallthru
        _
      %v4385 = vld [vmem:[%s372] sm:$0x1]
      %vm4386 = vcmask 130048
      %v4387 = vsel %vm4386, %v3995, 0.0
      %v4388 = vsel %vm4386, %v3996, 0.0
      %v4389 = vadd.f32 %v4387, %v4388
      %v4390 = vsel %vm4386, %v3997, 0.0
      %v4391 = vadd.f32 %v4389, %v4390
      %v4392 = vsel %vm4386, %v3998, 0.0
      %v4393 = vadd.f32 %v4391, %v4392
      %v4394 = vsel %vm4386, %v3999, 0.0
      %v4395 = vadd.f32 %v4393, %v4394
      %v4396 = vsel %vm4386, %v4000, 0.0
      %v4397 = vadd.f32 %v4395, %v4396
      %v4398 = vsel %vm4386, %v4001, 0.0
      %v4399 = vadd.f32 %v4397, %v4398
      %v4400 = vsel %vm4386, %v4002, 0.0
      %v4401 = vadd.f32 %v4399, %v4400
      %v4402 = vsel %vm4386, %v4003, 0.0
      %v4403 = vadd.f32 %v4401, %v4402
      %v4404 = vsel %vm4386, %v4004, 0.0
      %v4405 = vadd.f32 %v4403, %v4404
      %v4406 = vsel %vm4386, %v4005, 0.0
      %v4407 = vadd.f32 %v4405, %v4406
      %v4408 = vsel %vm4386, %v4006, 0.0
      %v4409 = vadd.f32 %v4407, %v4408
      %v4410 = vsel %vm4386, %v4007, 0.0
      %v4411 = vadd.f32 %v4409, %v4410
      %v4412 = vsel %vm4386, %v4008, 0.0
      %v4413 = vadd.f32 %v4411, %v4412
      %v4414 = vsel %vm4386, %v4009, 0.0
      %v4415 = vadd.f32 %v4413, %v4414
      %v4416 = vsel %vm4386, %v4010, 0.0
      %v4417 = vadd.f32 %v4415, %v4416
      %v4418 = vsel %vm4386, %v4011, 0.0
      %v4419 = vadd.f32 %v4417, %v4418
      %v4420 = vsel %vm4386, %v4012, 0.0
      %v4421 = vadd.f32 %v4419, %v4420
      %v4422 = vsel %vm4386, %v4013, 0.0
      %v4423 = vadd.f32 %v4421, %v4422
      %v4424 = vsel %vm4386, %v4014, 0.0
      %v4425 = vadd.f32 %v4423, %v4424
      %v4426 = vsel %vm4386, %v4015, 0.0
      %v4427 = vadd.f32 %v4425, %v4426
      %v4428 = vsel %vm4386, %v4016, 0.0
      %v4429 = vadd.f32 %v4427, %v4428
      %v4430 = vsel %vm4386, %v4017, 0.0
      %v4431 = vadd.f32 %v4429, %v4430
      %v4432 = vsel %vm4386, %v4018, 0.0
      %v4433 = vadd.f32 %v4431, %v4432
      %v4434 = vsel %vm4386, %v4019, 0.0
      %v4435 = vadd.f32 %v4433, %v4434
      %v4436 = vsel %vm4386, %v4020, 0.0
      %v4437 = vadd.f32 %v4435, %v4436
      %v4438 = vsel %vm4386, %v4021, 0.0
      %v4439 = vadd.f32 %v4437, %v4438
      %v4440 = vsel %vm4386, %v4022, 0.0
      %v4441 = vadd.f32 %v4439, %v4440
      %v4442 = vsel %vm4386, %v4023, 0.0
      %v4443 = vadd.f32 %v4441, %v4442
      %v4444 = vsel %vm4386, %v4024, 0.0
      %v4445 = vadd.f32 %v4443, %v4444
      %v4446 = vsel %vm4386, %v4025, 0.0
      %v4447 = vadd.f32 %v4445, %v4446
      %v4448 = vsel %vm4386, %v4026, 0.0
      %v4449 = vadd.f32 %v4447, %v4448
      %v4450 = vsel %vm4386, %v4027, 0.0
      %v4451 = vadd.f32 %v4449, %v4450
      %v4452 = vsel %vm4386, %v4028, 0.0
      %v4453 = vadd.f32 %v4451, %v4452
      %v4454 = vsel %vm4386, %v4029, 0.0
      %v4455 = vadd.f32 %v4453, %v4454
      %v4456 = vsel %vm4386, %v4030, 0.0
      %v4457 = vadd.f32 %v4455, %v4456
      %v4458 = vsel %vm4386, %v4031, 0.0
      %v4459 = vadd.f32 %v4457, %v4458
      %v4460 = vsel %vm4386, %v4032, 0.0
      %v4461 = vadd.f32 %v4459, %v4460
      %v4462 = vsel %vm4386, %v4033, 0.0
      %v4463 = vadd.f32 %v4461, %v4462
      %v4464 = vsel %vm4386, %v4034, 0.0
      %v4465 = vadd.f32 %v4463, %v4464
      %v4466 = vsel %vm4386, %v4035, 0.0
      %v4467 = vadd.f32 %v4465, %v4466
      %v4468 = vsel %vm4386, %v4036, 0.0
      %v4469 = vadd.f32 %v4467, %v4468
      %v4470 = vsel %vm4386, %v4037, 0.0
      %v4471 = vadd.f32 %v4469, %v4470
      %v4472 = vsel %vm4386, %v4038, 0.0
      %v4473 = vadd.f32 %v4471, %v4472
      %v4474 = vsel %vm4386, %v4039, 0.0
      %v4475 = vadd.f32 %v4473, %v4474
      %v4476 = vsel %vm4386, %v4040, 0.0
      %v4477 = vadd.f32 %v4475, %v4476
      %v4478 = vsel %vm4386, %v4041, 0.0
      %v4479 = vadd.f32 %v4477, %v4478
      %v4480 = vsel %vm4386, %v4042, 0.0
      %v4481 = vadd.f32 %v4479, %v4480
      %v4482 = vsel %vm4386, %v4043, 0.0
      %v4483 = vadd.f32 %v4481, %v4482
      %v4484 = vsel %vm4386, %v4044, 0.0
      %v4485 = vadd.f32 %v4483, %v4484
      %v4486 = vsel %vm4386, %v4045, 0.0
      %v4487 = vadd.f32 %v4485, %v4486
      %v4488 = vsel %vm4386, %v4046, 0.0
      %v4489 = vadd.f32 %v4487, %v4488
      %v4490 = vsel %vm4386, %v4047, 0.0
      %v4491 = vadd.f32 %v4489, %v4490
      %v4492 = vsel %vm4386, %v4048, 0.0
      %v4493 = vadd.f32 %v4491, %v4492
      %v4494 = vsel %vm4386, %v4049, 0.0
      %v4495 = vadd.f32 %v4493, %v4494
      %v4496 = vsel %vm4386, %v4050, 0.0
      %v4497 = vadd.f32 %v4495, %v4496
      %v4498 = vsel %vm4386, %v4051, 0.0
      %v4499 = vadd.f32 %v4497, %v4498
      %v4500 = vsel %vm4386, %v4052, 0.0
      %v4501 = vadd.f32 %v4499, %v4500
      %v4502 = vsel %vm4386, %v4053, 0.0
      %v4503 = vadd.f32 %v4501, %v4502
      %v4504 = vsel %vm4386, %v4054, 0.0
      %v4505 = vadd.f32 %v4503, %v4504
      %v4506 = vsel %vm4386, %v4055, 0.0
      %v4507 = vadd.f32 %v4505, %v4506
      %v4508 = vsel %vm4386, %v4056, 0.0
      %v4509 = vadd.f32 %v4507, %v4508
      %v4510 = vsel %vm4386, %v4057, 0.0
      %v4511 = vadd.f32 %v4509, %v4510
      %v4512 = vsel %vm4386, %v4058, 0.0
      %v4513 = vadd.f32 %v4511, %v4512
      %v4514 = vsel %vm4386, %v4059, 0.0
      %v4515 = vadd.f32 %v4513, %v4514
      %v4516 = vsel %vm4386, %v4060, 0.0
      %v4517 = vadd.f32 %v4515, %v4516
      %v4518 = vsel %vm4386, %v4061, 0.0
      %v4519 = vadd.f32 %v4517, %v4518
      %v4520 = vsel %vm4386, %v4062, 0.0
      %v4521 = vadd.f32 %v4519, %v4520
      %v4522 = vsel %vm4386, %v4063, 0.0
      %v4523 = vadd.f32 %v4521, %v4522
      %v4524 = vsel %vm4386, %v4064, 0.0
      %v4525 = vadd.f32 %v4523, %v4524
      %v4526 = vsel %vm4386, %v4065, 0.0
      %v4527 = vadd.f32 %v4525, %v4526
      %v4528 = vsel %vm4386, %v4066, 0.0
      %v4529 = vadd.f32 %v4527, %v4528
      %v4530 = vsel %vm4386, %v4067, 0.0
      %v4531 = vadd.f32 %v4529, %v4530
      %v4532 = vsel %vm4386, %v4068, 0.0
      %v4533 = vadd.f32 %v4531, %v4532
      %v4534 = vsel %vm4386, %v4069, 0.0
      %v4535 = vadd.f32 %v4533, %v4534
      %v4536 = vsel %vm4386, %v4070, 0.0
      %v4537 = vadd.f32 %v4535, %v4536
      %v4538 = vsel %vm4386, %v4071, 0.0
      %v4539 = vadd.f32 %v4537, %v4538
      %v4540 = vsel %vm4386, %v4072, 0.0
      %v4541 = vadd.f32 %v4539, %v4540
      %v4542 = vsel %vm4386, %v4073, 0.0
      %v4543 = vadd.f32 %v4541, %v4542
      %v4544 = vsel %vm4386, %v4074, 0.0
      %v4545 = vadd.f32 %v4543, %v4544
      %v4546 = vsel %vm4386, %v4075, 0.0
      %v4547 = vadd.f32 %v4545, %v4546
      %v4548 = vsel %vm4386, %v4076, 0.0
      %v4549 = vadd.f32 %v4547, %v4548
      %v4550 = vsel %vm4386, %v4077, 0.0
      %v4551 = vadd.f32 %v4549, %v4550
      %v4552 = vsel %vm4386, %v4078, 0.0
      %v4553 = vadd.f32 %v4551, %v4552
      %v4554 = vsel %vm4386, %v4079, 0.0
      %v4555 = vadd.f32 %v4553, %v4554
      %v4556 = vsel %vm4386, %v4080, 0.0
      %v4557 = vadd.f32 %v4555, %v4556
      %v4558 = vsel %vm4386, %v4081, 0.0
      %v4559 = vadd.f32 %v4557, %v4558
      %v4560 = vsel %vm4386, %v4082, 0.0
      %v4561 = vadd.f32 %v4559, %v4560
      %v4562 = vsel %vm4386, %v4083, 0.0
      %v4563 = vadd.f32 %v4561, %v4562
      %v4564 = vsel %vm4386, %v4084, 0.0
      %v4565 = vadd.f32 %v4563, %v4564
      %v4566 = vsel %vm4386, %v4085, 0.0
      %v4567 = vadd.f32 %v4565, %v4566
      %v4568 = vsel %vm4386, %v4086, 0.0
      %v4569 = vadd.f32 %v4567, %v4568
      %v4570 = vsel %vm4386, %v4087, 0.0
      %v4571 = vadd.f32 %v4569, %v4570
      %v4572 = vsel %vm4386, %v4088, 0.0
      %v4573 = vadd.f32 %v4571, %v4572
      %v4574 = vsel %vm4386, %v4089, 0.0
      %v4575 = vadd.f32 %v4573, %v4574
      %v4576 = vsel %vm4386, %v4090, 0.0
      %v4577 = vadd.f32 %v4575, %v4576
      %v4578 = vsel %vm4386, %v4091, 0.0
      %v4579 = vadd.f32 %v4577, %v4578
      %v4580 = vsel %vm4386, %v4092, 0.0
      %v4581 = vadd.f32 %v4579, %v4580
      %v4582 = vsel %vm4386, %v4093, 0.0
      %v4583 = vadd.f32 %v4581, %v4582
      %v4584 = vsel %vm4386, %v4094, 0.0
      %v4585 = vadd.f32 %v4583, %v4584
      %v4586 = vsel %vm4386, %v4095, 0.0
      %v4587 = vadd.f32 %v4585, %v4586
      %v4588 = vsel %vm4386, %v4096, 0.0
      %v4589 = vadd.f32 %v4587, %v4588
      %v4590 = vsel %vm4386, %v4097, 0.0
      %v4591 = vadd.f32 %v4589, %v4590
      %v4592 = vsel %vm4386, %v4098, 0.0
      %v4593 = vadd.f32 %v4591, %v4592
      %v4594 = vsel %vm4386, %v4099, 0.0
      %v4595 = vadd.f32 %v4593, %v4594
      %v4596 = vsel %vm4386, %v4100, 0.0
      %v4597 = vadd.f32 %v4595, %v4596
      %v4598 = vsel %vm4386, %v4101, 0.0
      %v4599 = vadd.f32 %v4597, %v4598
      %v4600 = vsel %vm4386, %v4102, 0.0
      %v4601 = vadd.f32 %v4599, %v4600
      %v4602 = vsel %vm4386, %v4103, 0.0
      %v4603 = vadd.f32 %v4601, %v4602
      %v4604 = vsel %vm4386, %v4104, 0.0
      %v4605 = vadd.f32 %v4603, %v4604
      %v4606 = vsel %vm4386, %v4105, 0.0
      %v4607 = vadd.f32 %v4605, %v4606
      %v4608 = vsel %vm4386, %v4106, 0.0
      %v4609 = vadd.f32 %v4607, %v4608
      %v4610 = vsel %vm4386, %v4107, 0.0
      %v4611 = vadd.f32 %v4609, %v4610
      %v4612 = vsel %vm4386, %v4108, 0.0
      %v4613 = vadd.f32 %v4611, %v4612
      %v4614 = vsel %vm4386, %v4109, 0.0
      %v4615 = vadd.f32 %v4613, %v4614
      %v4616 = vsel %vm4386, %v4110, 0.0
      %v4617 = vadd.f32 %v4615, %v4616
      %v4618 = vsel %vm4386, %v4111, 0.0
      %v4619 = vadd.f32 %v4617, %v4618
      %v4620 = vsel %vm4386, %v4112, 0.0
      %v4621 = vadd.f32 %v4619, %v4620
      %v4622 = vsel %vm4386, %v4113, 0.0
      %v4623 = vadd.f32 %v4621, %v4622
      %v4624 = vsel %vm4386, %v4114, 0.0
      %v4625 = vadd.f32 %v4623, %v4624
      %v4626 = vsel %vm4386, %v4115, 0.0
      %v4627 = vadd.f32 %v4625, %v4626
      %v4628 = vsel %vm4386, %v4116, 0.0
      %v4629 = vadd.f32 %v4627, %v4628
      %v4630 = vsel %vm4386, %v4117, 0.0
      %v4631 = vadd.f32 %v4629, %v4630
      %v4632 = vsel %vm4386, %v4118, 0.0
      %v4633 = vadd.f32 %v4631, %v4632
      %v4634 = vsel %vm4386, %v4119, 0.0
      %v4635 = vadd.f32 %v4633, %v4634
      %v4636 = vsel %vm4386, %v4120, 0.0
      %v4637 = vadd.f32 %v4635, %v4636
      %v4638 = vsel %vm4386, %v4121, 0.0
      %v4639 = vadd.f32 %v4637, %v4638
      %v4640 = vsel %vm4386, %v4122, 0.0
      %v4641 = vadd.f32 %v4639, %v4640
      %v4642 = vrot.slane %v4641, 4
      %v4643 = vadd.f32 %v4641, %v4642
      %v4644 = vrot.slane %v4643, 2
      %v4645 = vadd.f32 %v4643, %v4644
      %v4646 = vrot.slane %v4645, 1
      %v4647 = vadd.f32 %v4645, %v4646
      %v4648 = vadd.f32 %v4385, %v4647
      %vm4649 = vcmask 122880
      %4650 = vst.msk [vmem:[%s372] sm:$0x1] %vm4649, %v4648
      %v4651 = vld [vmem:[%s372 + $0x1] sm:$0x1]
      %v4652 = vmul.f32 %v3995, %v3995
      %v4653 = vmul.f32 %v3996, %v3996
      %v4654 = vmul.f32 %v3997, %v3997
      %v4655 = vmul.f32 %v3998, %v3998
      %v4656 = vmul.f32 %v3999, %v3999
      %v4657 = vmul.f32 %v4000, %v4000
      %v4658 = vmul.f32 %v4001, %v4001
      %v4659 = vmul.f32 %v4002, %v4002
      %v4660 = vmul.f32 %v4003, %v4003
      %v4661 = vmul.f32 %v4004, %v4004
      %v4662 = vmul.f32 %v4005, %v4005
      %v4663 = vmul.f32 %v4006, %v4006
      %v4664 = vmul.f32 %v4007, %v4007
      %v4665 = vmul.f32 %v4008, %v4008
      %v4666 = vmul.f32 %v4009, %v4009
      %v4667 = vmul.f32 %v4010, %v4010
      %v4668 = vmul.f32 %v4011, %v4011
      %v4669 = vmul.f32 %v4012, %v4012
      %v4670 = vmul.f32 %v4013, %v4013
      %v4671 = vmul.f32 %v4014, %v4014
      %v4672 = vmul.f32 %v4015, %v4015
      %v4673 = vmul.f32 %v4016, %v4016
      %v4674 = vmul.f32 %v4017, %v4017
      %v4675 = vmul.f32 %v4018, %v4018
      %v4676 = vmul.f32 %v4019, %v4019
      %v4677 = vmul.f32 %v4020, %v4020
      %v4678 = vmul.f32 %v4021, %v4021
      %v4679 = vmul.f32 %v4022, %v4022
      %v4680 = vmul.f32 %v4023, %v4023
      %v4681 = vmul.f32 %v4024, %v4024
      %v4682 = vmul.f32 %v4025, %v4025
      %v4683 = vmul.f32 %v4026, %v4026
      %v4684 = vmul.f32 %v4027, %v4027
      %v4685 = vmul.f32 %v4028, %v4028
      %v4686 = vmul.f32 %v4029, %v4029
      %v4687 = vmul.f32 %v4030, %v4030
      %v4688 = vmul.f32 %v4031, %v4031
      %v4689 = vmul.f32 %v4032, %v4032
      %v4690 = vmul.f32 %v4033, %v4033
      %v4691 = vmul.f32 %v4034, %v4034
      %v4692 = vmul.f32 %v4035, %v4035
      %v4693 = vmul.f32 %v4036, %v4036
      %v4694 = vmul.f32 %v4037, %v4037
      %v4695 = vmul.f32 %v4038, %v4038
      %v4696 = vmul.f32 %v4039, %v4039
      %v4697 = vmul.f32 %v4040, %v4040
      %v4698 = vmul.f32 %v4041, %v4041
      %v4699 = vmul.f32 %v4042, %v4042
      %v4700 = vmul.f32 %v4043, %v4043
      %v4701 = vmul.f32 %v4044, %v4044
      %v4702 = vmul.f32 %v4045, %v4045
      %v4703 = vmul.f32 %v4046, %v4046
      %v4704 = vmul.f32 %v4047, %v4047
      %v4705 = vmul.f32 %v4048, %v4048
      %v4706 = vmul.f32 %v4049, %v4049
      %v4707 = vmul.f32 %v4050, %v4050
      %v4708 = vmul.f32 %v4051, %v4051
      %v4709 = vmul.f32 %v4052, %v4052
      %v4710 = vmul.f32 %v4053, %v4053
      %v4711 = vmul.f32 %v4054, %v4054
      %v4712 = vmul.f32 %v4055, %v4055
      %v4713 = vmul.f32 %v4056, %v4056
      %v4714 = vmul.f32 %v4057, %v4057
      %v4715 = vmul.f32 %v4058, %v4058
      %v4716 = vmul.f32 %v4059, %v4059
      %v4717 = vmul.f32 %v4060, %v4060
      %v4718 = vmul.f32 %v4061, %v4061
      %v4719 = vmul.f32 %v4062, %v4062
      %v4720 = vmul.f32 %v4063, %v4063
      %v4721 = vmul.f32 %v4064, %v4064
      %v4722 = vmul.f32 %v4065, %v4065
      %v4723 = vmul.f32 %v4066, %v4066
      %v4724 = vmul.f32 %v4067, %v4067
      %v4725 = vmul.f32 %v4068, %v4068
      %v4726 = vmul.f32 %v4069, %v4069
      %v4727 = vmul.f32 %v4070, %v4070
      %v4728 = vmul.f32 %v4071, %v4071
      %v4729 = vmul.f32 %v4072, %v4072
      %v4730 = vmul.f32 %v4073, %v4073
      %v4731 = vmul.f32 %v4074, %v4074
      %v4732 = vmul.f32 %v4075, %v4075
      %v4733 = vmul.f32 %v4076, %v4076
      %v4734 = vmul.f32 %v4077, %v4077
      %v4735 = vmul.f32 %v4078, %v4078
      %v4736 = vmul.f32 %v4079, %v4079
      %v4737 = vmul.f32 %v4080, %v4080
      %v4738 = vmul.f32 %v4081, %v4081
      %v4739 = vmul.f32 %v4082, %v4082
      %v4740 = vmul.f32 %v4083, %v4083
      %v4741 = vmul.f32 %v4084, %v4084
      %v4742 = vmul.f32 %v4085, %v4085
      %v4743 = vmul.f32 %v4086, %v4086
      %v4744 = vmul.f32 %v4087, %v4087
      %v4745 = vmul.f32 %v4088, %v4088
      %v4746 = vmul.f32 %v4089, %v4089
      %v4747 = vmul.f32 %v4090, %v4090
      %v4748 = vmul.f32 %v4091, %v4091
      %v4749 = vmul.f32 %v4092, %v4092
      %v4750 = vmul.f32 %v4093, %v4093
      %v4751 = vmul.f32 %v4094, %v4094
      %v4752 = vmul.f32 %v4095, %v4095
      %v4753 = vmul.f32 %v4096, %v4096
      %v4754 = vmul.f32 %v4097, %v4097
      %v4755 = vmul.f32 %v4098, %v4098
      %v4756 = vmul.f32 %v4099, %v4099
      %v4757 = vmul.f32 %v4100, %v4100
      %v4758 = vmul.f32 %v4101, %v4101
      %v4759 = vmul.f32 %v4102, %v4102
      %v4760 = vmul.f32 %v4103, %v4103
      %v4761 = vmul.f32 %v4104, %v4104
      %v4762 = vmul.f32 %v4105, %v4105
      %v4763 = vmul.f32 %v4106, %v4106
      %v4764 = vmul.f32 %v4107, %v4107
      %v4765 = vmul.f32 %v4108, %v4108
      %v4766 = vmul.f32 %v4109, %v4109
      %v4767 = vmul.f32 %v4110, %v4110
      %v4768 = vmul.f32 %v4111, %v4111
      %v4769 = vmul.f32 %v4112, %v4112
      %v4770 = vmul.f32 %v4113, %v4113
      %v4771 = vmul.f32 %v4114, %v4114
      %v4772 = vmul.f32 %v4115, %v4115
      %v4773 = vmul.f32 %v4116, %v4116
      %v4774 = vmul.f32 %v4117, %v4117
      %v4775 = vmul.f32 %v4118, %v4118
      %v4776 = vmul.f32 %v4119, %v4119
      %v4777 = vmul.f32 %v4120, %v4120
      %v4778 = vmul.f32 %v4121, %v4121
      %v4779 = vmul.f32 %v4122, %v4122
      %v4780 = vsel %vm4386, %v4652, 0.0
      %v4781 = vsel %vm4386, %v4653, 0.0
      %v4782 = vadd.f32 %v4780, %v4781
      %v4783 = vsel %vm4386, %v4654, 0.0
      %v4784 = vadd.f32 %v4782, %v4783
      %v4785 = vsel %vm4386, %v4655, 0.0
      %v4786 = vadd.f32 %v4784, %v4785
      %v4787 = vsel %vm4386, %v4656, 0.0
      %v4788 = vadd.f32 %v4786, %v4787
      %v4789 = vsel %vm4386, %v4657, 0.0
      %v4790 = vadd.f32 %v4788, %v4789
      %v4791 = vsel %vm4386, %v4658, 0.0
      %v4792 = vadd.f32 %v4790, %v4791
      %v4793 = vsel %vm4386, %v4659, 0.0
      %v4794 = vadd.f32 %v4792, %v4793
      %v4795 = vsel %vm4386, %v4660, 0.0
      %v4796 = vadd.f32 %v4794, %v4795
      %v4797 = vsel %vm4386, %v4661, 0.0
      %v4798 = vadd.f32 %v4796, %v4797
      %v4799 = vsel %vm4386, %v4662, 0.0
      %v4800 = vadd.f32 %v4798, %v4799
      %v4801 = vsel %vm4386, %v4663, 0.0
      %v4802 = vadd.f32 %v4800, %v4801
      %v4803 = vsel %vm4386, %v4664, 0.0
      %v4804 = vadd.f32 %v4802, %v4803
      %v4805 = vsel %vm4386, %v4665, 0.0
      %v4806 = vadd.f32 %v4804, %v4805
      %v4807 = vsel %vm4386, %v4666, 0.0
      %v4808 = vadd.f32 %v4806, %v4807
      %v4809 = vsel %vm4386, %v4667, 0.0
      %v4810 = vadd.f32 %v4808, %v4809
      %v4811 = vsel %vm4386, %v4668, 0.0
      %v4812 = vadd.f32 %v4810, %v4811
      %v4813 = vsel %vm4386, %v4669, 0.0
      %v4814 = vadd.f32 %v4812, %v4813
      %v4815 = vsel %vm4386, %v4670, 0.0
      %v4816 = vadd.f32 %v4814, %v4815
      %v4817 = vsel %vm4386, %v4671, 0.0
      %v4818 = vadd.f32 %v4816, %v4817
      %v4819 = vsel %vm4386, %v4672, 0.0
      %v4820 = vadd.f32 %v4818, %v4819
      %v4821 = vsel %vm4386, %v4673, 0.0
      %v4822 = vadd.f32 %v4820, %v4821
      %v4823 = vsel %vm4386, %v4674, 0.0
      %v4824 = vadd.f32 %v4822, %v4823
      %v4825 = vsel %vm4386, %v4675, 0.0
      %v4826 = vadd.f32 %v4824, %v4825
      %v4827 = vsel %vm4386, %v4676, 0.0
      %v4828 = vadd.f32 %v4826, %v4827
      %v4829 = vsel %vm4386, %v4677, 0.0
      %v4830 = vadd.f32 %v4828, %v4829
      %v4831 = vsel %vm4386, %v4678, 0.0
      %v4832 = vadd.f32 %v4830, %v4831
      %v4833 = vsel %vm4386, %v4679, 0.0
      %v4834 = vadd.f32 %v4832, %v4833
      %v4835 = vsel %vm4386, %v4680, 0.0
      %v4836 = vadd.f32 %v4834, %v4835
      %v4837 = vsel %vm4386, %v4681, 0.0
      %v4838 = vadd.f32 %v4836, %v4837
      %v4839 = vsel %vm4386, %v4682, 0.0
      %v4840 = vadd.f32 %v4838, %v4839
      %v4841 = vsel %vm4386, %v4683, 0.0
      %v4842 = vadd.f32 %v4840, %v4841
      %v4843 = vsel %vm4386, %v4684, 0.0
      %v4844 = vadd.f32 %v4842, %v4843
      %v4845 = vsel %vm4386, %v4685, 0.0
      %v4846 = vadd.f32 %v4844, %v4845
      %v4847 = vsel %vm4386, %v4686, 0.0
      %v4848 = vadd.f32 %v4846, %v4847
      %v4849 = vsel %vm4386, %v4687, 0.0
      %v4850 = vadd.f32 %v4848, %v4849
      %v4851 = vsel %vm4386, %v4688, 0.0
      %v4852 = vadd.f32 %v4850, %v4851
      %v4853 = vsel %vm4386, %v4689, 0.0
      %v4854 = vadd.f32 %v4852, %v4853
      %v4855 = vsel %vm4386, %v4690, 0.0
      %v4856 = vadd.f32 %v4854, %v4855
      %v4857 = vsel %vm4386, %v4691, 0.0
      %v4858 = vadd.f32 %v4856, %v4857
      %v4859 = vsel %vm4386, %v4692, 0.0
      %v4860 = vadd.f32 %v4858, %v4859
      %v4861 = vsel %vm4386, %v4693, 0.0
      %v4862 = vadd.f32 %v4860, %v4861
      %v4863 = vsel %vm4386, %v4694, 0.0
      %v4864 = vadd.f32 %v4862, %v4863
      %v4865 = vsel %vm4386, %v4695, 0.0
      %v4866 = vadd.f32 %v4864, %v4865
      %v4867 = vsel %vm4386, %v4696, 0.0
      %v4868 = vadd.f32 %v4866, %v4867
      %v4869 = vsel %vm4386, %v4697, 0.0
      %v4870 = vadd.f32 %v4868, %v4869
      %v4871 = vsel %vm4386, %v4698, 0.0
      %v4872 = vadd.f32 %v4870, %v4871
      %v4873 = vsel %vm4386, %v4699, 0.0
      %v4874 = vadd.f32 %v4872, %v4873
      %v4875 = vsel %vm4386, %v4700, 0.0
      %v4876 = vadd.f32 %v4874, %v4875
      %v4877 = vsel %vm4386, %v4701, 0.0
      %v4878 = vadd.f32 %v4876, %v4877
      %v4879 = vsel %vm4386, %v4702, 0.0
      %v4880 = vadd.f32 %v4878, %v4879
      %v4881 = vsel %vm4386, %v4703, 0.0
      %v4882 = vadd.f32 %v4880, %v4881
      %v4883 = vsel %vm4386, %v4704, 0.0
      %v4884 = vadd.f32 %v4882, %v4883
      %v4885 = vsel %vm4386, %v4705, 0.0
      %v4886 = vadd.f32 %v4884, %v4885
      %v4887 = vsel %vm4386, %v4706, 0.0
      %v4888 = vadd.f32 %v4886, %v4887
      %v4889 = vsel %vm4386, %v4707, 0.0
      %v4890 = vadd.f32 %v4888, %v4889
      %v4891 = vsel %vm4386, %v4708, 0.0
      %v4892 = vadd.f32 %v4890, %v4891
      %v4893 = vsel %vm4386, %v4709, 0.0
      %v4894 = vadd.f32 %v4892, %v4893
      %v4895 = vsel %vm4386, %v4710, 0.0
      %v4896 = vadd.f32 %v4894, %v4895
      %v4897 = vsel %vm4386, %v4711, 0.0
      %v4898 = vadd.f32 %v4896, %v4897
      %v4899 = vsel %vm4386, %v4712, 0.0
      %v4900 = vadd.f32 %v4898, %v4899
      %v4901 = vsel %vm4386, %v4713, 0.0
      %v4902 = vadd.f32 %v4900, %v4901
      %v4903 = vsel %vm4386, %v4714, 0.0
      %v4904 = vadd.f32 %v4902, %v4903
      %v4905 = vsel %vm4386, %v4715, 0.0
      %v4906 = vadd.f32 %v4904, %v4905
      %v4907 = vsel %vm4386, %v4716, 0.0
      %v4908 = vadd.f32 %v4906, %v4907
      %v4909 = vsel %vm4386, %v4717, 0.0
      %v4910 = vadd.f32 %v4908, %v4909
      %v4911 = vsel %vm4386, %v4718, 0.0
      %v4912 = vadd.f32 %v4910, %v4911
      %v4913 = vsel %vm4386, %v4719, 0.0
      %v4914 = vadd.f32 %v4912, %v4913
      %v4915 = vsel %vm4386, %v4720, 0.0
      %v4916 = vadd.f32 %v4914, %v4915
      %v4917 = vsel %vm4386, %v4721, 0.0
      %v4918 = vadd.f32 %v4916, %v4917
      %v4919 = vsel %vm4386, %v4722, 0.0
      %v4920 = vadd.f32 %v4918, %v4919
      %v4921 = vsel %vm4386, %v4723, 0.0
      %v4922 = vadd.f32 %v4920, %v4921
      %v4923 = vsel %vm4386, %v4724, 0.0
      %v4924 = vadd.f32 %v4922, %v4923
      %v4925 = vsel %vm4386, %v4725, 0.0
      %v4926 = vadd.f32 %v4924, %v4925
      %v4927 = vsel %vm4386, %v4726, 0.0
      %v4928 = vadd.f32 %v4926, %v4927
      %v4929 = vsel %vm4386, %v4727, 0.0
      %v4930 = vadd.f32 %v4928, %v4929
      %v4931 = vsel %vm4386, %v4728, 0.0
      %v4932 = vadd.f32 %v4930, %v4931
      %v4933 = vsel %vm4386, %v4729, 0.0
      %v4934 = vadd.f32 %v4932, %v4933
      %v4935 = vsel %vm4386, %v4730, 0.0
      %v4936 = vadd.f32 %v4934, %v4935
      %v4937 = vsel %vm4386, %v4731, 0.0
      %v4938 = vadd.f32 %v4936, %v4937
      %v4939 = vsel %vm4386, %v4732, 0.0
      %v4940 = vadd.f32 %v4938, %v4939
      %v4941 = vsel %vm4386, %v4733, 0.0
      %v4942 = vadd.f32 %v4940, %v4941
      %v4943 = vsel %vm4386, %v4734, 0.0
      %v4944 = vadd.f32 %v4942, %v4943
      %v4945 = vsel %vm4386, %v4735, 0.0
      %v4946 = vadd.f32 %v4944, %v4945
      %v4947 = vsel %vm4386, %v4736, 0.0
      %v4948 = vadd.f32 %v4946, %v4947
      %v4949 = vsel %vm4386, %v4737, 0.0
      %v4950 = vadd.f32 %v4948, %v4949
      %v4951 = vsel %vm4386, %v4738, 0.0
      %v4952 = vadd.f32 %v4950, %v4951
      %v4953 = vsel %vm4386, %v4739, 0.0
      %v4954 = vadd.f32 %v4952, %v4953
      %v4955 = vsel %vm4386, %v4740, 0.0
      %v4956 = vadd.f32 %v4954, %v4955
      %v4957 = vsel %vm4386, %v4741, 0.0
      %v4958 = vadd.f32 %v4956, %v4957
      %v4959 = vsel %vm4386, %v4742, 0.0
      %v4960 = vadd.f32 %v4958, %v4959
      %v4961 = vsel %vm4386, %v4743, 0.0
      %v4962 = vadd.f32 %v4960, %v4961
      %v4963 = vsel %vm4386, %v4744, 0.0
      %v4964 = vadd.f32 %v4962, %v4963
      %v4965 = vsel %vm4386, %v4745, 0.0
      %v4966 = vadd.f32 %v4964, %v4965
      %v4967 = vsel %vm4386, %v4746, 0.0
      %v4968 = vadd.f32 %v4966, %v4967
      %v4969 = vsel %vm4386, %v4747, 0.0
      %v4970 = vadd.f32 %v4968, %v4969
      %v4971 = vsel %vm4386, %v4748, 0.0
      %v4972 = vadd.f32 %v4970, %v4971
      %v4973 = vsel %vm4386, %v4749, 0.0
      %v4974 = vadd.f32 %v4972, %v4973
      %v4975 = vsel %vm4386, %v4750, 0.0
      %v4976 = vadd.f32 %v4974, %v4975
      %v4977 = vsel %vm4386, %v4751, 0.0
      %v4978 = vadd.f32 %v4976, %v4977
      %v4979 = vsel %vm4386, %v4752, 0.0
      %v4980 = vadd.f32 %v4978, %v4979
      %v4981 = vsel %vm4386, %v4753, 0.0
      %v4982 = vadd.f32 %v4980, %v4981
      %v4983 = vsel %vm4386, %v4754, 0.0
      %v4984 = vadd.f32 %v4982, %v4983
      %v4985 = vsel %vm4386, %v4755, 0.0
      %v4986 = vadd.f32 %v4984, %v4985
      %v4987 = vsel %vm4386, %v4756, 0.0
      %v4988 = vadd.f32 %v4986, %v4987
      %v4989 = vsel %vm4386, %v4757, 0.0
      %v4990 = vadd.f32 %v4988, %v4989
      %v4991 = vsel %vm4386, %v4758, 0.0
      %v4992 = vadd.f32 %v4990, %v4991
      %v4993 = vsel %vm4386, %v4759, 0.0
      %v4994 = vadd.f32 %v4992, %v4993
      %v4995 = vsel %vm4386, %v4760, 0.0
      %v4996 = vadd.f32 %v4994, %v4995
      %v4997 = vsel %vm4386, %v4761, 0.0
      %v4998 = vadd.f32 %v4996, %v4997
      %v4999 = vsel %vm4386, %v4762, 0.0
      %v5000 = vadd.f32 %v4998, %v4999
      %v5001 = vsel %vm4386, %v4763, 0.0
      %v5002 = vadd.f32 %v5000, %v5001
      %v5003 = vsel %vm4386, %v4764, 0.0
      %v5004 = vadd.f32 %v5002, %v5003
      %v5005 = vsel %vm4386, %v4765, 0.0
      %v5006 = vadd.f32 %v5004, %v5005
      %v5007 = vsel %vm4386, %v4766, 0.0
      %v5008 = vadd.f32 %v5006, %v5007
      %v5009 = vsel %vm4386, %v4767, 0.0
      %v5010 = vadd.f32 %v5008, %v5009
      %v5011 = vsel %vm4386, %v4768, 0.0
      %v5012 = vadd.f32 %v5010, %v5011
      %v5013 = vsel %vm4386, %v4769, 0.0
      %v5014 = vadd.f32 %v5012, %v5013
      %v5015 = vsel %vm4386, %v4770, 0.0
      %v5016 = vadd.f32 %v5014, %v5015
      %v5017 = vsel %vm4386, %v4771, 0.0
      %v5018 = vadd.f32 %v5016, %v5017
      %v5019 = vsel %vm4386, %v4772, 0.0
      %v5020 = vadd.f32 %v5018, %v5019
      %v5021 = vsel %vm4386, %v4773, 0.0
      %v5022 = vadd.f32 %v5020, %v5021
      %v5023 = vsel %vm4386, %v4774, 0.0
      %v5024 = vadd.f32 %v5022, %v5023
      %v5025 = vsel %vm4386, %v4775, 0.0
      %v5026 = vadd.f32 %v5024, %v5025
      %v5027 = vsel %vm4386, %v4776, 0.0
      %v5028 = vadd.f32 %v5026, %v5027
      %v5029 = vsel %vm4386, %v4777, 0.0
      %v5030 = vadd.f32 %v5028, %v5029
      %v5031 = vsel %vm4386, %v4778, 0.0
      %v5032 = vadd.f32 %v5030, %v5031
      %v5033 = vsel %vm4386, %v4779, 0.0
      %v5034 = vadd.f32 %v5032, %v5033
      %v5035 = vrot.slane %v5034, 4
      %v5036 = vadd.f32 %v5034, %v5035
      %v5037 = vrot.slane %v5036, 2
      %v5038 = vadd.f32 %v5036, %v5037
      %v5039 = vrot.slane %v5038, 1
      %v5040 = vadd.f32 %v5038, %v5039
      %v5041 = vadd.f32 %v4651, %v5040
      %5042 = vst.msk [vmem:[%s372 + $0x1] sm:$0x1] %vm4649, %v5041
      %s5043 = sadd.s32 %s22, %s23
      %s5044 = smul.u32 128, %s5043
      %p5045 = scmp.lt.s32.totalorder %s5044, 255
      %s5046 = scalar_select %p5045, %s5044, 255
      %s5047 = smul.addr %s5046, 4
      %s5048 = scalar_lea.vmem %s5, %s5047
      %p5049 = scmp.lt.s32.totalorder %s22, 1
      %s5050 = scalar_select %p5049, %s22, 1
      %s5051 = smul.addr %s5050, 2
      %s5052 = scalar_lea.vmem %s6, %s5051
      // Predicated region
      $region45: #{decoder_bottleneck_forward.5} parent=39 // pred_check
        %p5053 = pneg %p173
      $region46: #{decoder_bottleneck_forward.5} parent=39 // pred_check_branch
        %5055 = sbr.rel (%p5053) target = $region48
      $region47: #{decoder_bottleneck_forward.5} parent=39 // pred_region
        %s5056 = sadd.s32 %s22, %s23
        %s5057 = smul.u32 128, %s5056
      $region48: #{decoder_bottleneck_forward.5} parent=39 // pred_fallthru
        _
      // Predicated region
      $region49: #{decoder_bottleneck_forward.5} parent=39 // pred_check
        %p5058 = pneg %p199
      $region50: #{decoder_bottleneck_forward.5} parent=39 // pred_check_branch
        %5060 = sbr.rel (%p5058) target = $region52
      $region51: #{decoder_bottleneck_forward.5} parent=39 // pred_region
        _
      $region52: #{decoder_bottleneck_forward.5} parent=39 // pred_fallthru
        _
    $region40: #{decoder_bottleneck_forward.5} parent=5 // pred_fallthru
      _
    %p5061 = scmp.le.s32.totalorder 2, %s13
    // Predicated region
    $region53: #{decoder_bottleneck_forward.5} parent=5 // pred_check
      %p5062 = pneg %p5061
    $region54: #{decoder_bottleneck_forward.5} parent=5 // pred_check_branch
      %5064 = sbr.rel (%p5062) target = $region56
    $region55: #{decoder_bottleneck_forward.5} parent=5 // pred_region
      %s5065 = ssub.s32 %s13, 2
      // Predicated region
      $region57: #{decoder_bottleneck_forward.5} parent=55 // pred_check
        %p5066 = pneg %p179
      $region58: #{decoder_bottleneck_forward.5} parent=55 // pred_check_branch
        %5068 = sbr.rel (%p5066) target = $region60
      $region59: #{decoder_bottleneck_forward.5} parent=55 // pred_region
        %s5069 = sadd.s32 %s24, %s25
        %s5070 = smul.u32 128, %s5069
        %p5071 = scmp.lt.s32.totalorder %s5070, 255
        %s5072 = scalar_select %p5071, %s5070, 255
        %s5073 = smul.addr %s5072, 4
        %s5074 = scalar_lea.vmem %s5, %s5073
      $region60: #{decoder_bottleneck_forward.5} parent=55 // pred_fallthru
        _
      // Predicated region
      $region61: #{decoder_bottleneck_forward.5} parent=55 // pred_check
        %p5075 = pneg %p205
      $region62: #{decoder_bottleneck_forward.5} parent=55 // pred_check_branch
        %5077 = sbr.rel (%p5075) target = $region64
      $region63: #{decoder_bottleneck_forward.5} parent=55 // pred_region
        %p5078 = scmp.lt.s32.totalorder %s24, 1
        %s5079 = scalar_select %p5078, %s24, 1
        %s5080 = smul.addr %s5079, 2
        %s5081 = scalar_lea.vmem %s6, %s5080
      $region64: #{decoder_bottleneck_forward.5} parent=55 // pred_fallthru
        _
    $region56: #{decoder_bottleneck_forward.5} parent=5 // pred_fallthru
      _
  $region6: #{decoder_bottleneck_forward.5} parent=0 // loop_footer
    %s17 = sadd.s32 1, %s13
  $region7: #{decoder_bottleneck_forward.5} parent=0 // loop_footer_branch
    %12 = sbr.rel target = $region3
  $region8: #{decoder_bottleneck_forward.5} parent=0 // loop_exit
    _

// kernel: decoder_bottleneck_forward.7
$region0: #{decoder_bottleneck_forward.7}
  #allocation0 [shape = 'u32[]', space=smem, size = 0x4, offset = 0x4, fixed_abs, tag = 'smem constant byte address 0x4 - core index']
  #allocation1 [shape = 'u32[72,128]{1,0:T(1,128)}', space=vmem, size = 0x9000, scoped, tag = 'internal scratch']
  %s0 = inlined_call_operand.vmem [shape: bf16[8192,8], index: 0, kind: input, shape index: {}]
  %s1 = inlined_call_operand.vmem [shape: f32[1,8], index: 1, kind: input, shape index: {}]
  %s2 = inlined_call_operand.vmem [shape: f32[1,8], index: 2, kind: input, shape index: {}]
  %s3 = inlined_call_operand.vmem [shape: f32[8192,8], index: 3, kind: output, shape index: {}]
  %s4 = sld [smem:[#allocation0]]
  $region45: #{decoder_bottleneck_forward.7} parent=0
    _
  %s6 = ssub.s32 1, %s4
  %s7 = scalar_select 0, %s6, %s4
  loop: start=0, step=1, limit=10
  $region2: #{decoder_bottleneck_forward.7} parent=0 // loop_pre_header
    _
  $region3: #{decoder_bottleneck_forward.7} parent=0 // loop_header
    %s9 = sphi 0, %s13
    %p10 = scmp.ge.s32.totalorder %s9, 10
    %s19 = sphi 0, %s21
    %s22 = sphi 0, %s19
    %s23 = sphi 0, %s22
    %s39 = sphi 0, %s23
    %s43 = sphi 0, %s43
    %s45 = sphi 0, %s43
    %s46 = sphi 0, %s45
    %s60 = sphi 0, %s46
    %s64 = sphi 0, %s64
    %s66 = sphi 0, %s64
    %s67 = sphi 0, %s66
    %s81 = sphi 0, %s67
    %s87 = sphi 0, %s89
    %s90 = sphi 0, %s87
    %s91 = sphi 0, %s90
    %s107 = sphi 0, %s91
  $region4: #{decoder_bottleneck_forward.7} parent=0 // loop_header_branch
    %12 = sbr.rel (%p10) target = $region8
  $region5: #{decoder_bottleneck_forward.7} parent=0 // loop_body
    %s14 = ssub.s32 %s9, 1
    %s15 = ssub.s32 %s9, 2
    %s16 = sadd.s32 %s9, 1
    %s17 = ssub.s32 %s9, %s16
    %p18 = scmp.eq.s32.totalorder %s17, 0
    %s20 = sadd.s32 %s19, 1
    %s21 = scalar_select %p18, %s19, %s20
    %p24 = pneg %p18
    %p25 = scmp.eq.s32.totalorder %s9, 7
    %p26 = por %p24, %p25
    %p27 = scmp.ne.s32.totalorder %s19, %s22
    %p28 = scmp.eq.s32.totalorder %s9, 0
    %p29 = por %p27, %p28
    %p30 = scmp.ne.s32.totalorder %s19, %s22
    %p31 = scmp.eq.s32.totalorder %s14, 7
    %p32 = por %p30, %p31
    %p33 = scmp.ne.s32.totalorder %s22, %s23
    %p34 = scmp.eq.s32.totalorder %s14, 0
    %p35 = por %p33, %p34
    %p36 = scmp.ne.s32.totalorder %s22, %s23
    %p37 = scmp.eq.s32.totalorder %s15, 7
    %p38 = por %p36, %p37
    %p40 = scmp.ne.s32.totalorder %s23, %s39
    %p41 = scmp.eq.s32.totalorder %s15, 0
    %p42 = por %p40, %p41
    %s44 = sadd.s32 %s43, 1
    %p47 = scmp.eq.s32.totalorder %s9, 7
    %p48 = scmp.ne.s32.totalorder %s43, %s45
    %p49 = scmp.eq.s32.totalorder %s9, 0
    %p50 = por %p48, %p49
    %p51 = scmp.ne.s32.totalorder %s43, %s45
    %p52 = scmp.eq.s32.totalorder %s14, 7
    %p53 = por %p51, %p52
    %p54 = scmp.ne.s32.totalorder %s45, %s46
    %p55 = scmp.eq.s32.totalorder %s14, 0
    %p56 = por %p54, %p55
    %p57 = scmp.ne.s32.totalorder %s45, %s46
    %p58 = scmp.eq.s32.totalorder %s15, 7
    %p59 = por %p57, %p58
    %p61 = scmp.ne.s32.totalorder %s46, %s60
    %p62 = scmp.eq.s32.totalorder %s15, 0
    %p63 = por %p61, %p62
    %s65 = sadd.s32 %s64, 1
    %p68 = scmp.eq.s32.totalorder %s9, 7
    %p69 = scmp.ne.s32.totalorder %s64, %s66
    %p70 = scmp.eq.s32.totalorder %s9, 0
    %p71 = por %p69, %p70
    %p72 = scmp.ne.s32.totalorder %s64, %s66
    %p73 = scmp.eq.s32.totalorder %s14, 7
    %p74 = por %p72, %p73
    %p75 = scmp.ne.s32.totalorder %s66, %s67
    %p76 = scmp.eq.s32.totalorder %s14, 0
    %p77 = por %p75, %p76
    %p78 = scmp.ne.s32.totalorder %s66, %s67
    %p79 = scmp.eq.s32.totalorder %s15, 7
    %p80 = por %p78, %p79
    %p82 = scmp.ne.s32.totalorder %s67, %s81
    %p83 = scmp.eq.s32.totalorder %s15, 0
    %p84 = por %p82, %p83
    %s85 = ssub.s32 %s9, %s16
    %p86 = scmp.eq.s32.totalorder %s85, 0
    %s88 = sadd.s32 %s87, 1
    %s89 = scalar_select %p86, %s87, %s88
    %p92 = pneg %p86
    %p93 = scmp.eq.s32.totalorder %s9, 7
    %p94 = por %p92, %p93
    %p95 = scmp.ne.s32.totalorder %s87, %s90
    %p96 = scmp.eq.s32.totalorder %s9, 0
    %p97 = por %p95, %p96
    %p98 = scmp.ne.s32.totalorder %s87, %s90
    %p99 = scmp.eq.s32.totalorder %s14, 7
    %p100 = por %p98, %p99
    %p101 = scmp.ne.s32.totalorder %s90, %s91
    %p102 = scmp.eq.s32.totalorder %s14, 0
    %p103 = por %p101, %p102
    %p104 = scmp.ne.s32.totalorder %s90, %s91
    %p105 = scmp.eq.s32.totalorder %s15, 7
    %p106 = por %p104, %p105
    %p108 = scmp.ne.s32.totalorder %s91, %s107
    %p109 = scmp.eq.s32.totalorder %s15, 0
    %p110 = por %p108, %p109
    %p111 = scmp.le.s32.totalorder 1, %s9
    %p112 = scmp.lt.s32.totalorder %s9, 9
    %p113 = pnand %p111, %p112
    %p114 = pneg %p113
    // Predicated region
    $region9: #{decoder_bottleneck_forward.7} parent=5 // pred_check
      _
    $region10: #{decoder_bottleneck_forward.7} parent=5 // pred_check_branch
      %116 = sbr.rel (%p113) target = $region12
    $region11: #{decoder_bottleneck_forward.7} parent=5 // pred_region
      %s117 = ssub.s32 %s9, 1
      // Predicated region
      $region13: #{decoder_bottleneck_forward.7} parent=11 // pred_check
        %p118 = pneg %p56
      $region14: #{decoder_bottleneck_forward.7} parent=11 // pred_check_branch
        %120 = sbr.rel (%p118) target = $region16
      $region15: #{decoder_bottleneck_forward.7} parent=11 // pred_region
        _
      $region16: #{decoder_bottleneck_forward.7} parent=11 // pred_fallthru
        _
      // Predicated region
      $region17: #{decoder_bottleneck_forward.7} parent=11 // pred_check
        %p121 = pneg %p77
      $region18: #{decoder_bottleneck_forward.7} parent=11 // pred_check_branch
        %123 = sbr.rel (%p121) target = $region20
      $region19: #{decoder_bottleneck_forward.7} parent=11 // pred_region
        _
      $region20: #{decoder_bottleneck_forward.7} parent=11 // pred_fallthru
        _
    $region12: #{decoder_bottleneck_forward.7} parent=5 // pred_fallthru
      _
    %p124 = scmp.lt.s32.totalorder %s9, 8
    // Predicated region
    $region21: #{decoder_bottleneck_forward.7} parent=5 // pred_check
      %p125 = pneg %p124
    $region22: #{decoder_bottleneck_forward.7} parent=5 // pred_check_branch
      %127 = sbr.rel (%p125) target = $region24
    $region23: #{decoder_bottleneck_forward.7} parent=5 // pred_region
      // Predicated region
      $region25: #{decoder_bottleneck_forward.7} parent=23 // pred_check
        %p128 = pneg %p29
      $region26: #{decoder_bottleneck_forward.7} parent=23 // pred_check_branch
        %130 = sbr.rel (%p128) target = $region28
      $region27: #{decoder_bottleneck_forward.7} parent=23 // pred_region
        %s131 = smul.u32 128, %s9
        %p132 = scmp.lt.s32.totalorder %s131, 1023
        %s133 = scalar_select %p132, %s131, 1023
        %s134 = smul.addr %s133, 4
        %s135 = scalar_lea.vmem %s0, %s134
        %s136 = smul.u32 128, %s9
      $region28: #{decoder_bottleneck_forward.7} parent=23 // pred_fallthru
        _
    $region24: #{decoder_bottleneck_forward.7} parent=5 // pred_fallthru
      _
    %p137 = scmp.le.s32.totalorder 1, %s9
    %p138 = scmp.lt.s32.totalorder %s9, 9
    %p139 = pnand %p137, %p138
    %p140 = pneg %p139
    // Predicated region
    $region29: #{decoder_bottleneck_forward.7} parent=5 // pred_check
      _
    $region30: #{decoder_bottleneck_forward.7} parent=5 // pred_check_branch
      %142 = sbr.rel (%p139) target = $region32
    $region31: #{decoder_bottleneck_forward.7} parent=5 // pred_region
      %s143 = ssub.s32 %s9, 1
      %s144 = smul.u32 128, %s14
      %p145 = scmp.lt.s32.totalorder %s144, 1023
      %s146 = scalar_select %p145, %s144, 1023
      %s147 = smul.addr %s146, 4
      %s148 = scalar_lea.vmem %s0, %s147
      %p149 = pneg %p35
      %p150 = pneg %p32
      %p151 = pneg %p56
      %p152 = pneg %p53
      %p153 = pneg %p77
      %p154 = pneg %p74
      %p155 = pneg %p103
      %p156 = pneg %p100
      %s157 = smul.u32 128, %s14
      %p158 = scmp.lt.s32.totalorder %s157, 1023
      %s159 = scalar_select %p158, %s157, 1023
      %s160 = smul.addr %s159, 8
      %s161 = scalar_lea.vmem %s3, %s160
      %s162 = smul.u32 128, %s14
      %p163 = scmp.lt.s32.totalorder %s162, 1023
      %s164 = scalar_select %p163, %s162, 1023
      %s165 = smul.addr %s164, 4
      %s166 = scalar_lea.vmem %s0, %s165
      %s167 = smul.u32 128, %s14
      %s168 = smul.u32 128, %s14
      %p169 = scmp.lt.s32.totalorder %s168, 1023
      %s170 = scalar_select %p169, %s168, 1023
      %s171 = smul.addr %s170, 8
      %s172 = scalar_lea.vmem %s3, %s171
      %s173 = smul.u32 128, %s14
      %v174 = vld [vmem:[%s166] sm:$0xf]
      %v175 = vld [vmem:[%s166 + $0x4] sm:$0xf]
      %v176 = vld [vmem:[%s166 + $0x8] sm:$0xf]
      %v177 = vld [vmem:[%s166 + $0xc] sm:$0xf]
      %v178 = vld [vmem:[%s166 + $0x10] sm:$0xf]
      %v179 = vld [vmem:[%s166 + $0x14] sm:$0xf]
      %v180 = vld [vmem:[%s166 + $0x18] sm:$0xf]
      %v181 = vld [vmem:[%s166 + $0x1c] sm:$0xf]
      %v182 = vld [vmem:[%s166 + $0x20] sm:$0xf]
      %v183 = vld [vmem:[%s166 + $0x24] sm:$0xf]
      %v184 = vld [vmem:[%s166 + $0x28] sm:$0xf]
      %v185 = vld [vmem:[%s166 + $0x2c] sm:$0xf]
      %v186 = vld [vmem:[%s166 + $0x30] sm:$0xf]
      %v187 = vld [vmem:[%s166 + $0x34] sm:$0xf]
      %v188 = vld [vmem:[%s166 + $0x38] sm:$0xf]
      %v189 = vld [vmem:[%s166 + $0x3c] sm:$0xf]
      %v190 = vld [vmem:[%s166 + $0x40] sm:$0xf]
      %v191 = vld [vmem:[%s166 + $0x44] sm:$0xf]
      %v192 = vld [vmem:[%s166 + $0x48] sm:$0xf]
      %v193 = vld [vmem:[%s166 + $0x4c] sm:$0xf]
      %v194 = vld [vmem:[%s166 + $0x50] sm:$0xf]
      %v195 = vld [vmem:[%s166 + $0x54] sm:$0xf]
      %v196 = vld [vmem:[%s166 + $0x58] sm:$0xf]
      %v197 = vld [vmem:[%s166 + $0x5c] sm:$0xf]
      %v198 = vld [vmem:[%s166 + $0x60] sm:$0xf]
      %v199 = vld [vmem:[%s166 + $0x64] sm:$0xf]
      %v200 = vld [vmem:[%s166 + $0x68] sm:$0xf]
      %v201 = vld [vmem:[%s166 + $0x6c] sm:$0xf]
      %v202 = vld [vmem:[%s166 + $0x70] sm:$0xf]
      %v203 = vld [vmem:[%s166 + $0x74] sm:$0xf]
      %v204 = vld [vmem:[%s166 + $0x78] sm:$0xf]
      %v205 = vld [vmem:[%s166 + $0x7c] sm:$0xf]
      %v206 = vld [vmem:[%s166 + $0x80] sm:$0xf]
      %v207 = vld [vmem:[%s166 + $0x84] sm:$0xf]
      %v208 = vld [vmem:[%s166 + $0x88] sm:$0xf]
      %v209 = vld [vmem:[%s166 + $0x8c] sm:$0xf]
      %v210 = vld [vmem:[%s166 + $0x90] sm:$0xf]
      %v211 = vld [vmem:[%s166 + $0x94] sm:$0xf]
      %v212 = vld [vmem:[%s166 + $0x98] sm:$0xf]
      %v213 = vld [vmem:[%s166 + $0x9c] sm:$0xf]
      %v214 = vld [vmem:[%s166 + $0xa0] sm:$0xf]
      %v215 = vld [vmem:[%s166 + $0xa4] sm:$0xf]
      %v216 = vld [vmem:[%s166 + $0xa8] sm:$0xf]
      %v217 = vld [vmem:[%s166 + $0xac] sm:$0xf]
      %v218 = vld [vmem:[%s166 + $0xb0] sm:$0xf]
      %v219 = vld [vmem:[%s166 + $0xb4] sm:$0xf]
      %v220 = vld [vmem:[%s166 + $0xb8] sm:$0xf]
      %v221 = vld [vmem:[%s166 + $0xbc] sm:$0xf]
      %v222 = vld [vmem:[%s166 + $0xc0] sm:$0xf]
      %v223 = vld [vmem:[%s166 + $0xc4] sm:$0xf]
      %v224 = vld [vmem:[%s166 + $0xc8] sm:$0xf]
      %v225 = vld [vmem:[%s166 + $0xcc] sm:$0xf]
      %v226 = vld [vmem:[%s166 + $0xd0] sm:$0xf]
      %v227 = vld [vmem:[%s166 + $0xd4] sm:$0xf]
      %v228 = vld [vmem:[%s166 + $0xd8] sm:$0xf]
      %v229 = vld [vmem:[%s166 + $0xdc] sm:$0xf]
      %v230 = vld [vmem:[%s166 + $0xe0] sm:$0xf]
      %v231 = vld [vmem:[%s166 + $0xe4] sm:$0xf]
      %v232 = vld [vmem:[%s166 + $0xe8] sm:$0xf]
      %v233 = vld [vmem:[%s166 + $0xec] sm:$0xf]
      %v234 = vld [vmem:[%s166 + $0xf0] sm:$0xf]
      %v235 = vld [vmem:[%s166 + $0xf4] sm:$0xf]
      %v236 = vld [vmem:[%s166 + $0xf8] sm:$0xf]
      %v237 = vld [vmem:[%s166 + $0xfc] sm:$0xf]
      %v238 = vld [vmem:[%s166 + $0x100] sm:$0xf]
      %v239 = vld [vmem:[%s166 + $0x104] sm:$0xf]
      %v240 = vld [vmem:[%s166 + $0x108] sm:$0xf]
      %v241 = vld [vmem:[%s166 + $0x10c] sm:$0xf]
      %v242 = vld [vmem:[%s166 + $0x110] sm:$0xf]
      %v243 = vld [vmem:[%s166 + $0x114] sm:$0xf]
      %v244 = vld [vmem:[%s166 + $0x118] sm:$0xf]
      %v245 = vld [vmem:[%s166 + $0x11c] sm:$0xf]
      %v246 = vld [vmem:[%s166 + $0x120] sm:$0xf]
      %v247 = vld [vmem:[%s166 + $0x124] sm:$0xf]
      %v248 = vld [vmem:[%s166 + $0x128] sm:$0xf]
      %v249 = vld [vmem:[%s166 + $0x12c] sm:$0xf]
      %v250 = vld [vmem:[%s166 + $0x130] sm:$0xf]
      %v251 = vld [vmem:[%s166 + $0x134] sm:$0xf]
      %v252 = vld [vmem:[%s166 + $0x138] sm:$0xf]
      %v253 = vld [vmem:[%s166 + $0x13c] sm:$0xf]
      %v254 = vld [vmem:[%s166 + $0x140] sm:$0xf]
      %v255 = vld [vmem:[%s166 + $0x144] sm:$0xf]
      %v256 = vld [vmem:[%s166 + $0x148] sm:$0xf]
      %v257 = vld [vmem:[%s166 + $0x14c] sm:$0xf]
      %v258 = vld [vmem:[%s166 + $0x150] sm:$0xf]
      %v259 = vld [vmem:[%s166 + $0x154] sm:$0xf]
      %v260 = vld [vmem:[%s166 + $0x158] sm:$0xf]
      %v261 = vld [vmem:[%s166 + $0x15c] sm:$0xf]
      %v262 = vld [vmem:[%s166 + $0x160] sm:$0xf]
      %v263 = vld [vmem:[%s166 + $0x164] sm:$0xf]
      %v264 = vld [vmem:[%s166 + $0x168] sm:$0xf]
      %v265 = vld [vmem:[%s166 + $0x16c] sm:$0xf]
      %v266 = vld [vmem:[%s166 + $0x170] sm:$0xf]
      %v267 = vld [vmem:[%s166 + $0x174] sm:$0xf]
      %v268 = vld [vmem:[%s166 + $0x178] sm:$0xf]
      %v269 = vld [vmem:[%s166 + $0x17c] sm:$0xf]
      %v270 = vld [vmem:[%s166 + $0x180] sm:$0xf]
      %v271 = vld [vmem:[%s166 + $0x184] sm:$0xf]
      %v272 = vld [vmem:[%s166 + $0x188] sm:$0xf]
      %v273 = vld [vmem:[%s166 + $0x18c] sm:$0xf]
      %v274 = vld [vmem:[%s166 + $0x190] sm:$0xf]
      %v275 = vld [vmem:[%s166 + $0x194] sm:$0xf]
      %v276 = vld [vmem:[%s166 + $0x198] sm:$0xf]
      %v277 = vld [vmem:[%s166 + $0x19c] sm:$0xf]
      %v278 = vld [vmem:[%s166 + $0x1a0] sm:$0xf]
      %v279 = vld [vmem:[%s166 + $0x1a4] sm:$0xf]
      %v280 = vld [vmem:[%s166 + $0x1a8] sm:$0xf]
      %v281 = vld [vmem:[%s166 + $0x1ac] sm:$0xf]
      %v282 = vld [vmem:[%s166 + $0x1b0] sm:$0xf]
      %v283 = vld [vmem:[%s166 + $0x1b4] sm:$0xf]
      %v284 = vld [vmem:[%s166 + $0x1b8] sm:$0xf]
      %v285 = vld [vmem:[%s166 + $0x1bc] sm:$0xf]
      %v286 = vld [vmem:[%s166 + $0x1c0] sm:$0xf]
      %v287 = vld [vmem:[%s166 + $0x1c4] sm:$0xf]
      %v288 = vld [vmem:[%s166 + $0x1c8] sm:$0xf]
      %v289 = vld [vmem:[%s166 + $0x1cc] sm:$0xf]
      %v290 = vld [vmem:[%s166 + $0x1d0] sm:$0xf]
      %v291 = vld [vmem:[%s166 + $0x1d4] sm:$0xf]
      %v292 = vld [vmem:[%s166 + $0x1d8] sm:$0xf]
      %v293 = vld [vmem:[%s166 + $0x1dc] sm:$0xf]
      %v294 = vld [vmem:[%s166 + $0x1e0] sm:$0xf]
      %v295 = vld [vmem:[%s166 + $0x1e4] sm:$0xf]
      %v296 = vld [vmem:[%s166 + $0x1e8] sm:$0xf]
      %v297 = vld [vmem:[%s166 + $0x1ec] sm:$0xf]
      %v298 = vld [vmem:[%s166 + $0x1f0] sm:$0xf]
      %v299 = vld [vmem:[%s166 + $0x1f4] sm:$0xf]
      %v300 = vld [vmem:[%s166 + $0x1f8] sm:$0xf]
      %v301 = vld [vmem:[%s166 + $0x1fc] sm:$0xf]
      %v302 = vunpack.c.l.bf16 %v174
      %v303 = vunpack.c.l.bf16 %v175
      %v304 = vunpack.c.l.bf16 %v176
      %v305 = vunpack.c.l.bf16 %v177
      %v306 = vunpack.c.l.bf16 %v178
      %v307 = vunpack.c.l.bf16 %v179
      %v308 = vunpack.c.l.bf16 %v180
      %v309 = vunpack.c.l.bf16 %v181
      %v310 = vunpack.c.l.bf16 %v182
      %v311 = vunpack.c.l.bf16 %v183
      %v312 = vunpack.c.l.bf16 %v184
      %v313 = vunpack.c.l.bf16 %v185
      %v314 = vunpack.c.l.bf16 %v186
      %v315 = vunpack.c.l.bf16 %v187
      %v316 = vunpack.c.l.bf16 %v188
      %v317 = vunpack.c.l.bf16 %v189
      %v318 = vunpack.c.l.bf16 %v190
      %v319 = vunpack.c.l.bf16 %v191
      %v320 = vunpack.c.l.bf16 %v192
      %v321 = vunpack.c.l.bf16 %v193
      %v322 = vunpack.c.l.bf16 %v194
      %v323 = vunpack.c.l.bf16 %v195
      %v324 = vunpack.c.l.bf16 %v196
      %v325 = vunpack.c.l.bf16 %v197
      %v326 = vunpack.c.l.bf16 %v198
      %v327 = vunpack.c.l.bf16 %v199
      %v328 = vunpack.c.l.bf16 %v200
      %v329 = vunpack.c.l.bf16 %v201
      %v330 = vunpack.c.l.bf16 %v202
      %v331 = vunpack.c.l.bf16 %v203
      %v332 = vunpack.c.l.bf16 %v204
      %v333 = vunpack.c.l.bf16 %v205
      %v334 = vunpack.c.l.bf16 %v206
      %v335 = vunpack.c.l.bf16 %v207
      %v336 = vunpack.c.l.bf16 %v208
      %v337 = vunpack.c.l.bf16 %v209
      %v338 = vunpack.c.l.bf16 %v210
      %v339 = vunpack.c.l.bf16 %v211
      %v340 = vunpack.c.l.bf16 %v212
      %v341 = vunpack.c.l.bf16 %v213
      %v342 = vunpack.c.l.bf16 %v214
      %v343 = vunpack.c.l.bf16 %v215
      %v344 = vunpack.c.l.bf16 %v216
      %v345 = vunpack.c.l.bf16 %v217
      %v346 = vunpack.c.l.bf16 %v218
      %v347 = vunpack.c.l.bf16 %v219
      %v348 = vunpack.c.l.bf16 %v220
      %v349 = vunpack.c.l.bf16 %v221
      %v350 = vunpack.c.l.bf16 %v222
      %v351 = vunpack.c.l.bf16 %v223
      %v352 = vunpack.c.l.bf16 %v224
      %v353 = vunpack.c.l.bf16 %v225
      %v354 = vunpack.c.l.bf16 %v226
      %v355 = vunpack.c.l.bf16 %v227
      %v356 = vunpack.c.l.bf16 %v228
      %v357 = vunpack.c.l.bf16 %v229
      %v358 = vunpack.c.l.bf16 %v230
      %v359 = vunpack.c.l.bf16 %v231
      %v360 = vunpack.c.l.bf16 %v232
      %v361 = vunpack.c.l.bf16 %v233
      %v362 = vunpack.c.l.bf16 %v234
      %v363 = vunpack.c.l.bf16 %v235
      %v364 = vunpack.c.l.bf16 %v236
      %v365 = vunpack.c.l.bf16 %v237
      %v366 = vunpack.c.l.bf16 %v238
      %v367 = vunpack.c.l.bf16 %v239
      %v368 = vunpack.c.l.bf16 %v240
      %v369 = vunpack.c.l.bf16 %v241
      %v370 = vunpack.c.l.bf16 %v242
      %v371 = vunpack.c.l.bf16 %v243
      %v372 = vunpack.c.l.bf16 %v244
      %v373 = vunpack.c.l.bf16 %v245
      %v374 = vunpack.c.l.bf16 %v246
      %v375 = vunpack.c.l.bf16 %v247
      %v376 = vunpack.c.l.bf16 %v248
      %v377 = vunpack.c.l.bf16 %v249
      %v378 = vunpack.c.l.bf16 %v250
      %v379 = vunpack.c.l.bf16 %v251
      %v380 = vunpack.c.l.bf16 %v252
      %v381 = vunpack.c.l.bf16 %v253
      %v382 = vunpack.c.l.bf16 %v254
      %v383 = vunpack.c.l.bf16 %v255
      %v384 = vunpack.c.l.bf16 %v256
      %v385 = vunpack.c.l.bf16 %v257
      %v386 = vunpack.c.l.bf16 %v258
      %v387 = vunpack.c.l.bf16 %v259
      %v388 = vunpack.c.l.bf16 %v260
      %v389 = vunpack.c.l.bf16 %v261
      %v390 = vunpack.c.l.bf16 %v262
      %v391 = vunpack.c.l.bf16 %v263
      %v392 = vunpack.c.l.bf16 %v264
      %v393 = vunpack.c.l.bf16 %v265
      %v394 = vunpack.c.l.bf16 %v266
      %v395 = vunpack.c.l.bf16 %v267
      %v396 = vunpack.c.l.bf16 %v268
      %v397 = vunpack.c.l.bf16 %v269
      %v398 = vunpack.c.l.bf16 %v270
      %v399 = vunpack.c.l.bf16 %v271
      %v400 = vunpack.c.l.bf16 %v272
      %v401 = vunpack.c.l.bf16 %v273
      %v402 = vunpack.c.l.bf16 %v274
      %v403 = vunpack.c.l.bf16 %v275
      %v404 = vunpack.c.l.bf16 %v276
      %v405 = vunpack.c.l.bf16 %v277
      %v406 = vunpack.c.l.bf16 %v278
      %v407 = vunpack.c.l.bf16 %v279
      %v408 = vunpack.c.l.bf16 %v280
      %v409 = vunpack.c.l.bf16 %v281
      %v410 = vunpack.c.l.bf16 %v282
      %v411 = vunpack.c.l.bf16 %v283
      %v412 = vunpack.c.l.bf16 %v284
      %v413 = vunpack.c.l.bf16 %v285
      %v414 = vunpack.c.l.bf16 %v286
      %v415 = vunpack.c.l.bf16 %v287
      %v416 = vunpack.c.l.bf16 %v288
      %v417 = vunpack.c.l.bf16 %v289
      %v418 = vunpack.c.l.bf16 %v290
      %v419 = vunpack.c.l.bf16 %v291
      %v420 = vunpack.c.l.bf16 %v292
      %v421 = vunpack.c.l.bf16 %v293
      %v422 = vunpack.c.l.bf16 %v294
      %v423 = vunpack.c.l.bf16 %v295
      %v424 = vunpack.c.l.bf16 %v296
      %v425 = vunpack.c.l.bf16 %v297
      %v426 = vunpack.c.l.bf16 %v298
      %v427 = vunpack.c.l.bf16 %v299
      %v428 = vunpack.c.l.bf16 %v300
      %v429 = vunpack.c.l.bf16 %v301
      %v430 = vld [vmem:[%s1] sm:$0x1]
      %v432 = vperm.slane %v430, 0
      %v434 = vmul.f32 %v302, %v432
      %v435 = vmul.f32 %v303, %v432
      %v436 = vmul.f32 %v304, %v432
      %v437 = vmul.f32 %v305, %v432
      %v438 = vmul.f32 %v306, %v432
      %v439 = vmul.f32 %v307, %v432
      %v440 = vmul.f32 %v308, %v432
      %v441 = vmul.f32 %v309, %v432
      %v442 = vmul.f32 %v310, %v432
      %v443 = vmul.f32 %v311, %v432
      %v444 = vmul.f32 %v312, %v432
      %v445 = vmul.f32 %v313, %v432
      %v446 = vmul.f32 %v314, %v432
      %v447 = vmul.f32 %v315, %v432
      %v448 = vmul.f32 %v316, %v432
      %v449 = vmul.f32 %v317, %v432
      %v450 = vmul.f32 %v318, %v432
      %v451 = vmul.f32 %v319, %v432
      %v452 = vmul.f32 %v320, %v432
      %v453 = vmul.f32 %v321, %v432
      %v454 = vmul.f32 %v322, %v432
      %v455 = vmul.f32 %v323, %v432
      %v456 = vmul.f32 %v324, %v432
      %v457 = vmul.f32 %v325, %v432
      %v458 = vmul.f32 %v326, %v432
      %v459 = vmul.f32 %v327, %v432
      %v460 = vmul.f32 %v328, %v432
      %v461 = vmul.f32 %v329, %v432
      %v462 = vmul.f32 %v330, %v432
      %v463 = vmul.f32 %v331, %v432
      %v464 = vmul.f32 %v332, %v432
      %v465 = vmul.f32 %v333, %v432
      %v466 = vmul.f32 %v334, %v432
      %v467 = vmul.f32 %v335, %v432
      %v468 = vmul.f32 %v336, %v432
      %v469 = vmul.f32 %v337, %v432
      %v470 = vmul.f32 %v338, %v432
      %v471 = vmul.f32 %v339, %v432
      %v472 = vmul.f32 %v340, %v432
      %v473 = vmul.f32 %v341, %v432
      %v474 = vmul.f32 %v342, %v432
      %v475 = vmul.f32 %v343, %v432
      %v476 = vmul.f32 %v344, %v432
      %v477 = vmul.f32 %v345, %v432
      %v478 = vmul.f32 %v346, %v432
      %v479 = vmul.f32 %v347, %v432
      %v480 = vmul.f32 %v348, %v432
      %v481 = vmul.f32 %v349, %v432
      %v482 = vmul.f32 %v350, %v432
      %v483 = vmul.f32 %v351, %v432
      %v484 = vmul.f32 %v352, %v432
      %v485 = vmul.f32 %v353, %v432
      %v486 = vmul.f32 %v354, %v432
      %v487 = vmul.f32 %v355, %v432
      %v488 = vmul.f32 %v356, %v432
      %v489 = vmul.f32 %v357, %v432
      %v490 = vmul.f32 %v358, %v432
      %v491 = vmul.f32 %v359, %v432
      %v492 = vmul.f32 %v360, %v432
      %v493 = vmul.f32 %v361, %v432
      %v494 = vmul.f32 %v362, %v432
      %v495 = vmul.f32 %v363, %v432
      %v496 = vmul.f32 %v364, %v432
      %v497 = vmul.f32 %v365, %v432
      %v498 = vmul.f32 %v366, %v432
      %v499 = vmul.f32 %v367, %v432
      %v500 = vmul.f32 %v368, %v432
      %v501 = vmul.f32 %v369, %v432
      %v502 = vmul.f32 %v370, %v432
      %v503 = vmul.f32 %v371, %v432
      %v504 = vmul.f32 %v372, %v432
      %v505 = vmul.f32 %v373, %v432
      %v506 = vmul.f32 %v374, %v432
      %v507 = vmul.f32 %v375, %v432
      %v508 = vmul.f32 %v376, %v432
      %v509 = vmul.f32 %v377, %v432
      %v510 = vmul.f32 %v378, %v432
      %v511 = vmul.f32 %v379, %v432
      %v512 = vmul.f32 %v380, %v432
      %v513 = vmul.f32 %v381, %v432
      %v514 = vmul.f32 %v382, %v432
      %v515 = vmul.f32 %v383, %v432
      %v516 = vmul.f32 %v384, %v432
      %v517 = vmul.f32 %v385, %v432
      %v518 = vmul.f32 %v386, %v432
      %v519 = vmul.f32 %v387, %v432
      %v520 = vmul.f32 %v388, %v432
      %v521 = vmul.f32 %v389, %v432
      %v522 = vmul.f32 %v390, %v432
      %v523 = vmul.f32 %v391, %v432
      %v524 = vmul.f32 %v392, %v432
      %v525 = vmul.f32 %v393, %v432
      %v526 = vmul.f32 %v394, %v432
      %v527 = vmul.f32 %v395, %v432
      %v528 = vmul.f32 %v396, %v432
      %v529 = vmul.f32 %v397, %v432
      %v530 = vmul.f32 %v398, %v432
      %v531 = vmul.f32 %v399, %v432
      %v532 = vmul.f32 %v400, %v432
      %v533 = vmul.f32 %v401, %v432
      %v534 = vmul.f32 %v402, %v432
      %v535 = vmul.f32 %v403, %v432
      %v536 = vmul.f32 %v404, %v432
      %v537 = vmul.f32 %v405, %v432
      %v538 = vmul.f32 %v406, %v432
      %v539 = vmul.f32 %v407, %v432
      %v540 = vmul.f32 %v408, %v432
      %v541 = vmul.f32 %v409, %v432
      %v542 = vmul.f32 %v410, %v432
      %v543 = vmul.f32 %v411, %v432
      %v544 = vmul.f32 %v412, %v432
      %v545 = vmul.f32 %v413, %v432
      %v546 = vmul.f32 %v414, %v432
      %v547 = vmul.f32 %v415, %v432
      %v548 = vmul.f32 %v416, %v432
      %v549 = vmul.f32 %v417, %v432
      %v550 = vmul.f32 %v418, %v432
      %v551 = vmul.f32 %v419, %v432
      %v552 = vmul.f32 %v420, %v432
      %v553 = vmul.f32 %v421, %v432
      %v554 = vmul.f32 %v422, %v432
      %v555 = vmul.f32 %v423, %v432
      %v556 = vmul.f32 %v424, %v432
      %v557 = vmul.f32 %v425, %v432
      %v558 = vmul.f32 %v426, %v432
      %v559 = vmul.f32 %v427, %v432
      %v560 = vmul.f32 %v428, %v432
      %v561 = vmul.f32 %v429, %v432
      %v562 = vld [vmem:[%s2] sm:$0x1]
      %v564 = vperm.slane %v562, 0
      %v566 = vadd.f32 %v434, %v564
      %v567 = vadd.f32 %v435, %v564
      %v568 = vadd.f32 %v436, %v564
      %v569 = vadd.f32 %v437, %v564
      %v570 = vadd.f32 %v438, %v564
      %v571 = vadd.f32 %v439, %v564
      %v572 = vadd.f32 %v440, %v564
      %v573 = vadd.f32 %v441, %v564
      %v574 = vadd.f32 %v442, %v564
      %v575 = vadd.f32 %v443, %v564
      %v576 = vadd.f32 %v444, %v564
      %v577 = vadd.f32 %v445, %v564
      %v578 = vadd.f32 %v446, %v564
      %v579 = vadd.f32 %v447, %v564
      %v580 = vadd.f32 %v448, %v564
      %v581 = vadd.f32 %v449, %v564
      %v582 = vadd.f32 %v450, %v564
      %v583 = vadd.f32 %v451, %v564
      %v584 = vadd.f32 %v452, %v564
      %v585 = vadd.f32 %v453, %v564
      %v586 = vadd.f32 %v454, %v564
      %v587 = vadd.f32 %v455, %v564
      %v588 = vadd.f32 %v456, %v564
      %v589 = vadd.f32 %v457, %v564
      %v590 = vadd.f32 %v458, %v564
      %v591 = vadd.f32 %v459, %v564
      %v592 = vadd.f32 %v460, %v564
      %v593 = vadd.f32 %v461, %v564
      %v594 = vadd.f32 %v462, %v564
      %v595 = vadd.f32 %v463, %v564
      %v596 = vadd.f32 %v464, %v564
      %v597 = vadd.f32 %v465, %v564
      %v598 = vadd.f32 %v466, %v564
      %v599 = vadd.f32 %v467, %v564
      %v600 = vadd.f32 %v468, %v564
      %v601 = vadd.f32 %v469, %v564
      %v602 = vadd.f32 %v470, %v564
      %v603 = vadd.f32 %v471, %v564
      %v604 = vadd.f32 %v472, %v564
      %v605 = vadd.f32 %v473, %v564
      %v606 = vadd.f32 %v474, %v564
      %v607 = vadd.f32 %v475, %v564
      %v608 = vadd.f32 %v476, %v564
      %v609 = vadd.f32 %v477, %v564
      %v610 = vadd.f32 %v478, %v564
      %v611 = vadd.f32 %v479, %v564
      %v612 = vadd.f32 %v480, %v564
      %v613 = vadd.f32 %v481, %v564
      %v614 = vadd.f32 %v482, %v564
      %v615 = vadd.f32 %v483, %v564
      %v616 = vadd.f32 %v484, %v564
      %v617 = vadd.f32 %v485, %v564
      %v618 = vadd.f32 %v486, %v564
      %v619 = vadd.f32 %v487, %v564
      %v620 = vadd.f32 %v488, %v564
      %v621 = vadd.f32 %v489, %v564
      %v622 = vadd.f32 %v490, %v564
      %v623 = vadd.f32 %v491, %v564
      %v624 = vadd.f32 %v492, %v564
      %v625 = vadd.f32 %v493, %v564
      %v626 = vadd.f32 %v494, %v564
      %v627 = vadd.f32 %v495, %v564
      %v628 = vadd.f32 %v496, %v564
      %v629 = vadd.f32 %v497, %v564
      %v630 = vadd.f32 %v498, %v564
      %v631 = vadd.f32 %v499, %v564
      %v632 = vadd.f32 %v500, %v564
      %v633 = vadd.f32 %v501, %v564
      %v634 = vadd.f32 %v502, %v564
      %v635 = vadd.f32 %v503, %v564
      %v636 = vadd.f32 %v504, %v564
      %v637 = vadd.f32 %v505, %v564
      %v638 = vadd.f32 %v506, %v564
      %v639 = vadd.f32 %v507, %v564
      %v640 = vadd.f32 %v508, %v564
      %v641 = vadd.f32 %v509, %v564
      %v642 = vadd.f32 %v510, %v564
      %v643 = vadd.f32 %v511, %v564
      %v644 = vadd.f32 %v512, %v564
      %v645 = vadd.f32 %v513, %v564
      %v646 = vadd.f32 %v514, %v564
      %v647 = vadd.f32 %v515, %v564
      %v648 = vadd.f32 %v516, %v564
      %v649 = vadd.f32 %v517, %v564
      %v650 = vadd.f32 %v518, %v564
      %v651 = vadd.f32 %v519, %v564
      %v652 = vadd.f32 %v520, %v564
      %v653 = vadd.f32 %v521, %v564
      %v654 = vadd.f32 %v522, %v564
      %v655 = vadd.f32 %v523, %v564
      %v656 = vadd.f32 %v524, %v564
      %v657 = vadd.f32 %v525, %v564
      %v658 = vadd.f32 %v526, %v564
      %v659 = vadd.f32 %v527, %v564
      %v660 = vadd.f32 %v528, %v564
      %v661 = vadd.f32 %v529, %v564
      %v662 = vadd.f32 %v530, %v564
      %v663 = vadd.f32 %v531, %v564
      %v664 = vadd.f32 %v532, %v564
      %v665 = vadd.f32 %v533, %v564
      %v666 = vadd.f32 %v534, %v564
      %v667 = vadd.f32 %v535, %v564
      %v668 = vadd.f32 %v536, %v564
      %v669 = vadd.f32 %v537, %v564
      %v670 = vadd.f32 %v538, %v564
      %v671 = vadd.f32 %v539, %v564
      %v672 = vadd.f32 %v540, %v564
      %v673 = vadd.f32 %v541, %v564
      %v674 = vadd.f32 %v542, %v564
      %v675 = vadd.f32 %v543, %v564
      %v676 = vadd.f32 %v544, %v564
      %v677 = vadd.f32 %v545, %v564
      %v678 = vadd.f32 %v546, %v564
      %v679 = vadd.f32 %v547, %v564
      %v680 = vadd.f32 %v548, %v564
      %v681 = vadd.f32 %v549, %v564
      %v682 = vadd.f32 %v550, %v564
      %v683 = vadd.f32 %v551, %v564
      %v684 = vadd.f32 %v552, %v564
      %v685 = vadd.f32 %v553, %v564
      %v686 = vadd.f32 %v554, %v564
      %v687 = vadd.f32 %v555, %v564
      %v688 = vadd.f32 %v556, %v564
      %v689 = vadd.f32 %v557, %v564
      %v690 = vadd.f32 %v558, %v564
      %v691 = vadd.f32 %v559, %v564
      %v692 = vadd.f32 %v560, %v564
      %v693 = vadd.f32 %v561, %v564
      %v694 = vmax.f32 %v566, 0.0
      %v695 = vmax.f32 %v567, 0.0
      %v696 = vmax.f32 %v568, 0.0
      %v697 = vmax.f32 %v569, 0.0
      %v698 = vmax.f32 %v570, 0.0
      %v699 = vmax.f32 %v571, 0.0
      %v700 = vmax.f32 %v572, 0.0
      %v701 = vmax.f32 %v573, 0.0
      %v702 = vmax.f32 %v574, 0.0
      %v703 = vmax.f32 %v575, 0.0
      %v704 = vmax.f32 %v576, 0.0
      %v705 = vmax.f32 %v577, 0.0
      %v706 = vmax.f32 %v578, 0.0
      %v707 = vmax.f32 %v579, 0.0
      %v708 = vmax.f32 %v580, 0.0
      %v709 = vmax.f32 %v581, 0.0
      %v710 = vmax.f32 %v582, 0.0
      %v711 = vmax.f32 %v583, 0.0
      %v712 = vmax.f32 %v584, 0.0
      %v713 = vmax.f32 %v585, 0.0
      %v714 = vmax.f32 %v586, 0.0
      %v715 = vmax.f32 %v587, 0.0
      %v716 = vmax.f32 %v588, 0.0
      %v717 = vmax.f32 %v589, 0.0
      %v718 = vmax.f32 %v590, 0.0
      %v719 = vmax.f32 %v591, 0.0
      %v720 = vmax.f32 %v592, 0.0
      %v721 = vmax.f32 %v593, 0.0
      %v722 = vmax.f32 %v594, 0.0
      %v723 = vmax.f32 %v595, 0.0
      %v724 = vmax.f32 %v596, 0.0
      %v725 = vmax.f32 %v597, 0.0
      %v726 = vmax.f32 %v598, 0.0
      %v727 = vmax.f32 %v599, 0.0
      %v728 = vmax.f32 %v600, 0.0
      %v729 = vmax.f32 %v601, 0.0
      %v730 = vmax.f32 %v602, 0.0
      %v731 = vmax.f32 %v603, 0.0
      %v732 = vmax.f32 %v604, 0.0
      %v733 = vmax.f32 %v605, 0.0
      %v734 = vmax.f32 %v606, 0.0
      %v735 = vmax.f32 %v607, 0.0
      %v736 = vmax.f32 %v608, 0.0
      %v737 = vmax.f32 %v609, 0.0
      %v738 = vmax.f32 %v610, 0.0
      %v739 = vmax.f32 %v611, 0.0
      %v740 = vmax.f32 %v612, 0.0
      %v741 = vmax.f32 %v613, 0.0
      %v742 = vmax.f32 %v614, 0.0
      %v743 = vmax.f32 %v615, 0.0
      %v744 = vmax.f32 %v616, 0.0
      %v745 = vmax.f32 %v617, 0.0
      %v746 = vmax.f32 %v618, 0.0
      %v747 = vmax.f32 %v619, 0.0
      %v748 = vmax.f32 %v620, 0.0
      %v749 = vmax.f32 %v621, 0.0
      %v750 = vmax.f32 %v622, 0.0
      %v751 = vmax.f32 %v623, 0.0
      %v752 = vmax.f32 %v624, 0.0
      %v753 = vmax.f32 %v625, 0.0
      %v754 = vmax.f32 %v626, 0.0
      %v755 = vmax.f32 %v627, 0.0
      %v756 = vmax.f32 %v628, 0.0
      %v757 = vmax.f32 %v629, 0.0
      %v758 = vmax.f32 %v630, 0.0
      %v759 = vmax.f32 %v631, 0.0
      %v760 = vmax.f32 %v632, 0.0
      %v761 = vmax.f32 %v633, 0.0
      %v762 = vmax.f32 %v634, 0.0
      %v763 = vmax.f32 %v635, 0.0
      %v764 = vmax.f32 %v636, 0.0
      %v765 = vmax.f32 %v637, 0.0
      %v766 = vmax.f32 %v638, 0.0
      %v767 = vmax.f32 %v639, 0.0
      %v768 = vmax.f32 %v640, 0.0
      %v769 = vmax.f32 %v641, 0.0
      %v770 = vmax.f32 %v642, 0.0
      %v771 = vmax.f32 %v643, 0.0
      %v772 = vmax.f32 %v644, 0.0
      %v773 = vmax.f32 %v645, 0.0
      %v774 = vmax.f32 %v646, 0.0
      %v775 = vmax.f32 %v647, 0.0
      %v776 = vmax.f32 %v648, 0.0
      %v777 = vmax.f32 %v649, 0.0
      %v778 = vmax.f32 %v650, 0.0
      %v779 = vmax.f32 %v651, 0.0
      %v780 = vmax.f32 %v652, 0.0
      %v781 = vmax.f32 %v653, 0.0
      %v782 = vmax.f32 %v654, 0.0
      %v783 = vmax.f32 %v655, 0.0
      %v784 = vmax.f32 %v656, 0.0
      %v785 = vmax.f32 %v657, 0.0
      %v786 = vmax.f32 %v658, 0.0
      %v787 = vmax.f32 %v659, 0.0
      %v788 = vmax.f32 %v660, 0.0
      %v789 = vmax.f32 %v661, 0.0
      %v790 = vmax.f32 %v662, 0.0
      %v791 = vmax.f32 %v663, 0.0
      %v792 = vmax.f32 %v664, 0.0
      %v793 = vmax.f32 %v665, 0.0
      %v794 = vmax.f32 %v666, 0.0
      %v795 = vmax.f32 %v667, 0.0
      %v796 = vmax.f32 %v668, 0.0
      %v797 = vmax.f32 %v669, 0.0
      %v798 = vmax.f32 %v670, 0.0
      %v799 = vmax.f32 %v671, 0.0
      %v800 = vmax.f32 %v672, 0.0
      %v801 = vmax.f32 %v673, 0.0
      %v802 = vmax.f32 %v674, 0.0
      %v803 = vmax.f32 %v675, 0.0
      %v804 = vmax.f32 %v676, 0.0
      %v805 = vmax.f32 %v677, 0.0
      %v806 = vmax.f32 %v678, 0.0
      %v807 = vmax.f32 %v679, 0.0
      %v808 = vmax.f32 %v680, 0.0
      %v809 = vmax.f32 %v681, 0.0
      %v810 = vmax.f32 %v682, 0.0
      %v811 = vmax.f32 %v683, 0.0
      %v812 = vmax.f32 %v684, 0.0
      %v813 = vmax.f32 %v685, 0.0
      %v814 = vmax.f32 %v686, 0.0
      %v815 = vmax.f32 %v687, 0.0
      %v816 = vmax.f32 %v688, 0.0
      %v817 = vmax.f32 %v689, 0.0
      %v818 = vmax.f32 %v690, 0.0
      %v819 = vmax.f32 %v691, 0.0
      %v820 = vmax.f32 %v692, 0.0
      %v821 = vmax.f32 %v693, 0.0
      %vm822 = vcmask 64512
      %823 = vst.msk [vmem:[%s172] sm:$0xff] %vm822, %v694
      %824 = vst.msk [vmem:[%s172 + $0x8] sm:$0xff] %vm822, %v695
      %825 = vst.msk [vmem:[%s172 + $0x10] sm:$0xff] %vm822, %v696
      %826 = vst.msk [vmem:[%s172 + $0x18] sm:$0xff] %vm822, %v697
      %827 = vst.msk [vmem:[%s172 + $0x20] sm:$0xff] %vm822, %v698
      %828 = vst.msk [vmem:[%s172 + $0x28] sm:$0xff] %vm822, %v699
      %829 = vst.msk [vmem:[%s172 + $0x30] sm:$0xff] %vm822, %v700
      %830 = vst.msk [vmem:[%s172 + $0x38] sm:$0xff] %vm822, %v701
      %831 = vst.msk [vmem:[%s172 + $0x40] sm:$0xff] %vm822, %v702
      %832 = vst.msk [vmem:[%s172 + $0x48] sm:$0xff] %vm822, %v703
      %833 = vst.msk [vmem:[%s172 + $0x50] sm:$0xff] %vm822, %v704
      %834 = vst.msk [vmem:[%s172 + $0x58] sm:$0xff] %vm822, %v705
      %835 = vst.msk [vmem:[%s172 + $0x60] sm:$0xff] %vm822, %v706
      %836 = vst.msk [vmem:[%s172 + $0x68] sm:$0xff] %vm822, %v707
      %837 = vst.msk [vmem:[%s172 + $0x70] sm:$0xff] %vm822, %v708
      %838 = vst.msk [vmem:[%s172 + $0x78] sm:$0xff] %vm822, %v709
      %839 = vst.msk [vmem:[%s172 + $0x80] sm:$0xff] %vm822, %v710
      %840 = vst.msk [vmem:[%s172 + $0x88] sm:$0xff] %vm822, %v711
      %841 = vst.msk [vmem:[%s172 + $0x90] sm:$0xff] %vm822, %v712
      %842 = vst.msk [vmem:[%s172 + $0x98] sm:$0xff] %vm822, %v713
      %843 = vst.msk [vmem:[%s172 + $0xa0] sm:$0xff] %vm822, %v714
      %844 = vst.msk [vmem:[%s172 + $0xa8] sm:$0xff] %vm822, %v715
      %845 = vst.msk [vmem:[%s172 + $0xb0] sm:$0xff] %vm822, %v716
      %846 = vst.msk [vmem:[%s172 + $0xb8] sm:$0xff] %vm822, %v717
      %847 = vst.msk [vmem:[%s172 + $0xc0] sm:$0xff] %vm822, %v718
      %848 = vst.msk [vmem:[%s172 + $0xc8] sm:$0xff] %vm822, %v719
      %849 = vst.msk [vmem:[%s172 + $0xd0] sm:$0xff] %vm822, %v720
      %850 = vst.msk [vmem:[%s172 + $0xd8] sm:$0xff] %vm822, %v721
      %851 = vst.msk [vmem:[%s172 + $0xe0] sm:$0xff] %vm822, %v722
      %852 = vst.msk [vmem:[%s172 + $0xe8] sm:$0xff] %vm822, %v723
      %853 = vst.msk [vmem:[%s172 + $0xf0] sm:$0xff] %vm822, %v724
      %854 = vst.msk [vmem:[%s172 + $0xf8] sm:$0xff] %vm822, %v725
      %855 = vst.msk [vmem:[%s172 + $0x100] sm:$0xff] %vm822, %v726
      %856 = vst.msk [vmem:[%s172 + $0x108] sm:$0xff] %vm822, %v727
      %857 = vst.msk [vmem:[%s172 + $0x110] sm:$0xff] %vm822, %v728
      %858 = vst.msk [vmem:[%s172 + $0x118] sm:$0xff] %vm822, %v729
      %859 = vst.msk [vmem:[%s172 + $0x120] sm:$0xff] %vm822, %v730
      %860 = vst.msk [vmem:[%s172 + $0x128] sm:$0xff] %vm822, %v731
      %861 = vst.msk [vmem:[%s172 + $0x130] sm:$0xff] %vm822, %v732
      %862 = vst.msk [vmem:[%s172 + $0x138] sm:$0xff] %vm822, %v733
      %863 = vst.msk [vmem:[%s172 + $0x140] sm:$0xff] %vm822, %v734
      %864 = vst.msk [vmem:[%s172 + $0x148] sm:$0xff] %vm822, %v735
      %865 = vst.msk [vmem:[%s172 + $0x150] sm:$0xff] %vm822, %v736
      %866 = vst.msk [vmem:[%s172 + $0x158] sm:$0xff] %vm822, %v737
      %867 = vst.msk [vmem:[%s172 + $0x160] sm:$0xff] %vm822, %v738
      %868 = vst.msk [vmem:[%s172 + $0x168] sm:$0xff] %vm822, %v739
      %869 = vst.msk [vmem:[%s172 + $0x170] sm:$0xff] %vm822, %v740
      %870 = vst.msk [vmem:[%s172 + $0x178] sm:$0xff] %vm822, %v741
      %871 = vst.msk [vmem:[%s172 + $0x180] sm:$0xff] %vm822, %v742
      %872 = vst.msk [vmem:[%s172 + $0x188] sm:$0xff] %vm822, %v743
      %873 = vst.msk [vmem:[%s172 + $0x190] sm:$0xff] %vm822, %v744
      %874 = vst.msk [vmem:[%s172 + $0x198] sm:$0xff] %vm822, %v745
      %875 = vst.msk [vmem:[%s172 + $0x1a0] sm:$0xff] %vm822, %v746
      %876 = vst.msk [vmem:[%s172 + $0x1a8] sm:$0xff] %vm822, %v747
      %877 = vst.msk [vmem:[%s172 + $0x1b0] sm:$0xff] %vm822, %v748
      %878 = vst.msk [vmem:[%s172 + $0x1b8] sm:$0xff] %vm822, %v749
      %879 = vst.msk [vmem:[%s172 + $0x1c0] sm:$0xff] %vm822, %v750
      %880 = vst.msk [vmem:[%s172 + $0x1c8] sm:$0xff] %vm822, %v751
      %881 = vst.msk [vmem:[%s172 + $0x1d0] sm:$0xff] %vm822, %v752
      %882 = vst.msk [vmem:[%s172 + $0x1d8] sm:$0xff] %vm822, %v753
      %883 = vst.msk [vmem:[%s172 + $0x1e0] sm:$0xff] %vm822, %v754
      %884 = vst.msk [vmem:[%s172 + $0x1e8] sm:$0xff] %vm822, %v755
      %885 = vst.msk [vmem:[%s172 + $0x1f0] sm:$0xff] %vm822, %v756
      %886 = vst.msk [vmem:[%s172 + $0x1f8] sm:$0xff] %vm822, %v757
      %887 = vst.msk [vmem:[%s172 + $0x200] sm:$0xff] %vm822, %v758
      %888 = vst.msk [vmem:[%s172 + $0x208] sm:$0xff] %vm822, %v759
      %889 = vst.msk [vmem:[%s172 + $0x210] sm:$0xff] %vm822, %v760
      %890 = vst.msk [vmem:[%s172 + $0x218] sm:$0xff] %vm822, %v761
      %891 = vst.msk [vmem:[%s172 + $0x220] sm:$0xff] %vm822, %v762
      %892 = vst.msk [vmem:[%s172 + $0x228] sm:$0xff] %vm822, %v763
      %893 = vst.msk [vmem:[%s172 + $0x230] sm:$0xff] %vm822, %v764
      %894 = vst.msk [vmem:[%s172 + $0x238] sm:$0xff] %vm822, %v765
      %895 = vst.msk [vmem:[%s172 + $0x240] sm:$0xff] %vm822, %v766
      %896 = vst.msk [vmem:[%s172 + $0x248] sm:$0xff] %vm822, %v767
      %897 = vst.msk [vmem:[%s172 + $0x250] sm:$0xff] %vm822, %v768
      %898 = vst.msk [vmem:[%s172 + $0x258] sm:$0xff] %vm822, %v769
      %899 = vst.msk [vmem:[%s172 + $0x260] sm:$0xff] %vm822, %v770
      %900 = vst.msk [vmem:[%s172 + $0x268] sm:$0xff] %vm822, %v771
      %901 = vst.msk [vmem:[%s172 + $0x270] sm:$0xff] %vm822, %v772
      %902 = vst.msk [vmem:[%s172 + $0x278] sm:$0xff] %vm822, %v773
      %903 = vst.msk [vmem:[%s172 + $0x280] sm:$0xff] %vm822, %v774
      %904 = vst.msk [vmem:[%s172 + $0x288] sm:$0xff] %vm822, %v775
      %905 = vst.msk [vmem:[%s172 + $0x290] sm:$0xff] %vm822, %v776
      %906 = vst.msk [vmem:[%s172 + $0x298] sm:$0xff] %vm822, %v777
      %907 = vst.msk [vmem:[%s172 + $0x2a0] sm:$0xff] %vm822, %v778
      %908 = vst.msk [vmem:[%s172 + $0x2a8] sm:$0xff] %vm822, %v779
      %909 = vst.msk [vmem:[%s172 + $0x2b0] sm:$0xff] %vm822, %v780
      %910 = vst.msk [vmem:[%s172 + $0x2b8] sm:$0xff] %vm822, %v781
      %911 = vst.msk [vmem:[%s172 + $0x2c0] sm:$0xff] %vm822, %v782
      %912 = vst.msk [vmem:[%s172 + $0x2c8] sm:$0xff] %vm822, %v783
      %913 = vst.msk [vmem:[%s172 + $0x2d0] sm:$0xff] %vm822, %v784
      %914 = vst.msk [vmem:[%s172 + $0x2d8] sm:$0xff] %vm822, %v785
      %915 = vst.msk [vmem:[%s172 + $0x2e0] sm:$0xff] %vm822, %v786
      %916 = vst.msk [vmem:[%s172 + $0x2e8] sm:$0xff] %vm822, %v787
      %917 = vst.msk [vmem:[%s172 + $0x2f0] sm:$0xff] %vm822, %v788
      %918 = vst.msk [vmem:[%s172 + $0x2f8] sm:$0xff] %vm822, %v789
      %919 = vst.msk [vmem:[%s172 + $0x300] sm:$0xff] %vm822, %v790
      %920 = vst.msk [vmem:[%s172 + $0x308] sm:$0xff] %vm822, %v791
      %921 = vst.msk [vmem:[%s172 + $0x310] sm:$0xff] %vm822, %v792
      %922 = vst.msk [vmem:[%s172 + $0x318] sm:$0xff] %vm822, %v793
      %923 = vst.msk [vmem:[%s172 + $0x320] sm:$0xff] %vm822, %v794
      %924 = vst.msk [vmem:[%s172 + $0x328] sm:$0xff] %vm822, %v795
      %925 = vst.msk [vmem:[%s172 + $0x330] sm:$0xff] %vm822, %v796
      %926 = vst.msk [vmem:[%s172 + $0x338] sm:$0xff] %vm822, %v797
      %927 = vst.msk [vmem:[%s172 + $0x340] sm:$0xff] %vm822, %v798
      %928 = vst.msk [vmem:[%s172 + $0x348] sm:$0xff] %vm822, %v799
      %929 = vst.msk [vmem:[%s172 + $0x350] sm:$0xff] %vm822, %v800
      %930 = vst.msk [vmem:[%s172 + $0x358] sm:$0xff] %vm822, %v801
      %931 = vst.msk [vmem:[%s172 + $0x360] sm:$0xff] %vm822, %v802
      %932 = vst.msk [vmem:[%s172 + $0x368] sm:$0xff] %vm822, %v803
      %933 = vst.msk [vmem:[%s172 + $0x370] sm:$0xff] %vm822, %v804
      %934 = vst.msk [vmem:[%s172 + $0x378] sm:$0xff] %vm822, %v805
      %935 = vst.msk [vmem:[%s172 + $0x380] sm:$0xff] %vm822, %v806
      %936 = vst.msk [vmem:[%s172 + $0x388] sm:$0xff] %vm822, %v807
      %937 = vst.msk [vmem:[%s172 + $0x390] sm:$0xff] %vm822, %v808
      %938 = vst.msk [vmem:[%s172 + $0x398] sm:$0xff] %vm822, %v809
      %939 = vst.msk [vmem:[%s172 + $0x3a0] sm:$0xff] %vm822, %v810
      %940 = vst.msk [vmem:[%s172 + $0x3a8] sm:$0xff] %vm822, %v811
      %941 = vst.msk [vmem:[%s172 + $0x3b0] sm:$0xff] %vm822, %v812
      %942 = vst.msk [vmem:[%s172 + $0x3b8] sm:$0xff] %vm822, %v813
      %943 = vst.msk [vmem:[%s172 + $0x3c0] sm:$0xff] %vm822, %v814
      %944 = vst.msk [vmem:[%s172 + $0x3c8] sm:$0xff] %vm822, %v815
      %945 = vst.msk [vmem:[%s172 + $0x3d0] sm:$0xff] %vm822, %v816
      %946 = vst.msk [vmem:[%s172 + $0x3d8] sm:$0xff] %vm822, %v817
      %947 = vst.msk [vmem:[%s172 + $0x3e0] sm:$0xff] %vm822, %v818
      %948 = vst.msk [vmem:[%s172 + $0x3e8] sm:$0xff] %vm822, %v819
      %949 = vst.msk [vmem:[%s172 + $0x3f0] sm:$0xff] %vm822, %v820
      %950 = vst.msk [vmem:[%s172 + $0x3f8] sm:$0xff] %vm822, %v821
      %s951 = smul.u32 128, %s14
      %p952 = scmp.lt.s32.totalorder %s951, 1023
      %s953 = scalar_select %p952, %s951, 1023
      %s954 = smul.addr %s953, 8
      %s955 = scalar_lea.vmem %s3, %s954
      // Predicated region
      $region33: #{decoder_bottleneck_forward.7} parent=31 // pred_check
        %p956 = pneg %p100
      $region34: #{decoder_bottleneck_forward.7} parent=31 // pred_check_branch
        %958 = sbr.rel (%p956) target = $region36
      $region35: #{decoder_bottleneck_forward.7} parent=31 // pred_region
        %s959 = smul.u32 128, %s14
      $region36: #{decoder_bottleneck_forward.7} parent=31 // pred_fallthru
        _
    $region32: #{decoder_bottleneck_forward.7} parent=5 // pred_fallthru
      _
    %p960 = scmp.le.s32.totalorder 2, %s9
    // Predicated region
    $region37: #{decoder_bottleneck_forward.7} parent=5 // pred_check
      %p961 = pneg %p960
    $region38: #{decoder_bottleneck_forward.7} parent=5 // pred_check_branch
      %963 = sbr.rel (%p961) target = $region40
    $region39: #{decoder_bottleneck_forward.7} parent=5 // pred_region
      %s964 = ssub.s32 %s9, 2
      // Predicated region
      $region41: #{decoder_bottleneck_forward.7} parent=39 // pred_check
        %p965 = pneg %p106
      $region42: #{decoder_bottleneck_forward.7} parent=39 // pred_check_branch
        %967 = sbr.rel (%p965) target = $region44
      $region43: #{decoder_bottleneck_forward.7} parent=39 // pred_region
        %s968 = smul.u32 128, %s15
        %p969 = scmp.lt.s32.totalorder %s968, 1023
        %s970 = scalar_select %p969, %s968, 1023
        %s971 = smul.addr %s970, 8
        %s972 = scalar_lea.vmem %s3, %s971
      $region44: #{decoder_bottleneck_forward.7} parent=39 // pred_fallthru
        _
    $region40: #{decoder_bottleneck_forward.7} parent=5 // pred_fallthru
      _
  $region6: #{decoder_bottleneck_forward.7} parent=0 // loop_footer
    %s13 = sadd.s32 1, %s9
  $region7: #{decoder_bottleneck_forward.7} parent=0 // loop_footer_branch
    %8 = sbr.rel target = $region3
  $region8: #{decoder_bottleneck_forward.7} parent=0 // loop_exit
    _

</llo_original>
